<compile_context>
chip_gen: v7x
topology: tpu7x:2x2x1
jax: 0.10.0
libtpu: 0.0.40
codegen_flags: <defaults>
</compile_context>

<pallas_src>
import jax
import jax.numpy as jnp
import numpy as np
from jax.experimental import pallas as pl
from jax.experimental.pallas import tpu as pltpu

MXU_DTYPE = jnp.float32   # set to jnp.bfloat16 on v6e / v7x for ~4x MXU rate
CL_TARGET = 512           # max conv-chunk lanes (bounds live-value size)


def _chunk_rows(H, W, target=CL_TARGET):
    """Largest divisor r of H with r*W <= target (>=1): one conv chunk = r image rows."""
    if H * W <= target:
        return H
    best = 1
    for r in range(1, H + 1):
        if H % r == 0 and r * W <= target:
            best = r
    return best


def _img0(W):
    """128-aligned lane offset of the image start, leaving >= W+1 guard/pad lanes in front."""
    return ((W + 1 + 127) // 128) * 128


def _pick_bt(B, cap=8):
    """Images per grid step: amortize grid overhead but keep >= 2 grid steps (v7x dual TC)."""
    best = 1
    for d in range(1, min(cap, B) + 1):
        if B % d == 0 and (B // d >= 2 or B == 1):
            best = d
    return best


# ------------------------------ kernel factory ------------------------------

def _make_kernel(S, C0, hidden, Bt, cdt):
    f32 = jnp.float32
    stages = ((S, S, C0, 16, 16),
              (S // 2, S // 2, 16, 16, 16),
              (S // 4, S // 4, 16, 32, 16))
    HWf = (S // 8) ** 2

    # static per-stage geometry: (H, W, Cin_convA, C_mid, C_out_convB, chunk_rows, CL, IMG0)
    geo = []
    for (H, W, cin_a, c_mid, c_out) in stages:
        r = _chunk_rows(H, W)
        geo.append((H, W, cin_a, c_mid, c_out, r, r * W, _img0(W)))

    def kernel(x_ref,
               wc1, bc1, wc2, bc2, wc3, bc3, wc4, bc4, wc5, bc5, wc6, bc6,
               wl1, bl1, wl2, bl2,
               o_ref,
               pbufA, pbufB, cbuf, patch, fbuf):
        conv_params = ((wc1, bc1), (wc2, bc2), (wc3, bc3),
                       (wc4, bc4), (wc5, bc5), (wc6, bc6))

        # ---- hoisted per-stage constants (built once per grid step) ----
        consts = []
        for (H, W, _, _, _, r, CL, IMG0) in geo:
            Wo = W // 2
            col = jax.lax.broadcasted_iota(jnp.int32, (1, CL), 1) % W
            mask_l = (col > 0).astype(f32)          # kills x == 0     for dx == 0 taps
            mask_r = (col < W - 1).astype(f32)      # kills x == W - 1 for dx == 2 taps
            ri = jax.lax.broadcasted_iota(jnp.int32, (W, Wo), 0)
            ci = jax.lax.broadcasted_iota(jnp.int32, (W, Wo), 1)
            sel_e = (ri == 2 * ci).astype(f32)      # picks even columns
            sel_o = (ri == 2 * ci + 1).astype(f32)  # picks odd  columns
            consts.append((mask_l, mask_r, sel_e, sel_o))

        def conv3x3_elu(src, w_ref, b_ref, H, W, Cin, Cout, r, CL, IMG0,
                        mask_l, mask_r, dst, dst_img0):
            """3x3 'same' conv + bias + ELU on channel-major (C, flat) buffers.

            Image pixel (y, x) lives at lane IMG0 + y*W + x of `src`; tap (dy, dx)
            of pixel m is lane IMG0 + m + (dy-1)*W + (dx-1).  Cross-row taps at the
            left/right image edge are masked to zero during the im2col copy; the
            top/bottom pad rows (and guard lanes) are zeroed by the caller.
            """
            K = 9 * Cin
            wv = w_ref[...]                       # (Cout, 9*Cin), already MXU dtype
            bv = b_ref[...]                       # (Cout, 1) f32
            for ck in range(H // r):
                m0 = ck * CL
                # fused im2col: 9 shifted lane-dense copies into the patch scratch
                for dy in range(3):
                    for dx in range(3):
                        off = (dy - 1) * W + (dx - 1)
                        xs = src[pl.ds(0, Cin), pl.ds(IMG0 + m0 + off, CL)]
                        if dx == 0:
                            xs = xs * mask_l
                        elif dx == 2:
                            xs = xs * mask_r
                        patch[pl.ds((dy * 3 + dx) * Cin, Cin),
                              pl.ds(0, CL)] = xs.astype(cdt)
                # one MXU matmul per chunk (K = 9*Cin)
                acc = jnp.dot(wv, patch[pl.ds(0, K), pl.ds(0, CL)],
                              preferred_element_type=f32)
                acc = acc + bv
                # ELU(alpha=1); min-clamp keeps the unselected exp branch benign.
                act = jnp.where(acc > 0.0, acc, jnp.exp(jnp.minimum(acc, 0.0)) - 1.0)
                dst[pl.ds(0, Cout), pl.ds(dst_img0 + m0, CL)] = act

        def maxpool2(src, H, W, sel_e, sel_o, dst, dst_row0, dst_col0):
            """2x2 stride-2 max pool of the flat (16, H*W) buffer `src` into `dst`."""
            Wo = W // 2
            for yo in range(H // 2):
                base = 2 * yo * W
                vm = jnp.maximum(src[pl.ds(0, 16), pl.ds(base, W)],
                                 src[pl.ds(0, 16), pl.ds(base + W, W)])
                pooled = jnp.maximum(
                    jnp.dot(vm, sel_e, preferred_element_type=f32),
                    jnp.dot(vm, sel_o, preferred_element_type=f32))
                dst[pl.ds(dst_row0, 16), pl.ds(dst_col0 + yo * Wo, Wo)] = pooled

        # ------------------------------ trunk ------------------------------
        for i in range(Bt):
            # stage-1 input: this image, NCHW-flat (lane-dense), into the padded buffer
            IMG0_1 = geo[0][7]
            pbufA[pl.ds(0, C0), pl.ds(IMG0_1, S * S)] = x_ref[0, i]

            for si, (H, W, cin_a, c_mid, c_out, r, CL, IMG0) in enumerate(geo):
                mask_l, mask_r, sel_e, sel_o = consts[si]
                wa, ba = conv_params[2 * si]
                wb, bb = conv_params[2 * si + 1]

                # boundary-only zeroing of the two padded conv inputs (pad rows + guards)
                back = W + 8
                pbufA[:, pl.ds(0, IMG0)] = jnp.zeros((pbufA.shape[0], IMG0), f32)
                pbufA[:, pl.ds(IMG0 + H * W, back)] = jnp.zeros((pbufA.shape[0], back), f32)
                pbufB[:, pl.ds(0, IMG0)] = jnp.zeros((pbufB.shape[0], IMG0), f32)
                pbufB[:, pl.ds(IMG0 + H * W, back)] = jnp.zeros((pbufB.shape[0], back), f32)

                # conv A: pbufA -> pbufB (padded, becomes conv B's input)
                conv3x3_elu(pbufA, wa, ba, H, W, cin_a, c_mid, r, CL, IMG0,
                            mask_l, mask_r, pbufB, IMG0)
                # conv B: pbufB -> cbuf (flat, unpadded pool source)
                conv3x3_elu(pbufB, wb, bb, H, W, c_mid, c_out, r, CL, IMG0,
                            mask_l, mask_r, cbuf, 0)
                # fused 2x2 max pool
                if si < 2:
                    maxpool2(cbuf, H, W, sel_e, sel_o, pbufA, 0, geo[si + 1][7])
                else:
                    maxpool2(cbuf, H, W, sel_e, sel_o, fbuf, i * 16, 0)

        # ------------------------------ head ------------------------------
        # fbuf rows are (image*16 + channel), lanes are the pooled spatial map, so the
        # NCHW flatten order matches w1's row blocks [c*HWf : (c+1)*HWf] directly.
        h1 = jnp.zeros((Bt, hidden), f32)
        for c in range(16):
            if Bt > 1:
                fc = fbuf[pl.ds(c, Bt, stride=16), pl.ds(0, HWf)]
            else:
                fc = fbuf[pl.ds(c, 1), pl.ds(0, HWf)]
            h1 = h1 + jnp.dot(fc.astype(cdt), wl1[pl.ds(c * HWf, HWf), :],
                              preferred_element_type=f32)
        h1 = jnp.maximum(h1 + bl1[...], 0.0)
        logits = jnp.dot(h1.astype(cdt), wl2[...],
                         preferred_element_type=f32) + bl2[...]
        logits = jnp.maximum(logits, 0.0)
        z = logits - jnp.max(logits, axis=-1, keepdims=True)
        e = jnp.exp(z)
        s = jnp.sum(e, axis=-1, keepdims=True)
        rinv = pl.reciprocal(s, approx=True)
        rinv = rinv * (2.0 - s * rinv)              # one Newton step -> ~f32 exact
        o_ref[0] = e * rinv

    return kernel


# ------------------------------- full forward -------------------------------

def actor_net_forward(params, state_nchw):
    """state_nchw: (B, N_frame, S, S), same convention as the PyTorch module."""
    B, C0, S, S2 = state_nchw.shape
    assert S == S2 and S % 8 == 0, "state_dim must be a multiple of 8"
    assert C0 <= 16, "N_frame > 16 not supported by this kernel"
    A = params["w2"].shape[1]
    hidden = params["w1"].shape[1]
    HWf = (S // 8) ** 2
    assert params["w1"].shape[0] == 16 * HWf

    Bt = _pick_bt(B)
    nblk = B // Bt

    # Input stays in NCHW order -> lane-dense (.., C0, S*S) DMA blocks (free reshape).
    x = state_nchw.astype(jnp.float32).reshape(nblk, Bt, C0, S * S)

    # Host-side weight prep: (Cout, 9*Cin) conv weights, (Cout, 1) biases, MXU dtype.
    flat_params = []
    for (w, b) in params["conv"]:
        cin, cout = w.shape[2], w.shape[3]
        flat_params.append(w.reshape(9 * cin, cout).T.astype(MXU_DTYPE))
        flat_params.append(b.reshape(cout, 1).astype(jnp.float32))
    flat_params += [params["w1"].astype(MXU_DTYPE),
                    params["b1"].reshape(1, hidden).astype(jnp.float32),
                    params["w2"].astype(MXU_DTYPE),
                    params["b2"].reshape(1, A).astype(jnp.float32)]

    kernel = _make_kernel(S, C0, hidden, Bt, MXU_DTYPE)

    # scratch geometry (max over stages)
    lanes, clmax = 0, 0
    for (H, W) in ((S, S), (S // 2, S // 2), (S // 4, S // 4)):
        lanes = max(lanes, _img0(W) + H * W + W + 8)
        clmax = max(clmax, _chunk_rows(H, W) * W)
    rows_a = max(16, C0)

    def whole(a):
        return pl.BlockSpec(a.shape, lambda b, n=a.ndim: (0,) * n)

    in_specs = [pl.BlockSpec((1, Bt, C0, S * S), lambda b: (b, 0, 0, 0))]
    in_specs += [whole(a) for a in flat_params]

    grid_spec = pltpu.PrefetchScalarGridSpec(
        num_scalar_prefetch=0,
        grid=(nblk,),
        in_specs=in_specs,
        out_specs=pl.BlockSpec((1, Bt, A), lambda b: (b, 0, 0)),
        scratch_shapes=[
            pltpu.VMEM((rows_a, lanes), jnp.float32),          # padded conv-A input
            pltpu.VMEM((32, lanes), jnp.float32),              # padded conv-B input
            pltpu.VMEM((16, S * S), jnp.float32),              # conv-B output / pool src
            pltpu.VMEM((9 * max(32, C0), clmax), MXU_DTYPE),   # im2col patch
            pltpu.VMEM((Bt * 16, HWf), jnp.float32),           # flattened trunk features
        ],
    )
    out = pl.pallas_call(
        kernel,
        out_shape=jax.ShapeDtypeStruct((nblk, Bt, A), jnp.float32),
        grid_spec=grid_spec,
        compiler_params=pltpu.CompilerParams(dimension_semantics=("parallel",)),
    )(x, *flat_params)
    return out.reshape(B, A)


# ------------------------- deterministic parameters -------------------------

def init_params(key, state_dim, action_dim, n_frame):
    conv_channels = [(n_frame, 16), (16, 16), (16, 16), (16, 16), (16, 32), (32, 16)]
    params = {"conv": []}
    for i, (cin, cout) in enumerate(conv_channels):
        kw = jax.random.fold_in(key, 2 * i)
        kb = jax.random.fold_in(key, 2 * i + 1)
        w = jax.random.normal(kw, (3, 3, cin, cout), jnp.float32) / np.sqrt(9.0 * cin)
        b = 0.01 * jax.random.normal(kb, (cout,), jnp.float32)
        params["conv"].append((w, b))
    feat = 16 * (state_dim // 8) ** 2
    k1, k2, k3, k4 = (jax.random.fold_in(key, 100 + i) for i in range(4))
    params["w1"] = jax.random.normal(k1, (feat, 256), jnp.float32) / np.sqrt(float(feat))
    params["b1"] = 0.01 * jax.random.normal(k2, (256,), jnp.float32)
    params["w2"] = jax.random.normal(k3, (256, action_dim), jnp.float32) / np.sqrt(256.0)
    params["b2"] = 0.01 * jax.random.normal(k4, (action_dim,), jnp.float32)
    return params


# ------------------------------ pure-JAX reference ---------------------------

def reference_forward(params, state_nchw):
    def elu(v):
        return jnp.where(v > 0, v, jnp.exp(v) - 1.0)

    def conv(h, w, b):
        wt = jnp.transpose(w, (3, 2, 0, 1))  # (Cout, Cin, 3, 3)
        out = jax.lax.conv_general_dilated(
            h, wt, (1, 1), ((1, 1), (1, 1)),
            dimension_numbers=("NCHW", "OIHW", "NCHW"))
        return out + b[None, :, None, None]

    def pool(h):
        return jax.lax.reduce_window(h, -jnp.inf, jax.lax.max,
                                     (1, 1, 2, 2), (1, 1, 2, 2), "VALID")

    h = state_nchw.astype(jnp.float32)
    (w1, b1), (w2, b2), (w3, b3), (w4, b4), (w5, b5), (w6, b6) = params["conv"]
    h = elu(conv(h, w1, b1)); h = elu(conv(h, w2, b2)); h = pool(h)
    h = elu(conv(h, w3, b3)); h = elu(conv(h, w4, b4)); h = pool(h)
    h = elu(conv(h, w5, b5)); h = elu(conv(h, w6, b6)); h = pool(h)
    h = h.reshape(h.shape[0], -1)
    h = jnp.maximum(h @ params["w1"] + params["b1"], 0.0)
    h = jnp.maximum(h @ params["w2"] + params["b2"], 0.0)
    return jax.nn.softmax(h, axis=1)


if __name__ == "__main__":
    key = jax.random.PRNGKey(0)
    state_dim, action_dim, n_frame, batch = 16, 5, 4, 2
    params = init_params(jax.random.fold_in(key, 1), state_dim, action_dim, n_frame)
    x = jax.random.normal(jax.random.fold_in(key, 2),
                          (batch, n_frame, state_dim, state_dim), jnp.float32)

    out = jax.jit(actor_net_forward)(params, x)
    out = jax.block_until_ready(out)

    ref = reference_forward(params, x)
    tol = 1e-3 if MXU_DTYPE == jnp.float32 else 2e-2
    np.testing.assert_allclose(np.asarray(out), np.asarray(ref), rtol=tol, atol=tol)
    assert out.shape == (batch, action_dim)
    assert np.allclose(np.asarray(out).sum(axis=1), 1.0, atol=1e-4)
    print("KERNEL_OK")
</pallas_src>

<mosaic_0001>
module attributes {stable_mosaic.version = 11 : i64} {
  func.func @kernel(%arg0: i32, %arg1: memref<1x1x4x256xf32, #tpu.memory_space<vmem>>, %arg2: memref<16x36xf32, #tpu.memory_space<vmem>>, %arg3: memref<16x1xf32, #tpu.memory_space<vmem>>, %arg4: memref<16x144xf32, #tpu.memory_space<vmem>>, %arg5: memref<16x1xf32, #tpu.memory_space<vmem>>, %arg6: memref<16x144xf32, #tpu.memory_space<vmem>>, %arg7: memref<16x1xf32, #tpu.memory_space<vmem>>, %arg8: memref<16x144xf32, #tpu.memory_space<vmem>>, %arg9: memref<16x1xf32, #tpu.memory_space<vmem>>, %arg10: memref<32x144xf32, #tpu.memory_space<vmem>>, %arg11: memref<32x1xf32, #tpu.memory_space<vmem>>, %arg12: memref<16x288xf32, #tpu.memory_space<vmem>>, %arg13: memref<16x1xf32, #tpu.memory_space<vmem>>, %arg14: memref<64x256xf32, #tpu.memory_space<vmem>>, %arg15: memref<1x256xf32, #tpu.memory_space<vmem>>, %arg16: memref<256x5xf32, #tpu.memory_space<vmem>>, %arg17: memref<1x5xf32, #tpu.memory_space<vmem>>, %arg18: memref<1x1x5xf32, #tpu.memory_space<vmem>>, %arg19: memref<16x408xf32, #tpu.memory_space<vmem>>, %arg20: memref<32x408xf32, #tpu.memory_space<vmem>>, %arg21: memref<16x256xf32, #tpu.memory_space<vmem>>, %arg22: memref<288x256xf32, #tpu.memory_space<vmem>>, %arg23: memref<16x4xf32, #tpu.memory_space<vmem>>) attributes {dimension_semantics = [#tpu.dimension_semantics<parallel>], iteration_bounds = array<i64: 2>, scalar_prefetch = 0 : i64, scratch_operands = 5 : i64, tpu.core_type = #tpu.core_type<tc>, window_params = [{transform_indices = @transform_0, window_bounds = array<i64: 1, 1, 4, 256>}, {pipeline_mode = #tpu.pipeline_mode<synchronous>, transform_indices = @transform_1, window_bounds = array<i64: 16, 36>}, {pipeline_mode = #tpu.pipeline_mode<synchronous>, transform_indices = @transform_2, window_bounds = array<i64: 16, 1>}, {pipeline_mode = #tpu.pipeline_mode<synchronous>, transform_indices = @transform_3, window_bounds = array<i64: 16, 144>}, {pipeline_mode = #tpu.pipeline_mode<synchronous>, transform_indices = @transform_4, window_bounds = array<i64: 16, 1>}, {pipeline_mode = #tpu.pipeline_mode<synchronous>, transform_indices = @transform_5, window_bounds = array<i64: 16, 144>}, {pipeline_mode = #tpu.pipeline_mode<synchronous>, transform_indices = @transform_6, window_bounds = array<i64: 16, 1>}, {pipeline_mode = #tpu.pipeline_mode<synchronous>, transform_indices = @transform_7, window_bounds = array<i64: 16, 144>}, {pipeline_mode = #tpu.pipeline_mode<synchronous>, transform_indices = @transform_8, window_bounds = array<i64: 16, 1>}, {pipeline_mode = #tpu.pipeline_mode<synchronous>, transform_indices = @transform_9, window_bounds = array<i64: 32, 144>}, {pipeline_mode = #tpu.pipeline_mode<synchronous>, transform_indices = @transform_10, window_bounds = array<i64: 32, 1>}, {pipeline_mode = #tpu.pipeline_mode<synchronous>, transform_indices = @transform_11, window_bounds = array<i64: 16, 288>}, {pipeline_mode = #tpu.pipeline_mode<synchronous>, transform_indices = @transform_12, window_bounds = array<i64: 16, 1>}, {pipeline_mode = #tpu.pipeline_mode<synchronous>, transform_indices = @transform_13, window_bounds = array<i64: 64, 256>}, {pipeline_mode = #tpu.pipeline_mode<synchronous>, transform_indices = @transform_14, window_bounds = array<i64: 1, 256>}, {pipeline_mode = #tpu.pipeline_mode<synchronous>, transform_indices = @transform_15, window_bounds = array<i64: 256, 5>}, {pipeline_mode = #tpu.pipeline_mode<synchronous>, transform_indices = @transform_16, window_bounds = array<i64: 1, 5>}, {transform_indices = @transform_17, window_bounds = array<i64: 1, 1, 5>}]} {
    %0 = tpu.iota {dimensions = array<i32: 1>} : vector<1x256xi32>
    %c16_i32 = arith.constant 16 : i32
    %c0_i32 = arith.constant 0 : i32
    %1 = arith.cmpi eq, %c16_i32, %c0_i32 : i32
    %c1_i32 = arith.constant 1 : i32
    %2 = arith.select %1, %c1_i32, %c16_i32 : i32
    %3 = vector.broadcast %2 : i32 to vector<1x256xi32>
    %4 = arith.remsi %0, %3 : vector<1x256xi32>
    %c0_i32_0 = arith.constant 0 : i32
    %5 = vector.broadcast %c0_i32_0 : i32 to vector<1x256xi32>
    %6 = arith.cmpi ne, %4, %5 : vector<1x256xi32>
    %c0_i32_1 = arith.constant 0 : i32
    %7 = vector.broadcast %c0_i32_1 : i32 to vector<1x256xi32>
    %8 = arith.cmpi slt, %4, %7 : vector<1x256xi32>
    %c0_i32_2 = arith.constant 0 : i32
    %9 = arith.cmpi slt, %2, %c0_i32_2 : i32
    %10 = vector.broadcast %9 : i1 to vector<1x256xi1>
    %11 = vector.broadcast %10 : vector<1x256xi1> to vector<1x256xi1>
    %12 = arith.xori %8, %11 : vector<1x256xi1>
    %13 = arith.andi %12, %6 : vector<1x256xi1>
    %14 = vector.broadcast %2 : i32 to vector<1x256xi32>
    %15 = arith.addi %4, %14 : vector<1x256xi32>
    %16 = arith.select %13, %15, %4 : vector<1x256xi1>, vector<1x256xi32>
    %c0_i32_3 = arith.constant 0 : i32
    %17 = vector.broadcast %c0_i32_3 : i32 to vector<1x256xi32>
    %18 = arith.cmpi sgt, %16, %17 : vector<1x256xi32>
    %19 = arith.extui %18 : vector<1x256xi1> to vector<1x256xi32>
    %20 = arith.sitofp %19 : vector<1x256xi32> to vector<1x256xf32>
    %c15_i32 = arith.constant 15 : i32
    %21 = vector.broadcast %c15_i32 : i32 to vector<1x256xi32>
    %22 = arith.cmpi slt, %16, %21 : vector<1x256xi32>
    %23 = arith.extui %22 : vector<1x256xi1> to vector<1x256xi32>
    %24 = arith.sitofp %23 : vector<1x256xi32> to vector<1x256xf32>
    %25 = tpu.iota {dimensions = array<i32: 0>} : vector<16x8xi32>
    %26 = tpu.iota {dimensions = array<i32: 1>} : vector<16x8xi32>
    %c2_i32 = arith.constant 2 : i32
    %27 = vector.broadcast %c2_i32 : i32 to vector<16x8xi32>
    %28 = arith.muli %27, %26 : vector<16x8xi32>
    %29 = arith.cmpi eq, %25, %28 : vector<16x8xi32>
    %30 = arith.extui %29 : vector<16x8xi1> to vector<16x8xi32>
    %31 = arith.sitofp %30 : vector<16x8xi32> to vector<16x8xf32>
    %c2_i32_4 = arith.constant 2 : i32
    %32 = vector.broadcast %c2_i32_4 : i32 to vector<16x8xi32>
    %33 = arith.muli %32, %26 : vector<16x8xi32>
    %c1_i32_5 = arith.constant 1 : i32
    %34 = vector.broadcast %c1_i32_5 : i32 to vector<16x8xi32>
    %35 = arith.addi %33, %34 : vector<16x8xi32>
    %36 = arith.cmpi eq, %25, %35 : vector<16x8xi32>
    %37 = arith.extui %36 : vector<16x8xi1> to vector<16x8xi32>
    %38 = arith.sitofp %37 : vector<16x8xi32> to vector<16x8xf32>
    %39 = tpu.iota {dimensions = array<i32: 1>} : vector<1x64xi32>
    %c8_i32 = arith.constant 8 : i32
    %c0_i32_6 = arith.constant 0 : i32
    %40 = arith.cmpi eq, %c8_i32, %c0_i32_6 : i32
    %c1_i32_7 = arith.constant 1 : i32
    %41 = arith.select %40, %c1_i32_7, %c8_i32 : i32
    %42 = vector.broadcast %41 : i32 to vector<1x64xi32>
    %43 = arith.remsi %39, %42 : vector<1x64xi32>
    %c0_i32_8 = arith.constant 0 : i32
    %44 = vector.broadcast %c0_i32_8 : i32 to vector<1x64xi32>
    %45 = arith.cmpi ne, %43, %44 : vector<1x64xi32>
    %c0_i32_9 = arith.constant 0 : i32
    %46 = vector.broadcast %c0_i32_9 : i32 to vector<1x64xi32>
    %47 = arith.cmpi slt, %43, %46 : vector<1x64xi32>
    %c0_i32_10 = arith.constant 0 : i32
    %48 = arith.cmpi slt, %41, %c0_i32_10 : i32
    %49 = vector.broadcast %48 : i1 to vector<1x64xi1>
    %50 = vector.broadcast %49 : vector<1x64xi1> to vector<1x64xi1>
    %51 = arith.xori %47, %50 : vector<1x64xi1>
    %52 = arith.andi %51, %45 : vector<1x64xi1>
    %53 = vector.broadcast %41 : i32 to vector<1x64xi32>
    %54 = arith.addi %43, %53 : vector<1x64xi32>
    %55 = arith.select %52, %54, %43 : vector<1x64xi1>, vector<1x64xi32>
    %c0_i32_11 = arith.constant 0 : i32
    %56 = vector.broadcast %c0_i32_11 : i32 to vector<1x64xi32>
    %57 = arith.cmpi sgt, %55, %56 : vector<1x64xi32>
    %58 = arith.extui %57 : vector<1x64xi1> to vector<1x64xi32>
    %59 = arith.sitofp %58 : vector<1x64xi32> to vector<1x64xf32>
    %c7_i32 = arith.constant 7 : i32
    %60 = vector.broadcast %c7_i32 : i32 to vector<1x64xi32>
    %61 = arith.cmpi slt, %55, %60 : vector<1x64xi32>
    %62 = arith.extui %61 : vector<1x64xi1> to vector<1x64xi32>
    %63 = arith.sitofp %62 : vector<1x64xi32> to vector<1x64xf32>
    %64 = tpu.iota {dimensions = array<i32: 0>} : vector<8x4xi32>
    %65 = tpu.iota {dimensions = array<i32: 1>} : vector<8x4xi32>
    %c2_i32_12 = arith.constant 2 : i32
    %66 = vector.broadcast %c2_i32_12 : i32 to vector<8x4xi32>
    %67 = arith.muli %66, %65 : vector<8x4xi32>
    %68 = arith.cmpi eq, %64, %67 : vector<8x4xi32>
    %69 = arith.extui %68 : vector<8x4xi1> to vector<8x4xi32>
    %70 = arith.sitofp %69 : vector<8x4xi32> to vector<8x4xf32>
    %c2_i32_13 = arith.constant 2 : i32
    %71 = vector.broadcast %c2_i32_13 : i32 to vector<8x4xi32>
    %72 = arith.muli %71, %65 : vector<8x4xi32>
    %c1_i32_14 = arith.constant 1 : i32
    %73 = vector.broadcast %c1_i32_14 : i32 to vector<8x4xi32>
    %74 = arith.addi %72, %73 : vector<8x4xi32>
    %75 = arith.cmpi eq, %64, %74 : vector<8x4xi32>
    %76 = arith.extui %75 : vector<8x4xi1> to vector<8x4xi32>
    %77 = arith.sitofp %76 : vector<8x4xi32> to vector<8x4xf32>
    %78 = tpu.iota {dimensions = array<i32: 1>} : vector<1x16xi32>
    %c4_i32 = arith.constant 4 : i32
    %c0_i32_15 = arith.constant 0 : i32
    %79 = arith.cmpi eq, %c4_i32, %c0_i32_15 : i32
    %c1_i32_16 = arith.constant 1 : i32
    %80 = arith.select %79, %c1_i32_16, %c4_i32 : i32
    %81 = vector.broadcast %80 : i32 to vector<1x16xi32>
    %82 = arith.remsi %78, %81 : vector<1x16xi32>
    %c0_i32_17 = arith.constant 0 : i32
    %83 = vector.broadcast %c0_i32_17 : i32 to vector<1x16xi32>
    %84 = arith.cmpi ne, %82, %83 : vector<1x16xi32>
    %c0_i32_18 = arith.constant 0 : i32
    %85 = vector.broadcast %c0_i32_18 : i32 to vector<1x16xi32>
    %86 = arith.cmpi slt, %82, %85 : vector<1x16xi32>
    %c0_i32_19 = arith.constant 0 : i32
    %87 = arith.cmpi slt, %80, %c0_i32_19 : i32
    %88 = vector.broadcast %87 : i1 to vector<1x16xi1>
    %89 = vector.broadcast %88 : vector<1x16xi1> to vector<1x16xi1>
    %90 = arith.xori %86, %89 : vector<1x16xi1>
    %91 = arith.andi %90, %84 : vector<1x16xi1>
    %92 = vector.broadcast %80 : i32 to vector<1x16xi32>
    %93 = arith.addi %82, %92 : vector<1x16xi32>
    %94 = arith.select %91, %93, %82 : vector<1x16xi1>, vector<1x16xi32>
    %c0_i32_20 = arith.constant 0 : i32
    %95 = vector.broadcast %c0_i32_20 : i32 to vector<1x16xi32>
    %96 = arith.cmpi sgt, %94, %95 : vector<1x16xi32>
    %97 = arith.extui %96 : vector<1x16xi1> to vector<1x16xi32>
    %98 = arith.sitofp %97 : vector<1x16xi32> to vector<1x16xf32>
    %c3_i32 = arith.constant 3 : i32
    %99 = vector.broadcast %c3_i32 : i32 to vector<1x16xi32>
    %100 = arith.cmpi slt, %94, %99 : vector<1x16xi32>
    %101 = arith.extui %100 : vector<1x16xi1> to vector<1x16xi32>
    %102 = arith.sitofp %101 : vector<1x16xi32> to vector<1x16xf32>
    %103 = tpu.iota {dimensions = array<i32: 0>} : vector<4x2xi32>
    %104 = tpu.iota {dimensions = array<i32: 1>} : vector<4x2xi32>
    %c2_i32_21 = arith.constant 2 : i32
    %105 = vector.broadcast %c2_i32_21 : i32 to vector<4x2xi32>
    %106 = arith.muli %105, %104 : vector<4x2xi32>
    %107 = arith.cmpi eq, %103, %106 : vector<4x2xi32>
    %108 = arith.extui %107 : vector<4x2xi1> to vector<4x2xi32>
    %109 = arith.sitofp %108 : vector<4x2xi32> to vector<4x2xf32>
    %c2_i32_22 = arith.constant 2 : i32
    %110 = vector.broadcast %c2_i32_22 : i32 to vector<4x2xi32>
    %111 = arith.muli %110, %104 : vector<4x2xi32>
    %c1_i32_23 = arith.constant 1 : i32
    %112 = vector.broadcast %c1_i32_23 : i32 to vector<4x2xi32>
    %113 = arith.addi %111, %112 : vector<4x2xi32>
    %114 = arith.cmpi eq, %103, %113 : vector<4x2xi32>
    %115 = arith.extui %114 : vector<4x2xi1> to vector<4x2xi32>
    %116 = arith.sitofp %115 : vector<4x2xi32> to vector<4x2xf32>
    %c0 = arith.constant 0 : index
    %c0_24 = arith.constant 0 : index
    %c0_25 = arith.constant 0 : index
    %c0_26 = arith.constant 0 : index
    %117 = vector.load %arg1[%c0, %c0_24, %c0_25, %c0_26] : memref<1x1x4x256xf32, #tpu.memory_space<vmem>>, vector<1x1x4x256xf32>
    %118 = vector.shape_cast %117 : vector<1x1x4x256xf32> to vector<4x256xf32>
    %c0_27 = arith.constant 0 : index
    %c128 = arith.constant 128 : index
    %119 = vector.load %arg19[%c0_27, %c128] : memref<16x408xf32, #tpu.memory_space<vmem>>, vector<4x256xf32>
    tpu.vector_store %arg19[%c0_27, %c128], %118 {strides = array<i32>} : memref<16x408xf32, #tpu.memory_space<vmem>>, vector<4x256xf32>,
    %cst = arith.constant 0.000000e+00 : f32
    %120 = vector.broadcast %cst : f32 to vector<16x128xf32>
    %c0_28 = arith.constant 0 : index
    %c0_29 = arith.constant 0 : index
    %121 = vector.load %arg19[%c0_28, %c0_29] : memref<16x408xf32, #tpu.memory_space<vmem>>, vector<16x128xf32>
    tpu.vector_store %arg19[%c0_28, %c0_29], %120 {strides = array<i32>} : memref<16x408xf32, #tpu.memory_space<vmem>>, vector<16x128xf32>,
    %cst_30 = arith.constant 0.000000e+00 : f32
    %122 = vector.broadcast %cst_30 : f32 to vector<16x24xf32>
    %c0_31 = arith.constant 0 : index
    %c384 = arith.constant 384 : index
    %123 = vector.load %arg19[%c0_31, %c384] : memref<16x408xf32, #tpu.memory_space<vmem>>, vector<16x24xf32>
    tpu.vector_store %arg19[%c0_31, %c384], %122 {strides = array<i32>} : memref<16x408xf32, #tpu.memory_space<vmem>>, vector<16x24xf32>,
    %cst_32 = arith.constant 0.000000e+00 : f32
    %124 = vector.broadcast %cst_32 : f32 to vector<32x128xf32>
    %c0_33 = arith.constant 0 : index
    %c0_34 = arith.constant 0 : index
    %125 = vector.load %arg20[%c0_33, %c0_34] : memref<32x408xf32, #tpu.memory_space<vmem>>, vector<32x128xf32>
    tpu.vector_store %arg20[%c0_33, %c0_34], %124 {strides = array<i32>} : memref<32x408xf32, #tpu.memory_space<vmem>>, vector<32x128xf32>,
    %cst_35 = arith.constant 0.000000e+00 : f32
    %126 = vector.broadcast %cst_35 : f32 to vector<32x24xf32>
    %c0_36 = arith.constant 0 : index
    %c384_37 = arith.constant 384 : index
    %127 = vector.load %arg20[%c0_36, %c384_37] : memref<32x408xf32, #tpu.memory_space<vmem>>, vector<32x24xf32>
    tpu.vector_store %arg20[%c0_36, %c384_37], %126 {strides = array<i32>} : memref<32x408xf32, #tpu.memory_space<vmem>>, vector<32x24xf32>,
    %c0_38 = arith.constant 0 : index
    %c0_39 = arith.constant 0 : index
    %128 = vector.load %arg2[%c0_38, %c0_39] : memref<16x36xf32, #tpu.memory_space<vmem>>, vector<16x36xf32>
    %c0_40 = arith.constant 0 : index
    %c0_41 = arith.constant 0 : index
    %129 = vector.load %arg3[%c0_40, %c0_41] : memref<16x1xf32, #tpu.memory_space<vmem>>, vector<16x1xf32>
    %c0_42 = arith.constant 0 : index
    %c111 = arith.constant 111 : index
    %130 = vector.load %arg19[%c0_42, %c111] : memref<16x408xf32, #tpu.memory_space<vmem>>, vector<4x256xf32>
    %131 = vector.broadcast %20 : vector<1x256xf32> to vector<4x256xf32>
    %132 = arith.mulf %130, %131 : vector<4x256xf32>
    %c0_43 = arith.constant 0 : index
    %c0_44 = arith.constant 0 : index
    %133 = vector.load %arg22[%c0_43, %c0_44] : memref<288x256xf32, #tpu.memory_space<vmem>>, vector<4x256xf32>
    tpu.vector_store %arg22[%c0_43, %c0_44], %132 {strides = array<i32>} : memref<288x256xf32, #tpu.memory_space<vmem>>, vector<4x256xf32>,
    %c0_45 = arith.constant 0 : index
    %c112 = arith.constant 112 : index
    %134 = vector.load %arg19[%c0_45, %c112] : memref<16x408xf32, #tpu.memory_space<vmem>>, vector<4x256xf32>
    %c4 = arith.constant 4 : index
    %c0_46 = arith.constant 0 : index
    %135 = vector.load %arg22[%c4, %c0_46] : memref<288x256xf32, #tpu.memory_space<vmem>>, vector<4x256xf32>
    tpu.vector_store %arg22[%c4, %c0_46], %134 {strides = array<i32>} : memref<288x256xf32, #tpu.memory_space<vmem>>, vector<4x256xf32>,
    %c0_47 = arith.constant 0 : index
    %c113 = arith.constant 113 : index
    %136 = vector.load %arg19[%c0_47, %c113] : memref<16x408xf32, #tpu.memory_space<vmem>>, vector<4x256xf32>
    %137 = vector.broadcast %24 : vector<1x256xf32> to vector<4x256xf32>
    %138 = arith.mulf %136, %137 : vector<4x256xf32>
    %c8 = arith.constant 8 : index
    %c0_48 = arith.constant 0 : index
    %139 = vector.load %arg22[%c8, %c0_48] : memref<288x256xf32, #tpu.memory_space<vmem>>, vector<4x256xf32>
    tpu.vector_store %arg22[%c8, %c0_48], %138 {strides = array<i32>} : memref<288x256xf32, #tpu.memory_space<vmem>>, vector<4x256xf32>,
    %c0_49 = arith.constant 0 : index
    %c127 = arith.constant 127 : index
    %140 = vector.load %arg19[%c0_49, %c127] : memref<16x408xf32, #tpu.memory_space<vmem>>, vector<4x256xf32>
    %141 = vector.broadcast %20 : vector<1x256xf32> to vector<4x256xf32>
    %142 = arith.mulf %140, %141 : vector<4x256xf32>
    %c12 = arith.constant 12 : index
    %c0_50 = arith.constant 0 : index
    %143 = vector.load %arg22[%c12, %c0_50] : memref<288x256xf32, #tpu.memory_space<vmem>>, vector<4x256xf32>
    tpu.vector_store %arg22[%c12, %c0_50], %142 {strides = array<i32>} : memref<288x256xf32, #tpu.memory_space<vmem>>, vector<4x256xf32>,
    %c0_51 = arith.constant 0 : index
    %c128_52 = arith.constant 128 : index
    %144 = vector.load %arg19[%c0_51, %c128_52] : memref<16x408xf32, #tpu.memory_space<vmem>>, vector<4x256xf32>
    %c16 = arith.constant 16 : index
    %c0_53 = arith.constant 0 : index
    %145 = vector.load %arg22[%c16, %c0_53] : memref<288x256xf32, #tpu.memory_space<vmem>>, vector<4x256xf32>
    tpu.vector_store %arg22[%c16, %c0_53], %144 {strides = array<i32>} : memref<288x256xf32, #tpu.memory_space<vmem>>, vector<4x256xf32>,
    %c0_54 = arith.constant 0 : index
    %c129 = arith.constant 129 : index
    %146 = vector.load %arg19[%c0_54, %c129] : memref<16x408xf32, #tpu.memory_space<vmem>>, vector<4x256xf32>
    %147 = vector.broadcast %24 : vector<1x256xf32> to vector<4x256xf32>
    %148 = arith.mulf %146, %147 : vector<4x256xf32>
    %c20 = arith.constant 20 : index
    %c0_55 = arith.constant 0 : index
    %149 = vector.load %arg22[%c20, %c0_55] : memref<288x256xf32, #tpu.memory_space<vmem>>, vector<4x256xf32>
    tpu.vector_store %arg22[%c20, %c0_55], %148 {strides = array<i32>} : memref<288x256xf32, #tpu.memory_space<vmem>>, vector<4x256xf32>,
    %c0_56 = arith.constant 0 : index
    %c143 = arith.constant 143 : index
    %150 = vector.load %arg19[%c0_56, %c143] : memref<16x408xf32, #tpu.memory_space<vmem>>, vector<4x256xf32>
    %151 = vector.broadcast %20 : vector<1x256xf32> to vector<4x256xf32>
    %152 = arith.mulf %150, %151 : vector<4x256xf32>
    %c24 = arith.constant 24 : index
    %c0_57 = arith.constant 0 : index
    %153 = vector.load %arg22[%c24, %c0_57] : memref<288x256xf32, #tpu.memory_space<vmem>>, vector<4x256xf32>
    tpu.vector_store %arg22[%c24, %c0_57], %152 {strides = array<i32>} : memref<288x256xf32, #tpu.memory_space<vmem>>, vector<4x256xf32>,
    %c0_58 = arith.constant 0 : index
    %c144 = arith.constant 144 : index
    %154 = vector.load %arg19[%c0_58, %c144] : memref<16x408xf32, #tpu.memory_space<vmem>>, vector<4x256xf32>
    %c28 = arith.constant 28 : index
    %c0_59 = arith.constant 0 : index
    %155 = vector.load %arg22[%c28, %c0_59] : memref<288x256xf32, #tpu.memory_space<vmem>>, vector<4x256xf32>
    tpu.vector_store %arg22[%c28, %c0_59], %154 {strides = array<i32>} : memref<288x256xf32, #tpu.memory_space<vmem>>, vector<4x256xf32>,
    %c0_60 = arith.constant 0 : index
    %c145 = arith.constant 145 : index
    %156 = vector.load %arg19[%c0_60, %c145] : memref<16x408xf32, #tpu.memory_space<vmem>>, vector<4x256xf32>
    %157 = vector.broadcast %24 : vector<1x256xf32> to vector<4x256xf32>
    %158 = arith.mulf %156, %157 : vector<4x256xf32>
    %c32 = arith.constant 32 : index
    %c0_61 = arith.constant 0 : index
    %159 = vector.load %arg22[%c32, %c0_61] : memref<288x256xf32, #tpu.memory_space<vmem>>, vector<4x256xf32>
    tpu.vector_store %arg22[%c32, %c0_61], %158 {strides = array<i32>} : memref<288x256xf32, #tpu.memory_space<vmem>>, vector<4x256xf32>,
    %c0_62 = arith.constant 0 : index
    %c0_63 = arith.constant 0 : index
    %160 = vector.load %arg22[%c0_62, %c0_63] : memref<288x256xf32, #tpu.memory_space<vmem>>, vector<36x256xf32>
    %cst_64 = arith.constant dense<0.000000e+00> : vector<16x256xf32>
    %161 = tpu.matmul %128, %160, %cst_64 {dimension_numbers = #tpu.dot_dimension_numbers<[1], [0], [0], [1], [0, 0, 1, 1], [], []>} : vector<16x36xf32>, vector<36x256xf32>, vector<16x256xf32> -> vector<16x256xf32>
    %162 = vector.broadcast %129 : vector<16x1xf32> to vector<16x256xf32>
    %163 = arith.addf %161, %162 : vector<16x256xf32>
    %cst_65 = arith.constant 0.000000e+00 : f32
    %164 = vector.broadcast %cst_65 : f32 to vector<16x256xf32>
    %165 = arith.cmpf ogt, %163, %164 : vector<16x256xf32>
    %cst_66 = arith.constant 0.000000e+00 : f32
    %166 = vector.broadcast %cst_66 : f32 to vector<16x256xf32>
    %167 = arith.minimumf %163, %166 : vector<16x256xf32>
    %168 = math.exp %167 : vector<16x256xf32>
    %cst_67 = arith.constant 1.000000e+00 : f32
    %169 = vector.broadcast %cst_67 : f32 to vector<16x256xf32>
    %170 = arith.subf %168, %169 : vector<16x256xf32>
    %171 = arith.select %165, %163, %170 : vector<16x256xi1>, vector<16x256xf32>
    %c0_68 = arith.constant 0 : index
    %c128_69 = arith.constant 128 : index
    %172 = vector.load %arg20[%c0_68, %c128_69] : memref<32x408xf32, #tpu.memory_space<vmem>>, vector<16x256xf32>
    tpu.vector_store %arg20[%c0_68, %c128_69], %171 {strides = array<i32>} : memref<32x408xf32, #tpu.memory_space<vmem>>, vector<16x256xf32>,
    %c0_70 = arith.constant 0 : index
    %c0_71 = arith.constant 0 : index
    %173 = vector.load %arg4[%c0_70, %c0_71] : memref<16x144xf32, #tpu.memory_space<vmem>>, vector<16x144xf32>
    %c0_72 = arith.constant 0 : index
    %c0_73 = arith.constant 0 : index
    %174 = vector.load %arg5[%c0_72, %c0_73] : memref<16x1xf32, #tpu.memory_space<vmem>>, vector<16x1xf32>
    %c0_74 = arith.constant 0 : index
    %c111_75 = arith.constant 111 : index
    %175 = vector.load %arg20[%c0_74, %c111_75] : memref<32x408xf32, #tpu.memory_space<vmem>>, vector<16x256xf32>
    %176 = vector.broadcast %20 : vector<1x256xf32> to vector<16x256xf32>
    %177 = arith.mulf %175, %176 : vector<16x256xf32>
    %c0_76 = arith.constant 0 : index
    %c0_77 = arith.constant 0 : index
    %178 = vector.load %arg22[%c0_76, %c0_77] : memref<288x256xf32, #tpu.memory_space<vmem>>, vector<16x256xf32>
    tpu.vector_store %arg22[%c0_76, %c0_77], %177 {strides = array<i32>} : memref<288x256xf32, #tpu.memory_space<vmem>>, vector<16x256xf32>,
    %c0_78 = arith.constant 0 : index
    %c112_79 = arith.constant 112 : index
    %179 = vector.load %arg20[%c0_78, %c112_79] : memref<32x408xf32, #tpu.memory_space<vmem>>, vector<16x256xf32>
    %c16_80 = arith.constant 16 : index
    %c0_81 = arith.constant 0 : index
    %180 = vector.load %arg22[%c16_80, %c0_81] : memref<288x256xf32, #tpu.memory_space<vmem>>, vector<16x256xf32>
    tpu.vector_store %arg22[%c16_80, %c0_81], %179 {strides = array<i32>} : memref<288x256xf32, #tpu.memory_space<vmem>>, vector<16x256xf32>,
    %c0_82 = arith.constant 0 : index
    %c113_83 = arith.constant 113 : index
    %181 = vector.load %arg20[%c0_82, %c113_83] : memref<32x408xf32, #tpu.memory_space<vmem>>, vector<16x256xf32>
    %182 = vector.broadcast %24 : vector<1x256xf32> to vector<16x256xf32>
    %183 = arith.mulf %181, %182 : vector<16x256xf32>
    %c32_84 = arith.constant 32 : index
    %c0_85 = arith.constant 0 : index
    %184 = vector.load %arg22[%c32_84, %c0_85] : memref<288x256xf32, #tpu.memory_space<vmem>>, vector<16x256xf32>
    tpu.vector_store %arg22[%c32_84, %c0_85], %183 {strides = array<i32>} : memref<288x256xf32, #tpu.memory_space<vmem>>, vector<16x256xf32>,
    %c0_86 = arith.constant 0 : index
    %c127_87 = arith.constant 127 : index
    %185 = vector.load %arg20[%c0_86, %c127_87] : memref<32x408xf32, #tpu.memory_space<vmem>>, vector<16x256xf32>
    %186 = vector.broadcast %20 : vector<1x256xf32> to vector<16x256xf32>
    %187 = arith.mulf %185, %186 : vector<16x256xf32>
    %c48 = arith.constant 48 : index
    %c0_88 = arith.constant 0 : index
    %188 = vector.load %arg22[%c48, %c0_88] : memref<288x256xf32, #tpu.memory_space<vmem>>, vector<16x256xf32>
    tpu.vector_store %arg22[%c48, %c0_88], %187 {strides = array<i32>} : memref<288x256xf32, #tpu.memory_space<vmem>>, vector<16x256xf32>,
    %c0_89 = arith.constant 0 : index
    %c128_90 = arith.constant 128 : index
    %189 = vector.load %arg20[%c0_89, %c128_90] : memref<32x408xf32, #tpu.memory_space<vmem>>, vector<16x256xf32>
    %c64 = arith.constant 64 : index
    %c0_91 = arith.constant 0 : index
    %190 = vector.load %arg22[%c64, %c0_91] : memref<288x256xf32, #tpu.memory_space<vmem>>, vector<16x256xf32>
    tpu.vector_store %arg22[%c64, %c0_91], %189 {strides = array<i32>} : memref<288x256xf32, #tpu.memory_space<vmem>>, vector<16x256xf32>,
    %c0_92 = arith.constant 0 : index
    %c129_93 = arith.constant 129 : index
    %191 = vector.load %arg20[%c0_92, %c129_93] : memref<32x408xf32, #tpu.memory_space<vmem>>, vector<16x256xf32>
    %192 = vector.broadcast %24 : vector<1x256xf32> to vector<16x256xf32>
    %193 = arith.mulf %191, %192 : vector<16x256xf32>
    %c80 = arith.constant 80 : index
    %c0_94 = arith.constant 0 : index
    %194 = vector.load %arg22[%c80, %c0_94] : memref<288x256xf32, #tpu.memory_space<vmem>>, vector<16x256xf32>
    tpu.vector_store %arg22[%c80, %c0_94], %193 {strides = array<i32>} : memref<288x256xf32, #tpu.memory_space<vmem>>, vector<16x256xf32>,
    %c0_95 = arith.constant 0 : index
    %c143_96 = arith.constant 143 : index
    %195 = vector.load %arg20[%c0_95, %c143_96] : memref<32x408xf32, #tpu.memory_space<vmem>>, vector<16x256xf32>
    %196 = vector.broadcast %20 : vector<1x256xf32> to vector<16x256xf32>
    %197 = arith.mulf %195, %196 : vector<16x256xf32>
    %c96 = arith.constant 96 : index
    %c0_97 = arith.constant 0 : index
    %198 = vector.load %arg22[%c96, %c0_97] : memref<288x256xf32, #tpu.memory_space<vmem>>, vector<16x256xf32>
    tpu.vector_store %arg22[%c96, %c0_97], %197 {strides = array<i32>} : memref<288x256xf32, #tpu.memory_space<vmem>>, vector<16x256xf32>,
    %c0_98 = arith.constant 0 : index
    %c144_99 = arith.constant 144 : index
    %199 = vector.load %arg20[%c0_98, %c144_99] : memref<32x408xf32, #tpu.memory_space<vmem>>, vector<16x256xf32>
    %c112_100 = arith.constant 112 : index
    %c0_101 = arith.constant 0 : index
    %200 = vector.load %arg22[%c112_100, %c0_101] : memref<288x256xf32, #tpu.memory_space<vmem>>, vector<16x256xf32>
    tpu.vector_store %arg22[%c112_100, %c0_101], %199 {strides = array<i32>} : memref<288x256xf32, #tpu.memory_space<vmem>>, vector<16x256xf32>,
    %c0_102 = arith.constant 0 : index
    %c145_103 = arith.constant 145 : index
    %201 = vector.load %arg20[%c0_102, %c145_103] : memref<32x408xf32, #tpu.memory_space<vmem>>, vector<16x256xf32>
    %202 = vector.broadcast %24 : vector<1x256xf32> to vector<16x256xf32>
    %203 = arith.mulf %201, %202 : vector<16x256xf32>
    %c128_104 = arith.constant 128 : index
    %c0_105 = arith.constant 0 : index
    %204 = vector.load %arg22[%c128_104, %c0_105] : memref<288x256xf32, #tpu.memory_space<vmem>>, vector<16x256xf32>
    tpu.vector_store %arg22[%c128_104, %c0_105], %203 {strides = array<i32>} : memref<288x256xf32, #tpu.memory_space<vmem>>, vector<16x256xf32>,
    %c0_106 = arith.constant 0 : index
    %c0_107 = arith.constant 0 : index
    %205 = vector.load %arg22[%c0_106, %c0_107] : memref<288x256xf32, #tpu.memory_space<vmem>>, vector<144x256xf32>
    %cst_108 = arith.constant dense<0.000000e+00> : vector<16x256xf32>
    %206 = tpu.matmul %173, %205, %cst_108 {dimension_numbers = #tpu.dot_dimension_numbers<[1], [0], [0], [1], [0, 0, 1, 1], [], []>} : vector<16x144xf32>, vector<144x256xf32>, vector<16x256xf32> -> vector<16x256xf32>
    %207 = vector.broadcast %174 : vector<16x1xf32> to vector<16x256xf32>
    %208 = arith.addf %206, %207 : vector<16x256xf32>
    %cst_109 = arith.constant 0.000000e+00 : f32
    %209 = vector.broadcast %cst_109 : f32 to vector<16x256xf32>
    %210 = arith.cmpf ogt, %208, %209 : vector<16x256xf32>
    %cst_110 = arith.constant 0.000000e+00 : f32
    %211 = vector.broadcast %cst_110 : f32 to vector<16x256xf32>
    %212 = arith.minimumf %208, %211 : vector<16x256xf32>
    %213 = math.exp %212 : vector<16x256xf32>
    %cst_111 = arith.constant 1.000000e+00 : f32
    %214 = vector.broadcast %cst_111 : f32 to vector<16x256xf32>
    %215 = arith.subf %213, %214 : vector<16x256xf32>
    %216 = arith.select %210, %208, %215 : vector<16x256xi1>, vector<16x256xf32>
    %c0_112 = arith.constant 0 : index
    %c0_113 = arith.constant 0 : index
    %217 = vector.load %arg21[%c0_112, %c0_113] : memref<16x256xf32, #tpu.memory_space<vmem>>, vector<16x256xf32>
    tpu.vector_store %arg21[%c0_112, %c0_113], %216 {strides = array<i32>} : memref<16x256xf32, #tpu.memory_space<vmem>>, vector<16x256xf32>,
    %c0_114 = arith.constant 0 : index
    %c0_115 = arith.constant 0 : index
    %218 = vector.load %arg21[%c0_114, %c0_115] : memref<16x256xf32, #tpu.memory_space<vmem>>, vector<16x16xf32>
    %c0_116 = arith.constant 0 : index
    %c16_117 = arith.constant 16 : index
    %219 = vector.load %arg21[%c0_116, %c16_117] : memref<16x256xf32, #tpu.memory_space<vmem>>, vector<16x16xf32>
    %220 = arith.maximumf %218, %219 : vector<16x16xf32>
    %cst_118 = arith.constant dense<0.000000e+00> : vector<16x8xf32>
    %221 = tpu.matmul %220, %31, %cst_118 {dimension_numbers = #tpu.dot_dimension_numbers<[1], [0], [0], [1], [0, 0, 1, 1], [], []>} : vector<16x16xf32>, vector<16x8xf32>, vector<16x8xf32> -> vector<16x8xf32>
    %cst_119 = arith.constant dense<0.000000e+00> : vector<16x8xf32>
    %222 = tpu.matmul %220, %38, %cst_119 {dimension_numbers = #tpu.dot_dimension_numbers<[1], [0], [0], [1], [0, 0, 1, 1], [], []>} : vector<16x16xf32>, vector<16x8xf32>, vector<16x8xf32> -> vector<16x8xf32>
    %223 = arith.maximumf %221, %222 : vector<16x8xf32>
    %c0_120 = arith.constant 0 : index
    %c128_121 = arith.constant 128 : index
    %224 = vector.load %arg19[%c0_120, %c128_121] : memref<16x408xf32, #tpu.memory_space<vmem>>, vector<16x8xf32>
    tpu.vector_store %arg19[%c0_120, %c128_121], %223 {strides = array<i32>} : memref<16x408xf32, #tpu.memory_space<vmem>>, vector<16x8xf32>,
    %c0_122 = arith.constant 0 : index
    %c32_123 = arith.constant 32 : index
    %225 = vector.load %arg21[%c0_122, %c32_123] : memref<16x256xf32, #tpu.memory_space<vmem>>, vector<16x16xf32>
    %c0_124 = arith.constant 0 : index
    %c48_125 = arith.constant 48 : index
    %226 = vector.load %arg21[%c0_124, %c48_125] : memref<16x256xf32, #tpu.memory_space<vmem>>, vector<16x16xf32>
    %227 = arith.maximumf %225, %226 : vector<16x16xf32>
    %cst_126 = arith.constant dense<0.000000e+00> : vector<16x8xf32>
    %228 = tpu.matmul %227, %31, %cst_126 {dimension_numbers = #tpu.dot_dimension_numbers<[1], [0], [0], [1], [0, 0, 1, 1], [], []>} : vector<16x16xf32>, vector<16x8xf32>, vector<16x8xf32> -> vector<16x8xf32>
    %cst_127 = arith.constant dense<0.000000e+00> : vector<16x8xf32>
    %229 = tpu.matmul %227, %38, %cst_127 {dimension_numbers = #tpu.dot_dimension_numbers<[1], [0], [0], [1], [0, 0, 1, 1], [], []>} : vector<16x16xf32>, vector<16x8xf32>, vector<16x8xf32> -> vector<16x8xf32>
    %230 = arith.maximumf %228, %229 : vector<16x8xf32>
    %c0_128 = arith.constant 0 : index
    %c136 = arith.constant 136 : index
    %231 = vector.load %arg19[%c0_128, %c136] : memref<16x408xf32, #tpu.memory_space<vmem>>, vector<16x8xf32>
    tpu.vector_store %arg19[%c0_128, %c136], %230 {strides = array<i32>} : memref<16x408xf32, #tpu.memory_space<vmem>>, vector<16x8xf32>,
    %c0_129 = arith.constant 0 : index
    %c64_130 = arith.constant 64 : index
    %232 = vector.load %arg21[%c0_129, %c64_130] : memref<16x256xf32, #tpu.memory_space<vmem>>, vector<16x16xf32>
    %c0_131 = arith.constant 0 : index
    %c80_132 = arith.constant 80 : index
    %233 = vector.load %arg21[%c0_131, %c80_132] : memref<16x256xf32, #tpu.memory_space<vmem>>, vector<16x16xf32>
    %234 = arith.maximumf %232, %233 : vector<16x16xf32>
    %cst_133 = arith.constant dense<0.000000e+00> : vector<16x8xf32>
    %235 = tpu.matmul %234, %31, %cst_133 {dimension_numbers = #tpu.dot_dimension_numbers<[1], [0], [0], [1], [0, 0, 1, 1], [], []>} : vector<16x16xf32>, vector<16x8xf32>, vector<16x8xf32> -> vector<16x8xf32>
    %cst_134 = arith.constant dense<0.000000e+00> : vector<16x8xf32>
    %236 = tpu.matmul %234, %38, %cst_134 {dimension_numbers = #tpu.dot_dimension_numbers<[1], [0], [0], [1], [0, 0, 1, 1], [], []>} : vector<16x16xf32>, vector<16x8xf32>, vector<16x8xf32> -> vector<16x8xf32>
    %237 = arith.maximumf %235, %236 : vector<16x8xf32>
    %c0_135 = arith.constant 0 : index
    %c144_136 = arith.constant 144 : index
    %238 = vector.load %arg19[%c0_135, %c144_136] : memref<16x408xf32, #tpu.memory_space<vmem>>, vector<16x8xf32>
    tpu.vector_store %arg19[%c0_135, %c144_136], %237 {strides = array<i32>} : memref<16x408xf32, #tpu.memory_space<vmem>>, vector<16x8xf32>,
    %c0_137 = arith.constant 0 : index
    %c96_138 = arith.constant 96 : index
    %239 = vector.load %arg21[%c0_137, %c96_138] : memref<16x256xf32, #tpu.memory_space<vmem>>, vector<16x16xf32>
    %c0_139 = arith.constant 0 : index
    %c112_140 = arith.constant 112 : index
    %240 = vector.load %arg21[%c0_139, %c112_140] : memref<16x256xf32, #tpu.memory_space<vmem>>, vector<16x16xf32>
    %241 = arith.maximumf %239, %240 : vector<16x16xf32>
    %cst_141 = arith.constant dense<0.000000e+00> : vector<16x8xf32>
    %242 = tpu.matmul %241, %31, %cst_141 {dimension_numbers = #tpu.dot_dimension_numbers<[1], [0], [0], [1], [0, 0, 1, 1], [], []>} : vector<16x16xf32>, vector<16x8xf32>, vector<16x8xf32> -> vector<16x8xf32>
    %cst_142 = arith.constant dense<0.000000e+00> : vector<16x8xf32>
    %243 = tpu.matmul %241, %38, %cst_142 {dimension_numbers = #tpu.dot_dimension_numbers<[1], [0], [0], [1], [0, 0, 1, 1], [], []>} : vector<16x16xf32>, vector<16x8xf32>, vector<16x8xf32> -> vector<16x8xf32>
    %244 = arith.maximumf %242, %243 : vector<16x8xf32>
    %c0_143 = arith.constant 0 : index
    %c152 = arith.constant 152 : index
    %245 = vector.load %arg19[%c0_143, %c152] : memref<16x408xf32, #tpu.memory_space<vmem>>, vector<16x8xf32>
    tpu.vector_store %arg19[%c0_143, %c152], %244 {strides = array<i32>} : memref<16x408xf32, #tpu.memory_space<vmem>>, vector<16x8xf32>,
    %c0_144 = arith.constant 0 : index
    %c128_145 = arith.constant 128 : index
    %246 = vector.load %arg21[%c0_144, %c128_145] : memref<16x256xf32, #tpu.memory_space<vmem>>, vector<16x16xf32>
    %c0_146 = arith.constant 0 : index
    %c144_147 = arith.constant 144 : index
    %247 = vector.load %arg21[%c0_146, %c144_147] : memref<16x256xf32, #tpu.memory_space<vmem>>, vector<16x16xf32>
    %248 = arith.maximumf %246, %247 : vector<16x16xf32>
    %cst_148 = arith.constant dense<0.000000e+00> : vector<16x8xf32>
    %249 = tpu.matmul %248, %31, %cst_148 {dimension_numbers = #tpu.dot_dimension_numbers<[1], [0], [0], [1], [0, 0, 1, 1], [], []>} : vector<16x16xf32>, vector<16x8xf32>, vector<16x8xf32> -> vector<16x8xf32>
    %cst_149 = arith.constant dense<0.000000e+00> : vector<16x8xf32>
    %250 = tpu.matmul %248, %38, %cst_149 {dimension_numbers = #tpu.dot_dimension_numbers<[1], [0], [0], [1], [0, 0, 1, 1], [], []>} : vector<16x16xf32>, vector<16x8xf32>, vector<16x8xf32> -> vector<16x8xf32>
    %251 = arith.maximumf %249, %250 : vector<16x8xf32>
    %c0_150 = arith.constant 0 : index
    %c160 = arith.constant 160 : index
    %252 = vector.load %arg19[%c0_150, %c160] : memref<16x408xf32, #tpu.memory_space<vmem>>, vector<16x8xf32>
    tpu.vector_store %arg19[%c0_150, %c160], %251 {strides = array<i32>} : memref<16x408xf32, #tpu.memory_space<vmem>>, vector<16x8xf32>,
    %c0_151 = arith.constant 0 : index
    %c160_152 = arith.constant 160 : index
    %253 = vector.load %arg21[%c0_151, %c160_152] : memref<16x256xf32, #tpu.memory_space<vmem>>, vector<16x16xf32>
    %c0_153 = arith.constant 0 : index
    %c176 = arith.constant 176 : index
    %254 = vector.load %arg21[%c0_153, %c176] : memref<16x256xf32, #tpu.memory_space<vmem>>, vector<16x16xf32>
    %255 = arith.maximumf %253, %254 : vector<16x16xf32>
    %cst_154 = arith.constant dense<0.000000e+00> : vector<16x8xf32>
    %256 = tpu.matmul %255, %31, %cst_154 {dimension_numbers = #tpu.dot_dimension_numbers<[1], [0], [0], [1], [0, 0, 1, 1], [], []>} : vector<16x16xf32>, vector<16x8xf32>, vector<16x8xf32> -> vector<16x8xf32>
    %cst_155 = arith.constant dense<0.000000e+00> : vector<16x8xf32>
    %257 = tpu.matmul %255, %38, %cst_155 {dimension_numbers = #tpu.dot_dimension_numbers<[1], [0], [0], [1], [0, 0, 1, 1], [], []>} : vector<16x16xf32>, vector<16x8xf32>, vector<16x8xf32> -> vector<16x8xf32>
    %258 = arith.maximumf %256, %257 : vector<16x8xf32>
    %c0_156 = arith.constant 0 : index
    %c168 = arith.constant 168 : index
    %259 = vector.load %arg19[%c0_156, %c168] : memref<16x408xf32, #tpu.memory_space<vmem>>, vector<16x8xf32>
    tpu.vector_store %arg19[%c0_156, %c168], %258 {strides = array<i32>} : memref<16x408xf32, #tpu.memory_space<vmem>>, vector<16x8xf32>,
    %c0_157 = arith.constant 0 : index
    %c192 = arith.constant 192 : index
    %260 = vector.load %arg21[%c0_157, %c192] : memref<16x256xf32, #tpu.memory_space<vmem>>, vector<16x16xf32>
    %c0_158 = arith.constant 0 : index
    %c208 = arith.constant 208 : index
    %261 = vector.load %arg21[%c0_158, %c208] : memref<16x256xf32, #tpu.memory_space<vmem>>, vector<16x16xf32>
    %262 = arith.maximumf %260, %261 : vector<16x16xf32>
    %cst_159 = arith.constant dense<0.000000e+00> : vector<16x8xf32>
    %263 = tpu.matmul %262, %31, %cst_159 {dimension_numbers = #tpu.dot_dimension_numbers<[1], [0], [0], [1], [0, 0, 1, 1], [], []>} : vector<16x16xf32>, vector<16x8xf32>, vector<16x8xf32> -> vector<16x8xf32>
    %cst_160 = arith.constant dense<0.000000e+00> : vector<16x8xf32>
    %264 = tpu.matmul %262, %38, %cst_160 {dimension_numbers = #tpu.dot_dimension_numbers<[1], [0], [0], [1], [0, 0, 1, 1], [], []>} : vector<16x16xf32>, vector<16x8xf32>, vector<16x8xf32> -> vector<16x8xf32>
    %265 = arith.maximumf %263, %264 : vector<16x8xf32>
    %c0_161 = arith.constant 0 : index
    %c176_162 = arith.constant 176 : index
    %266 = vector.load %arg19[%c0_161, %c176_162] : memref<16x408xf32, #tpu.memory_space<vmem>>, vector<16x8xf32>
    tpu.vector_store %arg19[%c0_161, %c176_162], %265 {strides = array<i32>} : memref<16x408xf32, #tpu.memory_space<vmem>>, vector<16x8xf32>,
    %c0_163 = arith.constant 0 : index
    %c224 = arith.constant 224 : index
    %267 = vector.load %arg21[%c0_163, %c224] : memref<16x256xf32, #tpu.memory_space<vmem>>, vector<16x16xf32>
    %c0_164 = arith.constant 0 : index
    %c240 = arith.constant 240 : index
    %268 = vector.load %arg21[%c0_164, %c240] : memref<16x256xf32, #tpu.memory_space<vmem>>, vector<16x16xf32>
    %269 = arith.maximumf %267, %268 : vector<16x16xf32>
    %cst_165 = arith.constant dense<0.000000e+00> : vector<16x8xf32>
    %270 = tpu.matmul %269, %31, %cst_165 {dimension_numbers = #tpu.dot_dimension_numbers<[1], [0], [0], [1], [0, 0, 1, 1], [], []>} : vector<16x16xf32>, vector<16x8xf32>, vector<16x8xf32> -> vector<16x8xf32>
    %cst_166 = arith.constant dense<0.000000e+00> : vector<16x8xf32>
    %271 = tpu.matmul %269, %38, %cst_166 {dimension_numbers = #tpu.dot_dimension_numbers<[1], [0], [0], [1], [0, 0, 1, 1], [], []>} : vector<16x16xf32>, vector<16x8xf32>, vector<16x8xf32> -> vector<16x8xf32>
    %272 = arith.maximumf %270, %271 : vector<16x8xf32>
    %c0_167 = arith.constant 0 : index
    %c184 = arith.constant 184 : index
    %273 = vector.load %arg19[%c0_167, %c184] : memref<16x408xf32, #tpu.memory_space<vmem>>, vector<16x8xf32>
    tpu.vector_store %arg19[%c0_167, %c184], %272 {strides = array<i32>} : memref<16x408xf32, #tpu.memory_space<vmem>>, vector<16x8xf32>,
    %cst_168 = arith.constant 0.000000e+00 : f32
    %274 = vector.broadcast %cst_168 : f32 to vector<16x128xf32>
    %c0_169 = arith.constant 0 : index
    %c0_170 = arith.constant 0 : index
    %275 = vector.load %arg19[%c0_169, %c0_170] : memref<16x408xf32, #tpu.memory_space<vmem>>, vector<16x128xf32>
    tpu.vector_store %arg19[%c0_169, %c0_170], %274 {strides = array<i32>} : memref<16x408xf32, #tpu.memory_space<vmem>>, vector<16x128xf32>,
    %cst_171 = arith.constant 0.000000e+00 : f32
    %276 = vector.broadcast %cst_171 : f32 to vector<16x16xf32>
    %c0_172 = arith.constant 0 : index
    %c192_173 = arith.constant 192 : index
    %277 = vector.load %arg19[%c0_172, %c192_173] : memref<16x408xf32, #tpu.memory_space<vmem>>, vector<16x16xf32>
    tpu.vector_store %arg19[%c0_172, %c192_173], %276 {strides = array<i32>} : memref<16x408xf32, #tpu.memory_space<vmem>>, vector<16x16xf32>,
    %cst_174 = arith.constant 0.000000e+00 : f32
    %278 = vector.broadcast %cst_174 : f32 to vector<32x128xf32>
    %c0_175 = arith.constant 0 : index
    %c0_176 = arith.constant 0 : index
    %279 = vector.load %arg20[%c0_175, %c0_176] : memref<32x408xf32, #tpu.memory_space<vmem>>, vector<32x128xf32>
    tpu.vector_store %arg20[%c0_175, %c0_176], %278 {strides = array<i32>} : memref<32x408xf32, #tpu.memory_space<vmem>>, vector<32x128xf32>,
    %cst_177 = arith.constant 0.000000e+00 : f32
    %280 = vector.broadcast %cst_177 : f32 to vector<32x16xf32>
    %c0_178 = arith.constant 0 : index
    %c192_179 = arith.constant 192 : index
    %281 = vector.load %arg20[%c0_178, %c192_179] : memref<32x408xf32, #tpu.memory_space<vmem>>, vector<32x16xf32>
    tpu.vector_store %arg20[%c0_178, %c192_179], %280 {strides = array<i32>} : memref<32x408xf32, #tpu.memory_space<vmem>>, vector<32x16xf32>,
    %c0_180 = arith.constant 0 : index
    %c0_181 = arith.constant 0 : index
    %282 = vector.load %arg6[%c0_180, %c0_181] : memref<16x144xf32, #tpu.memory_space<vmem>>, vector<16x144xf32>
    %c0_182 = arith.constant 0 : index
    %c0_183 = arith.constant 0 : index
    %283 = vector.load %arg7[%c0_182, %c0_183] : memref<16x1xf32, #tpu.memory_space<vmem>>, vector<16x1xf32>
    %c0_184 = arith.constant 0 : index
    %c119 = arith.constant 119 : index
    %284 = vector.load %arg19[%c0_184, %c119] : memref<16x408xf32, #tpu.memory_space<vmem>>, vector<16x64xf32>
    %285 = vector.broadcast %59 : vector<1x64xf32> to vector<16x64xf32>
    %286 = arith.mulf %284, %285 : vector<16x64xf32>
    %c0_185 = arith.constant 0 : index
    %c0_186 = arith.constant 0 : index
    %287 = vector.load %arg22[%c0_185, %c0_186] : memref<288x256xf32, #tpu.memory_space<vmem>>, vector<16x64xf32>
    tpu.vector_store %arg22[%c0_185, %c0_186], %286 {strides = array<i32>} : memref<288x256xf32, #tpu.memory_space<vmem>>, vector<16x64xf32>,
    %c0_187 = arith.constant 0 : index
    %c120 = arith.constant 120 : index
    %288 = vector.load %arg19[%c0_187, %c120] : memref<16x408xf32, #tpu.memory_space<vmem>>, vector<16x64xf32>
    %c16_188 = arith.constant 16 : index
    %c0_189 = arith.constant 0 : index
    %289 = vector.load %arg22[%c16_188, %c0_189] : memref<288x256xf32, #tpu.memory_space<vmem>>, vector<16x64xf32>
    tpu.vector_store %arg22[%c16_188, %c0_189], %288 {strides = array<i32>} : memref<288x256xf32, #tpu.memory_space<vmem>>, vector<16x64xf32>,
    %c0_190 = arith.constant 0 : index
    %c121 = arith.constant 121 : index
    %290 = vector.load %arg19[%c0_190, %c121] : memref<16x408xf32, #tpu.memory_space<vmem>>, vector<16x64xf32>
    %291 = vector.broadcast %63 : vector<1x64xf32> to vector<16x64xf32>
    %292 = arith.mulf %290, %291 : vector<16x64xf32>
    %c32_191 = arith.constant 32 : index
    %c0_192 = arith.constant 0 : index
    %293 = vector.load %arg22[%c32_191, %c0_192] : memref<288x256xf32, #tpu.memory_space<vmem>>, vector<16x64xf32>
    tpu.vector_store %arg22[%c32_191, %c0_192], %292 {strides = array<i32>} : memref<288x256xf32, #tpu.memory_space<vmem>>, vector<16x64xf32>,
    %c0_193 = arith.constant 0 : index
    %c127_194 = arith.constant 127 : index
    %294 = vector.load %arg19[%c0_193, %c127_194] : memref<16x408xf32, #tpu.memory_space<vmem>>, vector<16x64xf32>
    %295 = vector.broadcast %59 : vector<1x64xf32> to vector<16x64xf32>
    %296 = arith.mulf %294, %295 : vector<16x64xf32>
    %c48_195 = arith.constant 48 : index
    %c0_196 = arith.constant 0 : index
    %297 = vector.load %arg22[%c48_195, %c0_196] : memref<288x256xf32, #tpu.memory_space<vmem>>, vector<16x64xf32>
    tpu.vector_store %arg22[%c48_195, %c0_196], %296 {strides = array<i32>} : memref<288x256xf32, #tpu.memory_space<vmem>>, vector<16x64xf32>,
    %c0_197 = arith.constant 0 : index
    %c128_198 = arith.constant 128 : index
    %298 = vector.load %arg19[%c0_197, %c128_198] : memref<16x408xf32, #tpu.memory_space<vmem>>, vector<16x64xf32>
    %c64_199 = arith.constant 64 : index
    %c0_200 = arith.constant 0 : index
    %299 = vector.load %arg22[%c64_199, %c0_200] : memref<288x256xf32, #tpu.memory_space<vmem>>, vector<16x64xf32>
    tpu.vector_store %arg22[%c64_199, %c0_200], %298 {strides = array<i32>} : memref<288x256xf32, #tpu.memory_space<vmem>>, vector<16x64xf32>,
    %c0_201 = arith.constant 0 : index
    %c129_202 = arith.constant 129 : index
    %300 = vector.load %arg19[%c0_201, %c129_202] : memref<16x408xf32, #tpu.memory_space<vmem>>, vector<16x64xf32>
    %301 = vector.broadcast %63 : vector<1x64xf32> to vector<16x64xf32>
    %302 = arith.mulf %300, %301 : vector<16x64xf32>
    %c80_203 = arith.constant 80 : index
    %c0_204 = arith.constant 0 : index
    %303 = vector.load %arg22[%c80_203, %c0_204] : memref<288x256xf32, #tpu.memory_space<vmem>>, vector<16x64xf32>
    tpu.vector_store %arg22[%c80_203, %c0_204], %302 {strides = array<i32>} : memref<288x256xf32, #tpu.memory_space<vmem>>, vector<16x64xf32>,
    %c0_205 = arith.constant 0 : index
    %c135 = arith.constant 135 : index
    %304 = vector.load %arg19[%c0_205, %c135] : memref<16x408xf32, #tpu.memory_space<vmem>>, vector<16x64xf32>
    %305 = vector.broadcast %59 : vector<1x64xf32> to vector<16x64xf32>
    %306 = arith.mulf %304, %305 : vector<16x64xf32>
    %c96_206 = arith.constant 96 : index
    %c0_207 = arith.constant 0 : index
    %307 = vector.load %arg22[%c96_206, %c0_207] : memref<288x256xf32, #tpu.memory_space<vmem>>, vector<16x64xf32>
    tpu.vector_store %arg22[%c96_206, %c0_207], %306 {strides = array<i32>} : memref<288x256xf32, #tpu.memory_space<vmem>>, vector<16x64xf32>,
    %c0_208 = arith.constant 0 : index
    %c136_209 = arith.constant 136 : index
    %308 = vector.load %arg19[%c0_208, %c136_209] : memref<16x408xf32, #tpu.memory_space<vmem>>, vector<16x64xf32>
    %c112_210 = arith.constant 112 : index
    %c0_211 = arith.constant 0 : index
    %309 = vector.load %arg22[%c112_210, %c0_211] : memref<288x256xf32, #tpu.memory_space<vmem>>, vector<16x64xf32>
    tpu.vector_store %arg22[%c112_210, %c0_211], %308 {strides = array<i32>} : memref<288x256xf32, #tpu.memory_space<vmem>>, vector<16x64xf32>,
    %c0_212 = arith.constant 0 : index
    %c137 = arith.constant 137 : index
    %310 = vector.load %arg19[%c0_212, %c137] : memref<16x408xf32, #tpu.memory_space<vmem>>, vector<16x64xf32>
    %311 = vector.broadcast %63 : vector<1x64xf32> to vector<16x64xf32>
    %312 = arith.mulf %310, %311 : vector<16x64xf32>
    %c128_213 = arith.constant 128 : index
    %c0_214 = arith.constant 0 : index
    %313 = vector.load %arg22[%c128_213, %c0_214] : memref<288x256xf32, #tpu.memory_space<vmem>>, vector<16x64xf32>
    tpu.vector_store %arg22[%c128_213, %c0_214], %312 {strides = array<i32>} : memref<288x256xf32, #tpu.memory_space<vmem>>, vector<16x64xf32>,
    %c0_215 = arith.constant 0 : index
    %c0_216 = arith.constant 0 : index
    %314 = vector.load %arg22[%c0_215, %c0_216] : memref<288x256xf32, #tpu.memory_space<vmem>>, vector<144x64xf32>
    %cst_217 = arith.constant dense<0.000000e+00> : vector<16x64xf32>
    %315 = tpu.matmul %282, %314, %cst_217 {dimension_numbers = #tpu.dot_dimension_numbers<[1], [0], [0], [1], [0, 0, 1, 1], [], []>} : vector<16x144xf32>, vector<144x64xf32>, vector<16x64xf32> -> vector<16x64xf32>
    %316 = vector.broadcast %283 : vector<16x1xf32> to vector<16x64xf32>
    %317 = arith.addf %315, %316 : vector<16x64xf32>
    %cst_218 = arith.constant 0.000000e+00 : f32
    %318 = vector.broadcast %cst_218 : f32 to vector<16x64xf32>
    %319 = arith.cmpf ogt, %317, %318 : vector<16x64xf32>
    %cst_219 = arith.constant 0.000000e+00 : f32
    %320 = vector.broadcast %cst_219 : f32 to vector<16x64xf32>
    %321 = arith.minimumf %317, %320 : vector<16x64xf32>
    %322 = math.exp %321 : vector<16x64xf32>
    %cst_220 = arith.constant 1.000000e+00 : f32
    %323 = vector.broadcast %cst_220 : f32 to vector<16x64xf32>
    %324 = arith.subf %322, %323 : vector<16x64xf32>
    %325 = arith.select %319, %317, %324 : vector<16x64xi1>, vector<16x64xf32>
    %c0_221 = arith.constant 0 : index
    %c128_222 = arith.constant 128 : index
    %326 = vector.load %arg20[%c0_221, %c128_222] : memref<32x408xf32, #tpu.memory_space<vmem>>, vector<16x64xf32>
    tpu.vector_store %arg20[%c0_221, %c128_222], %325 {strides = array<i32>} : memref<32x408xf32, #tpu.memory_space<vmem>>, vector<16x64xf32>,
    %c0_223 = arith.constant 0 : index
    %c0_224 = arith.constant 0 : index
    %327 = vector.load %arg8[%c0_223, %c0_224] : memref<16x144xf32, #tpu.memory_space<vmem>>, vector<16x144xf32>
    %c0_225 = arith.constant 0 : index
    %c0_226 = arith.constant 0 : index
    %328 = vector.load %arg9[%c0_225, %c0_226] : memref<16x1xf32, #tpu.memory_space<vmem>>, vector<16x1xf32>
    %c0_227 = arith.constant 0 : index
    %c119_228 = arith.constant 119 : index
    %329 = vector.load %arg20[%c0_227, %c119_228] : memref<32x408xf32, #tpu.memory_space<vmem>>, vector<16x64xf32>
    %330 = vector.broadcast %59 : vector<1x64xf32> to vector<16x64xf32>
    %331 = arith.mulf %329, %330 : vector<16x64xf32>
    %c0_229 = arith.constant 0 : index
    %c0_230 = arith.constant 0 : index
    %332 = vector.load %arg22[%c0_229, %c0_230] : memref<288x256xf32, #tpu.memory_space<vmem>>, vector<16x64xf32>
    tpu.vector_store %arg22[%c0_229, %c0_230], %331 {strides = array<i32>} : memref<288x256xf32, #tpu.memory_space<vmem>>, vector<16x64xf32>,
    %c0_231 = arith.constant 0 : index
    %c120_232 = arith.constant 120 : index
    %333 = vector.load %arg20[%c0_231, %c120_232] : memref<32x408xf32, #tpu.memory_space<vmem>>, vector<16x64xf32>
    %c16_233 = arith.constant 16 : index
    %c0_234 = arith.constant 0 : index
    %334 = vector.load %arg22[%c16_233, %c0_234] : memref<288x256xf32, #tpu.memory_space<vmem>>, vector<16x64xf32>
    tpu.vector_store %arg22[%c16_233, %c0_234], %333 {strides = array<i32>} : memref<288x256xf32, #tpu.memory_space<vmem>>, vector<16x64xf32>,
    %c0_235 = arith.constant 0 : index
    %c121_236 = arith.constant 121 : index
    %335 = vector.load %arg20[%c0_235, %c121_236] : memref<32x408xf32, #tpu.memory_space<vmem>>, vector<16x64xf32>
    %336 = vector.broadcast %63 : vector<1x64xf32> to vector<16x64xf32>
    %337 = arith.mulf %335, %336 : vector<16x64xf32>
    %c32_237 = arith.constant 32 : index
    %c0_238 = arith.constant 0 : index
    %338 = vector.load %arg22[%c32_237, %c0_238] : memref<288x256xf32, #tpu.memory_space<vmem>>, vector<16x64xf32>
    tpu.vector_store %arg22[%c32_237, %c0_238], %337 {strides = array<i32>} : memref<288x256xf32, #tpu.memory_space<vmem>>, vector<16x64xf32>,
    %c0_239 = arith.constant 0 : index
    %c127_240 = arith.constant 127 : index
    %339 = vector.load %arg20[%c0_239, %c127_240] : memref<32x408xf32, #tpu.memory_space<vmem>>, vector<16x64xf32>
    %340 = vector.broadcast %59 : vector<1x64xf32> to vector<16x64xf32>
    %341 = arith.mulf %339, %340 : vector<16x64xf32>
    %c48_241 = arith.constant 48 : index
    %c0_242 = arith.constant 0 : index
    %342 = vector.load %arg22[%c48_241, %c0_242] : memref<288x256xf32, #tpu.memory_space<vmem>>, vector<16x64xf32>
    tpu.vector_store %arg22[%c48_241, %c0_242], %341 {strides = array<i32>} : memref<288x256xf32, #tpu.memory_space<vmem>>, vector<16x64xf32>,
    %c0_243 = arith.constant 0 : index
    %c128_244 = arith.constant 128 : index
    %343 = vector.load %arg20[%c0_243, %c128_244] : memref<32x408xf32, #tpu.memory_space<vmem>>, vector<16x64xf32>
    %c64_245 = arith.constant 64 : index
    %c0_246 = arith.constant 0 : index
    %344 = vector.load %arg22[%c64_245, %c0_246] : memref<288x256xf32, #tpu.memory_space<vmem>>, vector<16x64xf32>
    tpu.vector_store %arg22[%c64_245, %c0_246], %343 {strides = array<i32>} : memref<288x256xf32, #tpu.memory_space<vmem>>, vector<16x64xf32>,
    %c0_247 = arith.constant 0 : index
    %c129_248 = arith.constant 129 : index
    %345 = vector.load %arg20[%c0_247, %c129_248] : memref<32x408xf32, #tpu.memory_space<vmem>>, vector<16x64xf32>
    %346 = vector.broadcast %63 : vector<1x64xf32> to vector<16x64xf32>
    %347 = arith.mulf %345, %346 : vector<16x64xf32>
    %c80_249 = arith.constant 80 : index
    %c0_250 = arith.constant 0 : index
    %348 = vector.load %arg22[%c80_249, %c0_250] : memref<288x256xf32, #tpu.memory_space<vmem>>, vector<16x64xf32>
    tpu.vector_store %arg22[%c80_249, %c0_250], %347 {strides = array<i32>} : memref<288x256xf32, #tpu.memory_space<vmem>>, vector<16x64xf32>,
    %c0_251 = arith.constant 0 : index
    %c135_252 = arith.constant 135 : index
    %349 = vector.load %arg20[%c0_251, %c135_252] : memref<32x408xf32, #tpu.memory_space<vmem>>, vector<16x64xf32>
    %350 = vector.broadcast %59 : vector<1x64xf32> to vector<16x64xf32>
    %351 = arith.mulf %349, %350 : vector<16x64xf32>
    %c96_253 = arith.constant 96 : index
    %c0_254 = arith.constant 0 : index
    %352 = vector.load %arg22[%c96_253, %c0_254] : memref<288x256xf32, #tpu.memory_space<vmem>>, vector<16x64xf32>
    tpu.vector_store %arg22[%c96_253, %c0_254], %351 {strides = array<i32>} : memref<288x256xf32, #tpu.memory_space<vmem>>, vector<16x64xf32>,
    %c0_255 = arith.constant 0 : index
    %c136_256 = arith.constant 136 : index
    %353 = vector.load %arg20[%c0_255, %c136_256] : memref<32x408xf32, #tpu.memory_space<vmem>>, vector<16x64xf32>
    %c112_257 = arith.constant 112 : index
    %c0_258 = arith.constant 0 : index
    %354 = vector.load %arg22[%c112_257, %c0_258] : memref<288x256xf32, #tpu.memory_space<vmem>>, vector<16x64xf32>
    tpu.vector_store %arg22[%c112_257, %c0_258], %353 {strides = array<i32>} : memref<288x256xf32, #tpu.memory_space<vmem>>, vector<16x64xf32>,
    %c0_259 = arith.constant 0 : index
    %c137_260 = arith.constant 137 : index
    %355 = vector.load %arg20[%c0_259, %c137_260] : memref<32x408xf32, #tpu.memory_space<vmem>>, vector<16x64xf32>
    %356 = vector.broadcast %63 : vector<1x64xf32> to vector<16x64xf32>
    %357 = arith.mulf %355, %356 : vector<16x64xf32>
    %c128_261 = arith.constant 128 : index
    %c0_262 = arith.constant 0 : index
    %358 = vector.load %arg22[%c128_261, %c0_262] : memref<288x256xf32, #tpu.memory_space<vmem>>, vector<16x64xf32>
    tpu.vector_store %arg22[%c128_261, %c0_262], %357 {strides = array<i32>} : memref<288x256xf32, #tpu.memory_space<vmem>>, vector<16x64xf32>,
    %c0_263 = arith.constant 0 : index
    %c0_264 = arith.constant 0 : index
    %359 = vector.load %arg22[%c0_263, %c0_264] : memref<288x256xf32, #tpu.memory_space<vmem>>, vector<144x64xf32>
    %cst_265 = arith.constant dense<0.000000e+00> : vector<16x64xf32>
    %360 = tpu.matmul %327, %359, %cst_265 {dimension_numbers = #tpu.dot_dimension_numbers<[1], [0], [0], [1], [0, 0, 1, 1], [], []>} : vector<16x144xf32>, vector<144x64xf32>, vector<16x64xf32> -> vector<16x64xf32>
    %361 = vector.broadcast %328 : vector<16x1xf32> to vector<16x64xf32>
    %362 = arith.addf %360, %361 : vector<16x64xf32>
    %cst_266 = arith.constant 0.000000e+00 : f32
    %363 = vector.broadcast %cst_266 : f32 to vector<16x64xf32>
    %364 = arith.cmpf ogt, %362, %363 : vector<16x64xf32>
    %cst_267 = arith.constant 0.000000e+00 : f32
    %365 = vector.broadcast %cst_267 : f32 to vector<16x64xf32>
    %366 = arith.minimumf %362, %365 : vector<16x64xf32>
    %367 = math.exp %366 : vector<16x64xf32>
    %cst_268 = arith.constant 1.000000e+00 : f32
    %368 = vector.broadcast %cst_268 : f32 to vector<16x64xf32>
    %369 = arith.subf %367, %368 : vector<16x64xf32>
    %370 = arith.select %364, %362, %369 : vector<16x64xi1>, vector<16x64xf32>
    %c0_269 = arith.constant 0 : index
    %c0_270 = arith.constant 0 : index
    %371 = vector.load %arg21[%c0_269, %c0_270] : memref<16x256xf32, #tpu.memory_space<vmem>>, vector<16x64xf32>
    tpu.vector_store %arg21[%c0_269, %c0_270], %370 {strides = array<i32>} : memref<16x256xf32, #tpu.memory_space<vmem>>, vector<16x64xf32>,
    %c0_271 = arith.constant 0 : index
    %c0_272 = arith.constant 0 : index
    %372 = vector.load %arg21[%c0_271, %c0_272] : memref<16x256xf32, #tpu.memory_space<vmem>>, vector<16x8xf32>
    %c0_273 = arith.constant 0 : index
    %c8_274 = arith.constant 8 : index
    %373 = vector.load %arg21[%c0_273, %c8_274] : memref<16x256xf32, #tpu.memory_space<vmem>>, vector<16x8xf32>
    %374 = arith.maximumf %372, %373 : vector<16x8xf32>
    %cst_275 = arith.constant dense<0.000000e+00> : vector<16x4xf32>
    %375 = tpu.matmul %374, %70, %cst_275 {dimension_numbers = #tpu.dot_dimension_numbers<[1], [0], [0], [1], [0, 0, 1, 1], [], []>} : vector<16x8xf32>, vector<8x4xf32>, vector<16x4xf32> -> vector<16x4xf32>
    %cst_276 = arith.constant dense<0.000000e+00> : vector<16x4xf32>
    %376 = tpu.matmul %374, %77, %cst_276 {dimension_numbers = #tpu.dot_dimension_numbers<[1], [0], [0], [1], [0, 0, 1, 1], [], []>} : vector<16x8xf32>, vector<8x4xf32>, vector<16x4xf32> -> vector<16x4xf32>
    %377 = arith.maximumf %375, %376 : vector<16x4xf32>
    %c0_277 = arith.constant 0 : index
    %c128_278 = arith.constant 128 : index
    %378 = vector.load %arg19[%c0_277, %c128_278] : memref<16x408xf32, #tpu.memory_space<vmem>>, vector<16x4xf32>
    tpu.vector_store %arg19[%c0_277, %c128_278], %377 {strides = array<i32>} : memref<16x408xf32, #tpu.memory_space<vmem>>, vector<16x4xf32>,
    %c0_279 = arith.constant 0 : index
    %c16_280 = arith.constant 16 : index
    %379 = vector.load %arg21[%c0_279, %c16_280] : memref<16x256xf32, #tpu.memory_space<vmem>>, vector<16x8xf32>
    %c0_281 = arith.constant 0 : index
    %c24_282 = arith.constant 24 : index
    %380 = vector.load %arg21[%c0_281, %c24_282] : memref<16x256xf32, #tpu.memory_space<vmem>>, vector<16x8xf32>
    %381 = arith.maximumf %379, %380 : vector<16x8xf32>
    %cst_283 = arith.constant dense<0.000000e+00> : vector<16x4xf32>
    %382 = tpu.matmul %381, %70, %cst_283 {dimension_numbers = #tpu.dot_dimension_numbers<[1], [0], [0], [1], [0, 0, 1, 1], [], []>} : vector<16x8xf32>, vector<8x4xf32>, vector<16x4xf32> -> vector<16x4xf32>
    %cst_284 = arith.constant dense<0.000000e+00> : vector<16x4xf32>
    %383 = tpu.matmul %381, %77, %cst_284 {dimension_numbers = #tpu.dot_dimension_numbers<[1], [0], [0], [1], [0, 0, 1, 1], [], []>} : vector<16x8xf32>, vector<8x4xf32>, vector<16x4xf32> -> vector<16x4xf32>
    %384 = arith.maximumf %382, %383 : vector<16x4xf32>
    %c0_285 = arith.constant 0 : index
    %c132 = arith.constant 132 : index
    %385 = vector.load %arg19[%c0_285, %c132] : memref<16x408xf32, #tpu.memory_space<vmem>>, vector<16x4xf32>
    tpu.vector_store %arg19[%c0_285, %c132], %384 {strides = array<i32>} : memref<16x408xf32, #tpu.memory_space<vmem>>, vector<16x4xf32>,
    %c0_286 = arith.constant 0 : index
    %c32_287 = arith.constant 32 : index
    %386 = vector.load %arg21[%c0_286, %c32_287] : memref<16x256xf32, #tpu.memory_space<vmem>>, vector<16x8xf32>
    %c0_288 = arith.constant 0 : index
    %c40 = arith.constant 40 : index
    %387 = vector.load %arg21[%c0_288, %c40] : memref<16x256xf32, #tpu.memory_space<vmem>>, vector<16x8xf32>
    %388 = arith.maximumf %386, %387 : vector<16x8xf32>
    %cst_289 = arith.constant dense<0.000000e+00> : vector<16x4xf32>
    %389 = tpu.matmul %388, %70, %cst_289 {dimension_numbers = #tpu.dot_dimension_numbers<[1], [0], [0], [1], [0, 0, 1, 1], [], []>} : vector<16x8xf32>, vector<8x4xf32>, vector<16x4xf32> -> vector<16x4xf32>
    %cst_290 = arith.constant dense<0.000000e+00> : vector<16x4xf32>
    %390 = tpu.matmul %388, %77, %cst_290 {dimension_numbers = #tpu.dot_dimension_numbers<[1], [0], [0], [1], [0, 0, 1, 1], [], []>} : vector<16x8xf32>, vector<8x4xf32>, vector<16x4xf32> -> vector<16x4xf32>
    %391 = arith.maximumf %389, %390 : vector<16x4xf32>
    %c0_291 = arith.constant 0 : index
    %c136_292 = arith.constant 136 : index
    %392 = vector.load %arg19[%c0_291, %c136_292] : memref<16x408xf32, #tpu.memory_space<vmem>>, vector<16x4xf32>
    tpu.vector_store %arg19[%c0_291, %c136_292], %391 {strides = array<i32>} : memref<16x408xf32, #tpu.memory_space<vmem>>, vector<16x4xf32>,
    %c0_293 = arith.constant 0 : index
    %c48_294 = arith.constant 48 : index
    %393 = vector.load %arg21[%c0_293, %c48_294] : memref<16x256xf32, #tpu.memory_space<vmem>>, vector<16x8xf32>
    %c0_295 = arith.constant 0 : index
    %c56 = arith.constant 56 : index
    %394 = vector.load %arg21[%c0_295, %c56] : memref<16x256xf32, #tpu.memory_space<vmem>>, vector<16x8xf32>
    %395 = arith.maximumf %393, %394 : vector<16x8xf32>
    %cst_296 = arith.constant dense<0.000000e+00> : vector<16x4xf32>
    %396 = tpu.matmul %395, %70, %cst_296 {dimension_numbers = #tpu.dot_dimension_numbers<[1], [0], [0], [1], [0, 0, 1, 1], [], []>} : vector<16x8xf32>, vector<8x4xf32>, vector<16x4xf32> -> vector<16x4xf32>
    %cst_297 = arith.constant dense<0.000000e+00> : vector<16x4xf32>
    %397 = tpu.matmul %395, %77, %cst_297 {dimension_numbers = #tpu.dot_dimension_numbers<[1], [0], [0], [1], [0, 0, 1, 1], [], []>} : vector<16x8xf32>, vector<8x4xf32>, vector<16x4xf32> -> vector<16x4xf32>
    %398 = arith.maximumf %396, %397 : vector<16x4xf32>
    %c0_298 = arith.constant 0 : index
    %c140 = arith.constant 140 : index
    %399 = vector.load %arg19[%c0_298, %c140] : memref<16x408xf32, #tpu.memory_space<vmem>>, vector<16x4xf32>
    tpu.vector_store %arg19[%c0_298, %c140], %398 {strides = array<i32>} : memref<16x408xf32, #tpu.memory_space<vmem>>, vector<16x4xf32>,
    %cst_299 = arith.constant 0.000000e+00 : f32
    %400 = vector.broadcast %cst_299 : f32 to vector<16x128xf32>
    %c0_300 = arith.constant 0 : index
    %c0_301 = arith.constant 0 : index
    %401 = vector.load %arg19[%c0_300, %c0_301] : memref<16x408xf32, #tpu.memory_space<vmem>>, vector<16x128xf32>
    tpu.vector_store %arg19[%c0_300, %c0_301], %400 {strides = array<i32>} : memref<16x408xf32, #tpu.memory_space<vmem>>, vector<16x128xf32>,
    %cst_302 = arith.constant 0.000000e+00 : f32
    %402 = vector.broadcast %cst_302 : f32 to vector<16x12xf32>
    %c0_303 = arith.constant 0 : index
    %c144_304 = arith.constant 144 : index
    %403 = vector.load %arg19[%c0_303, %c144_304] : memref<16x408xf32, #tpu.memory_space<vmem>>, vector<16x12xf32>
    tpu.vector_store %arg19[%c0_303, %c144_304], %402 {strides = array<i32>} : memref<16x408xf32, #tpu.memory_space<vmem>>, vector<16x12xf32>,
    %cst_305 = arith.constant 0.000000e+00 : f32
    %404 = vector.broadcast %cst_305 : f32 to vector<32x128xf32>
    %c0_306 = arith.constant 0 : index
    %c0_307 = arith.constant 0 : index
    %405 = vector.load %arg20[%c0_306, %c0_307] : memref<32x408xf32, #tpu.memory_space<vmem>>, vector<32x128xf32>
    tpu.vector_store %arg20[%c0_306, %c0_307], %404 {strides = array<i32>} : memref<32x408xf32, #tpu.memory_space<vmem>>, vector<32x128xf32>,
    %cst_308 = arith.constant 0.000000e+00 : f32
    %406 = vector.broadcast %cst_308 : f32 to vector<32x12xf32>
    %c0_309 = arith.constant 0 : index
    %c144_310 = arith.constant 144 : index
    %407 = vector.load %arg20[%c0_309, %c144_310] : memref<32x408xf32, #tpu.memory_space<vmem>>, vector<32x12xf32>
    tpu.vector_store %arg20[%c0_309, %c144_310], %406 {strides = array<i32>} : memref<32x408xf32, #tpu.memory_space<vmem>>, vector<32x12xf32>,
    %c0_311 = arith.constant 0 : index
    %c0_312 = arith.constant 0 : index
    %408 = vector.load %arg10[%c0_311, %c0_312] : memref<32x144xf32, #tpu.memory_space<vmem>>, vector<32x144xf32>
    %c0_313 = arith.constant 0 : index
    %c0_314 = arith.constant 0 : index
    %409 = vector.load %arg11[%c0_313, %c0_314] : memref<32x1xf32, #tpu.memory_space<vmem>>, vector<32x1xf32>
    %c0_315 = arith.constant 0 : index
    %c123 = arith.constant 123 : index
    %410 = vector.load %arg19[%c0_315, %c123] : memref<16x408xf32, #tpu.memory_space<vmem>>, vector<16x16xf32>
    %411 = vector.broadcast %98 : vector<1x16xf32> to vector<16x16xf32>
    %412 = arith.mulf %410, %411 : vector<16x16xf32>
    %c0_316 = arith.constant 0 : index
    %c0_317 = arith.constant 0 : index
    %413 = vector.load %arg22[%c0_316, %c0_317] : memref<288x256xf32, #tpu.memory_space<vmem>>, vector<16x16xf32>
    tpu.vector_store %arg22[%c0_316, %c0_317], %412 {strides = array<i32>} : memref<288x256xf32, #tpu.memory_space<vmem>>, vector<16x16xf32>,
    %c0_318 = arith.constant 0 : index
    %c124 = arith.constant 124 : index
    %414 = vector.load %arg19[%c0_318, %c124] : memref<16x408xf32, #tpu.memory_space<vmem>>, vector<16x16xf32>
    %c16_319 = arith.constant 16 : index
    %c0_320 = arith.constant 0 : index
    %415 = vector.load %arg22[%c16_319, %c0_320] : memref<288x256xf32, #tpu.memory_space<vmem>>, vector<16x16xf32>
    tpu.vector_store %arg22[%c16_319, %c0_320], %414 {strides = array<i32>} : memref<288x256xf32, #tpu.memory_space<vmem>>, vector<16x16xf32>,
    %c0_321 = arith.constant 0 : index
    %c125 = arith.constant 125 : index
    %416 = vector.load %arg19[%c0_321, %c125] : memref<16x408xf32, #tpu.memory_space<vmem>>, vector<16x16xf32>
    %417 = vector.broadcast %102 : vector<1x16xf32> to vector<16x16xf32>
    %418 = arith.mulf %416, %417 : vector<16x16xf32>
    %c32_322 = arith.constant 32 : index
    %c0_323 = arith.constant 0 : index
    %419 = vector.load %arg22[%c32_322, %c0_323] : memref<288x256xf32, #tpu.memory_space<vmem>>, vector<16x16xf32>
    tpu.vector_store %arg22[%c32_322, %c0_323], %418 {strides = array<i32>} : memref<288x256xf32, #tpu.memory_space<vmem>>, vector<16x16xf32>,
    %c0_324 = arith.constant 0 : index
    %c127_325 = arith.constant 127 : index
    %420 = vector.load %arg19[%c0_324, %c127_325] : memref<16x408xf32, #tpu.memory_space<vmem>>, vector<16x16xf32>
    %421 = vector.broadcast %98 : vector<1x16xf32> to vector<16x16xf32>
    %422 = arith.mulf %420, %421 : vector<16x16xf32>
    %c48_326 = arith.constant 48 : index
    %c0_327 = arith.constant 0 : index
    %423 = vector.load %arg22[%c48_326, %c0_327] : memref<288x256xf32, #tpu.memory_space<vmem>>, vector<16x16xf32>
    tpu.vector_store %arg22[%c48_326, %c0_327], %422 {strides = array<i32>} : memref<288x256xf32, #tpu.memory_space<vmem>>, vector<16x16xf32>,
    %c0_328 = arith.constant 0 : index
    %c128_329 = arith.constant 128 : index
    %424 = vector.load %arg19[%c0_328, %c128_329] : memref<16x408xf32, #tpu.memory_space<vmem>>, vector<16x16xf32>
    %c64_330 = arith.constant 64 : index
    %c0_331 = arith.constant 0 : index
    %425 = vector.load %arg22[%c64_330, %c0_331] : memref<288x256xf32, #tpu.memory_space<vmem>>, vector<16x16xf32>
    tpu.vector_store %arg22[%c64_330, %c0_331], %424 {strides = array<i32>} : memref<288x256xf32, #tpu.memory_space<vmem>>, vector<16x16xf32>,
    %c0_332 = arith.constant 0 : index
    %c129_333 = arith.constant 129 : index
    %426 = vector.load %arg19[%c0_332, %c129_333] : memref<16x408xf32, #tpu.memory_space<vmem>>, vector<16x16xf32>
    %427 = vector.broadcast %102 : vector<1x16xf32> to vector<16x16xf32>
    %428 = arith.mulf %426, %427 : vector<16x16xf32>
    %c80_334 = arith.constant 80 : index
    %c0_335 = arith.constant 0 : index
    %429 = vector.load %arg22[%c80_334, %c0_335] : memref<288x256xf32, #tpu.memory_space<vmem>>, vector<16x16xf32>
    tpu.vector_store %arg22[%c80_334, %c0_335], %428 {strides = array<i32>} : memref<288x256xf32, #tpu.memory_space<vmem>>, vector<16x16xf32>,
    %c0_336 = arith.constant 0 : index
    %c131 = arith.constant 131 : index
    %430 = vector.load %arg19[%c0_336, %c131] : memref<16x408xf32, #tpu.memory_space<vmem>>, vector<16x16xf32>
    %431 = vector.broadcast %98 : vector<1x16xf32> to vector<16x16xf32>
    %432 = arith.mulf %430, %431 : vector<16x16xf32>
    %c96_337 = arith.constant 96 : index
    %c0_338 = arith.constant 0 : index
    %433 = vector.load %arg22[%c96_337, %c0_338] : memref<288x256xf32, #tpu.memory_space<vmem>>, vector<16x16xf32>
    tpu.vector_store %arg22[%c96_337, %c0_338], %432 {strides = array<i32>} : memref<288x256xf32, #tpu.memory_space<vmem>>, vector<16x16xf32>,
    %c0_339 = arith.constant 0 : index
    %c132_340 = arith.constant 132 : index
    %434 = vector.load %arg19[%c0_339, %c132_340] : memref<16x408xf32, #tpu.memory_space<vmem>>, vector<16x16xf32>
    %c112_341 = arith.constant 112 : index
    %c0_342 = arith.constant 0 : index
    %435 = vector.load %arg22[%c112_341, %c0_342] : memref<288x256xf32, #tpu.memory_space<vmem>>, vector<16x16xf32>
    tpu.vector_store %arg22[%c112_341, %c0_342], %434 {strides = array<i32>} : memref<288x256xf32, #tpu.memory_space<vmem>>, vector<16x16xf32>,
    %c0_343 = arith.constant 0 : index
    %c133 = arith.constant 133 : index
    %436 = vector.load %arg19[%c0_343, %c133] : memref<16x408xf32, #tpu.memory_space<vmem>>, vector<16x16xf32>
    %437 = vector.broadcast %102 : vector<1x16xf32> to vector<16x16xf32>
    %438 = arith.mulf %436, %437 : vector<16x16xf32>
    %c128_344 = arith.constant 128 : index
    %c0_345 = arith.constant 0 : index
    %439 = vector.load %arg22[%c128_344, %c0_345] : memref<288x256xf32, #tpu.memory_space<vmem>>, vector<16x16xf32>
    tpu.vector_store %arg22[%c128_344, %c0_345], %438 {strides = array<i32>} : memref<288x256xf32, #tpu.memory_space<vmem>>, vector<16x16xf32>,
    %c0_346 = arith.constant 0 : index
    %c0_347 = arith.constant 0 : index
    %440 = vector.load %arg22[%c0_346, %c0_347] : memref<288x256xf32, #tpu.memory_space<vmem>>, vector<144x16xf32>
    %cst_348 = arith.constant dense<0.000000e+00> : vector<32x16xf32>
    %441 = tpu.matmul %408, %440, %cst_348 {dimension_numbers = #tpu.dot_dimension_numbers<[1], [0], [0], [1], [0, 0, 1, 1], [], []>} : vector<32x144xf32>, vector<144x16xf32>, vector<32x16xf32> -> vector<32x16xf32>
    %442 = vector.broadcast %409 : vector<32x1xf32> to vector<32x16xf32>
    %443 = arith.addf %441, %442 : vector<32x16xf32>
    %cst_349 = arith.constant 0.000000e+00 : f32
    %444 = vector.broadcast %cst_349 : f32 to vector<32x16xf32>
    %445 = arith.cmpf ogt, %443, %444 : vector<32x16xf32>
    %cst_350 = arith.constant 0.000000e+00 : f32
    %446 = vector.broadcast %cst_350 : f32 to vector<32x16xf32>
    %447 = arith.minimumf %443, %446 : vector<32x16xf32>
    %448 = math.exp %447 : vector<32x16xf32>
    %cst_351 = arith.constant 1.000000e+00 : f32
    %449 = vector.broadcast %cst_351 : f32 to vector<32x16xf32>
    %450 = arith.subf %448, %449 : vector<32x16xf32>
    %451 = arith.select %445, %443, %450 : vector<32x16xi1>, vector<32x16xf32>
    %c0_352 = arith.constant 0 : index
    %c128_353 = arith.constant 128 : index
    %452 = vector.load %arg20[%c0_352, %c128_353] : memref<32x408xf32, #tpu.memory_space<vmem>>, vector<32x16xf32>
    tpu.vector_store %arg20[%c0_352, %c128_353], %451 {strides = array<i32>} : memref<32x408xf32, #tpu.memory_space<vmem>>, vector<32x16xf32>,
    %c0_354 = arith.constant 0 : index
    %c0_355 = arith.constant 0 : index
    %453 = vector.load %arg12[%c0_354, %c0_355] : memref<16x288xf32, #tpu.memory_space<vmem>>, vector<16x288xf32>
    %c0_356 = arith.constant 0 : index
    %c0_357 = arith.constant 0 : index
    %454 = vector.load %arg13[%c0_356, %c0_357] : memref<16x1xf32, #tpu.memory_space<vmem>>, vector<16x1xf32>
    %c0_358 = arith.constant 0 : index
    %c123_359 = arith.constant 123 : index
    %455 = vector.load %arg20[%c0_358, %c123_359] : memref<32x408xf32, #tpu.memory_space<vmem>>, vector<32x16xf32>
    %456 = vector.broadcast %98 : vector<1x16xf32> to vector<32x16xf32>
    %457 = arith.mulf %455, %456 : vector<32x16xf32>
    %c0_360 = arith.constant 0 : index
    %c0_361 = arith.constant 0 : index
    %458 = vector.load %arg22[%c0_360, %c0_361] : memref<288x256xf32, #tpu.memory_space<vmem>>, vector<32x16xf32>
    tpu.vector_store %arg22[%c0_360, %c0_361], %457 {strides = array<i32>} : memref<288x256xf32, #tpu.memory_space<vmem>>, vector<32x16xf32>,
    %c0_362 = arith.constant 0 : index
    %c124_363 = arith.constant 124 : index
    %459 = vector.load %arg20[%c0_362, %c124_363] : memref<32x408xf32, #tpu.memory_space<vmem>>, vector<32x16xf32>
    %c32_364 = arith.constant 32 : index
    %c0_365 = arith.constant 0 : index
    %460 = vector.load %arg22[%c32_364, %c0_365] : memref<288x256xf32, #tpu.memory_space<vmem>>, vector<32x16xf32>
    tpu.vector_store %arg22[%c32_364, %c0_365], %459 {strides = array<i32>} : memref<288x256xf32, #tpu.memory_space<vmem>>, vector<32x16xf32>,
    %c0_366 = arith.constant 0 : index
    %c125_367 = arith.constant 125 : index
    %461 = vector.load %arg20[%c0_366, %c125_367] : memref<32x408xf32, #tpu.memory_space<vmem>>, vector<32x16xf32>
    %462 = vector.broadcast %102 : vector<1x16xf32> to vector<32x16xf32>
    %463 = arith.mulf %461, %462 : vector<32x16xf32>
    %c64_368 = arith.constant 64 : index
    %c0_369 = arith.constant 0 : index
    %464 = vector.load %arg22[%c64_368, %c0_369] : memref<288x256xf32, #tpu.memory_space<vmem>>, vector<32x16xf32>
    tpu.vector_store %arg22[%c64_368, %c0_369], %463 {strides = array<i32>} : memref<288x256xf32, #tpu.memory_space<vmem>>, vector<32x16xf32>,
    %c0_370 = arith.constant 0 : index
    %c127_371 = arith.constant 127 : index
    %465 = vector.load %arg20[%c0_370, %c127_371] : memref<32x408xf32, #tpu.memory_space<vmem>>, vector<32x16xf32>
    %466 = vector.broadcast %98 : vector<1x16xf32> to vector<32x16xf32>
    %467 = arith.mulf %465, %466 : vector<32x16xf32>
    %c96_372 = arith.constant 96 : index
    %c0_373 = arith.constant 0 : index
    %468 = vector.load %arg22[%c96_372, %c0_373] : memref<288x256xf32, #tpu.memory_space<vmem>>, vector<32x16xf32>
    tpu.vector_store %arg22[%c96_372, %c0_373], %467 {strides = array<i32>} : memref<288x256xf32, #tpu.memory_space<vmem>>, vector<32x16xf32>,
    %c0_374 = arith.constant 0 : index
    %c128_375 = arith.constant 128 : index
    %469 = vector.load %arg20[%c0_374, %c128_375] : memref<32x408xf32, #tpu.memory_space<vmem>>, vector<32x16xf32>
    %c128_376 = arith.constant 128 : index
    %c0_377 = arith.constant 0 : index
    %470 = vector.load %arg22[%c128_376, %c0_377] : memref<288x256xf32, #tpu.memory_space<vmem>>, vector<32x16xf32>
    tpu.vector_store %arg22[%c128_376, %c0_377], %469 {strides = array<i32>} : memref<288x256xf32, #tpu.memory_space<vmem>>, vector<32x16xf32>,
    %c0_378 = arith.constant 0 : index
    %c129_379 = arith.constant 129 : index
    %471 = vector.load %arg20[%c0_378, %c129_379] : memref<32x408xf32, #tpu.memory_space<vmem>>, vector<32x16xf32>
    %472 = vector.broadcast %102 : vector<1x16xf32> to vector<32x16xf32>
    %473 = arith.mulf %471, %472 : vector<32x16xf32>
    %c160_380 = arith.constant 160 : index
    %c0_381 = arith.constant 0 : index
    %474 = vector.load %arg22[%c160_380, %c0_381] : memref<288x256xf32, #tpu.memory_space<vmem>>, vector<32x16xf32>
    tpu.vector_store %arg22[%c160_380, %c0_381], %473 {strides = array<i32>} : memref<288x256xf32, #tpu.memory_space<vmem>>, vector<32x16xf32>,
    %c0_382 = arith.constant 0 : index
    %c131_383 = arith.constant 131 : index
    %475 = vector.load %arg20[%c0_382, %c131_383] : memref<32x408xf32, #tpu.memory_space<vmem>>, vector<32x16xf32>
    %476 = vector.broadcast %98 : vector<1x16xf32> to vector<32x16xf32>
    %477 = arith.mulf %475, %476 : vector<32x16xf32>
    %c192_384 = arith.constant 192 : index
    %c0_385 = arith.constant 0 : index
    %478 = vector.load %arg22[%c192_384, %c0_385] : memref<288x256xf32, #tpu.memory_space<vmem>>, vector<32x16xf32>
    tpu.vector_store %arg22[%c192_384, %c0_385], %477 {strides = array<i32>} : memref<288x256xf32, #tpu.memory_space<vmem>>, vector<32x16xf32>,
    %c0_386 = arith.constant 0 : index
    %c132_387 = arith.constant 132 : index
    %479 = vector.load %arg20[%c0_386, %c132_387] : memref<32x408xf32, #tpu.memory_space<vmem>>, vector<32x16xf32>
    %c224_388 = arith.constant 224 : index
    %c0_389 = arith.constant 0 : index
    %480 = vector.load %arg22[%c224_388, %c0_389] : memref<288x256xf32, #tpu.memory_space<vmem>>, vector<32x16xf32>
    tpu.vector_store %arg22[%c224_388, %c0_389], %479 {strides = array<i32>} : memref<288x256xf32, #tpu.memory_space<vmem>>, vector<32x16xf32>,
    %c0_390 = arith.constant 0 : index
    %c133_391 = arith.constant 133 : index
    %481 = vector.load %arg20[%c0_390, %c133_391] : memref<32x408xf32, #tpu.memory_space<vmem>>, vector<32x16xf32>
    %482 = vector.broadcast %102 : vector<1x16xf32> to vector<32x16xf32>
    %483 = arith.mulf %481, %482 : vector<32x16xf32>
    %c256 = arith.constant 256 : index
    %c0_392 = arith.constant 0 : index
    %484 = vector.load %arg22[%c256, %c0_392] : memref<288x256xf32, #tpu.memory_space<vmem>>, vector<32x16xf32>
    tpu.vector_store %arg22[%c256, %c0_392], %483 {strides = array<i32>} : memref<288x256xf32, #tpu.memory_space<vmem>>, vector<32x16xf32>,
    %c0_393 = arith.constant 0 : index
    %c0_394 = arith.constant 0 : index
    %485 = vector.load %arg22[%c0_393, %c0_394] : memref<288x256xf32, #tpu.memory_space<vmem>>, vector<288x16xf32>
    %cst_395 = arith.constant dense<0.000000e+00> : vector<16x16xf32>
    %486 = tpu.matmul %453, %485, %cst_395 {dimension_numbers = #tpu.dot_dimension_numbers<[1], [0], [0], [1], [0, 0, 1, 1], [], []>} : vector<16x288xf32>, vector<288x16xf32>, vector<16x16xf32> -> vector<16x16xf32>
    %487 = vector.broadcast %454 : vector<16x1xf32> to vector<16x16xf32>
    %488 = arith.addf %486, %487 : vector<16x16xf32>
    %cst_396 = arith.constant 0.000000e+00 : f32
    %489 = vector.broadcast %cst_396 : f32 to vector<16x16xf32>
    %490 = arith.cmpf ogt, %488, %489 : vector<16x16xf32>
    %cst_397 = arith.constant 0.000000e+00 : f32
    %491 = vector.broadcast %cst_397 : f32 to vector<16x16xf32>
    %492 = arith.minimumf %488, %491 : vector<16x16xf32>
    %493 = math.exp %492 : vector<16x16xf32>
    %cst_398 = arith.constant 1.000000e+00 : f32
    %494 = vector.broadcast %cst_398 : f32 to vector<16x16xf32>
    %495 = arith.subf %493, %494 : vector<16x16xf32>
    %496 = arith.select %490, %488, %495 : vector<16x16xi1>, vector<16x16xf32>
    %c0_399 = arith.constant 0 : index
    %c0_400 = arith.constant 0 : index
    %497 = vector.load %arg21[%c0_399, %c0_400] : memref<16x256xf32, #tpu.memory_space<vmem>>, vector<16x16xf32>
    tpu.vector_store %arg21[%c0_399, %c0_400], %496 {strides = array<i32>} : memref<16x256xf32, #tpu.memory_space<vmem>>, vector<16x16xf32>,
    %c0_401 = arith.constant 0 : index
    %c0_402 = arith.constant 0 : index
    %498 = vector.load %arg21[%c0_401, %c0_402] : memref<16x256xf32, #tpu.memory_space<vmem>>, vector<16x4xf32>
    %c0_403 = arith.constant 0 : index
    %c4_404 = arith.constant 4 : index
    %499 = vector.load %arg21[%c0_403, %c4_404] : memref<16x256xf32, #tpu.memory_space<vmem>>, vector<16x4xf32>
    %500 = arith.maximumf %498, %499 : vector<16x4xf32>
    %cst_405 = arith.constant dense<0.000000e+00> : vector<16x2xf32>
    %501 = tpu.matmul %500, %109, %cst_405 {dimension_numbers = #tpu.dot_dimension_numbers<[1], [0], [0], [1], [0, 0, 1, 1], [], []>} : vector<16x4xf32>, vector<4x2xf32>, vector<16x2xf32> -> vector<16x2xf32>
    %cst_406 = arith.constant dense<0.000000e+00> : vector<16x2xf32>
    %502 = tpu.matmul %500, %116, %cst_406 {dimension_numbers = #tpu.dot_dimension_numbers<[1], [0], [0], [1], [0, 0, 1, 1], [], []>} : vector<16x4xf32>, vector<4x2xf32>, vector<16x2xf32> -> vector<16x2xf32>
    %503 = arith.maximumf %501, %502 : vector<16x2xf32>
    %c0_407 = arith.constant 0 : index
    %c0_408 = arith.constant 0 : index
    %504 = vector.load %arg23[%c0_407, %c0_408] : memref<16x4xf32, #tpu.memory_space<vmem>>, vector<16x2xf32>
    tpu.vector_store %arg23[%c0_407, %c0_408], %503 {strides = array<i32>} : memref<16x4xf32, #tpu.memory_space<vmem>>, vector<16x2xf32>,
    %c0_409 = arith.constant 0 : index
    %c8_410 = arith.constant 8 : index
    %505 = vector.load %arg21[%c0_409, %c8_410] : memref<16x256xf32, #tpu.memory_space<vmem>>, vector<16x4xf32>
    %c0_411 = arith.constant 0 : index
    %c12_412 = arith.constant 12 : index
    %506 = vector.load %arg21[%c0_411, %c12_412] : memref<16x256xf32, #tpu.memory_space<vmem>>, vector<16x4xf32>
    %507 = arith.maximumf %505, %506 : vector<16x4xf32>
    %cst_413 = arith.constant dense<0.000000e+00> : vector<16x2xf32>
    %508 = tpu.matmul %507, %109, %cst_413 {dimension_numbers = #tpu.dot_dimension_numbers<[1], [0], [0], [1], [0, 0, 1, 1], [], []>} : vector<16x4xf32>, vector<4x2xf32>, vector<16x2xf32> -> vector<16x2xf32>
    %cst_414 = arith.constant dense<0.000000e+00> : vector<16x2xf32>
    %509 = tpu.matmul %507, %116, %cst_414 {dimension_numbers = #tpu.dot_dimension_numbers<[1], [0], [0], [1], [0, 0, 1, 1], [], []>} : vector<16x4xf32>, vector<4x2xf32>, vector<16x2xf32> -> vector<16x2xf32>
    %510 = arith.maximumf %508, %509 : vector<16x2xf32>
    %c0_415 = arith.constant 0 : index
    %c2 = arith.constant 2 : index
    %511 = vector.load %arg23[%c0_415, %c2] : memref<16x4xf32, #tpu.memory_space<vmem>>, vector<16x2xf32>
    tpu.vector_store %arg23[%c0_415, %c2], %510 {strides = array<i32>} : memref<16x4xf32, #tpu.memory_space<vmem>>, vector<16x2xf32>,
    %cst_416 = arith.constant 0.000000e+00 : f32
    %512 = vector.broadcast %cst_416 : f32 to vector<1x256xf32>
    %c0_417 = arith.constant 0 : index
    %c0_418 = arith.constant 0 : index
    %513 = vector.load %arg23[%c0_417, %c0_418] : memref<16x4xf32, #tpu.memory_space<vmem>>, vector<1x4xf32>
    %c0_419 = arith.constant 0 : index
    %c0_420 = arith.constant 0 : index
    %514 = vector.load %arg14[%c0_419, %c0_420] : memref<64x256xf32, #tpu.memory_space<vmem>>, vector<4x256xf32>
    %cst_421 = arith.constant dense<0.000000e+00> : vector<1x256xf32>
    %515 = tpu.matmul %513, %514, %cst_421 {dimension_numbers = #tpu.dot_dimension_numbers<[1], [0], [0], [1], [0, 0, 1, 1], [], []>} : vector<1x4xf32>, vector<4x256xf32>, vector<1x256xf32> -> vector<1x256xf32>
    %516 = arith.addf %512, %515 : vector<1x256xf32>
    %c1 = arith.constant 1 : index
    %c0_422 = arith.constant 0 : index
    %517 = vector.load %arg23[%c1, %c0_422] : memref<16x4xf32, #tpu.memory_space<vmem>>, vector<1x4xf32>
    %c4_423 = arith.constant 4 : index
    %c0_424 = arith.constant 0 : index
    %518 = vector.load %arg14[%c4_423, %c0_424] : memref<64x256xf32, #tpu.memory_space<vmem>>, vector<4x256xf32>
    %cst_425 = arith.constant dense<0.000000e+00> : vector<1x256xf32>
    %519 = tpu.matmul %517, %518, %cst_425 {dimension_numbers = #tpu.dot_dimension_numbers<[1], [0], [0], [1], [0, 0, 1, 1], [], []>} : vector<1x4xf32>, vector<4x256xf32>, vector<1x256xf32> -> vector<1x256xf32>
    %520 = arith.addf %516, %519 : vector<1x256xf32>
    %c2_426 = arith.constant 2 : index
    %c0_427 = arith.constant 0 : index
    %521 = vector.load %arg23[%c2_426, %c0_427] : memref<16x4xf32, #tpu.memory_space<vmem>>, vector<1x4xf32>
    %c8_428 = arith.constant 8 : index
    %c0_429 = arith.constant 0 : index
    %522 = vector.load %arg14[%c8_428, %c0_429] : memref<64x256xf32, #tpu.memory_space<vmem>>, vector<4x256xf32>
    %cst_430 = arith.constant dense<0.000000e+00> : vector<1x256xf32>
    %523 = tpu.matmul %521, %522, %cst_430 {dimension_numbers = #tpu.dot_dimension_numbers<[1], [0], [0], [1], [0, 0, 1, 1], [], []>} : vector<1x4xf32>, vector<4x256xf32>, vector<1x256xf32> -> vector<1x256xf32>
    %524 = arith.addf %520, %523 : vector<1x256xf32>
    %c3 = arith.constant 3 : index
    %c0_431 = arith.constant 0 : index
    %525 = vector.load %arg23[%c3, %c0_431] : memref<16x4xf32, #tpu.memory_space<vmem>>, vector<1x4xf32>
    %c12_432 = arith.constant 12 : index
    %c0_433 = arith.constant 0 : index
    %526 = vector.load %arg14[%c12_432, %c0_433] : memref<64x256xf32, #tpu.memory_space<vmem>>, vector<4x256xf32>
    %cst_434 = arith.constant dense<0.000000e+00> : vector<1x256xf32>
    %527 = tpu.matmul %525, %526, %cst_434 {dimension_numbers = #tpu.dot_dimension_numbers<[1], [0], [0], [1], [0, 0, 1, 1], [], []>} : vector<1x4xf32>, vector<4x256xf32>, vector<1x256xf32> -> vector<1x256xf32>
    %528 = arith.addf %524, %527 : vector<1x256xf32>
    %c4_435 = arith.constant 4 : index
    %c0_436 = arith.constant 0 : index
    %529 = vector.load %arg23[%c4_435, %c0_436] : memref<16x4xf32, #tpu.memory_space<vmem>>, vector<1x4xf32>
    %c16_437 = arith.constant 16 : index
    %c0_438 = arith.constant 0 : index
    %530 = vector.load %arg14[%c16_437, %c0_438] : memref<64x256xf32, #tpu.memory_space<vmem>>, vector<4x256xf32>
    %cst_439 = arith.constant dense<0.000000e+00> : vector<1x256xf32>
    %531 = tpu.matmul %529, %530, %cst_439 {dimension_numbers = #tpu.dot_dimension_numbers<[1], [0], [0], [1], [0, 0, 1, 1], [], []>} : vector<1x4xf32>, vector<4x256xf32>, vector<1x256xf32> -> vector<1x256xf32>
    %532 = arith.addf %528, %531 : vector<1x256xf32>
    %c5 = arith.constant 5 : index
    %c0_440 = arith.constant 0 : index
    %533 = vector.load %arg23[%c5, %c0_440] : memref<16x4xf32, #tpu.memory_space<vmem>>, vector<1x4xf32>
    %c20_441 = arith.constant 20 : index
    %c0_442 = arith.constant 0 : index
    %534 = vector.load %arg14[%c20_441, %c0_442] : memref<64x256xf32, #tpu.memory_space<vmem>>, vector<4x256xf32>
    %cst_443 = arith.constant dense<0.000000e+00> : vector<1x256xf32>
    %535 = tpu.matmul %533, %534, %cst_443 {dimension_numbers = #tpu.dot_dimension_numbers<[1], [0], [0], [1], [0, 0, 1, 1], [], []>} : vector<1x4xf32>, vector<4x256xf32>, vector<1x256xf32> -> vector<1x256xf32>
    %536 = arith.addf %532, %535 : vector<1x256xf32>
    %c6 = arith.constant 6 : index
    %c0_444 = arith.constant 0 : index
    %537 = vector.load %arg23[%c6, %c0_444] : memref<16x4xf32, #tpu.memory_space<vmem>>, vector<1x4xf32>
    %c24_445 = arith.constant 24 : index
    %c0_446 = arith.constant 0 : index
    %538 = vector.load %arg14[%c24_445, %c0_446] : memref<64x256xf32, #tpu.memory_space<vmem>>, vector<4x256xf32>
    %cst_447 = arith.constant dense<0.000000e+00> : vector<1x256xf32>
    %539 = tpu.matmul %537, %538, %cst_447 {dimension_numbers = #tpu.dot_dimension_numbers<[1], [0], [0], [1], [0, 0, 1, 1], [], []>} : vector<1x4xf32>, vector<4x256xf32>, vector<1x256xf32> -> vector<1x256xf32>
    %540 = arith.addf %536, %539 : vector<1x256xf32>
    %c7 = arith.constant 7 : index
    %c0_448 = arith.constant 0 : index
    %541 = vector.load %arg23[%c7, %c0_448] : memref<16x4xf32, #tpu.memory_space<vmem>>, vector<1x4xf32>
    %c28_449 = arith.constant 28 : index
    %c0_450 = arith.constant 0 : index
    %542 = vector.load %arg14[%c28_449, %c0_450] : memref<64x256xf32, #tpu.memory_space<vmem>>, vector<4x256xf32>
    %cst_451 = arith.constant dense<0.000000e+00> : vector<1x256xf32>
    %543 = tpu.matmul %541, %542, %cst_451 {dimension_numbers = #tpu.dot_dimension_numbers<[1], [0], [0], [1], [0, 0, 1, 1], [], []>} : vector<1x4xf32>, vector<4x256xf32>, vector<1x256xf32> -> vector<1x256xf32>
    %544 = arith.addf %540, %543 : vector<1x256xf32>
    %c8_452 = arith.constant 8 : index
    %c0_453 = arith.constant 0 : index
    %545 = vector.load %arg23[%c8_452, %c0_453] : memref<16x4xf32, #tpu.memory_space<vmem>>, vector<1x4xf32>
    %c32_454 = arith.constant 32 : index
    %c0_455 = arith.constant 0 : index
    %546 = vector.load %arg14[%c32_454, %c0_455] : memref<64x256xf32, #tpu.memory_space<vmem>>, vector<4x256xf32>
    %cst_456 = arith.constant dense<0.000000e+00> : vector<1x256xf32>
    %547 = tpu.matmul %545, %546, %cst_456 {dimension_numbers = #tpu.dot_dimension_numbers<[1], [0], [0], [1], [0, 0, 1, 1], [], []>} : vector<1x4xf32>, vector<4x256xf32>, vector<1x256xf32> -> vector<1x256xf32>
    %548 = arith.addf %544, %547 : vector<1x256xf32>
    %c9 = arith.constant 9 : index
    %c0_457 = arith.constant 0 : index
    %549 = vector.load %arg23[%c9, %c0_457] : memref<16x4xf32, #tpu.memory_space<vmem>>, vector<1x4xf32>
    %c36 = arith.constant 36 : index
    %c0_458 = arith.constant 0 : index
    %550 = vector.load %arg14[%c36, %c0_458] : memref<64x256xf32, #tpu.memory_space<vmem>>, vector<4x256xf32>
    %cst_459 = arith.constant dense<0.000000e+00> : vector<1x256xf32>
    %551 = tpu.matmul %549, %550, %cst_459 {dimension_numbers = #tpu.dot_dimension_numbers<[1], [0], [0], [1], [0, 0, 1, 1], [], []>} : vector<1x4xf32>, vector<4x256xf32>, vector<1x256xf32> -> vector<1x256xf32>
    %552 = arith.addf %548, %551 : vector<1x256xf32>
    %c10 = arith.constant 10 : index
    %c0_460 = arith.constant 0 : index
    %553 = vector.load %arg23[%c10, %c0_460] : memref<16x4xf32, #tpu.memory_space<vmem>>, vector<1x4xf32>
    %c40_461 = arith.constant 40 : index
    %c0_462 = arith.constant 0 : index
    %554 = vector.load %arg14[%c40_461, %c0_462] : memref<64x256xf32, #tpu.memory_space<vmem>>, vector<4x256xf32>
    %cst_463 = arith.constant dense<0.000000e+00> : vector<1x256xf32>
    %555 = tpu.matmul %553, %554, %cst_463 {dimension_numbers = #tpu.dot_dimension_numbers<[1], [0], [0], [1], [0, 0, 1, 1], [], []>} : vector<1x4xf32>, vector<4x256xf32>, vector<1x256xf32> -> vector<1x256xf32>
    %556 = arith.addf %552, %555 : vector<1x256xf32>
    %c11 = arith.constant 11 : index
    %c0_464 = arith.constant 0 : index
    %557 = vector.load %arg23[%c11, %c0_464] : memref<16x4xf32, #tpu.memory_space<vmem>>, vector<1x4xf32>
    %c44 = arith.constant 44 : index
    %c0_465 = arith.constant 0 : index
    %558 = vector.load %arg14[%c44, %c0_465] : memref<64x256xf32, #tpu.memory_space<vmem>>, vector<4x256xf32>
    %cst_466 = arith.constant dense<0.000000e+00> : vector<1x256xf32>
    %559 = tpu.matmul %557, %558, %cst_466 {dimension_numbers = #tpu.dot_dimension_numbers<[1], [0], [0], [1], [0, 0, 1, 1], [], []>} : vector<1x4xf32>, vector<4x256xf32>, vector<1x256xf32> -> vector<1x256xf32>
    %560 = arith.addf %556, %559 : vector<1x256xf32>
    %c12_467 = arith.constant 12 : index
    %c0_468 = arith.constant 0 : index
    %561 = vector.load %arg23[%c12_467, %c0_468] : memref<16x4xf32, #tpu.memory_space<vmem>>, vector<1x4xf32>
    %c48_469 = arith.constant 48 : index
    %c0_470 = arith.constant 0 : index
    %562 = vector.load %arg14[%c48_469, %c0_470] : memref<64x256xf32, #tpu.memory_space<vmem>>, vector<4x256xf32>
    %cst_471 = arith.constant dense<0.000000e+00> : vector<1x256xf32>
    %563 = tpu.matmul %561, %562, %cst_471 {dimension_numbers = #tpu.dot_dimension_numbers<[1], [0], [0], [1], [0, 0, 1, 1], [], []>} : vector<1x4xf32>, vector<4x256xf32>, vector<1x256xf32> -> vector<1x256xf32>
    %564 = arith.addf %560, %563 : vector<1x256xf32>
    %c13 = arith.constant 13 : index
    %c0_472 = arith.constant 0 : index
    %565 = vector.load %arg23[%c13, %c0_472] : memref<16x4xf32, #tpu.memory_space<vmem>>, vector<1x4xf32>
    %c52 = arith.constant 52 : index
    %c0_473 = arith.constant 0 : index
    %566 = vector.load %arg14[%c52, %c0_473] : memref<64x256xf32, #tpu.memory_space<vmem>>, vector<4x256xf32>
    %cst_474 = arith.constant dense<0.000000e+00> : vector<1x256xf32>
    %567 = tpu.matmul %565, %566, %cst_474 {dimension_numbers = #tpu.dot_dimension_numbers<[1], [0], [0], [1], [0, 0, 1, 1], [], []>} : vector<1x4xf32>, vector<4x256xf32>, vector<1x256xf32> -> vector<1x256xf32>
    %568 = arith.addf %564, %567 : vector<1x256xf32>
    %c14 = arith.constant 14 : index
    %c0_475 = arith.constant 0 : index
    %569 = vector.load %arg23[%c14, %c0_475] : memref<16x4xf32, #tpu.memory_space<vmem>>, vector<1x4xf32>
    %c56_476 = arith.constant 56 : index
    %c0_477 = arith.constant 0 : index
    %570 = vector.load %arg14[%c56_476, %c0_477] : memref<64x256xf32, #tpu.memory_space<vmem>>, vector<4x256xf32>
    %cst_478 = arith.constant dense<0.000000e+00> : vector<1x256xf32>
    %571 = tpu.matmul %569, %570, %cst_478 {dimension_numbers = #tpu.dot_dimension_numbers<[1], [0], [0], [1], [0, 0, 1, 1], [], []>} : vector<1x4xf32>, vector<4x256xf32>, vector<1x256xf32> -> vector<1x256xf32>
    %572 = arith.addf %568, %571 : vector<1x256xf32>
    %c15 = arith.constant 15 : index
    %c0_479 = arith.constant 0 : index
    %573 = vector.load %arg23[%c15, %c0_479] : memref<16x4xf32, #tpu.memory_space<vmem>>, vector<1x4xf32>
    %c60 = arith.constant 60 : index
    %c0_480 = arith.constant 0 : index
    %574 = vector.load %arg14[%c60, %c0_480] : memref<64x256xf32, #tpu.memory_space<vmem>>, vector<4x256xf32>
    %cst_481 = arith.constant dense<0.000000e+00> : vector<1x256xf32>
    %575 = tpu.matmul %573, %574, %cst_481 {dimension_numbers = #tpu.dot_dimension_numbers<[1], [0], [0], [1], [0, 0, 1, 1], [], []>} : vector<1x4xf32>, vector<4x256xf32>, vector<1x256xf32> -> vector<1x256xf32>
    %576 = arith.addf %572, %575 : vector<1x256xf32>
    %c0_482 = arith.constant 0 : index
    %c0_483 = arith.constant 0 : index
    %577 = vector.load %arg15[%c0_482, %c0_483] : memref<1x256xf32, #tpu.memory_space<vmem>>, vector<1x256xf32>
    %578 = arith.addf %576, %577 : vector<1x256xf32>
    %cst_484 = arith.constant 0.000000e+00 : f32
    %579 = vector.broadcast %cst_484 : f32 to vector<1x256xf32>
    %580 = arith.maximumf %578, %579 : vector<1x256xf32>
    %c0_485 = arith.constant 0 : index
    %c0_486 = arith.constant 0 : index
    %581 = vector.load %arg16[%c0_485, %c0_486] : memref<256x5xf32, #tpu.memory_space<vmem>>, vector<256x5xf32>
    %cst_487 = arith.constant dense<0.000000e+00> : vector<1x5xf32>
    %582 = tpu.matmul %580, %581, %cst_487 {dimension_numbers = #tpu.dot_dimension_numbers<[1], [0], [0], [1], [0, 0, 1, 1], [], []>} : vector<1x256xf32>, vector<256x5xf32>, vector<1x5xf32> -> vector<1x5xf32>
    %c0_488 = arith.constant 0 : index
    %c0_489 = arith.constant 0 : index
    %583 = vector.load %arg17[%c0_488, %c0_489] : memref<1x5xf32, #tpu.memory_space<vmem>>, vector<1x5xf32>
    %584 = arith.addf %582, %583 : vector<1x5xf32>
    %cst_490 = arith.constant 0.000000e+00 : f32
    %585 = vector.broadcast %cst_490 : f32 to vector<1x5xf32>
    %586 = arith.maximumf %584, %585 : vector<1x5xf32>
    %cst_491 = arith.constant dense<0xFF800000> : vector<1xf32>
    %587 = vector.multi_reduction <maximumf>, %586, %cst_491 [1] : vector<1x5xf32> to vector<1xf32>
    %588 = vector.shape_cast %587 : vector<1xf32> to vector<1x1xf32>
    %589 = vector.broadcast %588 : vector<1x1xf32> to vector<1x5xf32>
    %590 = arith.subf %586, %589 : vector<1x5xf32>
    %591 = math.exp %590 : vector<1x5xf32>
    %cst_492 = arith.constant dense<0.000000e+00> : vector<1xf32>
    %592 = vector.multi_reduction <add>, %591, %cst_492 [1] : vector<1x5xf32> to vector<1xf32>
    %593 = vector.shape_cast %592 : vector<1xf32> to vector<1x1xf32>
    %594 = tpu.reciprocal %593 {approx = true} : vector<1x1xf32> -> vector<1x1xf32>
    %595 = arith.mulf %593, %594 : vector<1x1xf32>
    %cst_493 = arith.constant 2.000000e+00 : f32
    %596 = vector.broadcast %cst_493 : f32 to vector<1x1xf32>
    %597 = arith.subf %596, %595 : vector<1x1xf32>
    %598 = arith.mulf %594, %597 : vector<1x1xf32>
    %599 = vector.broadcast %598 : vector<1x1xf32> to vector<1x5xf32>
    %600 = arith.mulf %591, %599 : vector<1x5xf32>
    %c0_494 = arith.constant 0 : index
    %c0_495 = arith.constant 0 : index
    %c0_496 = arith.constant 0 : index
    %601 = vector.load %arg18[%c0_494, %c0_495, %c0_496] : memref<1x1x5xf32, #tpu.memory_space<vmem>>, vector<1x1x5xf32>
    %602 = vector.shape_cast %601 : vector<1x1x5xf32> to vector<1x5xf32>
    %603 = vector.shape_cast %600 : vector<1x5xf32> to vector<1x1x5xf32>
    tpu.vector_store %arg18[%c0_494, %c0_495, %c0_496], %603 {strides = array<i32>} : memref<1x1x5xf32, #tpu.memory_space<vmem>>, vector<1x1x5xf32>,
    return
  }
  func.func @transform_0(%arg0: i32) -> (i32, i32, i32, i32) {
    %c0_i32 = arith.constant 0 : i32
    %c0_i32_0 = arith.constant 0 : i32
    %c0_i32_1 = arith.constant 0 : i32
    %c0_i32_2 = arith.constant 0 : i32
    return %arg0, %c0_i32, %c0_i32_0, %c0_i32_1 : i32, i32, i32, i32
  }
  func.func @transform_1(%arg0: i32) -> (i32, i32) {
    %c0_i32 = arith.constant 0 : i32
    %c0_i32_0 = arith.constant 0 : i32
    %c0_i32_1 = arith.constant 0 : i32
    return %c0_i32, %c0_i32_0 : i32, i32
  }
  func.func @transform_2(%arg0: i32) -> (i32, i32) {
    %c0_i32 = arith.constant 0 : i32
    %c0_i32_0 = arith.constant 0 : i32
    %c0_i32_1 = arith.constant 0 : i32
    return %c0_i32, %c0_i32_0 : i32, i32
  }
  func.func @transform_3(%arg0: i32) -> (i32, i32) {
    %c0_i32 = arith.constant 0 : i32
    %c0_i32_0 = arith.constant 0 : i32
    %c0_i32_1 = arith.constant 0 : i32
    return %c0_i32, %c0_i32_0 : i32, i32
  }
  func.func @transform_4(%arg0: i32) -> (i32, i32) {
    %c0_i32 = arith.constant 0 : i32
    %c0_i32_0 = arith.constant 0 : i32
    %c0_i32_1 = arith.constant 0 : i32
    return %c0_i32, %c0_i32_0 : i32, i32
  }
  func.func @transform_5(%arg0: i32) -> (i32, i32) {
    %c0_i32 = arith.constant 0 : i32
    %c0_i32_0 = arith.constant 0 : i32
    %c0_i32_1 = arith.constant 0 : i32
    return %c0_i32, %c0_i32_0 : i32, i32
  }
  func.func @transform_6(%arg0: i32) -> (i32, i32) {
    %c0_i32 = arith.constant 0 : i32
    %c0_i32_0 = arith.constant 0 : i32
    %c0_i32_1 = arith.constant 0 : i32
    return %c0_i32, %c0_i32_0 : i32, i32
  }
  func.func @transform_7(%arg0: i32) -> (i32, i32) {
    %c0_i32 = arith.constant 0 : i32
    %c0_i32_0 = arith.constant 0 : i32
    %c0_i32_1 = arith.constant 0 : i32
    return %c0_i32, %c0_i32_0 : i32, i32
  }
  func.func @transform_8(%arg0: i32) -> (i32, i32) {
    %c0_i32 = arith.constant 0 : i32
    %c0_i32_0 = arith.constant 0 : i32
    %c0_i32_1 = arith.constant 0 : i32
    return %c0_i32, %c0_i32_0 : i32, i32
  }
  func.func @transform_9(%arg0: i32) -> (i32, i32) {
    %c0_i32 = arith.constant 0 : i32
    %c0_i32_0 = arith.constant 0 : i32
    %c0_i32_1 = arith.constant 0 : i32
    return %c0_i32, %c0_i32_0 : i32, i32
  }
  func.func @transform_10(%arg0: i32) -> (i32, i32) {
    %c0_i32 = arith.constant 0 : i32
    %c0_i32_0 = arith.constant 0 : i32
    %c0_i32_1 = arith.constant 0 : i32
    return %c0_i32, %c0_i32_0 : i32, i32
  }
  func.func @transform_11(%arg0: i32) -> (i32, i32) {
    %c0_i32 = arith.constant 0 : i32
    %c0_i32_0 = arith.constant 0 : i32
    %c0_i32_1 = arith.constant 0 : i32
    return %c0_i32, %c0_i32_0 : i32, i32
  }
  func.func @transform_12(%arg0: i32) -> (i32, i32) {
    %c0_i32 = arith.constant 0 : i32
    %c0_i32_0 = arith.constant 0 : i32
    %c0_i32_1 = arith.constant 0 : i32
    return %c0_i32, %c0_i32_0 : i32, i32
  }
  func.func @transform_13(%arg0: i32) -> (i32, i32) {
    %c0_i32 = arith.constant 0 : i32
    %c0_i32_0 = arith.constant 0 : i32
    %c0_i32_1 = arith.constant 0 : i32
    return %c0_i32, %c0_i32_0 : i32, i32
  }
  func.func @transform_14(%arg0: i32) -> (i32, i32) {
    %c0_i32 = arith.constant 0 : i32
    %c0_i32_0 = arith.constant 0 : i32
    %c0_i32_1 = arith.constant 0 : i32
    return %c0_i32, %c0_i32_0 : i32, i32
  }
  func.func @transform_15(%arg0: i32) -> (i32, i32) {
    %c0_i32 = arith.constant 0 : i32
    %c0_i32_0 = arith.constant 0 : i32
    %c0_i32_1 = arith.constant 0 : i32
    return %c0_i32, %c0_i32_0 : i32, i32
  }
  func.func @transform_16(%arg0: i32) -> (i32, i32) {
    %c0_i32 = arith.constant 0 : i32
    %c0_i32_0 = arith.constant 0 : i32
    %c0_i32_1 = arith.constant 0 : i32
    return %c0_i32, %c0_i32_0 : i32, i32
  }
  func.func @transform_17(%arg0: i32) -> (i32, i32, i32) {
    %c0_i32 = arith.constant 0 : i32
    %c0_i32_0 = arith.constant 0 : i32
    %c0_i32_1 = arith.constant 0 : i32
    return %arg0, %c0_i32, %c0_i32_0 : i32, i32, i32
  }
}

</mosaic_0001>

<llo_original>
// kernel: actor_net_forward.1
$region0: #{actor_net_forward.1}
  #allocation0 [shape = 'u32[]', space=smem, size = 0x4, offset = 0x4, fixed_abs, tag = 'smem constant byte address 0x4 - core index']
  #allocation1 [shape = 'u32[144,128]{1,0:T(1,128)}', space=vmem, size = 0x12000, scoped, tag = 'internal scratch']
  #allocation2 [shape = 'f32[16,408]{1,0:T(8,128)}', space=vmem, size = 0x8000, scoped, tag = 'scratch operand']
  #allocation3 [shape = 'f32[32,408]{1,0:T(8,128)}', space=vmem, size = 0x10000, scoped, tag = 'scratch operand']
  #allocation4 [shape = 'f32[16,256]{1,0:T(8,128)}', space=vmem, size = 0x4000, scoped, tag = 'scratch operand']
  #allocation5 [shape = 'f32[288,256]{1,0:T(8,128)}', space=vmem, size = 0x48000, scoped, tag = 'scratch operand']
  #allocation6 [shape = 'f32[16,4]{1,0:T(8,128)}', space=vmem, size = 0x2000, scoped, tag = 'scratch operand']
  %s0 = inlined_call_operand.vmem [shape: f32[2,1,4,256], index: 0, kind: input, shape index: {}]
  %s1 = inlined_call_operand.vmem [shape: f32[16,36], index: 1, kind: input, shape index: {}]
  %s2 = inlined_call_operand.vmem [shape: f32[16,1], index: 2, kind: input, shape index: {}]
  %s3 = inlined_call_operand.vmem [shape: f32[16,144], index: 3, kind: input, shape index: {}]
  %s4 = inlined_call_operand.vmem [shape: f32[16,1], index: 4, kind: input, shape index: {}]
  %s5 = inlined_call_operand.vmem [shape: f32[16,144], index: 5, kind: input, shape index: {}]
  %s6 = inlined_call_operand.vmem [shape: f32[16,1], index: 6, kind: input, shape index: {}]
  %s7 = inlined_call_operand.vmem [shape: f32[16,144], index: 7, kind: input, shape index: {}]
  %s8 = inlined_call_operand.vmem [shape: f32[16,1], index: 8, kind: input, shape index: {}]
  %s9 = inlined_call_operand.vmem [shape: f32[32,144], index: 9, kind: input, shape index: {}]
  %s10 = inlined_call_operand.vmem [shape: f32[32,1], index: 10, kind: input, shape index: {}]
  %s11 = inlined_call_operand.vmem [shape: f32[16,288], index: 11, kind: input, shape index: {}]
  %s12 = inlined_call_operand.vmem [shape: f32[16,1], index: 12, kind: input, shape index: {}]
  %s13 = inlined_call_operand.vmem [shape: f32[64,256], index: 13, kind: input, shape index: {}]
  %s14 = inlined_call_operand.vmem [shape: f32[1,256], index: 14, kind: input, shape index: {}]
  %s15 = inlined_call_operand.vmem [shape: f32[256,5], index: 15, kind: input, shape index: {}]
  %s16 = inlined_call_operand.vmem [shape: f32[1,5], index: 16, kind: input, shape index: {}]
  %s17 = inlined_call_operand.hbm [shape: f32[2,1,5], index: 17, kind: output, shape index: {}]
  %s18 = sld [smem:[#allocation0]]
  $region101: #{actor_net_forward.1} parent=0
    _
  %s20 = ssub.s32 1, %s18
  %s21 = scalar_select 0, %s20, %s18
  $region1: #{actor_net_forward.1} parent=0
    #allocation7 [shape = 'u8[1024]{0}', space=vmem, size = 0x400, scoped, tag = 'output window, operand 0']
    #allocation8 [shape = 's32[2]{0}', space=sflag, size = 0x8, scoped, tag = 'scoped memory for actor_net_forward.1']
    %22 = vsyncpa [#allocation8], 0
    %s23 = scalar_lea.sflag [#allocation8], 1
    %24 = vsyncpa %s23, 0
    loop: start=0, step=1, limit=4
    $region2: #{actor_net_forward.1} parent=1 // loop_pre_header
      _
    $region3: #{actor_net_forward.1} parent=1 // loop_header
      %s26 = sphi 0, %s30
      %p27 = scmp.ge.s32.totalorder %s26, 4
      %s36 = sphi 0, %s38
      %s39 = sphi 0, %s36
      %s40 = sphi 0, %s39
      %s56 = sphi 0, %s40
      %s60 = sphi 0, %s60
      %s62 = sphi 0, %s60
      %s63 = sphi 0, %s62
      %s77 = sphi 0, %s63
      %s81 = sphi 0, %s81
      %s83 = sphi 0, %s81
      %s84 = sphi 0, %s83
      %s98 = sphi 0, %s84
      %s102 = sphi 0, %s102
      %s104 = sphi 0, %s102
      %s105 = sphi 0, %s104
      %s119 = sphi 0, %s105
      %s123 = sphi 0, %s123
      %s125 = sphi 0, %s123
      %s126 = sphi 0, %s125
      %s140 = sphi 0, %s126
      %s144 = sphi 0, %s144
      %s146 = sphi 0, %s144
      %s147 = sphi 0, %s146
      %s161 = sphi 0, %s147
      %s165 = sphi 0, %s165
      %s167 = sphi 0, %s165
      %s168 = sphi 0, %s167
      %s182 = sphi 0, %s168
      %s186 = sphi 0, %s186
      %s188 = sphi 0, %s186
      %s189 = sphi 0, %s188
      %s203 = sphi 0, %s189
      %s207 = sphi 0, %s207
      %s209 = sphi 0, %s207
      %s210 = sphi 0, %s209
      %s224 = sphi 0, %s210
      %s228 = sphi 0, %s228
      %s230 = sphi 0, %s228
      %s231 = sphi 0, %s230
      %s245 = sphi 0, %s231
      %s249 = sphi 0, %s249
      %s251 = sphi 0, %s249
      %s252 = sphi 0, %s251
      %s266 = sphi 0, %s252
      %s270 = sphi 0, %s270
      %s272 = sphi 0, %s270
      %s273 = sphi 0, %s272
      %s287 = sphi 0, %s273
      %s291 = sphi 0, %s291
      %s293 = sphi 0, %s291
      %s294 = sphi 0, %s293
      %s308 = sphi 0, %s294
      %s312 = sphi 0, %s312
      %s314 = sphi 0, %s312
      %s315 = sphi 0, %s314
      %s329 = sphi 0, %s315
      %s333 = sphi 0, %s333
      %s335 = sphi 0, %s333
      %s336 = sphi 0, %s335
      %s350 = sphi 0, %s336
      %s354 = sphi 0, %s354
      %s356 = sphi 0, %s354
      %s357 = sphi 0, %s356
      %s371 = sphi 0, %s357
      %s375 = sphi 0, %s375
      %s377 = sphi 0, %s375
      %s378 = sphi 0, %s377
      %s392 = sphi 0, %s378
      %s398 = sphi 0, %s400
      %s401 = sphi 0, %s398
      %s402 = sphi 0, %s401
      %s418 = sphi 0, %s402
    $region4: #{actor_net_forward.1} parent=1 // loop_header_branch
      %29 = sbr.rel (%p27) target = $region8
    $region5: #{actor_net_forward.1} parent=1 // loop_body
      %s31 = ssub.s32 %s26, 1
      %s32 = ssub.s32 %s26, 2
      %s33 = sadd.s32 %s26, 1
      %s34 = ssub.s32 %s26, %s33
      %p35 = scmp.eq.s32.totalorder %s34, 0
      %s37 = sadd.s32 %s36, 1
      %s38 = scalar_select %p35, %s36, %s37
      %p41 = pneg %p35
      %p42 = scmp.eq.s32.totalorder %s26, 1
      %p43 = por %p41, %p42
      %p44 = scmp.ne.s32.totalorder %s36, %s39
      %p45 = scmp.eq.s32.totalorder %s26, 0
      %p46 = por %p44, %p45
      %p47 = scmp.ne.s32.totalorder %s36, %s39
      %p48 = scmp.eq.s32.totalorder %s31, 1
      %p49 = por %p47, %p48
      %p50 = scmp.ne.s32.totalorder %s39, %s40
      %p51 = scmp.eq.s32.totalorder %s31, 0
      %p52 = por %p50, %p51
      %p53 = scmp.ne.s32.totalorder %s39, %s40
      %p54 = scmp.eq.s32.totalorder %s32, 1
      %p55 = por %p53, %p54
      %p57 = scmp.ne.s32.totalorder %s40, %s56
      %p58 = scmp.eq.s32.totalorder %s32, 0
      %p59 = por %p57, %p58
      %s61 = sadd.s32 %s60, 1
      %p64 = scmp.eq.s32.totalorder %s26, 1
      %p65 = scmp.ne.s32.totalorder %s60, %s62
      %p66 = scmp.eq.s32.totalorder %s26, 0
      %p67 = por %p65, %p66
      %p68 = scmp.ne.s32.totalorder %s60, %s62
      %p69 = scmp.eq.s32.totalorder %s31, 1
      %p70 = por %p68, %p69
      %p71 = scmp.ne.s32.totalorder %s62, %s63
      %p72 = scmp.eq.s32.totalorder %s31, 0
      %p73 = por %p71, %p72
      %p74 = scmp.ne.s32.totalorder %s62, %s63
      %p75 = scmp.eq.s32.totalorder %s32, 1
      %p76 = por %p74, %p75
      %p78 = scmp.ne.s32.totalorder %s63, %s77
      %p79 = scmp.eq.s32.totalorder %s32, 0
      %p80 = por %p78, %p79
      %s82 = sadd.s32 %s81, 1
      %p85 = scmp.eq.s32.totalorder %s26, 1
      %p86 = scmp.ne.s32.totalorder %s81, %s83
      %p87 = scmp.eq.s32.totalorder %s26, 0
      %p88 = por %p86, %p87
      %p89 = scmp.ne.s32.totalorder %s81, %s83
      %p90 = scmp.eq.s32.totalorder %s31, 1
      %p91 = por %p89, %p90
      %p92 = scmp.ne.s32.totalorder %s83, %s84
      %p93 = scmp.eq.s32.totalorder %s31, 0
      %p94 = por %p92, %p93
      %p95 = scmp.ne.s32.totalorder %s83, %s84
      %p96 = scmp.eq.s32.totalorder %s32, 1
      %p97 = por %p95, %p96
      %p99 = scmp.ne.s32.totalorder %s84, %s98
      %p100 = scmp.eq.s32.totalorder %s32, 0
      %p101 = por %p99, %p100
      %s103 = sadd.s32 %s102, 1
      %p106 = scmp.eq.s32.totalorder %s26, 1
      %p107 = scmp.ne.s32.totalorder %s102, %s104
      %p108 = scmp.eq.s32.totalorder %s26, 0
      %p109 = por %p107, %p108
      %p110 = scmp.ne.s32.totalorder %s102, %s104
      %p111 = scmp.eq.s32.totalorder %s31, 1
      %p112 = por %p110, %p111
      %p113 = scmp.ne.s32.totalorder %s104, %s105
      %p114 = scmp.eq.s32.totalorder %s31, 0
      %p115 = por %p113, %p114
      %p116 = scmp.ne.s32.totalorder %s104, %s105
      %p117 = scmp.eq.s32.totalorder %s32, 1
      %p118 = por %p116, %p117
      %p120 = scmp.ne.s32.totalorder %s105, %s119
      %p121 = scmp.eq.s32.totalorder %s32, 0
      %p122 = por %p120, %p121
      %s124 = sadd.s32 %s123, 1
      %p127 = scmp.eq.s32.totalorder %s26, 1
      %p128 = scmp.ne.s32.totalorder %s123, %s125
      %p129 = scmp.eq.s32.totalorder %s26, 0
      %p130 = por %p128, %p129
      %p131 = scmp.ne.s32.totalorder %s123, %s125
      %p132 = scmp.eq.s32.totalorder %s31, 1
      %p133 = por %p131, %p132
      %p134 = scmp.ne.s32.totalorder %s125, %s126
      %p135 = scmp.eq.s32.totalorder %s31, 0
      %p136 = por %p134, %p135
      %p137 = scmp.ne.s32.totalorder %s125, %s126
      %p138 = scmp.eq.s32.totalorder %s32, 1
      %p139 = por %p137, %p138
      %p141 = scmp.ne.s32.totalorder %s126, %s140
      %p142 = scmp.eq.s32.totalorder %s32, 0
      %p143 = por %p141, %p142
      %s145 = sadd.s32 %s144, 1
      %p148 = scmp.eq.s32.totalorder %s26, 1
      %p149 = scmp.ne.s32.totalorder %s144, %s146
      %p150 = scmp.eq.s32.totalorder %s26, 0
      %p151 = por %p149, %p150
      %p152 = scmp.ne.s32.totalorder %s144, %s146
      %p153 = scmp.eq.s32.totalorder %s31, 1
      %p154 = por %p152, %p153
      %p155 = scmp.ne.s32.totalorder %s146, %s147
      %p156 = scmp.eq.s32.totalorder %s31, 0
      %p157 = por %p155, %p156
      %p158 = scmp.ne.s32.totalorder %s146, %s147
      %p159 = scmp.eq.s32.totalorder %s32, 1
      %p160 = por %p158, %p159
      %p162 = scmp.ne.s32.totalorder %s147, %s161
      %p163 = scmp.eq.s32.totalorder %s32, 0
      %p164 = por %p162, %p163
      %s166 = sadd.s32 %s165, 1
      %p169 = scmp.eq.s32.totalorder %s26, 1
      %p170 = scmp.ne.s32.totalorder %s165, %s167
      %p171 = scmp.eq.s32.totalorder %s26, 0
      %p172 = por %p170, %p171
      %p173 = scmp.ne.s32.totalorder %s165, %s167
      %p174 = scmp.eq.s32.totalorder %s31, 1
      %p175 = por %p173, %p174
      %p176 = scmp.ne.s32.totalorder %s167, %s168
      %p177 = scmp.eq.s32.totalorder %s31, 0
      %p178 = por %p176, %p177
      %p179 = scmp.ne.s32.totalorder %s167, %s168
      %p180 = scmp.eq.s32.totalorder %s32, 1
      %p181 = por %p179, %p180
      %p183 = scmp.ne.s32.totalorder %s168, %s182
      %p184 = scmp.eq.s32.totalorder %s32, 0
      %p185 = por %p183, %p184
      %s187 = sadd.s32 %s186, 1
      %p190 = scmp.eq.s32.totalorder %s26, 1
      %p191 = scmp.ne.s32.totalorder %s186, %s188
      %p192 = scmp.eq.s32.totalorder %s26, 0
      %p193 = por %p191, %p192
      %p194 = scmp.ne.s32.totalorder %s186, %s188
      %p195 = scmp.eq.s32.totalorder %s31, 1
      %p196 = por %p194, %p195
      %p197 = scmp.ne.s32.totalorder %s188, %s189
      %p198 = scmp.eq.s32.totalorder %s31, 0
      %p199 = por %p197, %p198
      %p200 = scmp.ne.s32.totalorder %s188, %s189
      %p201 = scmp.eq.s32.totalorder %s32, 1
      %p202 = por %p200, %p201
      %p204 = scmp.ne.s32.totalorder %s189, %s203
      %p205 = scmp.eq.s32.totalorder %s32, 0
      %p206 = por %p204, %p205
      %s208 = sadd.s32 %s207, 1
      %p211 = scmp.eq.s32.totalorder %s26, 1
      %p212 = scmp.ne.s32.totalorder %s207, %s209
      %p213 = scmp.eq.s32.totalorder %s26, 0
      %p214 = por %p212, %p213
      %p215 = scmp.ne.s32.totalorder %s207, %s209
      %p216 = scmp.eq.s32.totalorder %s31, 1
      %p217 = por %p215, %p216
      %p218 = scmp.ne.s32.totalorder %s209, %s210
      %p219 = scmp.eq.s32.totalorder %s31, 0
      %p220 = por %p218, %p219
      %p221 = scmp.ne.s32.totalorder %s209, %s210
      %p222 = scmp.eq.s32.totalorder %s32, 1
      %p223 = por %p221, %p222
      %p225 = scmp.ne.s32.totalorder %s210, %s224
      %p226 = scmp.eq.s32.totalorder %s32, 0
      %p227 = por %p225, %p226
      %s229 = sadd.s32 %s228, 1
      %p232 = scmp.eq.s32.totalorder %s26, 1
      %p233 = scmp.ne.s32.totalorder %s228, %s230
      %p234 = scmp.eq.s32.totalorder %s26, 0
      %p235 = por %p233, %p234
      %p236 = scmp.ne.s32.totalorder %s228, %s230
      %p237 = scmp.eq.s32.totalorder %s31, 1
      %p238 = por %p236, %p237
      %p239 = scmp.ne.s32.totalorder %s230, %s231
      %p240 = scmp.eq.s32.totalorder %s31, 0
      %p241 = por %p239, %p240
      %p242 = scmp.ne.s32.totalorder %s230, %s231
      %p243 = scmp.eq.s32.totalorder %s32, 1
      %p244 = por %p242, %p243
      %p246 = scmp.ne.s32.totalorder %s231, %s245
      %p247 = scmp.eq.s32.totalorder %s32, 0
      %p248 = por %p246, %p247
      %s250 = sadd.s32 %s249, 1
      %p253 = scmp.eq.s32.totalorder %s26, 1
      %p254 = scmp.ne.s32.totalorder %s249, %s251
      %p255 = scmp.eq.s32.totalorder %s26, 0
      %p256 = por %p254, %p255
      %p257 = scmp.ne.s32.totalorder %s249, %s251
      %p258 = scmp.eq.s32.totalorder %s31, 1
      %p259 = por %p257, %p258
      %p260 = scmp.ne.s32.totalorder %s251, %s252
      %p261 = scmp.eq.s32.totalorder %s31, 0
      %p262 = por %p260, %p261
      %p263 = scmp.ne.s32.totalorder %s251, %s252
      %p264 = scmp.eq.s32.totalorder %s32, 1
      %p265 = por %p263, %p264
      %p267 = scmp.ne.s32.totalorder %s252, %s266
      %p268 = scmp.eq.s32.totalorder %s32, 0
      %p269 = por %p267, %p268
      %s271 = sadd.s32 %s270, 1
      %p274 = scmp.eq.s32.totalorder %s26, 1
      %p275 = scmp.ne.s32.totalorder %s270, %s272
      %p276 = scmp.eq.s32.totalorder %s26, 0
      %p277 = por %p275, %p276
      %p278 = scmp.ne.s32.totalorder %s270, %s272
      %p279 = scmp.eq.s32.totalorder %s31, 1
      %p280 = por %p278, %p279
      %p281 = scmp.ne.s32.totalorder %s272, %s273
      %p282 = scmp.eq.s32.totalorder %s31, 0
      %p283 = por %p281, %p282
      %p284 = scmp.ne.s32.totalorder %s272, %s273
      %p285 = scmp.eq.s32.totalorder %s32, 1
      %p286 = por %p284, %p285
      %p288 = scmp.ne.s32.totalorder %s273, %s287
      %p289 = scmp.eq.s32.totalorder %s32, 0
      %p290 = por %p288, %p289
      %s292 = sadd.s32 %s291, 1
      %p295 = scmp.eq.s32.totalorder %s26, 1
      %p296 = scmp.ne.s32.totalorder %s291, %s293
      %p297 = scmp.eq.s32.totalorder %s26, 0
      %p298 = por %p296, %p297
      %p299 = scmp.ne.s32.totalorder %s291, %s293
      %p300 = scmp.eq.s32.totalorder %s31, 1
      %p301 = por %p299, %p300
      %p302 = scmp.ne.s32.totalorder %s293, %s294
      %p303 = scmp.eq.s32.totalorder %s31, 0
      %p304 = por %p302, %p303
      %p305 = scmp.ne.s32.totalorder %s293, %s294
      %p306 = scmp.eq.s32.totalorder %s32, 1
      %p307 = por %p305, %p306
      %p309 = scmp.ne.s32.totalorder %s294, %s308
      %p310 = scmp.eq.s32.totalorder %s32, 0
      %p311 = por %p309, %p310
      %s313 = sadd.s32 %s312, 1
      %p316 = scmp.eq.s32.totalorder %s26, 1
      %p317 = scmp.ne.s32.totalorder %s312, %s314
      %p318 = scmp.eq.s32.totalorder %s26, 0
      %p319 = por %p317, %p318
      %p320 = scmp.ne.s32.totalorder %s312, %s314
      %p321 = scmp.eq.s32.totalorder %s31, 1
      %p322 = por %p320, %p321
      %p323 = scmp.ne.s32.totalorder %s314, %s315
      %p324 = scmp.eq.s32.totalorder %s31, 0
      %p325 = por %p323, %p324
      %p326 = scmp.ne.s32.totalorder %s314, %s315
      %p327 = scmp.eq.s32.totalorder %s32, 1
      %p328 = por %p326, %p327
      %p330 = scmp.ne.s32.totalorder %s315, %s329
      %p331 = scmp.eq.s32.totalorder %s32, 0
      %p332 = por %p330, %p331
      %s334 = sadd.s32 %s333, 1
      %p337 = scmp.eq.s32.totalorder %s26, 1
      %p338 = scmp.ne.s32.totalorder %s333, %s335
      %p339 = scmp.eq.s32.totalorder %s26, 0
      %p340 = por %p338, %p339
      %p341 = scmp.ne.s32.totalorder %s333, %s335
      %p342 = scmp.eq.s32.totalorder %s31, 1
      %p343 = por %p341, %p342
      %p344 = scmp.ne.s32.totalorder %s335, %s336
      %p345 = scmp.eq.s32.totalorder %s31, 0
      %p346 = por %p344, %p345
      %p347 = scmp.ne.s32.totalorder %s335, %s336
      %p348 = scmp.eq.s32.totalorder %s32, 1
      %p349 = por %p347, %p348
      %p351 = scmp.ne.s32.totalorder %s336, %s350
      %p352 = scmp.eq.s32.totalorder %s32, 0
      %p353 = por %p351, %p352
      %s355 = sadd.s32 %s354, 1
      %p358 = scmp.eq.s32.totalorder %s26, 1
      %p359 = scmp.ne.s32.totalorder %s354, %s356
      %p360 = scmp.eq.s32.totalorder %s26, 0
      %p361 = por %p359, %p360
      %p362 = scmp.ne.s32.totalorder %s354, %s356
      %p363 = scmp.eq.s32.totalorder %s31, 1
      %p364 = por %p362, %p363
      %p365 = scmp.ne.s32.totalorder %s356, %s357
      %p366 = scmp.eq.s32.totalorder %s31, 0
      %p367 = por %p365, %p366
      %p368 = scmp.ne.s32.totalorder %s356, %s357
      %p369 = scmp.eq.s32.totalorder %s32, 1
      %p370 = por %p368, %p369
      %p372 = scmp.ne.s32.totalorder %s357, %s371
      %p373 = scmp.eq.s32.totalorder %s32, 0
      %p374 = por %p372, %p373
      %s376 = sadd.s32 %s375, 1
      %p379 = scmp.eq.s32.totalorder %s26, 1
      %p380 = scmp.ne.s32.totalorder %s375, %s377
      %p381 = scmp.eq.s32.totalorder %s26, 0
      %p382 = por %p380, %p381
      %p383 = scmp.ne.s32.totalorder %s375, %s377
      %p384 = scmp.eq.s32.totalorder %s31, 1
      %p385 = por %p383, %p384
      %p386 = scmp.ne.s32.totalorder %s377, %s378
      %p387 = scmp.eq.s32.totalorder %s31, 0
      %p388 = por %p386, %p387
      %p389 = scmp.ne.s32.totalorder %s377, %s378
      %p390 = scmp.eq.s32.totalorder %s32, 1
      %p391 = por %p389, %p390
      %p393 = scmp.ne.s32.totalorder %s378, %s392
      %p394 = scmp.eq.s32.totalorder %s32, 0
      %p395 = por %p393, %p394
      %s396 = ssub.s32 %s26, %s33
      %p397 = scmp.eq.s32.totalorder %s396, 0
      %s399 = sadd.s32 %s398, 1
      %s400 = scalar_select %p397, %s398, %s399
      %p403 = pneg %p397
      %p404 = scmp.eq.s32.totalorder %s26, 1
      %p405 = por %p403, %p404
      %p406 = scmp.ne.s32.totalorder %s398, %s401
      %p407 = scmp.eq.s32.totalorder %s26, 0
      %p408 = por %p406, %p407
      %p409 = scmp.ne.s32.totalorder %s398, %s401
      %p410 = scmp.eq.s32.totalorder %s31, 1
      %p411 = por %p409, %p410
      %p412 = scmp.ne.s32.totalorder %s401, %s402
      %p413 = scmp.eq.s32.totalorder %s31, 0
      %p414 = por %p412, %p413
      %p415 = scmp.ne.s32.totalorder %s401, %s402
      %p416 = scmp.eq.s32.totalorder %s32, 1
      %p417 = por %p415, %p416
      %p419 = scmp.ne.s32.totalorder %s402, %s418
      %p420 = scmp.eq.s32.totalorder %s32, 0
      %p421 = por %p419, %p420
      %p422 = scmp.le.s32.totalorder 1, %s26
      %p423 = scmp.lt.s32.totalorder %s26, 3
      %p424 = pnand %p422, %p423
      %p425 = pneg %p424
      // Predicated region
      $region9: #{actor_net_forward.1} parent=5 // pred_check
        _
      $region10: #{actor_net_forward.1} parent=5 // pred_check_branch
        %427 = sbr.rel (%p424) target = $region12
      $region11: #{actor_net_forward.1} parent=5 // pred_region
        %s428 = ssub.s32 %s26, 1
        // Predicated region
        $region13: #{actor_net_forward.1} parent=11 // pred_check
          %p429 = pneg %p73
        $region14: #{actor_net_forward.1} parent=11 // pred_check_branch
          %431 = sbr.rel (%p429) target = $region16
        $region15: #{actor_net_forward.1} parent=11 // pred_region
          _
        $region16: #{actor_net_forward.1} parent=11 // pred_fallthru
          _
        // Predicated region
        $region17: #{actor_net_forward.1} parent=11 // pred_check
          %p432 = pneg %p94
        $region18: #{actor_net_forward.1} parent=11 // pred_check_branch
          %434 = sbr.rel (%p432) target = $region20
        $region19: #{actor_net_forward.1} parent=11 // pred_region
          _
        $region20: #{actor_net_forward.1} parent=11 // pred_fallthru
          _
        // Predicated region
        $region21: #{actor_net_forward.1} parent=11 // pred_check
          %p435 = pneg %p115
        $region22: #{actor_net_forward.1} parent=11 // pred_check_branch
          %437 = sbr.rel (%p435) target = $region24
        $region23: #{actor_net_forward.1} parent=11 // pred_region
          _
        $region24: #{actor_net_forward.1} parent=11 // pred_fallthru
          _
        // Predicated region
        $region25: #{actor_net_forward.1} parent=11 // pred_check
          %p438 = pneg %p136
        $region26: #{actor_net_forward.1} parent=11 // pred_check_branch
          %440 = sbr.rel (%p438) target = $region28
        $region27: #{actor_net_forward.1} parent=11 // pred_region
          _
        $region28: #{actor_net_forward.1} parent=11 // pred_fallthru
          _
        // Predicated region
        $region29: #{actor_net_forward.1} parent=11 // pred_check
          %p441 = pneg %p157
        $region30: #{actor_net_forward.1} parent=11 // pred_check_branch
          %443 = sbr.rel (%p441) target = $region32
        $region31: #{actor_net_forward.1} parent=11 // pred_region
          _
        $region32: #{actor_net_forward.1} parent=11 // pred_fallthru
          _
        // Predicated region
        $region33: #{actor_net_forward.1} parent=11 // pred_check
          %p444 = pneg %p178
        $region34: #{actor_net_forward.1} parent=11 // pred_check_branch
          %446 = sbr.rel (%p444) target = $region36
        $region35: #{actor_net_forward.1} parent=11 // pred_region
          _
        $region36: #{actor_net_forward.1} parent=11 // pred_fallthru
          _
        // Predicated region
        $region37: #{actor_net_forward.1} parent=11 // pred_check
          %p447 = pneg %p199
        $region38: #{actor_net_forward.1} parent=11 // pred_check_branch
          %449 = sbr.rel (%p447) target = $region40
        $region39: #{actor_net_forward.1} parent=11 // pred_region
          _
        $region40: #{actor_net_forward.1} parent=11 // pred_fallthru
          _
        // Predicated region
        $region41: #{actor_net_forward.1} parent=11 // pred_check
          %p450 = pneg %p220
        $region42: #{actor_net_forward.1} parent=11 // pred_check_branch
          %452 = sbr.rel (%p450) target = $region44
        $region43: #{actor_net_forward.1} parent=11 // pred_region
          _
        $region44: #{actor_net_forward.1} parent=11 // pred_fallthru
          _
        // Predicated region
        $region45: #{actor_net_forward.1} parent=11 // pred_check
          %p453 = pneg %p241
        $region46: #{actor_net_forward.1} parent=11 // pred_check_branch
          %455 = sbr.rel (%p453) target = $region48
        $region47: #{actor_net_forward.1} parent=11 // pred_region
          _
        $region48: #{actor_net_forward.1} parent=11 // pred_fallthru
          _
        // Predicated region
        $region49: #{actor_net_forward.1} parent=11 // pred_check
          %p456 = pneg %p262
        $region50: #{actor_net_forward.1} parent=11 // pred_check_branch
          %458 = sbr.rel (%p456) target = $region52
        $region51: #{actor_net_forward.1} parent=11 // pred_region
          _
        $region52: #{actor_net_forward.1} parent=11 // pred_fallthru
          _
        // Predicated region
        $region53: #{actor_net_forward.1} parent=11 // pred_check
          %p459 = pneg %p283
        $region54: #{actor_net_forward.1} parent=11 // pred_check_branch
          %461 = sbr.rel (%p459) target = $region56
        $region55: #{actor_net_forward.1} parent=11 // pred_region
          _
        $region56: #{actor_net_forward.1} parent=11 // pred_fallthru
          _
        // Predicated region
        $region57: #{actor_net_forward.1} parent=11 // pred_check
          %p462 = pneg %p304
        $region58: #{actor_net_forward.1} parent=11 // pred_check_branch
          %464 = sbr.rel (%p462) target = $region60
        $region59: #{actor_net_forward.1} parent=11 // pred_region
          _
        $region60: #{actor_net_forward.1} parent=11 // pred_fallthru
          _
        // Predicated region
        $region61: #{actor_net_forward.1} parent=11 // pred_check
          %p465 = pneg %p325
        $region62: #{actor_net_forward.1} parent=11 // pred_check_branch
          %467 = sbr.rel (%p465) target = $region64
        $region63: #{actor_net_forward.1} parent=11 // pred_region
          _
        $region64: #{actor_net_forward.1} parent=11 // pred_fallthru
          _
        // Predicated region
        $region65: #{actor_net_forward.1} parent=11 // pred_check
          %p468 = pneg %p346
        $region66: #{actor_net_forward.1} parent=11 // pred_check_branch
          %470 = sbr.rel (%p468) target = $region68
        $region67: #{actor_net_forward.1} parent=11 // pred_region
          _
        $region68: #{actor_net_forward.1} parent=11 // pred_fallthru
          _
        // Predicated region
        $region69: #{actor_net_forward.1} parent=11 // pred_check
          %p471 = pneg %p367
        $region70: #{actor_net_forward.1} parent=11 // pred_check_branch
          %473 = sbr.rel (%p471) target = $region72
        $region71: #{actor_net_forward.1} parent=11 // pred_region
          _
        $region72: #{actor_net_forward.1} parent=11 // pred_fallthru
          _
        // Predicated region
        $region73: #{actor_net_forward.1} parent=11 // pred_check
          %p474 = pneg %p388
        $region74: #{actor_net_forward.1} parent=11 // pred_check_branch
          %476 = sbr.rel (%p474) target = $region76
        $region75: #{actor_net_forward.1} parent=11 // pred_region
          _
        $region76: #{actor_net_forward.1} parent=11 // pred_fallthru
          _
      $region12: #{actor_net_forward.1} parent=5 // pred_fallthru
        _
      %p477 = scmp.lt.s32.totalorder %s26, 2
      // Predicated region
      $region77: #{actor_net_forward.1} parent=5 // pred_check
        %p478 = pneg %p477
      $region78: #{actor_net_forward.1} parent=5 // pred_check_branch
        %480 = sbr.rel (%p478) target = $region80
      $region79: #{actor_net_forward.1} parent=5 // pred_region
        // Predicated region
        $region81: #{actor_net_forward.1} parent=79 // pred_check
          %p481 = pneg %p46
        $region82: #{actor_net_forward.1} parent=79 // pred_check_branch
          %483 = sbr.rel (%p481) target = $region84
        $region83: #{actor_net_forward.1} parent=79 // pred_region
          %p484 = scmp.lt.s32.totalorder %s26, 1
          %s485 = scalar_select %p484, %s26, 1
          %s486 = smul.addr %s485, 2
          %s487 = smul.addr %s486, 4
          %s488 = scalar_lea.vmem %s0, %s487
        $region84: #{actor_net_forward.1} parent=79 // pred_fallthru
          _
      $region80: #{actor_net_forward.1} parent=5 // pred_fallthru
        _
      %p489 = scmp.le.s32.totalorder 1, %s26
      %p490 = scmp.lt.s32.totalorder %s26, 3
      %p491 = pnand %p489, %p490
      %p492 = pneg %p491
      // Predicated region
      $region85: #{actor_net_forward.1} parent=5 // pred_check
        _
      $region86: #{actor_net_forward.1} parent=5 // pred_check_branch
        %494 = sbr.rel (%p491) target = $region88
      $region87: #{actor_net_forward.1} parent=5 // pred_region
        %s495 = ssub.s32 %s26, 1
        %p496 = scmp.lt.s32.totalorder %s31, 1
        %s497 = scalar_select %p496, %s31, 1
        %s498 = smul.addr %s497, 2
        %s499 = smul.addr %s498, 4
        %s500 = scalar_lea.vmem %s0, %s499
        %p501 = pneg %p52
        %p502 = pneg %p49
        %p503 = pneg %p73
        %p504 = pneg %p70
        %p505 = pneg %p94
        %p506 = pneg %p91
        %p507 = pneg %p115
        %p508 = pneg %p112
        %p509 = pneg %p136
        %p510 = pneg %p133
        %p511 = pneg %p157
        %p512 = pneg %p154
        %p513 = pneg %p178
        %p514 = pneg %p175
        %p515 = pneg %p199
        %p516 = pneg %p196
        %p517 = pneg %p220
        %p518 = pneg %p217
        %p519 = pneg %p241
        %p520 = pneg %p238
        %p521 = pneg %p262
        %p522 = pneg %p259
        %p523 = pneg %p283
        %p524 = pneg %p280
        %p525 = pneg %p304
        %p526 = pneg %p301
        %p527 = pneg %p325
        %p528 = pneg %p322
        %p529 = pneg %p346
        %p530 = pneg %p343
        %p531 = pneg %p367
        %p532 = pneg %p364
        %p533 = pneg %p388
        %p534 = pneg %p385
        %p535 = pneg %p414
        %p536 = pneg %p411
        %s537 = sand.u32 %s401, 1
        %s538 = scalar_lea.sflag [#allocation8], %s537
        %s539 = sand.u32 %s401, 1
        %s540 = scalar_lea.vmem [#allocation7], %s539
        %p541 = scmp.lt.s32.totalorder %s31, 1
        %s542 = scalar_select %p541, %s31, 1
        %s543 = smul.addr %s542, 2
        %s544 = smul.addr %s543, 4
        %s545 = scalar_lea.vmem %s0, %s544
        %v546 = vlaneseq
        %v547 = vand.u32 %v546, 127
        %v548 = vadd.s32 %v547, 128
        %vm549 = vcmp.lt.s32.totalorder %v547, 0
        %v550 = vsub.s32 0, %v547
        %v551 = vsel %vm549, %v550, %v547
        %v552 = vshrl.u32 %v551, 4
        %v553 = vand.u32 %v551, 15
        %v554 = vsub.s32 0, %v553
        %v555 = vsel %vm549, %v554, %v553
        %vm556 = vcmp.lt.s32.totalorder %v548, 0
        %v557 = vsub.s32 0, %v548
        %v558 = vsel %vm556, %v557, %v548
        %v559 = vshrl.u32 %v558, 4
        %v560 = vand.u32 %v558, 15
        %v561 = vsub.s32 0, %v560
        %v562 = vsel %vm556, %v561, %v560
        %vm563 = vcmp.ne.s32.totalorder %v555, 0
        %vm564 = vcmp.ne.s32.totalorder %v562, 0
        %vm565 = vcmp.lt.s32.totalorder %v555, 0
        %vm566 = vcmp.lt.s32.totalorder %v562, 0
        %vm567 = vmand %vm565, %vm563
        %vm568 = vmand %vm566, %vm564
        %v569 = vadd.s32 %v555, 16
        %v570 = vadd.s32 %v562, 16
        %v571 = vsel %vm567, %v569, %v555
        %v572 = vsel %vm568, %v570, %v562
        %vm573 = vcmp.gt.s32.totalorder %v571, 0
        %vm574 = vcmp.gt.s32.totalorder %v572, 0
        %v575 = vsel %vm573, 1, 0
        %v576 = vsel %vm574, 1, 0
        %v577 = vcvt.s32.f32 %v575
        %v578 = vcvt.s32.f32 %v576
        %vm579 = vcmp.lt.s32.totalorder %v571, 15
        %vm580 = vcmp.lt.s32.totalorder %v572, 15
        %v581 = vsel %vm579, 1, 0
        %v582 = vsel %vm580, 1, 0
        %v583 = vcvt.s32.f32 %v581
        %v584 = vcvt.s32.f32 %v582
        %v585 = vlaneseq
        %v586 = vshrl.u32 %v585, 7
        %v587 = vadd.s32 %v586, 8
        %v588 = vmul.u32 %v547, 2
        %vm589 = vcmp.eq.s32.totalorder %v586, %v588
        %vm590 = vcmp.eq.s32.totalorder %v587, %v588
        %v591 = vsel %vm589, 1, 0
        %v592 = vsel %vm590, 1, 0
        %v593 = vcvt.s32.f32 %v591
        %v594 = vcvt.s32.f32 %v592
        %v595 = vadd.s32 %v588, 1
        %vm596 = vcmp.eq.s32.totalorder %v586, %v595
        %vm597 = vcmp.eq.s32.totalorder %v587, %v595
        %v598 = vsel %vm596, 1, 0
        %v599 = vsel %vm597, 1, 0
        %v600 = vcvt.s32.f32 %v598
        %v601 = vcvt.s32.f32 %v599
        %vm602 = vcmp.lt.s32.totalorder %v547, 0
        %v603 = vsub.s32 0, %v547
        %v604 = vsel %vm602, %v603, %v547
        %v605 = vshrl.u32 %v604, 3
        %v606 = vand.u32 %v604, 7
        %v607 = vsub.s32 0, %v606
        %v608 = vsel %vm602, %v607, %v606
        %vm609 = vcmp.ne.s32.totalorder %v608, 0
        %vm610 = vcmp.lt.s32.totalorder %v608, 0
        %vm611 = vmand %vm610, %vm609
        %v612 = vadd.s32 %v608, 8
        %v613 = vsel %vm611, %v612, %v608
        %vm614 = vcmp.gt.s32.totalorder %v613, 0
        %v615 = vsel %vm614, 1, 0
        %v616 = vcvt.s32.f32 %v615
        %vm617 = vcmp.lt.s32.totalorder %v613, 7
        %v618 = vsel %vm617, 1, 0
        %v619 = vcvt.s32.f32 %v618
        %vm620 = vcmp.lt.s32.totalorder %v547, 0
        %v621 = vsub.s32 0, %v547
        %v622 = vsel %vm620, %v621, %v547
        %v623 = vshrl.u32 %v622, 2
        %v624 = vand.u32 %v622, 3
        %v625 = vsub.s32 0, %v624
        %v626 = vsel %vm620, %v625, %v624
        %vm627 = vcmp.ne.s32.totalorder %v626, 0
        %vm628 = vcmp.lt.s32.totalorder %v626, 0
        %vm629 = vmand %vm628, %vm627
        %v630 = vadd.s32 %v626, 4
        %v631 = vsel %vm629, %v630, %v626
        %vm632 = vcmp.gt.s32.totalorder %v631, 0
        %v633 = vsel %vm632, 1, 0
        %v634 = vcvt.s32.f32 %v633
        %vm635 = vcmp.lt.s32.totalorder %v631, 3
        %v636 = vsel %vm635, 1, 0
        %v637 = vcvt.s32.f32 %v636
        %v638 = vld [vmem:[%s545] sm:$0xff]
        %v640 = vcombine.high %v638, %v638
        %642 = vst [vmem:[#allocation2 + $0x8] sm:$0xf] %v638
        %643 = vst [vmem:[#allocation2 + $0x10] sm:$0xf] %v640
        %644 = vst [vmem:[#allocation2] sm:$0xff] 0.0
        %645 = vst [vmem:[#allocation2 + $0x20] sm:$0xff] 0.0
        %vm646 = vcmask 195584
        %647 = vst.msk [vmem:[#allocation2 + $0x18] sm:$0xff] %vm646, 0.0
        %648 = vst.msk [vmem:[#allocation2 + $0x38] sm:$0xff] %vm646, 0.0
        %649 = vst [vmem:[#allocation3] sm:$0xff] 0.0
        %650 = vst [vmem:[#allocation3 + $0x20] sm:$0xff] 0.0
        %651 = vst [vmem:[#allocation3 + $0x40] sm:$0xff] 0.0
        %652 = vst [vmem:[#allocation3 + $0x60] sm:$0xff] 0.0
        %653 = vst.msk [vmem:[#allocation3 + $0x18] sm:$0xff] %vm646, 0.0
        %654 = vst.msk [vmem:[#allocation3 + $0x38] sm:$0xff] %vm646, 0.0
        %655 = vst.msk [vmem:[#allocation3 + $0x58] sm:$0xff] %vm646, 0.0
        %656 = vst.msk [vmem:[#allocation3 + $0x78] sm:$0xff] %vm646, 0.0
        %v657 = vld [vmem:[%s1] sm:$0xff]
        %v658 = vld [vmem:[%s1 + $0x8] sm:$0xff]
        %v659 = vld [vmem:[%s2] sm:$0xff]
        %v660 = vld [vmem:[%s2 + $0x8] sm:$0xff]
        %v661 = vld [vmem:[#allocation2] sm:$0xf]
        %v662 = vld [vmem:[#allocation2 + $0x8] sm:$0xf]
        %v663 = vld [vmem:[#allocation2 + $0x10] sm:$0xf]
        %666 = vrot.lane.b32.xlu0 %v577, 111
        %v667 = vpop.permute.xlu0 %666
        %668 = vrot.lane.b32.xlu0 %v578, 111
        %v669 = vpop.permute.xlu0 %668
        %vm670 = vcmask 908288
        %v671 = vsel %vm670, %v667, %v669
        %v675 = vmul.f32 %v661, %v667
        %v676 = vmul.f32 %v662, %v671
        %v677 = vmul.f32 %v663, %v669
        %681 = vrot.lane.b32.xlu0 %v675, 17
        %v682 = vpop.permute.xlu0 %681
        %683 = vrot.lane.b32.xlu0 %v676, 17
        %v684 = vpop.permute.xlu0 %683
        %685 = vrot.lane.b32.xlu0 %v677, 17
        %v686 = vpop.permute.xlu0 %685
        %vm687 = vcmask 138240
        %v688 = vsel %vm687, %v682, %v684
        %v689 = vsel %vm687, %v684, %v686
        %692 = vst [vmem:[#allocation5] sm:$0xf] %v688
        %693 = vst [vmem:[#allocation5 + $0x8] sm:$0xf] %v689
        %v694 = vld [vmem:[#allocation2] sm:$0xf]
        %v695 = vld [vmem:[#allocation2 + $0x8] sm:$0xf]
        %v696 = vld [vmem:[#allocation2 + $0x10] sm:$0xf]
        %v700 = vrot.slane %v694, 4
        %v701 = vrot.slane %v695, 4
        %v702 = vrot.slane %v696, 4
        %703 = vrot.lane.b32.xlu0 %v700, 16
        %v704 = vpop.permute.xlu0 %703
        %705 = vrot.lane.b32.xlu0 %v701, 16
        %v706 = vpop.permute.xlu0 %705
        %707 = vrot.lane.b32.xlu0 %v702, 16
        %v708 = vpop.permute.xlu0 %707
        %vm709 = vcmask 130048
        %v710 = vsel %vm709, %v704, %v706
        %v711 = vsel %vm709, %v706, %v708
        %714 = vst [vmem:[#allocation5] sm:$0xf0] %v710
        %715 = vst [vmem:[#allocation5 + $0x8] sm:$0xf0] %v711
        %v716 = vld [vmem:[#allocation2] sm:$0xf]
        %v717 = vld [vmem:[#allocation2 + $0x8] sm:$0xf]
        %v718 = vld [vmem:[#allocation2 + $0x10] sm:$0xf]
        %721 = vrot.lane.b32.xlu0 %v583, 113
        %v722 = vpop.permute.xlu0 %721
        %723 = vrot.lane.b32.xlu0 %v584, 113
        %v724 = vpop.permute.xlu0 %723
        %vm725 = vcmask 924672
        %v726 = vsel %vm725, %v722, %v724
        %v730 = vmul.f32 %v716, %v722
        %v731 = vmul.f32 %v717, %v726
        %v732 = vmul.f32 %v718, %v724
        %736 = vrot.lane.b32.xlu0 %v730, 15
        %v737 = vpop.permute.xlu0 %736
        %738 = vrot.lane.b32.xlu0 %v731, 15
        %v739 = vpop.permute.xlu0 %738
        %740 = vrot.lane.b32.xlu0 %v732, 15
        %v741 = vpop.permute.xlu0 %740
        %vm742 = vcmask 121856
        %v743 = vsel %vm742, %v737, %v739
        %v744 = vsel %vm742, %v739, %v741
        %747 = vst [vmem:[#allocation5 + $0x10] sm:$0xf] %v743
        %748 = vst [vmem:[#allocation5 + $0x18] sm:$0xf] %v744
        %v749 = vld [vmem:[#allocation2] sm:$0xf]
        %v750 = vld [vmem:[#allocation2 + $0x8] sm:$0xf]
        %v751 = vld [vmem:[#allocation2 + $0x10] sm:$0xf]
        %752 = vrot.lane.b32.xlu0 %v577, 127
        %v753 = vpop.permute.xlu0 %752
        %754 = vrot.lane.b32.xlu0 %v578, 127
        %v755 = vpop.permute.xlu0 %754
        %vm756 = vcmask 1039360
        %v757 = vsel %vm756, %v753, %v755
        %v761 = vmul.f32 %v749, %v753
        %v762 = vmul.f32 %v750, %v757
        %v763 = vmul.f32 %v751, %v755
        %v767 = vrot.slane %v761, 4
        %v768 = vrot.slane %v762, 4
        %v769 = vrot.slane %v763, 4
        %770 = vrot.lane.b32.xlu0 %v767, 1
        %v771 = vpop.permute.xlu0 %770
        %772 = vrot.lane.b32.xlu0 %v768, 1
        %v773 = vpop.permute.xlu0 %772
        %774 = vrot.lane.b32.xlu0 %v769, 1
        %v775 = vpop.permute.xlu0 %774
        %vm776 = vcmask 7168
        %v777 = vsel %vm776, %v771, %v773
        %v778 = vsel %vm776, %v773, %v775
        %781 = vst [vmem:[#allocation5 + $0x10] sm:$0xf0] %v777
        %782 = vst [vmem:[#allocation5 + $0x18] sm:$0xf0] %v778
        %v783 = vld [vmem:[#allocation2 + $0x8] sm:$0xf]
        %v784 = vld [vmem:[#allocation2 + $0x10] sm:$0xf]
        %785 = vst [vmem:[#allocation5 + $0x20] sm:$0xf] %v783
        %786 = vst [vmem:[#allocation5 + $0x28] sm:$0xf] %v784
        %v787 = vld [vmem:[#allocation2 + $0x8] sm:$0xf]
        %v788 = vld [vmem:[#allocation2 + $0x10] sm:$0xf]
        %v789 = vld [vmem:[#allocation2 + $0x18] sm:$0xf]
        %790 = vrot.lane.b32.xlu0 %v583, 1
        %v791 = vpop.permute.xlu0 %790
        %792 = vrot.lane.b32.xlu0 %v584, 1
        %v793 = vpop.permute.xlu0 %792
        %v794 = vsel %vm776, %v791, %v793
        %v798 = vmul.f32 %v787, %v791
        %v799 = vmul.f32 %v788, %v794
        %v800 = vmul.f32 %v789, %v793
        %v804 = vrot.slane %v798, 4
        %v805 = vrot.slane %v799, 4
        %v806 = vrot.slane %v800, 4
        %807 = vrot.lane.b32.xlu0 %v804, 127
        %v808 = vpop.permute.xlu0 %807
        %809 = vrot.lane.b32.xlu0 %v805, 127
        %v810 = vpop.permute.xlu0 %809
        %811 = vrot.lane.b32.xlu0 %v806, 127
        %v812 = vpop.permute.xlu0 %811
        %v813 = vsel %vm756, %v808, %v810
        %v814 = vsel %vm756, %v810, %v812
        %817 = vst [vmem:[#allocation5 + $0x20] sm:$0xf0] %v813
        %818 = vst [vmem:[#allocation5 + $0x28] sm:$0xf0] %v814
        %v819 = vld [vmem:[#allocation2 + $0x8] sm:$0xf]
        %v820 = vld [vmem:[#allocation2 + $0x10] sm:$0xf]
        %v821 = vld [vmem:[#allocation2 + $0x18] sm:$0xf]
        %822 = vrot.lane.b32.xlu0 %v577, 15
        %v823 = vpop.permute.xlu0 %822
        %824 = vrot.lane.b32.xlu0 %v578, 15
        %v825 = vpop.permute.xlu0 %824
        %v826 = vsel %vm742, %v823, %v825
        %v830 = vmul.f32 %v819, %v823
        %v831 = vmul.f32 %v820, %v826
        %v832 = vmul.f32 %v821, %v825
        %836 = vrot.lane.b32.xlu0 %v830, 113
        %v837 = vpop.permute.xlu0 %836
        %838 = vrot.lane.b32.xlu0 %v831, 113
        %v839 = vpop.permute.xlu0 %838
        %840 = vrot.lane.b32.xlu0 %v832, 113
        %v841 = vpop.permute.xlu0 %840
        %v842 = vsel %vm725, %v837, %v839
        %v843 = vsel %vm725, %v839, %v841
        %846 = vst [vmem:[#allocation5 + $0x30] sm:$0xf] %v842
        %847 = vst [vmem:[#allocation5 + $0x38] sm:$0xf] %v843
        %v848 = vld [vmem:[#allocation2 + $0x8] sm:$0xf]
        %v849 = vld [vmem:[#allocation2 + $0x10] sm:$0xf]
        %v850 = vld [vmem:[#allocation2 + $0x18] sm:$0xf]
        %v854 = vrot.slane %v848, 4
        %v855 = vrot.slane %v849, 4
        %v856 = vrot.slane %v850, 4
        %857 = vrot.lane.b32.xlu0 %v854, 112
        %v858 = vpop.permute.xlu0 %857
        %859 = vrot.lane.b32.xlu0 %v855, 112
        %v860 = vpop.permute.xlu0 %859
        %861 = vrot.lane.b32.xlu0 %v856, 112
        %v862 = vpop.permute.xlu0 %861
        %vm863 = vcmask 916480
        %v864 = vsel %vm863, %v858, %v860
        %v865 = vsel %vm863, %v860, %v862
        %868 = vst [vmem:[#allocation5 + $0x30] sm:$0xf0] %v864
        %869 = vst [vmem:[#allocation5 + $0x38] sm:$0xf0] %v865
        %v870 = vld [vmem:[#allocation2 + $0x8] sm:$0xf]
        %v871 = vld [vmem:[#allocation2 + $0x10] sm:$0xf]
        %v872 = vld [vmem:[#allocation2 + $0x18] sm:$0xf]
        %873 = vrot.lane.b32.xlu0 %v583, 17
        %v874 = vpop.permute.xlu0 %873
        %875 = vrot.lane.b32.xlu0 %v584, 17
        %v876 = vpop.permute.xlu0 %875
        %v877 = vsel %vm687, %v874, %v876
        %v881 = vmul.f32 %v870, %v874
        %v882 = vmul.f32 %v871, %v877
        %v883 = vmul.f32 %v872, %v876
        %887 = vrot.lane.b32.xlu0 %v881, 111
        %v888 = vpop.permute.xlu0 %887
        %889 = vrot.lane.b32.xlu0 %v882, 111
        %v890 = vpop.permute.xlu0 %889
        %891 = vrot.lane.b32.xlu0 %v883, 111
        %v892 = vpop.permute.xlu0 %891
        %v893 = vsel %vm670, %v888, %v890
        %v894 = vsel %vm670, %v890, %v892
        %897 = vst [vmem:[#allocation5 + $0x40] sm:$0xf] %v893
        %898 = vst [vmem:[#allocation5 + $0x48] sm:$0xf] %v894
        %v899 = vld [vmem:[#allocation5] sm:$0xff]
        %v900 = vld [vmem:[#allocation5 + $0x8] sm:$0xff]
        %v901 = vld [vmem:[#allocation5 + $0x10] sm:$0xff]
        %v902 = vld [vmem:[#allocation5 + $0x18] sm:$0xff]
        %v903 = vld [vmem:[#allocation5 + $0x20] sm:$0xff]
        %v904 = vld [vmem:[#allocation5 + $0x28] sm:$0xff]
        %v905 = vld [vmem:[#allocation5 + $0x30] sm:$0xff]
        %v906 = vld [vmem:[#allocation5 + $0x38] sm:$0xff]
        %v907 = vld [vmem:[#allocation5 + $0x40] sm:$0xf]
        %v908 = vld [vmem:[#allocation5 + $0x48] sm:$0xf]
        %910 = vset.pattern.permute.xlu0 0
        %911 = vperm.xlu0 %910, %v659
        %v912 = vpop.permute.xlu0 %911
        %915 = vset.pattern.permute.xlu0 0
        %916 = vperm.xlu0 %915, %v660
        %v917 = vpop.permute.xlu0 %916
        %vm919 = vcmask 293888
        %v921 = vsel %vm919, %v657, 0
        %v924 = vsel %vm919, %v658, 0
        %vm926 = vcmask 1043456
        %v928 = vsel %vm926, %v907, 0
        %v931 = vsel %vm926, %v908, 0
        %933 = vmatprep.subr.mxu0 %v900
        %934 = vmatpush1.msra.mxu0 %v899
        %935 = vmatprep.subr.mxu0 %v902
        %936 = vmatpush1.msra.mxu0 %v901
        %937 = vmatprep.subr.mxu0 %v904
        %938 = vmatpush1.msra.mxu0 %v903
        %939 = vmatprep.subr.mxu0 %v906
        %940 = vmatpush1.msra.mxu0 %v905
        %941 = vmatprep.subr.mxu0 %v931
        %942 = vmatpush1.msra.mxu0 %v928
        %943 = vmatprep.subr.mxu0 0.0
        %944 = vmatpush1.msra.mxu0 0.0
        %945 = vmatprep.subr.mxu0 0.0
        %946 = vmatpush1.msra.mxu0 0.0
        %947 = vmatprep.subr.mxu0 0.0
        %948 = vmatpush1.msra.mxu0 0.0
        %949 = vmatprep.subr.mxu0 0.0
        %950 = vmatpush1.msra.mxu0 0.0
        %951 = vmatprep.subr.mxu0 0.0
        %952 = vmatpush1.msra.mxu0 0.0
        %953 = vmatprep.subr.mxu0 0.0
        %954 = vmatpush1.msra.mxu0 0.0
        %955 = vmatprep.subr.mxu0 0.0
        %956 = vmatpush1.msra.mxu0 0.0
        %957 = vmatprep.subr.mxu0 0.0
        %958 = vmatpush1.msra.mxu0 0.0
        %959 = vmatprep.subr.mxu0 0.0
        %960 = vmatpush1.msra.mxu0 0.0
        %961 = vmatprep.subr.mxu0 0.0
        %962 = vmatpush1.msra.mxu0 0.0
        %963 = vmatprep.subr.mxu0 0.0
        %964 = vmatpush1.msra.mxu0 0.0
        %965 = vmatprep.subr.mxu0 0.0
        %966 = vmatpush1.msra.mxu0 0.0
        %967 = vmatprep.subr.mxu0 0.0
        %968 = vmatpush1.msra.mxu0 0.0
        %969 = vmatprep.subr.mxu0 0.0
        %970 = vmatpush1.msra.mxu0 0.0
        %971 = vmatprep.subr.mxu0 0.0
        %972 = vmatpush1.msra.mxu0 0.0
        %973 = vmatprep.subr.mxu0 0.0
        %974 = vmatpush1.msra.mxu0 0.0
        %975 = vmatprep.subr.mxu0 0.0
        %976 = vmatpush1.msra.mxu0 0.0
        %977 = vmatprep.subr.mxu0 0.0
        %978 = vmatpush1.msra.mxu0 0.0
        %979 = vmatprep.subr.mxu0 0.0
        %980 = vmatpush1.msra.mxu0 0.0
        %981 = vmatprep.subr.mxu0 0.0
        %982 = vmatpush1.msra.mxu0 0.0
        %983 = vmatprep.subr.mxu0 0.0
        %984 = vmatpush1.msra.mxu0 0.0
        %985 = vmatprep.subr.mxu0 0.0
        %986 = vmatpush1.msra.mxu0 0.0
        %987 = vmatprep.subr.mxu0 0.0
        %988 = vmatpush1.msra.mxu0 0.0
        %989 = vmatprep.subr.mxu0 0.0
        %990 = vmatpush1.msra.mxu0 0.0
        %991 = vmatprep.subr.mxu0 0.0
        %992 = vmatpush1.msra.mxu0 0.0
        %993 = vmatprep.subr.mxu0 0.0
        %994 = vmatpush1.msra.mxu0 0.0
        %995 = vmatprep.subr.mxu0 0.0
        %996 = vmatpush1.msra.mxu0 0.0
        %997 = vmatprep.mubr.f32.mxu0 0.0
        %998 = vmatmul.mubr.f32.gmra.mrb[0].mxu0 %v921
        %v999 = vpop.f32.mrb[0].mxu0
        %v1000 = vadd.f32 %v912, %v999
        %v1001 = vpop.f32.mrb[0].mxu0
        %v1002 = vadd.f32 %v912, %v1001
        %1003 = vmatprep.mubr.f32.mxu0 0.0
        %1004 = vmatmul.mubr.f32.gmra.mrb[0].mxu0 %v924
        %v1005 = vpop.f32.mrb[0].mxu0
        %v1006 = vadd.f32 %v917, %v1005
        %v1007 = vpop.f32.mrb[0].mxu0
        %v1008 = vadd.f32 %v917, %v1007
        %1009 = vdwg.mxu0
        %vm1010 = vcmp.gt.f32.partialorder %v1000, 0.0
        %vm1011 = vcmp.gt.f32.partialorder %v1002, 0.0
        %vm1012 = vcmp.gt.f32.partialorder %v1006, 0.0
        %vm1013 = vcmp.gt.f32.partialorder %v1008, 0.0
        %v1014 = vmin.f32 %v1000, 0.0
        %v1015 = vmin.f32 %v1002, 0.0
        %v1016 = vmin.f32 %v1006, 0.0
        %v1017 = vmin.f32 %v1008, 0.0
        %v1018 = vmul.f32 %v1014, 1.442695
        %v1019 = vpow.pop %v1018
        %v1020 = vmul.f32 %v1015, 1.442695
        %v1021 = vpow.pop %v1020
        %v1022 = vmul.f32 %v1016, 1.442695
        %v1023 = vpow.pop %v1022
        %v1024 = vmul.f32 %v1017, 1.442695
        %v1025 = vpow.pop %v1024
        %v1026 = vsub.f32 %v1019, 1.0
        %v1027 = vsub.f32 %v1021, 1.0
        %v1028 = vsub.f32 %v1023, 1.0
        %v1029 = vsub.f32 %v1025, 1.0
        %v1030 = vsel %vm1010, %v1000, %v1026
        %v1031 = vsel %vm1011, %v1002, %v1027
        %v1032 = vsel %vm1012, %v1006, %v1028
        %v1033 = vsel %vm1013, %v1008, %v1029
        %1034 = vst [vmem:[#allocation3 + $0x8] sm:$0xff] %v1030
        %1035 = vst [vmem:[#allocation3 + $0x10] sm:$0xff] %v1031
        %1036 = vst [vmem:[#allocation3 + $0x28] sm:$0xff] %v1032
        %1037 = vst [vmem:[#allocation3 + $0x30] sm:$0xff] %v1033
        %v1038 = vld [vmem:[%s3] sm:$0xff]
        %v1039 = vld [vmem:[%s3 + $0x8] sm:$0xff]
        %v1040 = vld [vmem:[%s3 + $0x10] sm:$0xff]
        %v1041 = vld [vmem:[%s3 + $0x18] sm:$0xff]
        %v1042 = vld [vmem:[%s4] sm:$0xff]
        %v1043 = vld [vmem:[%s4 + $0x8] sm:$0xff]
        %v1044 = vld [vmem:[#allocation3] sm:$0xff]
        %v1045 = vld [vmem:[#allocation3 + $0x8] sm:$0xff]
        %v1046 = vld [vmem:[#allocation3 + $0x10] sm:$0xff]
        %v1047 = vld [vmem:[#allocation3 + $0x20] sm:$0xff]
        %v1048 = vld [vmem:[#allocation3 + $0x28] sm:$0xff]
        %v1049 = vld [vmem:[#allocation3 + $0x30] sm:$0xff]
        %v1050 = vmul.f32 %v1044, %v667
        %v1051 = vmul.f32 %v1045, %v671
        %v1052 = vmul.f32 %v1046, %v669
        %v1053 = vmul.f32 %v1047, %v667
        %v1054 = vmul.f32 %v1048, %v671
        %v1055 = vmul.f32 %v1049, %v669
        %1062 = vrot.lane.b32.xlu0 %v1050, 17
        %v1063 = vpop.permute.xlu0 %1062
        %1064 = vrot.lane.b32.xlu0 %v1051, 17
        %v1065 = vpop.permute.xlu0 %1064
        %1066 = vrot.lane.b32.xlu0 %v1052, 17
        %v1067 = vpop.permute.xlu0 %1066
        %1068 = vrot.lane.b32.xlu0 %v1053, 17
        %v1069 = vpop.permute.xlu0 %1068
        %1070 = vrot.lane.b32.xlu0 %v1054, 17
        %v1071 = vpop.permute.xlu0 %1070
        %1072 = vrot.lane.b32.xlu0 %v1055, 17
        %v1073 = vpop.permute.xlu0 %1072
        %v1074 = vsel %vm687, %v1063, %v1065
        %v1075 = vsel %vm687, %v1065, %v1067
        %v1076 = vsel %vm687, %v1069, %v1071
        %v1077 = vsel %vm687, %v1071, %v1073
        %1082 = vst [vmem:[#allocation5] sm:$0xff] %v1074
        %1083 = vst [vmem:[#allocation5 + $0x8] sm:$0xff] %v1075
        %1084 = vst [vmem:[#allocation5 + $0x10] sm:$0xff] %v1076
        %1085 = vst [vmem:[#allocation5 + $0x18] sm:$0xff] %v1077
        %v1086 = vld [vmem:[#allocation3] sm:$0xff]
        %v1087 = vld [vmem:[#allocation3 + $0x8] sm:$0xff]
        %v1088 = vld [vmem:[#allocation3 + $0x10] sm:$0xff]
        %v1089 = vld [vmem:[#allocation3 + $0x20] sm:$0xff]
        %v1090 = vld [vmem:[#allocation3 + $0x28] sm:$0xff]
        %v1091 = vld [vmem:[#allocation3 + $0x30] sm:$0xff]
        %1098 = vrot.lane.b32.xlu0 %v1086, 16
        %v1099 = vpop.permute.xlu0 %1098
        %1100 = vrot.lane.b32.xlu0 %v1087, 16
        %v1101 = vpop.permute.xlu0 %1100
        %1102 = vrot.lane.b32.xlu0 %v1088, 16
        %v1103 = vpop.permute.xlu0 %1102
        %1104 = vrot.lane.b32.xlu0 %v1089, 16
        %v1105 = vpop.permute.xlu0 %1104
        %1106 = vrot.lane.b32.xlu0 %v1090, 16
        %v1107 = vpop.permute.xlu0 %1106
        %1108 = vrot.lane.b32.xlu0 %v1091, 16
        %v1109 = vpop.permute.xlu0 %1108
        %v1110 = vsel %vm709, %v1099, %v1101
        %v1111 = vsel %vm709, %v1101, %v1103
        %v1112 = vsel %vm709, %v1105, %v1107
        %v1113 = vsel %vm709, %v1107, %v1109
        %1118 = vst [vmem:[#allocation5 + $0x20] sm:$0xff] %v1110
        %1119 = vst [vmem:[#allocation5 + $0x28] sm:$0xff] %v1111
        %1120 = vst [vmem:[#allocation5 + $0x30] sm:$0xff] %v1112
        %1121 = vst [vmem:[#allocation5 + $0x38] sm:$0xff] %v1113
        %v1122 = vld [vmem:[#allocation3] sm:$0xff]
        %v1123 = vld [vmem:[#allocation3 + $0x8] sm:$0xff]
        %v1124 = vld [vmem:[#allocation3 + $0x10] sm:$0xff]
        %v1125 = vld [vmem:[#allocation3 + $0x20] sm:$0xff]
        %v1126 = vld [vmem:[#allocation3 + $0x28] sm:$0xff]
        %v1127 = vld [vmem:[#allocation3 + $0x30] sm:$0xff]
        %v1128 = vmul.f32 %v1122, %v722
        %v1129 = vmul.f32 %v1123, %v726
        %v1130 = vmul.f32 %v1124, %v724
        %v1131 = vmul.f32 %v1125, %v722
        %v1132 = vmul.f32 %v1126, %v726
        %v1133 = vmul.f32 %v1127, %v724
        %1140 = vrot.lane.b32.xlu0 %v1128, 15
        %v1141 = vpop.permute.xlu0 %1140
        %1142 = vrot.lane.b32.xlu0 %v1129, 15
        %v1143 = vpop.permute.xlu0 %1142
        %1144 = vrot.lane.b32.xlu0 %v1130, 15
        %v1145 = vpop.permute.xlu0 %1144
        %1146 = vrot.lane.b32.xlu0 %v1131, 15
        %v1147 = vpop.permute.xlu0 %1146
        %1148 = vrot.lane.b32.xlu0 %v1132, 15
        %v1149 = vpop.permute.xlu0 %1148
        %1150 = vrot.lane.b32.xlu0 %v1133, 15
        %v1151 = vpop.permute.xlu0 %1150
        %v1152 = vsel %vm742, %v1141, %v1143
        %v1153 = vsel %vm742, %v1143, %v1145
        %v1154 = vsel %vm742, %v1147, %v1149
        %v1155 = vsel %vm742, %v1149, %v1151
        %1160 = vst [vmem:[#allocation5 + $0x40] sm:$0xff] %v1152
        %1161 = vst [vmem:[#allocation5 + $0x48] sm:$0xff] %v1153
        %1162 = vst [vmem:[#allocation5 + $0x50] sm:$0xff] %v1154
        %1163 = vst [vmem:[#allocation5 + $0x58] sm:$0xff] %v1155
        %v1164 = vld [vmem:[#allocation3] sm:$0xff]
        %v1165 = vld [vmem:[#allocation3 + $0x8] sm:$0xff]
        %v1166 = vld [vmem:[#allocation3 + $0x10] sm:$0xff]
        %v1167 = vld [vmem:[#allocation3 + $0x20] sm:$0xff]
        %v1168 = vld [vmem:[#allocation3 + $0x28] sm:$0xff]
        %v1169 = vld [vmem:[#allocation3 + $0x30] sm:$0xff]
        %v1170 = vmul.f32 %v1164, %v753
        %v1171 = vmul.f32 %v1165, %v757
        %v1172 = vmul.f32 %v1166, %v755
        %v1173 = vmul.f32 %v1167, %v753
        %v1174 = vmul.f32 %v1168, %v757
        %v1175 = vmul.f32 %v1169, %v755
        %1182 = vrot.lane.b32.xlu0 %v1170, 1
        %v1183 = vpop.permute.xlu0 %1182
        %1184 = vrot.lane.b32.xlu0 %v1171, 1
        %v1185 = vpop.permute.xlu0 %1184
        %1186 = vrot.lane.b32.xlu0 %v1172, 1
        %v1187 = vpop.permute.xlu0 %1186
        %1188 = vrot.lane.b32.xlu0 %v1173, 1
        %v1189 = vpop.permute.xlu0 %1188
        %1190 = vrot.lane.b32.xlu0 %v1174, 1
        %v1191 = vpop.permute.xlu0 %1190
        %1192 = vrot.lane.b32.xlu0 %v1175, 1
        %v1193 = vpop.permute.xlu0 %1192
        %v1194 = vsel %vm776, %v1183, %v1185
        %v1195 = vsel %vm776, %v1185, %v1187
        %v1196 = vsel %vm776, %v1189, %v1191
        %v1197 = vsel %vm776, %v1191, %v1193
        %1202 = vst [vmem:[#allocation5 + $0x60] sm:$0xff] %v1194
        %1203 = vst [vmem:[#allocation5 + $0x68] sm:$0xff] %v1195
        %1204 = vst [vmem:[#allocation5 + $0x70] sm:$0xff] %v1196
        %1205 = vst [vmem:[#allocation5 + $0x78] sm:$0xff] %v1197
        %v1206 = vld [vmem:[#allocation3 + $0x8] sm:$0xff]
        %v1207 = vld [vmem:[#allocation3 + $0x10] sm:$0xff]
        %v1208 = vld [vmem:[#allocation3 + $0x28] sm:$0xff]
        %v1209 = vld [vmem:[#allocation3 + $0x30] sm:$0xff]
        %1210 = vst [vmem:[#allocation5 + $0x80] sm:$0xff] %v1206
        %1211 = vst [vmem:[#allocation5 + $0x88] sm:$0xff] %v1207
        %1212 = vst [vmem:[#allocation5 + $0x90] sm:$0xff] %v1208
        %1213 = vst [vmem:[#allocation5 + $0x98] sm:$0xff] %v1209
        %v1214 = vld [vmem:[#allocation3 + $0x8] sm:$0xff]
        %v1215 = vld [vmem:[#allocation3 + $0x10] sm:$0xff]
        %v1216 = vld [vmem:[#allocation3 + $0x18] sm:$0xff]
        %v1217 = vld [vmem:[#allocation3 + $0x28] sm:$0xff]
        %v1218 = vld [vmem:[#allocation3 + $0x30] sm:$0xff]
        %v1219 = vld [vmem:[#allocation3 + $0x38] sm:$0xff]
        %v1220 = vmul.f32 %v1214, %v791
        %v1221 = vmul.f32 %v1215, %v794
        %v1222 = vmul.f32 %v1216, %v793
        %v1223 = vmul.f32 %v1217, %v791
        %v1224 = vmul.f32 %v1218, %v794
        %v1225 = vmul.f32 %v1219, %v793
        %1232 = vrot.lane.b32.xlu0 %v1220, 127
        %v1233 = vpop.permute.xlu0 %1232
        %1234 = vrot.lane.b32.xlu0 %v1221, 127
        %v1235 = vpop.permute.xlu0 %1234
        %1236 = vrot.lane.b32.xlu0 %v1222, 127
        %v1237 = vpop.permute.xlu0 %1236
        %1238 = vrot.lane.b32.xlu0 %v1223, 127
        %v1239 = vpop.permute.xlu0 %1238
        %1240 = vrot.lane.b32.xlu0 %v1224, 127
        %v1241 = vpop.permute.xlu0 %1240
        %1242 = vrot.lane.b32.xlu0 %v1225, 127
        %v1243 = vpop.permute.xlu0 %1242
        %v1244 = vsel %vm756, %v1233, %v1235
        %v1245 = vsel %vm756, %v1235, %v1237
        %v1246 = vsel %vm756, %v1239, %v1241
        %v1247 = vsel %vm756, %v1241, %v1243
        %1252 = vst [vmem:[#allocation5 + $0xa0] sm:$0xff] %v1244
        %1253 = vst [vmem:[#allocation5 + $0xa8] sm:$0xff] %v1245
        %1254 = vst [vmem:[#allocation5 + $0xb0] sm:$0xff] %v1246
        %1255 = vst [vmem:[#allocation5 + $0xb8] sm:$0xff] %v1247
        %v1256 = vld [vmem:[#allocation3 + $0x8] sm:$0xff]
        %v1257 = vld [vmem:[#allocation3 + $0x10] sm:$0xff]
        %v1258 = vld [vmem:[#allocation3 + $0x18] sm:$0xff]
        %v1259 = vld [vmem:[#allocation3 + $0x28] sm:$0xff]
        %v1260 = vld [vmem:[#allocation3 + $0x30] sm:$0xff]
        %v1261 = vld [vmem:[#allocation3 + $0x38] sm:$0xff]
        %v1262 = vmul.f32 %v1256, %v823
        %v1263 = vmul.f32 %v1257, %v826
        %v1264 = vmul.f32 %v1258, %v825
        %v1265 = vmul.f32 %v1259, %v823
        %v1266 = vmul.f32 %v1260, %v826
        %v1267 = vmul.f32 %v1261, %v825
        %1274 = vrot.lane.b32.xlu0 %v1262, 113
        %v1275 = vpop.permute.xlu0 %1274
        %1276 = vrot.lane.b32.xlu0 %v1263, 113
        %v1277 = vpop.permute.xlu0 %1276
        %1278 = vrot.lane.b32.xlu0 %v1264, 113
        %v1279 = vpop.permute.xlu0 %1278
        %1280 = vrot.lane.b32.xlu0 %v1265, 113
        %v1281 = vpop.permute.xlu0 %1280
        %1282 = vrot.lane.b32.xlu0 %v1266, 113
        %v1283 = vpop.permute.xlu0 %1282
        %1284 = vrot.lane.b32.xlu0 %v1267, 113
        %v1285 = vpop.permute.xlu0 %1284
        %v1286 = vsel %vm725, %v1275, %v1277
        %v1287 = vsel %vm725, %v1277, %v1279
        %v1288 = vsel %vm725, %v1281, %v1283
        %v1289 = vsel %vm725, %v1283, %v1285
        %1294 = vst [vmem:[#allocation5 + $0xc0] sm:$0xff] %v1286
        %1295 = vst [vmem:[#allocation5 + $0xc8] sm:$0xff] %v1287
        %1296 = vst [vmem:[#allocation5 + $0xd0] sm:$0xff] %v1288
        %1297 = vst [vmem:[#allocation5 + $0xd8] sm:$0xff] %v1289
        %v1298 = vld [vmem:[#allocation3 + $0x8] sm:$0xff]
        %v1299 = vld [vmem:[#allocation3 + $0x10] sm:$0xff]
        %v1300 = vld [vmem:[#allocation3 + $0x18] sm:$0xff]
        %v1301 = vld [vmem:[#allocation3 + $0x28] sm:$0xff]
        %v1302 = vld [vmem:[#allocation3 + $0x30] sm:$0xff]
        %v1303 = vld [vmem:[#allocation3 + $0x38] sm:$0xff]
        %1310 = vrot.lane.b32.xlu0 %v1298, 112
        %v1311 = vpop.permute.xlu0 %1310
        %1312 = vrot.lane.b32.xlu0 %v1299, 112
        %v1313 = vpop.permute.xlu0 %1312
        %1314 = vrot.lane.b32.xlu0 %v1300, 112
        %v1315 = vpop.permute.xlu0 %1314
        %1316 = vrot.lane.b32.xlu0 %v1301, 112
        %v1317 = vpop.permute.xlu0 %1316
        %1318 = vrot.lane.b32.xlu0 %v1302, 112
        %v1319 = vpop.permute.xlu0 %1318
        %1320 = vrot.lane.b32.xlu0 %v1303, 112
        %v1321 = vpop.permute.xlu0 %1320
        %v1322 = vsel %vm863, %v1311, %v1313
        %v1323 = vsel %vm863, %v1313, %v1315
        %v1324 = vsel %vm863, %v1317, %v1319
        %v1325 = vsel %vm863, %v1319, %v1321
        %1330 = vst [vmem:[#allocation5 + $0xe0] sm:$0xff] %v1322
        %1331 = vst [vmem:[#allocation5 + $0xe8] sm:$0xff] %v1323
        %1332 = vst [vmem:[#allocation5 + $0xf0] sm:$0xff] %v1324
        %1333 = vst [vmem:[#allocation5 + $0xf8] sm:$0xff] %v1325
        %v1334 = vld [vmem:[#allocation3 + $0x8] sm:$0xff]
        %v1335 = vld [vmem:[#allocation3 + $0x10] sm:$0xff]
        %v1336 = vld [vmem:[#allocation3 + $0x18] sm:$0xff]
        %v1337 = vld [vmem:[#allocation3 + $0x28] sm:$0xff]
        %v1338 = vld [vmem:[#allocation3 + $0x30] sm:$0xff]
        %v1339 = vld [vmem:[#allocation3 + $0x38] sm:$0xff]
        %v1340 = vmul.f32 %v1334, %v874
        %v1341 = vmul.f32 %v1335, %v877
        %v1342 = vmul.f32 %v1336, %v876
        %v1343 = vmul.f32 %v1337, %v874
        %v1344 = vmul.f32 %v1338, %v877
        %v1345 = vmul.f32 %v1339, %v876
        %1352 = vrot.lane.b32.xlu0 %v1340, 111
        %v1353 = vpop.permute.xlu0 %1352
        %1354 = vrot.lane.b32.xlu0 %v1341, 111
        %v1355 = vpop.permute.xlu0 %1354
        %1356 = vrot.lane.b32.xlu0 %v1342, 111
        %v1357 = vpop.permute.xlu0 %1356
        %1358 = vrot.lane.b32.xlu0 %v1343, 111
        %v1359 = vpop.permute.xlu0 %1358
        %1360 = vrot.lane.b32.xlu0 %v1344, 111
        %v1361 = vpop.permute.xlu0 %1360
        %1362 = vrot.lane.b32.xlu0 %v1345, 111
        %v1363 = vpop.permute.xlu0 %1362
        %v1364 = vsel %vm670, %v1353, %v1355
        %v1365 = vsel %vm670, %v1355, %v1357
        %v1366 = vsel %vm670, %v1359, %v1361
        %v1367 = vsel %vm670, %v1361, %v1363
        %1372 = vst [vmem:[#allocation5 + $0x100] sm:$0xff] %v1364
        %1373 = vst [vmem:[#allocation5 + $0x108] sm:$0xff] %v1365
        %1374 = vst [vmem:[#allocation5 + $0x110] sm:$0xff] %v1366
        %1375 = vst [vmem:[#allocation5 + $0x118] sm:$0xff] %v1367
        %v1376 = vld [vmem:[#allocation5] sm:$0xff]
        %v1377 = vld [vmem:[#allocation5 + $0x8] sm:$0xff]
        %v1378 = vld [vmem:[#allocation5 + $0x10] sm:$0xff]
        %v1379 = vld [vmem:[#allocation5 + $0x18] sm:$0xff]
        %v1380 = vld [vmem:[#allocation5 + $0x20] sm:$0xff]
        %v1381 = vld [vmem:[#allocation5 + $0x28] sm:$0xff]
        %v1382 = vld [vmem:[#allocation5 + $0x30] sm:$0xff]
        %v1383 = vld [vmem:[#allocation5 + $0x38] sm:$0xff]
        %v1384 = vld [vmem:[#allocation5 + $0x40] sm:$0xff]
        %v1385 = vld [vmem:[#allocation5 + $0x48] sm:$0xff]
        %v1386 = vld [vmem:[#allocation5 + $0x50] sm:$0xff]
        %v1387 = vld [vmem:[#allocation5 + $0x58] sm:$0xff]
        %v1388 = vld [vmem:[#allocation5 + $0x60] sm:$0xff]
        %v1389 = vld [vmem:[#allocation5 + $0x68] sm:$0xff]
        %v1390 = vld [vmem:[#allocation5 + $0x70] sm:$0xff]
        %v1391 = vld [vmem:[#allocation5 + $0x78] sm:$0xff]
        %v1392 = vld [vmem:[#allocation5 + $0x80] sm:$0xff]
        %v1393 = vld [vmem:[#allocation5 + $0x88] sm:$0xff]
        %v1394 = vld [vmem:[#allocation5 + $0x90] sm:$0xff]
        %v1395 = vld [vmem:[#allocation5 + $0x98] sm:$0xff]
        %v1396 = vld [vmem:[#allocation5 + $0xa0] sm:$0xff]
        %v1397 = vld [vmem:[#allocation5 + $0xa8] sm:$0xff]
        %v1398 = vld [vmem:[#allocation5 + $0xb0] sm:$0xff]
        %v1399 = vld [vmem:[#allocation5 + $0xb8] sm:$0xff]
        %v1400 = vld [vmem:[#allocation5 + $0xc0] sm:$0xff]
        %v1401 = vld [vmem:[#allocation5 + $0xc8] sm:$0xff]
        %v1402 = vld [vmem:[#allocation5 + $0xd0] sm:$0xff]
        %v1403 = vld [vmem:[#allocation5 + $0xd8] sm:$0xff]
        %v1404 = vld [vmem:[#allocation5 + $0xe0] sm:$0xff]
        %v1405 = vld [vmem:[#allocation5 + $0xe8] sm:$0xff]
        %v1406 = vld [vmem:[#allocation5 + $0xf0] sm:$0xff]
        %v1407 = vld [vmem:[#allocation5 + $0xf8] sm:$0xff]
        %v1408 = vld [vmem:[#allocation5 + $0x100] sm:$0xff]
        %v1409 = vld [vmem:[#allocation5 + $0x108] sm:$0xff]
        %v1410 = vld [vmem:[#allocation5 + $0x110] sm:$0xff]
        %v1411 = vld [vmem:[#allocation5 + $0x118] sm:$0xff]
        %1413 = vset.pattern.permute.xlu0 0
        %1414 = vperm.xlu0 %1413, %v1042
        %v1415 = vpop.permute.xlu0 %1414
        %1418 = vset.pattern.permute.xlu0 0
        %1419 = vperm.xlu0 %1418, %v1043
        %v1420 = vpop.permute.xlu0 %1419
        %v1423 = vsel %vm709, %v1039, 0
        %v1426 = vsel %vm709, %v1041, 0
        %1428 = vmatprep.subr.mxu0 %v1377
        %1429 = vmatpush1.msra.mxu0 %v1376
        %1430 = vmatprep.subr.mxu0 %v1379
        %1431 = vmatpush1.msra.mxu0 %v1378
        %1432 = vmatprep.subr.mxu0 %v1381
        %1433 = vmatpush1.msra.mxu0 %v1380
        %1434 = vmatprep.subr.mxu0 %v1383
        %1435 = vmatpush1.msra.mxu0 %v1382
        %1436 = vmatprep.subr.mxu0 %v1385
        %1437 = vmatpush1.msra.mxu0 %v1384
        %1438 = vmatprep.subr.mxu0 %v1387
        %1439 = vmatpush1.msra.mxu0 %v1386
        %1440 = vmatprep.subr.mxu0 %v1389
        %1441 = vmatpush1.msra.mxu0 %v1388
        %1442 = vmatprep.subr.mxu0 %v1391
        %1443 = vmatpush1.msra.mxu0 %v1390
        %1444 = vmatprep.subr.mxu0 %v1393
        %1445 = vmatpush1.msra.mxu0 %v1392
        %1446 = vmatprep.subr.mxu0 %v1395
        %1447 = vmatpush1.msra.mxu0 %v1394
        %1448 = vmatprep.subr.mxu0 %v1397
        %1449 = vmatpush1.msra.mxu0 %v1396
        %1450 = vmatprep.subr.mxu0 %v1399
        %1451 = vmatpush1.msra.mxu0 %v1398
        %1452 = vmatprep.subr.mxu0 %v1401
        %1453 = vmatpush1.msra.mxu0 %v1400
        %1454 = vmatprep.subr.mxu0 %v1403
        %1455 = vmatpush1.msra.mxu0 %v1402
        %1456 = vmatprep.subr.mxu0 %v1405
        %1457 = vmatpush1.msra.mxu0 %v1404
        %1458 = vmatprep.subr.mxu0 %v1407
        %1459 = vmatpush1.msra.mxu0 %v1406
        %1460 = vmatprep.subr.mxu0 %v1409
        %1461 = vmatpush1.msra.mxu0 %v1408
        %1462 = vmatprep.subr.mxu0 %v1411
        %1463 = vmatpush1.msra.mxu0 %v1410
        %1464 = vmatprep.subr.mxu0 0.0
        %1465 = vmatpush1.msra.mxu0 0.0
        %1466 = vmatprep.subr.mxu0 0.0
        %1467 = vmatpush1.msra.mxu0 0.0
        %1468 = vmatprep.subr.mxu0 0.0
        %1469 = vmatpush1.msra.mxu0 0.0
        %1470 = vmatprep.subr.mxu0 0.0
        %1471 = vmatpush1.msra.mxu0 0.0
        %1472 = vmatprep.subr.mxu0 0.0
        %1473 = vmatpush1.msra.mxu0 0.0
        %1474 = vmatprep.subr.mxu0 0.0
        %1475 = vmatpush1.msra.mxu0 0.0
        %1476 = vmatprep.subr.mxu0 0.0
        %1477 = vmatpush1.msra.mxu0 0.0
        %1478 = vmatprep.subr.mxu0 0.0
        %1479 = vmatpush1.msra.mxu0 0.0
        %1480 = vmatprep.subr.mxu0 0.0
        %1481 = vmatpush1.msra.mxu0 0.0
        %1482 = vmatprep.subr.mxu0 0.0
        %1483 = vmatpush1.msra.mxu0 0.0
        %1484 = vmatprep.subr.mxu0 0.0
        %1485 = vmatpush1.msra.mxu0 0.0
        %1486 = vmatprep.subr.mxu0 0.0
        %1487 = vmatpush1.msra.mxu0 0.0
        %1488 = vmatprep.subr.mxu0 0.0
        %1489 = vmatpush1.msra.mxu0 0.0
        %1490 = vmatprep.subr.mxu0 0.0
        %1491 = vmatpush1.msra.mxu0 0.0
        %1492 = vmatprep.mubr.f32.mxu0 %v1423
        %1493 = vmatmul.mubr.f32.gmra.mrb[0].mxu0 %v1038
        %v1494 = vpop.f32.mrb[0].mxu0
        %v1495 = vadd.f32 %v1415, %v1494
        %v1496 = vpop.f32.mrb[0].mxu0
        %v1497 = vadd.f32 %v1415, %v1496
        %1498 = vmatprep.mubr.f32.mxu0 %v1426
        %1499 = vmatmul.mubr.f32.gmra.mrb[0].mxu0 %v1040
        %v1500 = vpop.f32.mrb[0].mxu0
        %v1501 = vadd.f32 %v1420, %v1500
        %v1502 = vpop.f32.mrb[0].mxu0
        %v1503 = vadd.f32 %v1420, %v1502
        %1504 = vdwg.mxu0
        %vm1505 = vcmp.gt.f32.partialorder %v1495, 0.0
        %vm1506 = vcmp.gt.f32.partialorder %v1497, 0.0
        %vm1507 = vcmp.gt.f32.partialorder %v1501, 0.0
        %vm1508 = vcmp.gt.f32.partialorder %v1503, 0.0
        %v1509 = vmin.f32 %v1495, 0.0
        %v1510 = vmin.f32 %v1497, 0.0
        %v1511 = vmin.f32 %v1501, 0.0
        %v1512 = vmin.f32 %v1503, 0.0
        %v1513 = vmul.f32 %v1509, 1.442695
        %v1514 = vpow.pop %v1513
        %v1515 = vmul.f32 %v1510, 1.442695
        %v1516 = vpow.pop %v1515
        %v1517 = vmul.f32 %v1511, 1.442695
        %v1518 = vpow.pop %v1517
        %v1519 = vmul.f32 %v1512, 1.442695
        %v1520 = vpow.pop %v1519
        %v1521 = vsub.f32 %v1514, 1.0
        %v1522 = vsub.f32 %v1516, 1.0
        %v1523 = vsub.f32 %v1518, 1.0
        %v1524 = vsub.f32 %v1520, 1.0
        %v1525 = vsel %vm1505, %v1495, %v1521
        %v1526 = vsel %vm1506, %v1497, %v1522
        %v1527 = vsel %vm1507, %v1501, %v1523
        %v1528 = vsel %vm1508, %v1503, %v1524
        %1529 = vst [vmem:[#allocation4] sm:$0xff] %v1525
        %1530 = vst [vmem:[#allocation4 + $0x8] sm:$0xff] %v1526
        %1531 = vst [vmem:[#allocation4 + $0x10] sm:$0xff] %v1527
        %1532 = vst [vmem:[#allocation4 + $0x18] sm:$0xff] %v1528
        %v1533 = vld [vmem:[#allocation4] sm:$0xff]
        %v1534 = vld [vmem:[#allocation4 + $0x10] sm:$0xff]
        %1537 = vrot.lane.b32.xlu0 %v1533, 112
        %v1538 = vpop.permute.xlu0 %1537
        %1539 = vrot.lane.b32.xlu0 %v1534, 112
        %v1540 = vpop.permute.xlu0 %1539
        %v1543 = vmax.f32 %v1533, %v1538
        %v1544 = vmax.f32 %v1534, %v1540
        %v1546 = vsel %vm709, %v1543, 0
        %v1549 = vsel %vm709, %v1544, 0
        %1551 = vmatprep.subr.mxu0 0.0
        %1552 = vmatpush1.msra.mxu0 %v593
        %1553 = vmatprep.subr.mxu0 0.0
        %1554 = vmatpush1.msra.mxu0 %v594
        %1555 = vmatprep.subr.mxu0 0.0
        %1556 = vmatpush1.msra.mxu0 0.0
        %1557 = vmatprep.subr.mxu0 0.0
        %1558 = vmatpush1.msra.mxu0 0.0
        %1559 = vmatprep.subr.mxu0 0.0
        %1560 = vmatpush1.msra.mxu0 0.0
        %1561 = vmatprep.subr.mxu0 0.0
        %1562 = vmatpush1.msra.mxu0 0.0
        %1563 = vmatprep.subr.mxu0 0.0
        %1564 = vmatpush1.msra.mxu0 0.0
        %1565 = vmatprep.subr.mxu0 0.0
        %1566 = vmatpush1.msra.mxu0 0.0
        %1567 = vmatprep.subr.mxu0 0.0
        %1568 = vmatpush1.msra.mxu0 0.0
        %1569 = vmatprep.subr.mxu0 0.0
        %1570 = vmatpush1.msra.mxu0 0.0
        %1571 = vmatprep.subr.mxu0 0.0
        %1572 = vmatpush1.msra.mxu0 0.0
        %1573 = vmatprep.subr.mxu0 0.0
        %1574 = vmatpush1.msra.mxu0 0.0
        %1575 = vmatprep.subr.mxu0 0.0
        %1576 = vmatpush1.msra.mxu0 0.0
        %1577 = vmatprep.subr.mxu0 0.0
        %1578 = vmatpush1.msra.mxu0 0.0
        %1579 = vmatprep.subr.mxu0 0.0
        %1580 = vmatpush1.msra.mxu0 0.0
        %1581 = vmatprep.subr.mxu0 0.0
        %1582 = vmatpush1.msra.mxu0 0.0
        %1583 = vmatprep.subr.mxu0 0.0
        %1584 = vmatpush1.msra.mxu0 0.0
        %1585 = vmatprep.subr.mxu0 0.0
        %1586 = vmatpush1.msra.mxu0 0.0
        %1587 = vmatprep.subr.mxu0 0.0
        %1588 = vmatpush1.msra.mxu0 0.0
        %1589 = vmatprep.subr.mxu0 0.0
        %1590 = vmatpush1.msra.mxu0 0.0
        %1591 = vmatprep.subr.mxu0 0.0
        %1592 = vmatpush1.msra.mxu0 0.0
        %1593 = vmatprep.subr.mxu0 0.0
        %1594 = vmatpush1.msra.mxu0 0.0
        %1595 = vmatprep.subr.mxu0 0.0
        %1596 = vmatpush1.msra.mxu0 0.0
        %1597 = vmatprep.subr.mxu0 0.0
        %1598 = vmatpush1.msra.mxu0 0.0
        %1599 = vmatprep.subr.mxu0 0.0
        %1600 = vmatpush1.msra.mxu0 0.0
        %1601 = vmatprep.subr.mxu0 0.0
        %1602 = vmatpush1.msra.mxu0 0.0
        %1603 = vmatprep.subr.mxu0 0.0
        %1604 = vmatpush1.msra.mxu0 0.0
        %1605 = vmatprep.subr.mxu0 0.0
        %1606 = vmatpush1.msra.mxu0 0.0
        %1607 = vmatprep.subr.mxu0 0.0
        %1608 = vmatpush1.msra.mxu0 0.0
        %1609 = vmatprep.subr.mxu0 0.0
        %1610 = vmatpush1.msra.mxu0 0.0
        %1611 = vmatprep.subr.mxu0 0.0
        %1612 = vmatpush1.msra.mxu0 0.0
        %1613 = vmatprep.subr.mxu0 0.0
        %1614 = vmatpush1.msra.mxu0 0.0
        %1615 = vmatprep.mubr.f32.mxu0 0.0
        %1616 = vmatmul.mubr.f32.gmra.mrb[0].mxu0 %v1546
        %v1617 = vpop.f32.mrb[0].mxu0
        %v1618 = vadd.f32 0.0, %v1617
        %v1619 = vpop.f32.mrb[0].mxu0
        %1620 = vmatprep.mubr.f32.mxu0 0.0
        %1621 = vmatmul.mubr.f32.gmra.mrb[0].mxu0 %v1549
        %v1622 = vpop.f32.mrb[0].mxu0
        %v1623 = vadd.f32 0.0, %v1622
        %v1624 = vpop.f32.mrb[0].mxu0
        %1625 = vdwg.mxu0
        %1626 = vmatprep.subr.mxu0 0.0
        %1627 = vmatpush1.msra.mxu0 %v600
        %1628 = vmatprep.subr.mxu0 0.0
        %1629 = vmatpush1.msra.mxu0 %v601
        %1630 = vmatprep.subr.mxu0 0.0
        %1631 = vmatpush1.msra.mxu0 0.0
        %1632 = vmatprep.subr.mxu0 0.0
        %1633 = vmatpush1.msra.mxu0 0.0
        %1634 = vmatprep.subr.mxu0 0.0
        %1635 = vmatpush1.msra.mxu0 0.0
        %1636 = vmatprep.subr.mxu0 0.0
        %1637 = vmatpush1.msra.mxu0 0.0
        %1638 = vmatprep.subr.mxu0 0.0
        %1639 = vmatpush1.msra.mxu0 0.0
        %1640 = vmatprep.subr.mxu0 0.0
        %1641 = vmatpush1.msra.mxu0 0.0
        %1642 = vmatprep.subr.mxu0 0.0
        %1643 = vmatpush1.msra.mxu0 0.0
        %1644 = vmatprep.subr.mxu0 0.0
        %1645 = vmatpush1.msra.mxu0 0.0
        %1646 = vmatprep.subr.mxu0 0.0
        %1647 = vmatpush1.msra.mxu0 0.0
        %1648 = vmatprep.subr.mxu0 0.0
        %1649 = vmatpush1.msra.mxu0 0.0
        %1650 = vmatprep.subr.mxu0 0.0
        %1651 = vmatpush1.msra.mxu0 0.0
        %1652 = vmatprep.subr.mxu0 0.0
        %1653 = vmatpush1.msra.mxu0 0.0
        %1654 = vmatprep.subr.mxu0 0.0
        %1655 = vmatpush1.msra.mxu0 0.0
        %1656 = vmatprep.subr.mxu0 0.0
        %1657 = vmatpush1.msra.mxu0 0.0
        %1658 = vmatprep.subr.mxu0 0.0
        %1659 = vmatpush1.msra.mxu0 0.0
        %1660 = vmatprep.subr.mxu0 0.0
        %1661 = vmatpush1.msra.mxu0 0.0
        %1662 = vmatprep.subr.mxu0 0.0
        %1663 = vmatpush1.msra.mxu0 0.0
        %1664 = vmatprep.subr.mxu0 0.0
        %1665 = vmatpush1.msra.mxu0 0.0
        %1666 = vmatprep.subr.mxu0 0.0
        %1667 = vmatpush1.msra.mxu0 0.0
        %1668 = vmatprep.subr.mxu0 0.0
        %1669 = vmatpush1.msra.mxu0 0.0
        %1670 = vmatprep.subr.mxu0 0.0
        %1671 = vmatpush1.msra.mxu0 0.0
        %1672 = vmatprep.subr.mxu0 0.0
        %1673 = vmatpush1.msra.mxu0 0.0
        %1674 = vmatprep.subr.mxu0 0.0
        %1675 = vmatpush1.msra.mxu0 0.0
        %1676 = vmatprep.subr.mxu0 0.0
        %1677 = vmatpush1.msra.mxu0 0.0
        %1678 = vmatprep.subr.mxu0 0.0
        %1679 = vmatpush1.msra.mxu0 0.0
        %1680 = vmatprep.subr.mxu0 0.0
        %1681 = vmatpush1.msra.mxu0 0.0
        %1682 = vmatprep.subr.mxu0 0.0
        %1683 = vmatpush1.msra.mxu0 0.0
        %1684 = vmatprep.subr.mxu0 0.0
        %1685 = vmatpush1.msra.mxu0 0.0
        %1686 = vmatprep.subr.mxu0 0.0
        %1687 = vmatpush1.msra.mxu0 0.0
        %1688 = vmatprep.subr.mxu0 0.0
        %1689 = vmatpush1.msra.mxu0 0.0
        %1690 = vmatprep.mubr.f32.mxu0 0.0
        %1691 = vmatmul.mubr.f32.gmra.mrb[0].mxu0 %v1546
        %v1692 = vpop.f32.mrb[0].mxu0
        %v1693 = vadd.f32 0.0, %v1692
        %v1694 = vpop.f32.mrb[0].mxu0
        %1695 = vmatprep.mubr.f32.mxu0 0.0
        %1696 = vmatmul.mubr.f32.gmra.mrb[0].mxu0 %v1549
        %v1697 = vpop.f32.mrb[0].mxu0
        %v1698 = vadd.f32 0.0, %v1697
        %v1699 = vpop.f32.mrb[0].mxu0
        %1700 = vdwg.mxu0
        %v1701 = vmax.f32 %v1618, %v1693
        %v1702 = vmax.f32 %v1623, %v1698
        %vm1703 = vcmask 64512
        %1704 = vst.msk [vmem:[#allocation2 + $0x8] sm:$0xff] %vm1703, %v1701
        %1705 = vst.msk [vmem:[#allocation2 + $0x28] sm:$0xff] %vm1703, %v1702
        %v1706 = vld [vmem:[#allocation4] sm:$0xff]
        %v1707 = vld [vmem:[#allocation4 + $0x10] sm:$0xff]
        %1710 = vrot.lane.b32.xlu0 %v1706, 112
        %v1711 = vpop.permute.xlu0 %1710
        %1712 = vrot.lane.b32.xlu0 %v1707, 112
        %v1713 = vpop.permute.xlu0 %1712
        %v1716 = vmax.f32 %v1706, %v1711
        %v1717 = vmax.f32 %v1707, %v1713
        %1720 = vrot.lane.b32.xlu0 %v1716, 96
        %v1721 = vpop.permute.xlu0 %1720
        %1722 = vrot.lane.b32.xlu0 %v1717, 96
        %v1723 = vpop.permute.xlu0 %1722
        %v1724 = vsel %vm709, %v1721, 0
        %v1726 = vsel %vm709, %v1723, 0
        %1728 = vmatprep.subr.mxu0 0.0
        %1729 = vmatpush1.msra.mxu0 %v593
        %1730 = vmatprep.subr.mxu0 0.0
        %1731 = vmatpush1.msra.mxu0 %v594
        %1732 = vmatprep.subr.mxu0 0.0
        %1733 = vmatpush1.msra.mxu0 0.0
        %1734 = vmatprep.subr.mxu0 0.0
        %1735 = vmatpush1.msra.mxu0 0.0
        %1736 = vmatprep.subr.mxu0 0.0
        %1737 = vmatpush1.msra.mxu0 0.0
        %1738 = vmatprep.subr.mxu0 0.0
        %1739 = vmatpush1.msra.mxu0 0.0
        %1740 = vmatprep.subr.mxu0 0.0
        %1741 = vmatpush1.msra.mxu0 0.0
        %1742 = vmatprep.subr.mxu0 0.0
        %1743 = vmatpush1.msra.mxu0 0.0
        %1744 = vmatprep.subr.mxu0 0.0
        %1745 = vmatpush1.msra.mxu0 0.0
        %1746 = vmatprep.subr.mxu0 0.0
        %1747 = vmatpush1.msra.mxu0 0.0
        %1748 = vmatprep.subr.mxu0 0.0
        %1749 = vmatpush1.msra.mxu0 0.0
        %1750 = vmatprep.subr.mxu0 0.0
        %1751 = vmatpush1.msra.mxu0 0.0
        %1752 = vmatprep.subr.mxu0 0.0
        %1753 = vmatpush1.msra.mxu0 0.0
        %1754 = vmatprep.subr.mxu0 0.0
        %1755 = vmatpush1.msra.mxu0 0.0
        %1756 = vmatprep.subr.mxu0 0.0
        %1757 = vmatpush1.msra.mxu0 0.0
        %1758 = vmatprep.subr.mxu0 0.0
        %1759 = vmatpush1.msra.mxu0 0.0
        %1760 = vmatprep.subr.mxu0 0.0
        %1761 = vmatpush1.msra.mxu0 0.0
        %1762 = vmatprep.subr.mxu0 0.0
        %1763 = vmatpush1.msra.mxu0 0.0
        %1764 = vmatprep.subr.mxu0 0.0
        %1765 = vmatpush1.msra.mxu0 0.0
        %1766 = vmatprep.subr.mxu0 0.0
        %1767 = vmatpush1.msra.mxu0 0.0
        %1768 = vmatprep.subr.mxu0 0.0
        %1769 = vmatpush1.msra.mxu0 0.0
        %1770 = vmatprep.subr.mxu0 0.0
        %1771 = vmatpush1.msra.mxu0 0.0
        %1772 = vmatprep.subr.mxu0 0.0
        %1773 = vmatpush1.msra.mxu0 0.0
        %1774 = vmatprep.subr.mxu0 0.0
        %1775 = vmatpush1.msra.mxu0 0.0
        %1776 = vmatprep.subr.mxu0 0.0
        %1777 = vmatpush1.msra.mxu0 0.0
        %1778 = vmatprep.subr.mxu0 0.0
        %1779 = vmatpush1.msra.mxu0 0.0
        %1780 = vmatprep.subr.mxu0 0.0
        %1781 = vmatpush1.msra.mxu0 0.0
        %1782 = vmatprep.subr.mxu0 0.0
        %1783 = vmatpush1.msra.mxu0 0.0
        %1784 = vmatprep.subr.mxu0 0.0
        %1785 = vmatpush1.msra.mxu0 0.0
        %1786 = vmatprep.subr.mxu0 0.0
        %1787 = vmatpush1.msra.mxu0 0.0
        %1788 = vmatprep.subr.mxu0 0.0
        %1789 = vmatpush1.msra.mxu0 0.0
        %1790 = vmatprep.subr.mxu0 0.0
        %1791 = vmatpush1.msra.mxu0 0.0
        %1792 = vmatprep.mubr.f32.mxu0 0.0
        %1793 = vmatmul.mubr.f32.gmra.mrb[0].mxu0 %v1724
        %v1794 = vpop.f32.mrb[0].mxu0
        %v1795 = vadd.f32 0.0, %v1794
        %v1796 = vpop.f32.mrb[0].mxu0
        %1797 = vmatprep.mubr.f32.mxu0 0.0
        %1798 = vmatmul.mubr.f32.gmra.mrb[0].mxu0 %v1726
        %v1799 = vpop.f32.mrb[0].mxu0
        %v1800 = vadd.f32 0.0, %v1799
        %v1801 = vpop.f32.mrb[0].mxu0
        %1802 = vdwg.mxu0
        %1803 = vmatprep.subr.mxu0 0.0
        %1804 = vmatpush1.msra.mxu0 %v600
        %1805 = vmatprep.subr.mxu0 0.0
        %1806 = vmatpush1.msra.mxu0 %v601
        %1807 = vmatprep.subr.mxu0 0.0
        %1808 = vmatpush1.msra.mxu0 0.0
        %1809 = vmatprep.subr.mxu0 0.0
        %1810 = vmatpush1.msra.mxu0 0.0
        %1811 = vmatprep.subr.mxu0 0.0
        %1812 = vmatpush1.msra.mxu0 0.0
        %1813 = vmatprep.subr.mxu0 0.0
        %1814 = vmatpush1.msra.mxu0 0.0
        %1815 = vmatprep.subr.mxu0 0.0
        %1816 = vmatpush1.msra.mxu0 0.0
        %1817 = vmatprep.subr.mxu0 0.0
        %1818 = vmatpush1.msra.mxu0 0.0
        %1819 = vmatprep.subr.mxu0 0.0
        %1820 = vmatpush1.msra.mxu0 0.0
        %1821 = vmatprep.subr.mxu0 0.0
        %1822 = vmatpush1.msra.mxu0 0.0
        %1823 = vmatprep.subr.mxu0 0.0
        %1824 = vmatpush1.msra.mxu0 0.0
        %1825 = vmatprep.subr.mxu0 0.0
        %1826 = vmatpush1.msra.mxu0 0.0
        %1827 = vmatprep.subr.mxu0 0.0
        %1828 = vmatpush1.msra.mxu0 0.0
        %1829 = vmatprep.subr.mxu0 0.0
        %1830 = vmatpush1.msra.mxu0 0.0
        %1831 = vmatprep.subr.mxu0 0.0
        %1832 = vmatpush1.msra.mxu0 0.0
        %1833 = vmatprep.subr.mxu0 0.0
        %1834 = vmatpush1.msra.mxu0 0.0
        %1835 = vmatprep.subr.mxu0 0.0
        %1836 = vmatpush1.msra.mxu0 0.0
        %1837 = vmatprep.subr.mxu0 0.0
        %1838 = vmatpush1.msra.mxu0 0.0
        %1839 = vmatprep.subr.mxu0 0.0
        %1840 = vmatpush1.msra.mxu0 0.0
        %1841 = vmatprep.subr.mxu0 0.0
        %1842 = vmatpush1.msra.mxu0 0.0
        %1843 = vmatprep.subr.mxu0 0.0
        %1844 = vmatpush1.msra.mxu0 0.0
        %1845 = vmatprep.subr.mxu0 0.0
        %1846 = vmatpush1.msra.mxu0 0.0
        %1847 = vmatprep.subr.mxu0 0.0
        %1848 = vmatpush1.msra.mxu0 0.0
        %1849 = vmatprep.subr.mxu0 0.0
        %1850 = vmatpush1.msra.mxu0 0.0
        %1851 = vmatprep.subr.mxu0 0.0
        %1852 = vmatpush1.msra.mxu0 0.0
        %1853 = vmatprep.subr.mxu0 0.0
        %1854 = vmatpush1.msra.mxu0 0.0
        %1855 = vmatprep.subr.mxu0 0.0
        %1856 = vmatpush1.msra.mxu0 0.0
        %1857 = vmatprep.subr.mxu0 0.0
        %1858 = vmatpush1.msra.mxu0 0.0
        %1859 = vmatprep.subr.mxu0 0.0
        %1860 = vmatpush1.msra.mxu0 0.0
        %1861 = vmatprep.subr.mxu0 0.0
        %1862 = vmatpush1.msra.mxu0 0.0
        %1863 = vmatprep.subr.mxu0 0.0
        %1864 = vmatpush1.msra.mxu0 0.0
        %1865 = vmatprep.subr.mxu0 0.0
        %1866 = vmatpush1.msra.mxu0 0.0
        %1867 = vmatprep.mubr.f32.mxu0 0.0
        %1868 = vmatmul.mubr.f32.gmra.mrb[0].mxu0 %v1724
        %v1869 = vpop.f32.mrb[0].mxu0
        %v1870 = vadd.f32 0.0, %v1869
        %v1871 = vpop.f32.mrb[0].mxu0
        %1872 = vmatprep.mubr.f32.mxu0 0.0
        %1873 = vmatmul.mubr.f32.gmra.mrb[0].mxu0 %v1726
        %v1874 = vpop.f32.mrb[0].mxu0
        %v1875 = vadd.f32 0.0, %v1874
        %v1876 = vpop.f32.mrb[0].mxu0
        %1877 = vdwg.mxu0
        %v1878 = vmax.f32 %v1795, %v1870
        %v1879 = vmax.f32 %v1800, %v1875
        %1882 = vrot.lane.b32.xlu0 %v1878, 8
        %v1883 = vpop.permute.xlu0 %1882
        %1884 = vrot.lane.b32.xlu0 %v1879, 8
        %v1885 = vpop.permute.xlu0 %1884
        %vm1888 = vcmask 130112
        %1889 = vst.msk [vmem:[#allocation2 + $0x8] sm:$0xff] %vm1888, %v1883
        %1890 = vst.msk [vmem:[#allocation2 + $0x28] sm:$0xff] %vm1888, %v1885
        %v1891 = vld [vmem:[#allocation4] sm:$0xff]
        %v1892 = vld [vmem:[#allocation4 + $0x10] sm:$0xff]
        %1895 = vrot.lane.b32.xlu0 %v1891, 112
        %v1896 = vpop.permute.xlu0 %1895
        %1897 = vrot.lane.b32.xlu0 %v1892, 112
        %v1898 = vpop.permute.xlu0 %1897
        %v1901 = vmax.f32 %v1891, %v1896
        %v1902 = vmax.f32 %v1892, %v1898
        %1905 = vrot.lane.b32.xlu0 %v1901, 64
        %v1906 = vpop.permute.xlu0 %1905
        %1907 = vrot.lane.b32.xlu0 %v1902, 64
        %v1908 = vpop.permute.xlu0 %1907
        %v1909 = vsel %vm709, %v1906, 0
        %v1911 = vsel %vm709, %v1908, 0
        %1913 = vmatprep.subr.mxu0 0.0
        %1914 = vmatpush1.msra.mxu0 %v593
        %1915 = vmatprep.subr.mxu0 0.0
        %1916 = vmatpush1.msra.mxu0 %v594
        %1917 = vmatprep.subr.mxu0 0.0
        %1918 = vmatpush1.msra.mxu0 0.0
        %1919 = vmatprep.subr.mxu0 0.0
        %1920 = vmatpush1.msra.mxu0 0.0
        %1921 = vmatprep.subr.mxu0 0.0
        %1922 = vmatpush1.msra.mxu0 0.0
        %1923 = vmatprep.subr.mxu0 0.0
        %1924 = vmatpush1.msra.mxu0 0.0
        %1925 = vmatprep.subr.mxu0 0.0
        %1926 = vmatpush1.msra.mxu0 0.0
        %1927 = vmatprep.subr.mxu0 0.0
        %1928 = vmatpush1.msra.mxu0 0.0
        %1929 = vmatprep.subr.mxu0 0.0
        %1930 = vmatpush1.msra.mxu0 0.0
        %1931 = vmatprep.subr.mxu0 0.0
        %1932 = vmatpush1.msra.mxu0 0.0
        %1933 = vmatprep.subr.mxu0 0.0
        %1934 = vmatpush1.msra.mxu0 0.0
        %1935 = vmatprep.subr.mxu0 0.0
        %1936 = vmatpush1.msra.mxu0 0.0
        %1937 = vmatprep.subr.mxu0 0.0
        %1938 = vmatpush1.msra.mxu0 0.0
        %1939 = vmatprep.subr.mxu0 0.0
        %1940 = vmatpush1.msra.mxu0 0.0
        %1941 = vmatprep.subr.mxu0 0.0
        %1942 = vmatpush1.msra.mxu0 0.0
        %1943 = vmatprep.subr.mxu0 0.0
        %1944 = vmatpush1.msra.mxu0 0.0
        %1945 = vmatprep.subr.mxu0 0.0
        %1946 = vmatpush1.msra.mxu0 0.0
        %1947 = vmatprep.subr.mxu0 0.0
        %1948 = vmatpush1.msra.mxu0 0.0
        %1949 = vmatprep.subr.mxu0 0.0
        %1950 = vmatpush1.msra.mxu0 0.0
        %1951 = vmatprep.subr.mxu0 0.0
        %1952 = vmatpush1.msra.mxu0 0.0
        %1953 = vmatprep.subr.mxu0 0.0
        %1954 = vmatpush1.msra.mxu0 0.0
        %1955 = vmatprep.subr.mxu0 0.0
        %1956 = vmatpush1.msra.mxu0 0.0
        %1957 = vmatprep.subr.mxu0 0.0
        %1958 = vmatpush1.msra.mxu0 0.0
        %1959 = vmatprep.subr.mxu0 0.0
        %1960 = vmatpush1.msra.mxu0 0.0
        %1961 = vmatprep.subr.mxu0 0.0
        %1962 = vmatpush1.msra.mxu0 0.0
        %1963 = vmatprep.subr.mxu0 0.0
        %1964 = vmatpush1.msra.mxu0 0.0
        %1965 = vmatprep.subr.mxu0 0.0
        %1966 = vmatpush1.msra.mxu0 0.0
        %1967 = vmatprep.subr.mxu0 0.0
        %1968 = vmatpush1.msra.mxu0 0.0
        %1969 = vmatprep.subr.mxu0 0.0
        %1970 = vmatpush1.msra.mxu0 0.0
        %1971 = vmatprep.subr.mxu0 0.0
        %1972 = vmatpush1.msra.mxu0 0.0
        %1973 = vmatprep.subr.mxu0 0.0
        %1974 = vmatpush1.msra.mxu0 0.0
        %1975 = vmatprep.subr.mxu0 0.0
        %1976 = vmatpush1.msra.mxu0 0.0
        %1977 = vmatprep.mubr.f32.mxu0 0.0
        %1978 = vmatmul.mubr.f32.gmra.mrb[0].mxu0 %v1909
        %v1979 = vpop.f32.mrb[0].mxu0
        %v1980 = vadd.f32 0.0, %v1979
        %v1981 = vpop.f32.mrb[0].mxu0
        %1982 = vmatprep.mubr.f32.mxu0 0.0
        %1983 = vmatmul.mubr.f32.gmra.mrb[0].mxu0 %v1911
        %v1984 = vpop.f32.mrb[0].mxu0
        %v1985 = vadd.f32 0.0, %v1984
        %v1986 = vpop.f32.mrb[0].mxu0
        %1987 = vdwg.mxu0
        %1988 = vmatprep.subr.mxu0 0.0
        %1989 = vmatpush1.msra.mxu0 %v600
        %1990 = vmatprep.subr.mxu0 0.0
        %1991 = vmatpush1.msra.mxu0 %v601
        %1992 = vmatprep.subr.mxu0 0.0
        %1993 = vmatpush1.msra.mxu0 0.0
        %1994 = vmatprep.subr.mxu0 0.0
        %1995 = vmatpush1.msra.mxu0 0.0
        %1996 = vmatprep.subr.mxu0 0.0
        %1997 = vmatpush1.msra.mxu0 0.0
        %1998 = vmatprep.subr.mxu0 0.0
        %1999 = vmatpush1.msra.mxu0 0.0
        %2000 = vmatprep.subr.mxu0 0.0
        %2001 = vmatpush1.msra.mxu0 0.0
        %2002 = vmatprep.subr.mxu0 0.0
        %2003 = vmatpush1.msra.mxu0 0.0
        %2004 = vmatprep.subr.mxu0 0.0
        %2005 = vmatpush1.msra.mxu0 0.0
        %2006 = vmatprep.subr.mxu0 0.0
        %2007 = vmatpush1.msra.mxu0 0.0
        %2008 = vmatprep.subr.mxu0 0.0
        %2009 = vmatpush1.msra.mxu0 0.0
        %2010 = vmatprep.subr.mxu0 0.0
        %2011 = vmatpush1.msra.mxu0 0.0
        %2012 = vmatprep.subr.mxu0 0.0
        %2013 = vmatpush1.msra.mxu0 0.0
        %2014 = vmatprep.subr.mxu0 0.0
        %2015 = vmatpush1.msra.mxu0 0.0
        %2016 = vmatprep.subr.mxu0 0.0
        %2017 = vmatpush1.msra.mxu0 0.0
        %2018 = vmatprep.subr.mxu0 0.0
        %2019 = vmatpush1.msra.mxu0 0.0
        %2020 = vmatprep.subr.mxu0 0.0
        %2021 = vmatpush1.msra.mxu0 0.0
        %2022 = vmatprep.subr.mxu0 0.0
        %2023 = vmatpush1.msra.mxu0 0.0
        %2024 = vmatprep.subr.mxu0 0.0
        %2025 = vmatpush1.msra.mxu0 0.0
        %2026 = vmatprep.subr.mxu0 0.0
        %2027 = vmatpush1.msra.mxu0 0.0
        %2028 = vmatprep.subr.mxu0 0.0
        %2029 = vmatpush1.msra.mxu0 0.0
        %2030 = vmatprep.subr.mxu0 0.0
        %2031 = vmatpush1.msra.mxu0 0.0
        %2032 = vmatprep.subr.mxu0 0.0
        %2033 = vmatpush1.msra.mxu0 0.0
        %2034 = vmatprep.subr.mxu0 0.0
        %2035 = vmatpush1.msra.mxu0 0.0
        %2036 = vmatprep.subr.mxu0 0.0
        %2037 = vmatpush1.msra.mxu0 0.0
        %2038 = vmatprep.subr.mxu0 0.0
        %2039 = vmatpush1.msra.mxu0 0.0
        %2040 = vmatprep.subr.mxu0 0.0
        %2041 = vmatpush1.msra.mxu0 0.0
        %2042 = vmatprep.subr.mxu0 0.0
        %2043 = vmatpush1.msra.mxu0 0.0
        %2044 = vmatprep.subr.mxu0 0.0
        %2045 = vmatpush1.msra.mxu0 0.0
        %2046 = vmatprep.subr.mxu0 0.0
        %2047 = vmatpush1.msra.mxu0 0.0
        %2048 = vmatprep.subr.mxu0 0.0
        %2049 = vmatpush1.msra.mxu0 0.0
        %2050 = vmatprep.subr.mxu0 0.0
        %2051 = vmatpush1.msra.mxu0 0.0
        %2052 = vmatprep.mubr.f32.mxu0 0.0
        %2053 = vmatmul.mubr.f32.gmra.mrb[0].mxu0 %v1909
        %v2054 = vpop.f32.mrb[0].mxu0
        %v2055 = vadd.f32 0.0, %v2054
        %v2056 = vpop.f32.mrb[0].mxu0
        %2057 = vmatprep.mubr.f32.mxu0 0.0
        %2058 = vmatmul.mubr.f32.gmra.mrb[0].mxu0 %v1911
        %v2059 = vpop.f32.mrb[0].mxu0
        %v2060 = vadd.f32 0.0, %v2059
        %v2061 = vpop.f32.mrb[0].mxu0
        %2062 = vdwg.mxu0
        %v2063 = vmax.f32 %v1980, %v2055
        %v2064 = vmax.f32 %v1985, %v2060
        %2067 = vrot.lane.b32.xlu0 %v2063, 16
        %v2068 = vpop.permute.xlu0 %2067
        %2069 = vrot.lane.b32.xlu0 %v2064, 16
        %v2070 = vpop.permute.xlu0 %2069
        %vm2073 = vcmask 195712
        %2074 = vst.msk [vmem:[#allocation2 + $0x8] sm:$0xff] %vm2073, %v2068
        %2075 = vst.msk [vmem:[#allocation2 + $0x28] sm:$0xff] %vm2073, %v2070
        %v2076 = vld [vmem:[#allocation4] sm:$0xff]
        %v2077 = vld [vmem:[#allocation4 + $0x10] sm:$0xff]
        %2080 = vrot.lane.b32.xlu0 %v2076, 112
        %v2081 = vpop.permute.xlu0 %2080
        %2082 = vrot.lane.b32.xlu0 %v2077, 112
        %v2083 = vpop.permute.xlu0 %2082
        %v2086 = vmax.f32 %v2076, %v2081
        %v2087 = vmax.f32 %v2077, %v2083
        %2090 = vrot.lane.b32.xlu0 %v2086, 32
        %v2091 = vpop.permute.xlu0 %2090
        %2092 = vrot.lane.b32.xlu0 %v2087, 32
        %v2093 = vpop.permute.xlu0 %2092
        %v2094 = vsel %vm709, %v2091, 0
        %v2096 = vsel %vm709, %v2093, 0
        %2098 = vmatprep.subr.mxu0 0.0
        %2099 = vmatpush1.msra.mxu0 %v593
        %2100 = vmatprep.subr.mxu0 0.0
        %2101 = vmatpush1.msra.mxu0 %v594
        %2102 = vmatprep.subr.mxu0 0.0
        %2103 = vmatpush1.msra.mxu0 0.0
        %2104 = vmatprep.subr.mxu0 0.0
        %2105 = vmatpush1.msra.mxu0 0.0
        %2106 = vmatprep.subr.mxu0 0.0
        %2107 = vmatpush1.msra.mxu0 0.0
        %2108 = vmatprep.subr.mxu0 0.0
        %2109 = vmatpush1.msra.mxu0 0.0
        %2110 = vmatprep.subr.mxu0 0.0
        %2111 = vmatpush1.msra.mxu0 0.0
        %2112 = vmatprep.subr.mxu0 0.0
        %2113 = vmatpush1.msra.mxu0 0.0
        %2114 = vmatprep.subr.mxu0 0.0
        %2115 = vmatpush1.msra.mxu0 0.0
        %2116 = vmatprep.subr.mxu0 0.0
        %2117 = vmatpush1.msra.mxu0 0.0
        %2118 = vmatprep.subr.mxu0 0.0
        %2119 = vmatpush1.msra.mxu0 0.0
        %2120 = vmatprep.subr.mxu0 0.0
        %2121 = vmatpush1.msra.mxu0 0.0
        %2122 = vmatprep.subr.mxu0 0.0
        %2123 = vmatpush1.msra.mxu0 0.0
        %2124 = vmatprep.subr.mxu0 0.0
        %2125 = vmatpush1.msra.mxu0 0.0
        %2126 = vmatprep.subr.mxu0 0.0
        %2127 = vmatpush1.msra.mxu0 0.0
        %2128 = vmatprep.subr.mxu0 0.0
        %2129 = vmatpush1.msra.mxu0 0.0
        %2130 = vmatprep.subr.mxu0 0.0
        %2131 = vmatpush1.msra.mxu0 0.0
        %2132 = vmatprep.subr.mxu0 0.0
        %2133 = vmatpush1.msra.mxu0 0.0
        %2134 = vmatprep.subr.mxu0 0.0
        %2135 = vmatpush1.msra.mxu0 0.0
        %2136 = vmatprep.subr.mxu0 0.0
        %2137 = vmatpush1.msra.mxu0 0.0
        %2138 = vmatprep.subr.mxu0 0.0
        %2139 = vmatpush1.msra.mxu0 0.0
        %2140 = vmatprep.subr.mxu0 0.0
        %2141 = vmatpush1.msra.mxu0 0.0
        %2142 = vmatprep.subr.mxu0 0.0
        %2143 = vmatpush1.msra.mxu0 0.0
        %2144 = vmatprep.subr.mxu0 0.0
        %2145 = vmatpush1.msra.mxu0 0.0
        %2146 = vmatprep.subr.mxu0 0.0
        %2147 = vmatpush1.msra.mxu0 0.0
        %2148 = vmatprep.subr.mxu0 0.0
        %2149 = vmatpush1.msra.mxu0 0.0
        %2150 = vmatprep.subr.mxu0 0.0
        %2151 = vmatpush1.msra.mxu0 0.0
        %2152 = vmatprep.subr.mxu0 0.0
        %2153 = vmatpush1.msra.mxu0 0.0
        %2154 = vmatprep.subr.mxu0 0.0
        %2155 = vmatpush1.msra.mxu0 0.0
        %2156 = vmatprep.subr.mxu0 0.0
        %2157 = vmatpush1.msra.mxu0 0.0
        %2158 = vmatprep.subr.mxu0 0.0
        %2159 = vmatpush1.msra.mxu0 0.0
        %2160 = vmatprep.subr.mxu0 0.0
        %2161 = vmatpush1.msra.mxu0 0.0
        %2162 = vmatprep.mubr.f32.mxu0 0.0
        %2163 = vmatmul.mubr.f32.gmra.mrb[0].mxu0 %v2094
        %v2164 = vpop.f32.mrb[0].mxu0
        %v2165 = vadd.f32 0.0, %v2164
        %v2166 = vpop.f32.mrb[0].mxu0
        %2167 = vmatprep.mubr.f32.mxu0 0.0
        %2168 = vmatmul.mubr.f32.gmra.mrb[0].mxu0 %v2096
        %v2169 = vpop.f32.mrb[0].mxu0
        %v2170 = vadd.f32 0.0, %v2169
        %v2171 = vpop.f32.mrb[0].mxu0
        %2172 = vdwg.mxu0
        %2173 = vmatprep.subr.mxu0 0.0
        %2174 = vmatpush1.msra.mxu0 %v600
        %2175 = vmatprep.subr.mxu0 0.0
        %2176 = vmatpush1.msra.mxu0 %v601
        %2177 = vmatprep.subr.mxu0 0.0
        %2178 = vmatpush1.msra.mxu0 0.0
        %2179 = vmatprep.subr.mxu0 0.0
        %2180 = vmatpush1.msra.mxu0 0.0
        %2181 = vmatprep.subr.mxu0 0.0
        %2182 = vmatpush1.msra.mxu0 0.0
        %2183 = vmatprep.subr.mxu0 0.0
        %2184 = vmatpush1.msra.mxu0 0.0
        %2185 = vmatprep.subr.mxu0 0.0
        %2186 = vmatpush1.msra.mxu0 0.0
        %2187 = vmatprep.subr.mxu0 0.0
        %2188 = vmatpush1.msra.mxu0 0.0
        %2189 = vmatprep.subr.mxu0 0.0
        %2190 = vmatpush1.msra.mxu0 0.0
        %2191 = vmatprep.subr.mxu0 0.0
        %2192 = vmatpush1.msra.mxu0 0.0
        %2193 = vmatprep.subr.mxu0 0.0
        %2194 = vmatpush1.msra.mxu0 0.0
        %2195 = vmatprep.subr.mxu0 0.0
        %2196 = vmatpush1.msra.mxu0 0.0
        %2197 = vmatprep.subr.mxu0 0.0
        %2198 = vmatpush1.msra.mxu0 0.0
        %2199 = vmatprep.subr.mxu0 0.0
        %2200 = vmatpush1.msra.mxu0 0.0
        %2201 = vmatprep.subr.mxu0 0.0
        %2202 = vmatpush1.msra.mxu0 0.0
        %2203 = vmatprep.subr.mxu0 0.0
        %2204 = vmatpush1.msra.mxu0 0.0
        %2205 = vmatprep.subr.mxu0 0.0
        %2206 = vmatpush1.msra.mxu0 0.0
        %2207 = vmatprep.subr.mxu0 0.0
        %2208 = vmatpush1.msra.mxu0 0.0
        %2209 = vmatprep.subr.mxu0 0.0
        %2210 = vmatpush1.msra.mxu0 0.0
        %2211 = vmatprep.subr.mxu0 0.0
        %2212 = vmatpush1.msra.mxu0 0.0
        %2213 = vmatprep.subr.mxu0 0.0
        %2214 = vmatpush1.msra.mxu0 0.0
        %2215 = vmatprep.subr.mxu0 0.0
        %2216 = vmatpush1.msra.mxu0 0.0
        %2217 = vmatprep.subr.mxu0 0.0
        %2218 = vmatpush1.msra.mxu0 0.0
        %2219 = vmatprep.subr.mxu0 0.0
        %2220 = vmatpush1.msra.mxu0 0.0
        %2221 = vmatprep.subr.mxu0 0.0
        %2222 = vmatpush1.msra.mxu0 0.0
        %2223 = vmatprep.subr.mxu0 0.0
        %2224 = vmatpush1.msra.mxu0 0.0
        %2225 = vmatprep.subr.mxu0 0.0
        %2226 = vmatpush1.msra.mxu0 0.0
        %2227 = vmatprep.subr.mxu0 0.0
        %2228 = vmatpush1.msra.mxu0 0.0
        %2229 = vmatprep.subr.mxu0 0.0
        %2230 = vmatpush1.msra.mxu0 0.0
        %2231 = vmatprep.subr.mxu0 0.0
        %2232 = vmatpush1.msra.mxu0 0.0
        %2233 = vmatprep.subr.mxu0 0.0
        %2234 = vmatpush1.msra.mxu0 0.0
        %2235 = vmatprep.subr.mxu0 0.0
        %2236 = vmatpush1.msra.mxu0 0.0
        %2237 = vmatprep.mubr.f32.mxu0 0.0
        %2238 = vmatmul.mubr.f32.gmra.mrb[0].mxu0 %v2094
        %v2239 = vpop.f32.mrb[0].mxu0
        %v2240 = vadd.f32 0.0, %v2239
        %v2241 = vpop.f32.mrb[0].mxu0
        %2242 = vmatprep.mubr.f32.mxu0 0.0
        %2243 = vmatmul.mubr.f32.gmra.mrb[0].mxu0 %v2096
        %v2244 = vpop.f32.mrb[0].mxu0
        %v2245 = vadd.f32 0.0, %v2244
        %v2246 = vpop.f32.mrb[0].mxu0
        %2247 = vdwg.mxu0
        %v2248 = vmax.f32 %v2165, %v2240
        %v2249 = vmax.f32 %v2170, %v2245
        %2252 = vrot.lane.b32.xlu0 %v2248, 24
        %v2253 = vpop.permute.xlu0 %2252
        %2254 = vrot.lane.b32.xlu0 %v2249, 24
        %v2255 = vpop.permute.xlu0 %2254
        %vm2258 = vcmask 261312
        %2259 = vst.msk [vmem:[#allocation2 + $0x8] sm:$0xff] %vm2258, %v2253
        %2260 = vst.msk [vmem:[#allocation2 + $0x28] sm:$0xff] %vm2258, %v2255
        %v2261 = vld [vmem:[#allocation4 + $0x8] sm:$0xff]
        %v2262 = vld [vmem:[#allocation4 + $0x18] sm:$0xff]
        %2265 = vrot.lane.b32.xlu0 %v2261, 112
        %v2266 = vpop.permute.xlu0 %2265
        %2267 = vrot.lane.b32.xlu0 %v2262, 112
        %v2268 = vpop.permute.xlu0 %2267
        %v2271 = vmax.f32 %v2261, %v2266
        %v2272 = vmax.f32 %v2262, %v2268
        %v2274 = vsel %vm709, %v2271, 0
        %v2277 = vsel %vm709, %v2272, 0
        %2279 = vmatprep.subr.mxu0 0.0
        %2280 = vmatpush1.msra.mxu0 %v593
        %2281 = vmatprep.subr.mxu0 0.0
        %2282 = vmatpush1.msra.mxu0 %v594
        %2283 = vmatprep.subr.mxu0 0.0
        %2284 = vmatpush1.msra.mxu0 0.0
        %2285 = vmatprep.subr.mxu0 0.0
        %2286 = vmatpush1.msra.mxu0 0.0
        %2287 = vmatprep.subr.mxu0 0.0
        %2288 = vmatpush1.msra.mxu0 0.0
        %2289 = vmatprep.subr.mxu0 0.0
        %2290 = vmatpush1.msra.mxu0 0.0
        %2291 = vmatprep.subr.mxu0 0.0
        %2292 = vmatpush1.msra.mxu0 0.0
        %2293 = vmatprep.subr.mxu0 0.0
        %2294 = vmatpush1.msra.mxu0 0.0
        %2295 = vmatprep.subr.mxu0 0.0
        %2296 = vmatpush1.msra.mxu0 0.0
        %2297 = vmatprep.subr.mxu0 0.0
        %2298 = vmatpush1.msra.mxu0 0.0
        %2299 = vmatprep.subr.mxu0 0.0
        %2300 = vmatpush1.msra.mxu0 0.0
        %2301 = vmatprep.subr.mxu0 0.0
        %2302 = vmatpush1.msra.mxu0 0.0
        %2303 = vmatprep.subr.mxu0 0.0
        %2304 = vmatpush1.msra.mxu0 0.0
        %2305 = vmatprep.subr.mxu0 0.0
        %2306 = vmatpush1.msra.mxu0 0.0
        %2307 = vmatprep.subr.mxu0 0.0
        %2308 = vmatpush1.msra.mxu0 0.0
        %2309 = vmatprep.subr.mxu0 0.0
        %2310 = vmatpush1.msra.mxu0 0.0
        %2311 = vmatprep.subr.mxu0 0.0
        %2312 = vmatpush1.msra.mxu0 0.0
        %2313 = vmatprep.subr.mxu0 0.0
        %2314 = vmatpush1.msra.mxu0 0.0
        %2315 = vmatprep.subr.mxu0 0.0
        %2316 = vmatpush1.msra.mxu0 0.0
        %2317 = vmatprep.subr.mxu0 0.0
        %2318 = vmatpush1.msra.mxu0 0.0
        %2319 = vmatprep.subr.mxu0 0.0
        %2320 = vmatpush1.msra.mxu0 0.0
        %2321 = vmatprep.subr.mxu0 0.0
        %2322 = vmatpush1.msra.mxu0 0.0
        %2323 = vmatprep.subr.mxu0 0.0
        %2324 = vmatpush1.msra.mxu0 0.0
        %2325 = vmatprep.subr.mxu0 0.0
        %2326 = vmatpush1.msra.mxu0 0.0
        %2327 = vmatprep.subr.mxu0 0.0
        %2328 = vmatpush1.msra.mxu0 0.0
        %2329 = vmatprep.subr.mxu0 0.0
        %2330 = vmatpush1.msra.mxu0 0.0
        %2331 = vmatprep.subr.mxu0 0.0
        %2332 = vmatpush1.msra.mxu0 0.0
        %2333 = vmatprep.subr.mxu0 0.0
        %2334 = vmatpush1.msra.mxu0 0.0
        %2335 = vmatprep.subr.mxu0 0.0
        %2336 = vmatpush1.msra.mxu0 0.0
        %2337 = vmatprep.subr.mxu0 0.0
        %2338 = vmatpush1.msra.mxu0 0.0
        %2339 = vmatprep.subr.mxu0 0.0
        %2340 = vmatpush1.msra.mxu0 0.0
        %2341 = vmatprep.subr.mxu0 0.0
        %2342 = vmatpush1.msra.mxu0 0.0
        %2343 = vmatprep.mubr.f32.mxu0 0.0
        %2344 = vmatmul.mubr.f32.gmra.mrb[0].mxu0 %v2274
        %v2345 = vpop.f32.mrb[0].mxu0
        %v2346 = vadd.f32 0.0, %v2345
        %v2347 = vpop.f32.mrb[0].mxu0
        %2348 = vmatprep.mubr.f32.mxu0 0.0
        %2349 = vmatmul.mubr.f32.gmra.mrb[0].mxu0 %v2277
        %v2350 = vpop.f32.mrb[0].mxu0
        %v2351 = vadd.f32 0.0, %v2350
        %v2352 = vpop.f32.mrb[0].mxu0
        %2353 = vdwg.mxu0
        %2354 = vmatprep.subr.mxu0 0.0
        %2355 = vmatpush1.msra.mxu0 %v600
        %2356 = vmatprep.subr.mxu0 0.0
        %2357 = vmatpush1.msra.mxu0 %v601
        %2358 = vmatprep.subr.mxu0 0.0
        %2359 = vmatpush1.msra.mxu0 0.0
        %2360 = vmatprep.subr.mxu0 0.0
        %2361 = vmatpush1.msra.mxu0 0.0
        %2362 = vmatprep.subr.mxu0 0.0
        %2363 = vmatpush1.msra.mxu0 0.0
        %2364 = vmatprep.subr.mxu0 0.0
        %2365 = vmatpush1.msra.mxu0 0.0
        %2366 = vmatprep.subr.mxu0 0.0
        %2367 = vmatpush1.msra.mxu0 0.0
        %2368 = vmatprep.subr.mxu0 0.0
        %2369 = vmatpush1.msra.mxu0 0.0
        %2370 = vmatprep.subr.mxu0 0.0
        %2371 = vmatpush1.msra.mxu0 0.0
        %2372 = vmatprep.subr.mxu0 0.0
        %2373 = vmatpush1.msra.mxu0 0.0
        %2374 = vmatprep.subr.mxu0 0.0
        %2375 = vmatpush1.msra.mxu0 0.0
        %2376 = vmatprep.subr.mxu0 0.0
        %2377 = vmatpush1.msra.mxu0 0.0
        %2378 = vmatprep.subr.mxu0 0.0
        %2379 = vmatpush1.msra.mxu0 0.0
        %2380 = vmatprep.subr.mxu0 0.0
        %2381 = vmatpush1.msra.mxu0 0.0
        %2382 = vmatprep.subr.mxu0 0.0
        %2383 = vmatpush1.msra.mxu0 0.0
        %2384 = vmatprep.subr.mxu0 0.0
        %2385 = vmatpush1.msra.mxu0 0.0
        %2386 = vmatprep.subr.mxu0 0.0
        %2387 = vmatpush1.msra.mxu0 0.0
        %2388 = vmatprep.subr.mxu0 0.0
        %2389 = vmatpush1.msra.mxu0 0.0
        %2390 = vmatprep.subr.mxu0 0.0
        %2391 = vmatpush1.msra.mxu0 0.0
        %2392 = vmatprep.subr.mxu0 0.0
        %2393 = vmatpush1.msra.mxu0 0.0
        %2394 = vmatprep.subr.mxu0 0.0
        %2395 = vmatpush1.msra.mxu0 0.0
        %2396 = vmatprep.subr.mxu0 0.0
        %2397 = vmatpush1.msra.mxu0 0.0
        %2398 = vmatprep.subr.mxu0 0.0
        %2399 = vmatpush1.msra.mxu0 0.0
        %2400 = vmatprep.subr.mxu0 0.0
        %2401 = vmatpush1.msra.mxu0 0.0
        %2402 = vmatprep.subr.mxu0 0.0
        %2403 = vmatpush1.msra.mxu0 0.0
        %2404 = vmatprep.subr.mxu0 0.0
        %2405 = vmatpush1.msra.mxu0 0.0
        %2406 = vmatprep.subr.mxu0 0.0
        %2407 = vmatpush1.msra.mxu0 0.0
        %2408 = vmatprep.subr.mxu0 0.0
        %2409 = vmatpush1.msra.mxu0 0.0
        %2410 = vmatprep.subr.mxu0 0.0
        %2411 = vmatpush1.msra.mxu0 0.0
        %2412 = vmatprep.subr.mxu0 0.0
        %2413 = vmatpush1.msra.mxu0 0.0
        %2414 = vmatprep.subr.mxu0 0.0
        %2415 = vmatpush1.msra.mxu0 0.0
        %2416 = vmatprep.subr.mxu0 0.0
        %2417 = vmatpush1.msra.mxu0 0.0
        %2418 = vmatprep.mubr.f32.mxu0 0.0
        %2419 = vmatmul.mubr.f32.gmra.mrb[0].mxu0 %v2274
        %v2420 = vpop.f32.mrb[0].mxu0
        %v2421 = vadd.f32 0.0, %v2420
        %v2422 = vpop.f32.mrb[0].mxu0
        %2423 = vmatprep.mubr.f32.mxu0 0.0
        %2424 = vmatmul.mubr.f32.gmra.mrb[0].mxu0 %v2277
        %v2425 = vpop.f32.mrb[0].mxu0
        %v2426 = vadd.f32 0.0, %v2425
        %v2427 = vpop.f32.mrb[0].mxu0
        %2428 = vdwg.mxu0
        %v2429 = vmax.f32 %v2346, %v2421
        %v2430 = vmax.f32 %v2351, %v2426
        %2433 = vrot.lane.b32.xlu0 %v2429, 32
        %v2434 = vpop.permute.xlu0 %2433
        %2435 = vrot.lane.b32.xlu0 %v2430, 32
        %v2436 = vpop.permute.xlu0 %2435
        %vm2439 = vcmask 326912
        %2440 = vst.msk [vmem:[#allocation2 + $0x8] sm:$0xff] %vm2439, %v2434
        %2441 = vst.msk [vmem:[#allocation2 + $0x28] sm:$0xff] %vm2439, %v2436
        %v2442 = vld [vmem:[#allocation4 + $0x8] sm:$0xff]
        %v2443 = vld [vmem:[#allocation4 + $0x18] sm:$0xff]
        %2446 = vrot.lane.b32.xlu0 %v2442, 112
        %v2447 = vpop.permute.xlu0 %2446
        %2448 = vrot.lane.b32.xlu0 %v2443, 112
        %v2449 = vpop.permute.xlu0 %2448
        %v2452 = vmax.f32 %v2442, %v2447
        %v2453 = vmax.f32 %v2443, %v2449
        %2456 = vrot.lane.b32.xlu0 %v2452, 96
        %v2457 = vpop.permute.xlu0 %2456
        %2458 = vrot.lane.b32.xlu0 %v2453, 96
        %v2459 = vpop.permute.xlu0 %2458
        %v2460 = vsel %vm709, %v2457, 0
        %v2462 = vsel %vm709, %v2459, 0
        %2464 = vmatprep.subr.mxu0 0.0
        %2465 = vmatpush1.msra.mxu0 %v593
        %2466 = vmatprep.subr.mxu0 0.0
        %2467 = vmatpush1.msra.mxu0 %v594
        %2468 = vmatprep.subr.mxu0 0.0
        %2469 = vmatpush1.msra.mxu0 0.0
        %2470 = vmatprep.subr.mxu0 0.0
        %2471 = vmatpush1.msra.mxu0 0.0
        %2472 = vmatprep.subr.mxu0 0.0
        %2473 = vmatpush1.msra.mxu0 0.0
        %2474 = vmatprep.subr.mxu0 0.0
        %2475 = vmatpush1.msra.mxu0 0.0
        %2476 = vmatprep.subr.mxu0 0.0
        %2477 = vmatpush1.msra.mxu0 0.0
        %2478 = vmatprep.subr.mxu0 0.0
        %2479 = vmatpush1.msra.mxu0 0.0
        %2480 = vmatprep.subr.mxu0 0.0
        %2481 = vmatpush1.msra.mxu0 0.0
        %2482 = vmatprep.subr.mxu0 0.0
        %2483 = vmatpush1.msra.mxu0 0.0
        %2484 = vmatprep.subr.mxu0 0.0
        %2485 = vmatpush1.msra.mxu0 0.0
        %2486 = vmatprep.subr.mxu0 0.0
        %2487 = vmatpush1.msra.mxu0 0.0
        %2488 = vmatprep.subr.mxu0 0.0
        %2489 = vmatpush1.msra.mxu0 0.0
        %2490 = vmatprep.subr.mxu0 0.0
        %2491 = vmatpush1.msra.mxu0 0.0
        %2492 = vmatprep.subr.mxu0 0.0
        %2493 = vmatpush1.msra.mxu0 0.0
        %2494 = vmatprep.subr.mxu0 0.0
        %2495 = vmatpush1.msra.mxu0 0.0
        %2496 = vmatprep.subr.mxu0 0.0
        %2497 = vmatpush1.msra.mxu0 0.0
        %2498 = vmatprep.subr.mxu0 0.0
        %2499 = vmatpush1.msra.mxu0 0.0
        %2500 = vmatprep.subr.mxu0 0.0
        %2501 = vmatpush1.msra.mxu0 0.0
        %2502 = vmatprep.subr.mxu0 0.0
        %2503 = vmatpush1.msra.mxu0 0.0
        %2504 = vmatprep.subr.mxu0 0.0
        %2505 = vmatpush1.msra.mxu0 0.0
        %2506 = vmatprep.subr.mxu0 0.0
        %2507 = vmatpush1.msra.mxu0 0.0
        %2508 = vmatprep.subr.mxu0 0.0
        %2509 = vmatpush1.msra.mxu0 0.0
        %2510 = vmatprep.subr.mxu0 0.0
        %2511 = vmatpush1.msra.mxu0 0.0
        %2512 = vmatprep.subr.mxu0 0.0
        %2513 = vmatpush1.msra.mxu0 0.0
        %2514 = vmatprep.subr.mxu0 0.0
        %2515 = vmatpush1.msra.mxu0 0.0
        %2516 = vmatprep.subr.mxu0 0.0
        %2517 = vmatpush1.msra.mxu0 0.0
        %2518 = vmatprep.subr.mxu0 0.0
        %2519 = vmatpush1.msra.mxu0 0.0
        %2520 = vmatprep.subr.mxu0 0.0
        %2521 = vmatpush1.msra.mxu0 0.0
        %2522 = vmatprep.subr.mxu0 0.0
        %2523 = vmatpush1.msra.mxu0 0.0
        %2524 = vmatprep.subr.mxu0 0.0
        %2525 = vmatpush1.msra.mxu0 0.0
        %2526 = vmatprep.subr.mxu0 0.0
        %2527 = vmatpush1.msra.mxu0 0.0
        %2528 = vmatprep.mubr.f32.mxu0 0.0
        %2529 = vmatmul.mubr.f32.gmra.mrb[0].mxu0 %v2460
        %v2530 = vpop.f32.mrb[0].mxu0
        %v2531 = vadd.f32 0.0, %v2530
        %v2532 = vpop.f32.mrb[0].mxu0
        %2533 = vmatprep.mubr.f32.mxu0 0.0
        %2534 = vmatmul.mubr.f32.gmra.mrb[0].mxu0 %v2462
        %v2535 = vpop.f32.mrb[0].mxu0
        %v2536 = vadd.f32 0.0, %v2535
        %v2537 = vpop.f32.mrb[0].mxu0
        %2538 = vdwg.mxu0
        %2539 = vmatprep.subr.mxu0 0.0
        %2540 = vmatpush1.msra.mxu0 %v600
        %2541 = vmatprep.subr.mxu0 0.0
        %2542 = vmatpush1.msra.mxu0 %v601
        %2543 = vmatprep.subr.mxu0 0.0
        %2544 = vmatpush1.msra.mxu0 0.0
        %2545 = vmatprep.subr.mxu0 0.0
        %2546 = vmatpush1.msra.mxu0 0.0
        %2547 = vmatprep.subr.mxu0 0.0
        %2548 = vmatpush1.msra.mxu0 0.0
        %2549 = vmatprep.subr.mxu0 0.0
        %2550 = vmatpush1.msra.mxu0 0.0
        %2551 = vmatprep.subr.mxu0 0.0
        %2552 = vmatpush1.msra.mxu0 0.0
        %2553 = vmatprep.subr.mxu0 0.0
        %2554 = vmatpush1.msra.mxu0 0.0
        %2555 = vmatprep.subr.mxu0 0.0
        %2556 = vmatpush1.msra.mxu0 0.0
        %2557 = vmatprep.subr.mxu0 0.0
        %2558 = vmatpush1.msra.mxu0 0.0
        %2559 = vmatprep.subr.mxu0 0.0
        %2560 = vmatpush1.msra.mxu0 0.0
        %2561 = vmatprep.subr.mxu0 0.0
        %2562 = vmatpush1.msra.mxu0 0.0
        %2563 = vmatprep.subr.mxu0 0.0
        %2564 = vmatpush1.msra.mxu0 0.0
        %2565 = vmatprep.subr.mxu0 0.0
        %2566 = vmatpush1.msra.mxu0 0.0
        %2567 = vmatprep.subr.mxu0 0.0
        %2568 = vmatpush1.msra.mxu0 0.0
        %2569 = vmatprep.subr.mxu0 0.0
        %2570 = vmatpush1.msra.mxu0 0.0
        %2571 = vmatprep.subr.mxu0 0.0
        %2572 = vmatpush1.msra.mxu0 0.0
        %2573 = vmatprep.subr.mxu0 0.0
        %2574 = vmatpush1.msra.mxu0 0.0
        %2575 = vmatprep.subr.mxu0 0.0
        %2576 = vmatpush1.msra.mxu0 0.0
        %2577 = vmatprep.subr.mxu0 0.0
        %2578 = vmatpush1.msra.mxu0 0.0
        %2579 = vmatprep.subr.mxu0 0.0
        %2580 = vmatpush1.msra.mxu0 0.0
        %2581 = vmatprep.subr.mxu0 0.0
        %2582 = vmatpush1.msra.mxu0 0.0
        %2583 = vmatprep.subr.mxu0 0.0
        %2584 = vmatpush1.msra.mxu0 0.0
        %2585 = vmatprep.subr.mxu0 0.0
        %2586 = vmatpush1.msra.mxu0 0.0
        %2587 = vmatprep.subr.mxu0 0.0
        %2588 = vmatpush1.msra.mxu0 0.0
        %2589 = vmatprep.subr.mxu0 0.0
        %2590 = vmatpush1.msra.mxu0 0.0
        %2591 = vmatprep.subr.mxu0 0.0
        %2592 = vmatpush1.msra.mxu0 0.0
        %2593 = vmatprep.subr.mxu0 0.0
        %2594 = vmatpush1.msra.mxu0 0.0
        %2595 = vmatprep.subr.mxu0 0.0
        %2596 = vmatpush1.msra.mxu0 0.0
        %2597 = vmatprep.subr.mxu0 0.0
        %2598 = vmatpush1.msra.mxu0 0.0
        %2599 = vmatprep.subr.mxu0 0.0
        %2600 = vmatpush1.msra.mxu0 0.0
        %2601 = vmatprep.subr.mxu0 0.0
        %2602 = vmatpush1.msra.mxu0 0.0
        %2603 = vmatprep.mubr.f32.mxu0 0.0
        %2604 = vmatmul.mubr.f32.gmra.mrb[0].mxu0 %v2460
        %v2605 = vpop.f32.mrb[0].mxu0
        %v2606 = vadd.f32 0.0, %v2605
        %v2607 = vpop.f32.mrb[0].mxu0
        %2608 = vmatprep.mubr.f32.mxu0 0.0
        %2609 = vmatmul.mubr.f32.gmra.mrb[0].mxu0 %v2462
        %v2610 = vpop.f32.mrb[0].mxu0
        %v2611 = vadd.f32 0.0, %v2610
        %v2612 = vpop.f32.mrb[0].mxu0
        %2613 = vdwg.mxu0
        %v2614 = vmax.f32 %v2531, %v2606
        %v2615 = vmax.f32 %v2536, %v2611
        %2618 = vrot.lane.b32.xlu0 %v2614, 40
        %v2619 = vpop.permute.xlu0 %2618
        %2620 = vrot.lane.b32.xlu0 %v2615, 40
        %v2621 = vpop.permute.xlu0 %2620
        %vm2624 = vcmask 392512
        %2625 = vst.msk [vmem:[#allocation2 + $0x8] sm:$0xff] %vm2624, %v2619
        %2626 = vst.msk [vmem:[#allocation2 + $0x28] sm:$0xff] %vm2624, %v2621
        %v2627 = vld [vmem:[#allocation4 + $0x8] sm:$0xff]
        %v2628 = vld [vmem:[#allocation4 + $0x18] sm:$0xff]
        %2631 = vrot.lane.b32.xlu0 %v2627, 112
        %v2632 = vpop.permute.xlu0 %2631
        %2633 = vrot.lane.b32.xlu0 %v2628, 112
        %v2634 = vpop.permute.xlu0 %2633
        %v2637 = vmax.f32 %v2627, %v2632
        %v2638 = vmax.f32 %v2628, %v2634
        %2641 = vrot.lane.b32.xlu0 %v2637, 64
        %v2642 = vpop.permute.xlu0 %2641
        %2643 = vrot.lane.b32.xlu0 %v2638, 64
        %v2644 = vpop.permute.xlu0 %2643
        %v2645 = vsel %vm709, %v2642, 0
        %v2647 = vsel %vm709, %v2644, 0
        %2649 = vmatprep.subr.mxu0 0.0
        %2650 = vmatpush1.msra.mxu0 %v593
        %2651 = vmatprep.subr.mxu0 0.0
        %2652 = vmatpush1.msra.mxu0 %v594
        %2653 = vmatprep.subr.mxu0 0.0
        %2654 = vmatpush1.msra.mxu0 0.0
        %2655 = vmatprep.subr.mxu0 0.0
        %2656 = vmatpush1.msra.mxu0 0.0
        %2657 = vmatprep.subr.mxu0 0.0
        %2658 = vmatpush1.msra.mxu0 0.0
        %2659 = vmatprep.subr.mxu0 0.0
        %2660 = vmatpush1.msra.mxu0 0.0
        %2661 = vmatprep.subr.mxu0 0.0
        %2662 = vmatpush1.msra.mxu0 0.0
        %2663 = vmatprep.subr.mxu0 0.0
        %2664 = vmatpush1.msra.mxu0 0.0
        %2665 = vmatprep.subr.mxu0 0.0
        %2666 = vmatpush1.msra.mxu0 0.0
        %2667 = vmatprep.subr.mxu0 0.0
        %2668 = vmatpush1.msra.mxu0 0.0
        %2669 = vmatprep.subr.mxu0 0.0
        %2670 = vmatpush1.msra.mxu0 0.0
        %2671 = vmatprep.subr.mxu0 0.0
        %2672 = vmatpush1.msra.mxu0 0.0
        %2673 = vmatprep.subr.mxu0 0.0
        %2674 = vmatpush1.msra.mxu0 0.0
        %2675 = vmatprep.subr.mxu0 0.0
        %2676 = vmatpush1.msra.mxu0 0.0
        %2677 = vmatprep.subr.mxu0 0.0
        %2678 = vmatpush1.msra.mxu0 0.0
        %2679 = vmatprep.subr.mxu0 0.0
        %2680 = vmatpush1.msra.mxu0 0.0
        %2681 = vmatprep.subr.mxu0 0.0
        %2682 = vmatpush1.msra.mxu0 0.0
        %2683 = vmatprep.subr.mxu0 0.0
        %2684 = vmatpush1.msra.mxu0 0.0
        %2685 = vmatprep.subr.mxu0 0.0
        %2686 = vmatpush1.msra.mxu0 0.0
        %2687 = vmatprep.subr.mxu0 0.0
        %2688 = vmatpush1.msra.mxu0 0.0
        %2689 = vmatprep.subr.mxu0 0.0
        %2690 = vmatpush1.msra.mxu0 0.0
        %2691 = vmatprep.subr.mxu0 0.0
        %2692 = vmatpush1.msra.mxu0 0.0
        %2693 = vmatprep.subr.mxu0 0.0
        %2694 = vmatpush1.msra.mxu0 0.0
        %2695 = vmatprep.subr.mxu0 0.0
        %2696 = vmatpush1.msra.mxu0 0.0
        %2697 = vmatprep.subr.mxu0 0.0
        %2698 = vmatpush1.msra.mxu0 0.0
        %2699 = vmatprep.subr.mxu0 0.0
        %2700 = vmatpush1.msra.mxu0 0.0
        %2701 = vmatprep.subr.mxu0 0.0
        %2702 = vmatpush1.msra.mxu0 0.0
        %2703 = vmatprep.subr.mxu0 0.0
        %2704 = vmatpush1.msra.mxu0 0.0
        %2705 = vmatprep.subr.mxu0 0.0
        %2706 = vmatpush1.msra.mxu0 0.0
        %2707 = vmatprep.subr.mxu0 0.0
        %2708 = vmatpush1.msra.mxu0 0.0
        %2709 = vmatprep.subr.mxu0 0.0
        %2710 = vmatpush1.msra.mxu0 0.0
        %2711 = vmatprep.subr.mxu0 0.0
        %2712 = vmatpush1.msra.mxu0 0.0
        %2713 = vmatprep.mubr.f32.mxu0 0.0
        %2714 = vmatmul.mubr.f32.gmra.mrb[0].mxu0 %v2645
        %v2715 = vpop.f32.mrb[0].mxu0
        %v2716 = vadd.f32 0.0, %v2715
        %v2717 = vpop.f32.mrb[0].mxu0
        %2718 = vmatprep.mubr.f32.mxu0 0.0
        %2719 = vmatmul.mubr.f32.gmra.mrb[0].mxu0 %v2647
        %v2720 = vpop.f32.mrb[0].mxu0
        %v2721 = vadd.f32 0.0, %v2720
        %v2722 = vpop.f32.mrb[0].mxu0
        %2723 = vdwg.mxu0
        %2724 = vmatprep.subr.mxu0 0.0
        %2725 = vmatpush1.msra.mxu0 %v600
        %2726 = vmatprep.subr.mxu0 0.0
        %2727 = vmatpush1.msra.mxu0 %v601
        %2728 = vmatprep.subr.mxu0 0.0
        %2729 = vmatpush1.msra.mxu0 0.0
        %2730 = vmatprep.subr.mxu0 0.0
        %2731 = vmatpush1.msra.mxu0 0.0
        %2732 = vmatprep.subr.mxu0 0.0
        %2733 = vmatpush1.msra.mxu0 0.0
        %2734 = vmatprep.subr.mxu0 0.0
        %2735 = vmatpush1.msra.mxu0 0.0
        %2736 = vmatprep.subr.mxu0 0.0
        %2737 = vmatpush1.msra.mxu0 0.0
        %2738 = vmatprep.subr.mxu0 0.0
        %2739 = vmatpush1.msra.mxu0 0.0
        %2740 = vmatprep.subr.mxu0 0.0
        %2741 = vmatpush1.msra.mxu0 0.0
        %2742 = vmatprep.subr.mxu0 0.0
        %2743 = vmatpush1.msra.mxu0 0.0
        %2744 = vmatprep.subr.mxu0 0.0
        %2745 = vmatpush1.msra.mxu0 0.0
        %2746 = vmatprep.subr.mxu0 0.0
        %2747 = vmatpush1.msra.mxu0 0.0
        %2748 = vmatprep.subr.mxu0 0.0
        %2749 = vmatpush1.msra.mxu0 0.0
        %2750 = vmatprep.subr.mxu0 0.0
        %2751 = vmatpush1.msra.mxu0 0.0
        %2752 = vmatprep.subr.mxu0 0.0
        %2753 = vmatpush1.msra.mxu0 0.0
        %2754 = vmatprep.subr.mxu0 0.0
        %2755 = vmatpush1.msra.mxu0 0.0
        %2756 = vmatprep.subr.mxu0 0.0
        %2757 = vmatpush1.msra.mxu0 0.0
        %2758 = vmatprep.subr.mxu0 0.0
        %2759 = vmatpush1.msra.mxu0 0.0
        %2760 = vmatprep.subr.mxu0 0.0
        %2761 = vmatpush1.msra.mxu0 0.0
        %2762 = vmatprep.subr.mxu0 0.0
        %2763 = vmatpush1.msra.mxu0 0.0
        %2764 = vmatprep.subr.mxu0 0.0
        %2765 = vmatpush1.msra.mxu0 0.0
        %2766 = vmatprep.subr.mxu0 0.0
        %2767 = vmatpush1.msra.mxu0 0.0
        %2768 = vmatprep.subr.mxu0 0.0
        %2769 = vmatpush1.msra.mxu0 0.0
        %2770 = vmatprep.subr.mxu0 0.0
        %2771 = vmatpush1.msra.mxu0 0.0
        %2772 = vmatprep.subr.mxu0 0.0
        %2773 = vmatpush1.msra.mxu0 0.0
        %2774 = vmatprep.subr.mxu0 0.0
        %2775 = vmatpush1.msra.mxu0 0.0
        %2776 = vmatprep.subr.mxu0 0.0
        %2777 = vmatpush1.msra.mxu0 0.0
        %2778 = vmatprep.subr.mxu0 0.0
        %2779 = vmatpush1.msra.mxu0 0.0
        %2780 = vmatprep.subr.mxu0 0.0
        %2781 = vmatpush1.msra.mxu0 0.0
        %2782 = vmatprep.subr.mxu0 0.0
        %2783 = vmatpush1.msra.mxu0 0.0
        %2784 = vmatprep.subr.mxu0 0.0
        %2785 = vmatpush1.msra.mxu0 0.0
        %2786 = vmatprep.subr.mxu0 0.0
        %2787 = vmatpush1.msra.mxu0 0.0
        %2788 = vmatprep.mubr.f32.mxu0 0.0
        %2789 = vmatmul.mubr.f32.gmra.mrb[0].mxu0 %v2645
        %v2790 = vpop.f32.mrb[0].mxu0
        %v2791 = vadd.f32 0.0, %v2790
        %v2792 = vpop.f32.mrb[0].mxu0
        %2793 = vmatprep.mubr.f32.mxu0 0.0
        %2794 = vmatmul.mubr.f32.gmra.mrb[0].mxu0 %v2647
        %v2795 = vpop.f32.mrb[0].mxu0
        %v2796 = vadd.f32 0.0, %v2795
        %v2797 = vpop.f32.mrb[0].mxu0
        %2798 = vdwg.mxu0
        %v2799 = vmax.f32 %v2716, %v2791
        %v2800 = vmax.f32 %v2721, %v2796
        %2803 = vrot.lane.b32.xlu0 %v2799, 48
        %v2804 = vpop.permute.xlu0 %2803
        %2805 = vrot.lane.b32.xlu0 %v2800, 48
        %v2806 = vpop.permute.xlu0 %2805
        %vm2809 = vcmask 458112
        %2810 = vst.msk [vmem:[#allocation2 + $0x8] sm:$0xff] %vm2809, %v2804
        %2811 = vst.msk [vmem:[#allocation2 + $0x28] sm:$0xff] %vm2809, %v2806
        %v2812 = vld [vmem:[#allocation4 + $0x8] sm:$0xff]
        %v2813 = vld [vmem:[#allocation4 + $0x18] sm:$0xff]
        %2816 = vrot.lane.b32.xlu0 %v2812, 112
        %v2817 = vpop.permute.xlu0 %2816
        %2818 = vrot.lane.b32.xlu0 %v2813, 112
        %v2819 = vpop.permute.xlu0 %2818
        %v2822 = vmax.f32 %v2812, %v2817
        %v2823 = vmax.f32 %v2813, %v2819
        %2826 = vrot.lane.b32.xlu0 %v2822, 32
        %v2827 = vpop.permute.xlu0 %2826
        %2828 = vrot.lane.b32.xlu0 %v2823, 32
        %v2829 = vpop.permute.xlu0 %2828
        %v2830 = vsel %vm709, %v2827, 0
        %v2832 = vsel %vm709, %v2829, 0
        %2834 = vmatprep.subr.mxu0 0.0
        %2835 = vmatpush1.msra.mxu0 %v593
        %2836 = vmatprep.subr.mxu0 0.0
        %2837 = vmatpush1.msra.mxu0 %v594
        %2838 = vmatprep.subr.mxu0 0.0
        %2839 = vmatpush1.msra.mxu0 0.0
        %2840 = vmatprep.subr.mxu0 0.0
        %2841 = vmatpush1.msra.mxu0 0.0
        %2842 = vmatprep.subr.mxu0 0.0
        %2843 = vmatpush1.msra.mxu0 0.0
        %2844 = vmatprep.subr.mxu0 0.0
        %2845 = vmatpush1.msra.mxu0 0.0
        %2846 = vmatprep.subr.mxu0 0.0
        %2847 = vmatpush1.msra.mxu0 0.0
        %2848 = vmatprep.subr.mxu0 0.0
        %2849 = vmatpush1.msra.mxu0 0.0
        %2850 = vmatprep.subr.mxu0 0.0
        %2851 = vmatpush1.msra.mxu0 0.0
        %2852 = vmatprep.subr.mxu0 0.0
        %2853 = vmatpush1.msra.mxu0 0.0
        %2854 = vmatprep.subr.mxu0 0.0
        %2855 = vmatpush1.msra.mxu0 0.0
        %2856 = vmatprep.subr.mxu0 0.0
        %2857 = vmatpush1.msra.mxu0 0.0
        %2858 = vmatprep.subr.mxu0 0.0
        %2859 = vmatpush1.msra.mxu0 0.0
        %2860 = vmatprep.subr.mxu0 0.0
        %2861 = vmatpush1.msra.mxu0 0.0
        %2862 = vmatprep.subr.mxu0 0.0
        %2863 = vmatpush1.msra.mxu0 0.0
        %2864 = vmatprep.subr.mxu0 0.0
        %2865 = vmatpush1.msra.mxu0 0.0
        %2866 = vmatprep.subr.mxu0 0.0
        %2867 = vmatpush1.msra.mxu0 0.0
        %2868 = vmatprep.subr.mxu0 0.0
        %2869 = vmatpush1.msra.mxu0 0.0
        %2870 = vmatprep.subr.mxu0 0.0
        %2871 = vmatpush1.msra.mxu0 0.0
        %2872 = vmatprep.subr.mxu0 0.0
        %2873 = vmatpush1.msra.mxu0 0.0
        %2874 = vmatprep.subr.mxu0 0.0
        %2875 = vmatpush1.msra.mxu0 0.0
        %2876 = vmatprep.subr.mxu0 0.0
        %2877 = vmatpush1.msra.mxu0 0.0
        %2878 = vmatprep.subr.mxu0 0.0
        %2879 = vmatpush1.msra.mxu0 0.0
        %2880 = vmatprep.subr.mxu0 0.0
        %2881 = vmatpush1.msra.mxu0 0.0
        %2882 = vmatprep.subr.mxu0 0.0
        %2883 = vmatpush1.msra.mxu0 0.0
        %2884 = vmatprep.subr.mxu0 0.0
        %2885 = vmatpush1.msra.mxu0 0.0
        %2886 = vmatprep.subr.mxu0 0.0
        %2887 = vmatpush1.msra.mxu0 0.0
        %2888 = vmatprep.subr.mxu0 0.0
        %2889 = vmatpush1.msra.mxu0 0.0
        %2890 = vmatprep.subr.mxu0 0.0
        %2891 = vmatpush1.msra.mxu0 0.0
        %2892 = vmatprep.subr.mxu0 0.0
        %2893 = vmatpush1.msra.mxu0 0.0
        %2894 = vmatprep.subr.mxu0 0.0
        %2895 = vmatpush1.msra.mxu0 0.0
        %2896 = vmatprep.subr.mxu0 0.0
        %2897 = vmatpush1.msra.mxu0 0.0
        %2898 = vmatprep.mubr.f32.mxu0 0.0
        %2899 = vmatmul.mubr.f32.gmra.mrb[0].mxu0 %v2830
        %v2900 = vpop.f32.mrb[0].mxu0
        %v2901 = vadd.f32 0.0, %v2900
        %v2902 = vpop.f32.mrb[0].mxu0
        %2903 = vmatprep.mubr.f32.mxu0 0.0
        %2904 = vmatmul.mubr.f32.gmra.mrb[0].mxu0 %v2832
        %v2905 = vpop.f32.mrb[0].mxu0
        %v2906 = vadd.f32 0.0, %v2905
        %v2907 = vpop.f32.mrb[0].mxu0
        %2908 = vdwg.mxu0
        %2909 = vmatprep.subr.mxu0 0.0
        %2910 = vmatpush1.msra.mxu0 %v600
        %2911 = vmatprep.subr.mxu0 0.0
        %2912 = vmatpush1.msra.mxu0 %v601
        %2913 = vmatprep.subr.mxu0 0.0
        %2914 = vmatpush1.msra.mxu0 0.0
        %2915 = vmatprep.subr.mxu0 0.0
        %2916 = vmatpush1.msra.mxu0 0.0
        %2917 = vmatprep.subr.mxu0 0.0
        %2918 = vmatpush1.msra.mxu0 0.0
        %2919 = vmatprep.subr.mxu0 0.0
        %2920 = vmatpush1.msra.mxu0 0.0
        %2921 = vmatprep.subr.mxu0 0.0
        %2922 = vmatpush1.msra.mxu0 0.0
        %2923 = vmatprep.subr.mxu0 0.0
        %2924 = vmatpush1.msra.mxu0 0.0
        %2925 = vmatprep.subr.mxu0 0.0
        %2926 = vmatpush1.msra.mxu0 0.0
        %2927 = vmatprep.subr.mxu0 0.0
        %2928 = vmatpush1.msra.mxu0 0.0
        %2929 = vmatprep.subr.mxu0 0.0
        %2930 = vmatpush1.msra.mxu0 0.0
        %2931 = vmatprep.subr.mxu0 0.0
        %2932 = vmatpush1.msra.mxu0 0.0
        %2933 = vmatprep.subr.mxu0 0.0
        %2934 = vmatpush1.msra.mxu0 0.0
        %2935 = vmatprep.subr.mxu0 0.0
        %2936 = vmatpush1.msra.mxu0 0.0
        %2937 = vmatprep.subr.mxu0 0.0
        %2938 = vmatpush1.msra.mxu0 0.0
        %2939 = vmatprep.subr.mxu0 0.0
        %2940 = vmatpush1.msra.mxu0 0.0
        %2941 = vmatprep.subr.mxu0 0.0
        %2942 = vmatpush1.msra.mxu0 0.0
        %2943 = vmatprep.subr.mxu0 0.0
        %2944 = vmatpush1.msra.mxu0 0.0
        %2945 = vmatprep.subr.mxu0 0.0
        %2946 = vmatpush1.msra.mxu0 0.0
        %2947 = vmatprep.subr.mxu0 0.0
        %2948 = vmatpush1.msra.mxu0 0.0
        %2949 = vmatprep.subr.mxu0 0.0
        %2950 = vmatpush1.msra.mxu0 0.0
        %2951 = vmatprep.subr.mxu0 0.0
        %2952 = vmatpush1.msra.mxu0 0.0
        %2953 = vmatprep.subr.mxu0 0.0
        %2954 = vmatpush1.msra.mxu0 0.0
        %2955 = vmatprep.subr.mxu0 0.0
        %2956 = vmatpush1.msra.mxu0 0.0
        %2957 = vmatprep.subr.mxu0 0.0
        %2958 = vmatpush1.msra.mxu0 0.0
        %2959 = vmatprep.subr.mxu0 0.0
        %2960 = vmatpush1.msra.mxu0 0.0
        %2961 = vmatprep.subr.mxu0 0.0
        %2962 = vmatpush1.msra.mxu0 0.0
        %2963 = vmatprep.subr.mxu0 0.0
        %2964 = vmatpush1.msra.mxu0 0.0
        %2965 = vmatprep.subr.mxu0 0.0
        %2966 = vmatpush1.msra.mxu0 0.0
        %2967 = vmatprep.subr.mxu0 0.0
        %2968 = vmatpush1.msra.mxu0 0.0
        %2969 = vmatprep.subr.mxu0 0.0
        %2970 = vmatpush1.msra.mxu0 0.0
        %2971 = vmatprep.subr.mxu0 0.0
        %2972 = vmatpush1.msra.mxu0 0.0
        %2973 = vmatprep.mubr.f32.mxu0 0.0
        %2974 = vmatmul.mubr.f32.gmra.mrb[0].mxu0 %v2830
        %v2975 = vpop.f32.mrb[0].mxu0
        %v2976 = vadd.f32 0.0, %v2975
        %v2977 = vpop.f32.mrb[0].mxu0
        %2978 = vmatprep.mubr.f32.mxu0 0.0
        %2979 = vmatmul.mubr.f32.gmra.mrb[0].mxu0 %v2832
        %v2980 = vpop.f32.mrb[0].mxu0
        %v2981 = vadd.f32 0.0, %v2980
        %v2982 = vpop.f32.mrb[0].mxu0
        %2983 = vdwg.mxu0
        %v2984 = vmax.f32 %v2901, %v2976
        %v2985 = vmax.f32 %v2906, %v2981
        %2988 = vrot.lane.b32.xlu0 %v2984, 56
        %v2989 = vpop.permute.xlu0 %2988
        %2990 = vrot.lane.b32.xlu0 %v2985, 56
        %v2991 = vpop.permute.xlu0 %2990
        %vm2994 = vcmask 523712
        %2995 = vst.msk [vmem:[#allocation2 + $0x8] sm:$0xff] %vm2994, %v2989
        %2996 = vst.msk [vmem:[#allocation2 + $0x28] sm:$0xff] %vm2994, %v2991
        %2997 = vst [vmem:[#allocation2] sm:$0xff] 0.0
        %2998 = vst [vmem:[#allocation2 + $0x20] sm:$0xff] 0.0
        %vm2999 = vcmask 654848
        %3000 = vst.msk [vmem:[#allocation2 + $0x8] sm:$0xff] %vm2999, 0.0
        %3001 = vst.msk [vmem:[#allocation2 + $0x28] sm:$0xff] %vm2999, 0.0
        %3002 = vst [vmem:[#allocation3] sm:$0xff] 0.0
        %3003 = vst [vmem:[#allocation3 + $0x20] sm:$0xff] 0.0
        %3004 = vst [vmem:[#allocation3 + $0x40] sm:$0xff] 0.0
        %3005 = vst [vmem:[#allocation3 + $0x60] sm:$0xff] 0.0
        %3006 = vst.msk [vmem:[#allocation3 + $0x8] sm:$0xff] %vm2999, 0.0
        %3007 = vst.msk [vmem:[#allocation3 + $0x28] sm:$0xff] %vm2999, 0.0
        %3008 = vst.msk [vmem:[#allocation3 + $0x48] sm:$0xff] %vm2999, 0.0
        %3009 = vst.msk [vmem:[#allocation3 + $0x68] sm:$0xff] %vm2999, 0.0
        %v3010 = vld [vmem:[%s5] sm:$0xff]
        %v3011 = vld [vmem:[%s5 + $0x8] sm:$0xff]
        %v3012 = vld [vmem:[%s5 + $0x10] sm:$0xff]
        %v3013 = vld [vmem:[%s5 + $0x18] sm:$0xff]
        %v3014 = vld [vmem:[%s6] sm:$0xff]
        %v3015 = vld [vmem:[%s6 + $0x8] sm:$0xff]
        %v3016 = vld [vmem:[#allocation2] sm:$0xff]
        %v3017 = vld [vmem:[#allocation2 + $0x8] sm:$0xff]
        %v3018 = vld [vmem:[#allocation2 + $0x20] sm:$0xff]
        %v3019 = vld [vmem:[#allocation2 + $0x28] sm:$0xff]
        %3021 = vrot.lane.b32.xlu0 %v616, 119
        %v3022 = vpop.permute.xlu0 %3021
        %v3024 = vmul.f32 %v3016, %v3022
        %v3025 = vmul.f32 %v3017, %v3022
        %v3026 = vmul.f32 %v3018, %v3022
        %v3027 = vmul.f32 %v3019, %v3022
        %3032 = vrot.lane.b32.xlu0 %v3024, 9
        %v3033 = vpop.permute.xlu0 %3032
        %3034 = vrot.lane.b32.xlu0 %v3025, 9
        %v3035 = vpop.permute.xlu0 %3034
        %3036 = vrot.lane.b32.xlu0 %v3026, 9
        %v3037 = vpop.permute.xlu0 %3036
        %3038 = vrot.lane.b32.xlu0 %v3027, 9
        %v3039 = vpop.permute.xlu0 %3038
        %vm3040 = vcmask 72704
        %v3041 = vsel %vm3040, %v3033, %v3035
        %v3042 = vsel %vm3040, %v3037, %v3039
        %vm3045 = vcmask 523264
        %3046 = vst.msk [vmem:[#allocation5] sm:$0xff] %vm3045, %v3041
        %3047 = vst.msk [vmem:[#allocation5 + $0x10] sm:$0xff] %vm3045, %v3042
        %v3048 = vld [vmem:[#allocation2] sm:$0xff]
        %v3049 = vld [vmem:[#allocation2 + $0x8] sm:$0xff]
        %v3050 = vld [vmem:[#allocation2 + $0x20] sm:$0xff]
        %v3051 = vld [vmem:[#allocation2 + $0x28] sm:$0xff]
        %3056 = vrot.lane.b32.xlu0 %v3048, 8
        %v3057 = vpop.permute.xlu0 %3056
        %3058 = vrot.lane.b32.xlu0 %v3049, 8
        %v3059 = vpop.permute.xlu0 %3058
        %3060 = vrot.lane.b32.xlu0 %v3050, 8
        %v3061 = vpop.permute.xlu0 %3060
        %3062 = vrot.lane.b32.xlu0 %v3051, 8
        %v3063 = vpop.permute.xlu0 %3062
        %v3064 = vsel %vm1703, %v3057, %v3059
        %v3065 = vsel %vm1703, %v3061, %v3063
        %3068 = vst.msk [vmem:[#allocation5 + $0x20] sm:$0xff] %vm3045, %v3064
        %3069 = vst.msk [vmem:[#allocation5 + $0x30] sm:$0xff] %vm3045, %v3065
        %v3070 = vld [vmem:[#allocation2] sm:$0xff]
        %v3071 = vld [vmem:[#allocation2 + $0x8] sm:$0xff]
        %v3072 = vld [vmem:[#allocation2 + $0x20] sm:$0xff]
        %v3073 = vld [vmem:[#allocation2 + $0x28] sm:$0xff]
        %3075 = vrot.lane.b32.xlu0 %v619, 121
        %v3076 = vpop.permute.xlu0 %3075
        %v3078 = vmul.f32 %v3070, %v3076
        %v3079 = vmul.f32 %v3071, %v3076
        %v3080 = vmul.f32 %v3072, %v3076
        %v3081 = vmul.f32 %v3073, %v3076
        %3086 = vrot.lane.b32.xlu0 %v3078, 7
        %v3087 = vpop.permute.xlu0 %3086
        %3088 = vrot.lane.b32.xlu0 %v3079, 7
        %v3089 = vpop.permute.xlu0 %3088
        %3090 = vrot.lane.b32.xlu0 %v3080, 7
        %v3091 = vpop.permute.xlu0 %3090
        %3092 = vrot.lane.b32.xlu0 %v3081, 7
        %v3093 = vpop.permute.xlu0 %3092
        %vm3094 = vcmask 56320
        %v3095 = vsel %vm3094, %v3087, %v3089
        %v3096 = vsel %vm3094, %v3091, %v3093
        %3099 = vst.msk [vmem:[#allocation5 + $0x40] sm:$0xff] %vm3045, %v3095
        %3100 = vst.msk [vmem:[#allocation5 + $0x50] sm:$0xff] %vm3045, %v3096
        %v3101 = vld [vmem:[#allocation2] sm:$0xff]
        %v3102 = vld [vmem:[#allocation2 + $0x8] sm:$0xff]
        %v3103 = vld [vmem:[#allocation2 + $0x20] sm:$0xff]
        %v3104 = vld [vmem:[#allocation2 + $0x28] sm:$0xff]
        %3105 = vrot.lane.b32.xlu0 %v616, 127
        %v3106 = vpop.permute.xlu0 %3105
        %v3108 = vmul.f32 %v3101, %v3106
        %v3109 = vmul.f32 %v3102, %v3106
        %v3110 = vmul.f32 %v3103, %v3106
        %v3111 = vmul.f32 %v3104, %v3106
        %3116 = vrot.lane.b32.xlu0 %v3108, 1
        %v3117 = vpop.permute.xlu0 %3116
        %3118 = vrot.lane.b32.xlu0 %v3109, 1
        %v3119 = vpop.permute.xlu0 %3118
        %3120 = vrot.lane.b32.xlu0 %v3110, 1
        %v3121 = vpop.permute.xlu0 %3120
        %3122 = vrot.lane.b32.xlu0 %v3111, 1
        %v3123 = vpop.permute.xlu0 %3122
        %v3124 = vsel %vm776, %v3117, %v3119
        %v3125 = vsel %vm776, %v3121, %v3123
        %3128 = vst.msk [vmem:[#allocation5 + $0x60] sm:$0xff] %vm3045, %v3124
        %3129 = vst.msk [vmem:[#allocation5 + $0x70] sm:$0xff] %vm3045, %v3125
        %v3130 = vld [vmem:[#allocation2 + $0x8] sm:$0xff]
        %v3131 = vld [vmem:[#allocation2 + $0x28] sm:$0xff]
        %3132 = vst.msk [vmem:[#allocation5 + $0x80] sm:$0xff] %vm3045, %v3130
        %3133 = vst.msk [vmem:[#allocation5 + $0x90] sm:$0xff] %vm3045, %v3131
        %v3134 = vld [vmem:[#allocation2 + $0x8] sm:$0xff]
        %v3135 = vld [vmem:[#allocation2 + $0x28] sm:$0xff]
        %3136 = vrot.lane.b32.xlu0 %v619, 1
        %v3137 = vpop.permute.xlu0 %3136
        %v3139 = vmul.f32 %v3134, %v3137
        %v3140 = vmul.f32 %v3135, %v3137
        %3143 = vrot.lane.b32.xlu0 %v3139, 127
        %v3144 = vpop.permute.xlu0 %3143
        %3145 = vrot.lane.b32.xlu0 %v3140, 127
        %v3146 = vpop.permute.xlu0 %3145
        %3149 = vst.msk [vmem:[#allocation5 + $0xa0] sm:$0xff] %vm3045, %v3144
        %3150 = vst.msk [vmem:[#allocation5 + $0xb0] sm:$0xff] %vm3045, %v3146
        %v3151 = vld [vmem:[#allocation2 + $0x8] sm:$0xff]
        %v3152 = vld [vmem:[#allocation2 + $0x28] sm:$0xff]
        %3153 = vrot.lane.b32.xlu0 %v616, 7
        %v3154 = vpop.permute.xlu0 %3153
        %v3156 = vmul.f32 %v3151, %v3154
        %v3157 = vmul.f32 %v3152, %v3154
        %3160 = vrot.lane.b32.xlu0 %v3156, 121
        %v3161 = vpop.permute.xlu0 %3160
        %3162 = vrot.lane.b32.xlu0 %v3157, 121
        %v3163 = vpop.permute.xlu0 %3162
        %3166 = vst.msk [vmem:[#allocation5 + $0xc0] sm:$0xff] %vm3045, %v3161
        %3167 = vst.msk [vmem:[#allocation5 + $0xd0] sm:$0xff] %vm3045, %v3163
        %v3168 = vld [vmem:[#allocation2 + $0x8] sm:$0xff]
        %v3169 = vld [vmem:[#allocation2 + $0x28] sm:$0xff]
        %3172 = vrot.lane.b32.xlu0 %v3168, 120
        %v3173 = vpop.permute.xlu0 %3172
        %3174 = vrot.lane.b32.xlu0 %v3169, 120
        %v3175 = vpop.permute.xlu0 %3174
        %3178 = vst.msk [vmem:[#allocation5 + $0xe0] sm:$0xff] %vm3045, %v3173
        %3179 = vst.msk [vmem:[#allocation5 + $0xf0] sm:$0xff] %vm3045, %v3175
        %v3180 = vld [vmem:[#allocation2 + $0x8] sm:$0xff]
        %v3181 = vld [vmem:[#allocation2 + $0x28] sm:$0xff]
        %3182 = vrot.lane.b32.xlu0 %v619, 9
        %v3183 = vpop.permute.xlu0 %3182
        %v3185 = vmul.f32 %v3180, %v3183
        %v3186 = vmul.f32 %v3181, %v3183
        %3189 = vrot.lane.b32.xlu0 %v3185, 119
        %v3190 = vpop.permute.xlu0 %3189
        %3191 = vrot.lane.b32.xlu0 %v3186, 119
        %v3192 = vpop.permute.xlu0 %3191
        %3195 = vst.msk [vmem:[#allocation5 + $0x100] sm:$0xff] %vm3045, %v3190
        %3196 = vst.msk [vmem:[#allocation5 + $0x110] sm:$0xff] %vm3045, %v3192
        %v3197 = vld [vmem:[#allocation5] sm:$0xff]
        %v3198 = vld [vmem:[#allocation5 + $0x10] sm:$0xff]
        %v3199 = vld [vmem:[#allocation5 + $0x20] sm:$0xff]
        %v3200 = vld [vmem:[#allocation5 + $0x30] sm:$0xff]
        %v3201 = vld [vmem:[#allocation5 + $0x40] sm:$0xff]
        %v3202 = vld [vmem:[#allocation5 + $0x50] sm:$0xff]
        %v3203 = vld [vmem:[#allocation5 + $0x60] sm:$0xff]
        %v3204 = vld [vmem:[#allocation5 + $0x70] sm:$0xff]
        %v3205 = vld [vmem:[#allocation5 + $0x80] sm:$0xff]
        %v3206 = vld [vmem:[#allocation5 + $0x90] sm:$0xff]
        %v3207 = vld [vmem:[#allocation5 + $0xa0] sm:$0xff]
        %v3208 = vld [vmem:[#allocation5 + $0xb0] sm:$0xff]
        %v3209 = vld [vmem:[#allocation5 + $0xc0] sm:$0xff]
        %v3210 = vld [vmem:[#allocation5 + $0xd0] sm:$0xff]
        %v3211 = vld [vmem:[#allocation5 + $0xe0] sm:$0xff]
        %v3212 = vld [vmem:[#allocation5 + $0xf0] sm:$0xff]
        %v3213 = vld [vmem:[#allocation5 + $0x100] sm:$0xff]
        %v3214 = vld [vmem:[#allocation5 + $0x110] sm:$0xff]
        %3216 = vset.pattern.permute.xlu0 0
        %3217 = vperm.xlu0 %3216, %v3014
        %v3218 = vpop.permute.xlu0 %3217
        %3221 = vset.pattern.permute.xlu0 0
        %3222 = vperm.xlu0 %3221, %v3015
        %v3223 = vpop.permute.xlu0 %3222
        %v3226 = vsel %vm709, %v3011, 0
        %v3229 = vsel %vm709, %v3013, 0
        %3231 = vmatprep.subr.mxu0 0.0
        %3232 = vmatpush1.msra.mxu0 %v3197
        %3233 = vmatprep.subr.mxu0 0.0
        %3234 = vmatpush1.msra.mxu0 %v3198
        %3235 = vmatprep.subr.mxu0 0.0
        %3236 = vmatpush1.msra.mxu0 %v3199
        %3237 = vmatprep.subr.mxu0 0.0
        %3238 = vmatpush1.msra.mxu0 %v3200
        %3239 = vmatprep.subr.mxu0 0.0
        %3240 = vmatpush1.msra.mxu0 %v3201
        %3241 = vmatprep.subr.mxu0 0.0
        %3242 = vmatpush1.msra.mxu0 %v3202
        %3243 = vmatprep.subr.mxu0 0.0
        %3244 = vmatpush1.msra.mxu0 %v3203
        %3245 = vmatprep.subr.mxu0 0.0
        %3246 = vmatpush1.msra.mxu0 %v3204
        %3247 = vmatprep.subr.mxu0 0.0
        %3248 = vmatpush1.msra.mxu0 %v3205
        %3249 = vmatprep.subr.mxu0 0.0
        %3250 = vmatpush1.msra.mxu0 %v3206
        %3251 = vmatprep.subr.mxu0 0.0
        %3252 = vmatpush1.msra.mxu0 %v3207
        %3253 = vmatprep.subr.mxu0 0.0
        %3254 = vmatpush1.msra.mxu0 %v3208
        %3255 = vmatprep.subr.mxu0 0.0
        %3256 = vmatpush1.msra.mxu0 %v3209
        %3257 = vmatprep.subr.mxu0 0.0
        %3258 = vmatpush1.msra.mxu0 %v3210
        %3259 = vmatprep.subr.mxu0 0.0
        %3260 = vmatpush1.msra.mxu0 %v3211
        %3261 = vmatprep.subr.mxu0 0.0
        %3262 = vmatpush1.msra.mxu0 %v3212
        %3263 = vmatprep.subr.mxu0 0.0
        %3264 = vmatpush1.msra.mxu0 %v3213
        %3265 = vmatprep.subr.mxu0 0.0
        %3266 = vmatpush1.msra.mxu0 %v3214
        %3267 = vmatprep.subr.mxu0 0.0
        %3268 = vmatpush1.msra.mxu0 0.0
        %3269 = vmatprep.subr.mxu0 0.0
        %3270 = vmatpush1.msra.mxu0 0.0
        %3271 = vmatprep.subr.mxu0 0.0
        %3272 = vmatpush1.msra.mxu0 0.0
        %3273 = vmatprep.subr.mxu0 0.0
        %3274 = vmatpush1.msra.mxu0 0.0
        %3275 = vmatprep.subr.mxu0 0.0
        %3276 = vmatpush1.msra.mxu0 0.0
        %3277 = vmatprep.subr.mxu0 0.0
        %3278 = vmatpush1.msra.mxu0 0.0
        %3279 = vmatprep.subr.mxu0 0.0
        %3280 = vmatpush1.msra.mxu0 0.0
        %3281 = vmatprep.subr.mxu0 0.0
        %3282 = vmatpush1.msra.mxu0 0.0
        %3283 = vmatprep.subr.mxu0 0.0
        %3284 = vmatpush1.msra.mxu0 0.0
        %3285 = vmatprep.subr.mxu0 0.0
        %3286 = vmatpush1.msra.mxu0 0.0
        %3287 = vmatprep.subr.mxu0 0.0
        %3288 = vmatpush1.msra.mxu0 0.0
        %3289 = vmatprep.subr.mxu0 0.0
        %3290 = vmatpush1.msra.mxu0 0.0
        %3291 = vmatprep.subr.mxu0 0.0
        %3292 = vmatpush1.msra.mxu0 0.0
        %3293 = vmatprep.subr.mxu0 0.0
        %3294 = vmatpush1.msra.mxu0 0.0
        %3295 = vmatprep.mubr.f32.mxu0 %v3226
        %3296 = vmatmul.mubr.f32.gmra.mrb[0].mxu0 %v3010
        %v3297 = vpop.f32.mrb[0].mxu0
        %v3298 = vadd.f32 %v3218, %v3297
        %v3299 = vpop.f32.mrb[0].mxu0
        %3300 = vmatprep.mubr.f32.mxu0 %v3229
        %3301 = vmatmul.mubr.f32.gmra.mrb[0].mxu0 %v3012
        %v3302 = vpop.f32.mrb[0].mxu0
        %v3303 = vadd.f32 %v3223, %v3302
        %v3304 = vpop.f32.mrb[0].mxu0
        %3305 = vdwg.mxu0
        %vm3306 = vcmp.gt.f32.partialorder %v3298, 0.0
        %vm3307 = vcmp.gt.f32.partialorder %v3303, 0.0
        %v3308 = vmin.f32 %v3298, 0.0
        %v3309 = vmin.f32 %v3303, 0.0
        %v3310 = vmul.f32 %v3308, 1.442695
        %v3311 = vpow.pop %v3310
        %v3312 = vmul.f32 %v3309, 1.442695
        %v3313 = vpow.pop %v3312
        %v3314 = vsub.f32 %v3311, 1.0
        %v3315 = vsub.f32 %v3313, 1.0
        %v3316 = vsel %vm3306, %v3298, %v3314
        %v3317 = vsel %vm3307, %v3303, %v3315
        %3318 = vst.msk [vmem:[#allocation3 + $0x8] sm:$0xff] %vm3045, %v3316
        %3319 = vst.msk [vmem:[#allocation3 + $0x28] sm:$0xff] %vm3045, %v3317
        %v3320 = vld [vmem:[%s7] sm:$0xff]
        %v3321 = vld [vmem:[%s7 + $0x8] sm:$0xff]
        %v3322 = vld [vmem:[%s7 + $0x10] sm:$0xff]
        %v3323 = vld [vmem:[%s7 + $0x18] sm:$0xff]
        %v3324 = vld [vmem:[%s8] sm:$0xff]
        %v3325 = vld [vmem:[%s8 + $0x8] sm:$0xff]
        %v3326 = vld [vmem:[#allocation3] sm:$0xff]
        %v3327 = vld [vmem:[#allocation3 + $0x8] sm:$0xff]
        %v3328 = vld [vmem:[#allocation3 + $0x20] sm:$0xff]
        %v3329 = vld [vmem:[#allocation3 + $0x28] sm:$0xff]
        %v3330 = vmul.f32 %v3326, %v3022
        %v3331 = vmul.f32 %v3327, %v3022
        %v3332 = vmul.f32 %v3328, %v3022
        %v3333 = vmul.f32 %v3329, %v3022
        %3338 = vrot.lane.b32.xlu0 %v3330, 9
        %v3339 = vpop.permute.xlu0 %3338
        %3340 = vrot.lane.b32.xlu0 %v3331, 9
        %v3341 = vpop.permute.xlu0 %3340
        %3342 = vrot.lane.b32.xlu0 %v3332, 9
        %v3343 = vpop.permute.xlu0 %3342
        %3344 = vrot.lane.b32.xlu0 %v3333, 9
        %v3345 = vpop.permute.xlu0 %3344
        %v3346 = vsel %vm3040, %v3339, %v3341
        %v3347 = vsel %vm3040, %v3343, %v3345
        %3350 = vst.msk [vmem:[#allocation5] sm:$0xff] %vm3045, %v3346
        %3351 = vst.msk [vmem:[#allocation5 + $0x10] sm:$0xff] %vm3045, %v3347
        %v3352 = vld [vmem:[#allocation3] sm:$0xff]
        %v3353 = vld [vmem:[#allocation3 + $0x8] sm:$0xff]
        %v3354 = vld [vmem:[#allocation3 + $0x20] sm:$0xff]
        %v3355 = vld [vmem:[#allocation3 + $0x28] sm:$0xff]
        %3360 = vrot.lane.b32.xlu0 %v3352, 8
        %v3361 = vpop.permute.xlu0 %3360
        %3362 = vrot.lane.b32.xlu0 %v3353, 8
        %v3363 = vpop.permute.xlu0 %3362
        %3364 = vrot.lane.b32.xlu0 %v3354, 8
        %v3365 = vpop.permute.xlu0 %3364
        %3366 = vrot.lane.b32.xlu0 %v3355, 8
        %v3367 = vpop.permute.xlu0 %3366
        %v3368 = vsel %vm1703, %v3361, %v3363
        %v3369 = vsel %vm1703, %v3365, %v3367
        %3372 = vst.msk [vmem:[#allocation5 + $0x20] sm:$0xff] %vm3045, %v3368
        %3373 = vst.msk [vmem:[#allocation5 + $0x30] sm:$0xff] %vm3045, %v3369
        %v3374 = vld [vmem:[#allocation3] sm:$0xff]
        %v3375 = vld [vmem:[#allocation3 + $0x8] sm:$0xff]
        %v3376 = vld [vmem:[#allocation3 + $0x20] sm:$0xff]
        %v3377 = vld [vmem:[#allocation3 + $0x28] sm:$0xff]
        %v3378 = vmul.f32 %v3374, %v3076
        %v3379 = vmul.f32 %v3375, %v3076
        %v3380 = vmul.f32 %v3376, %v3076
        %v3381 = vmul.f32 %v3377, %v3076
        %3386 = vrot.lane.b32.xlu0 %v3378, 7
        %v3387 = vpop.permute.xlu0 %3386
        %3388 = vrot.lane.b32.xlu0 %v3379, 7
        %v3389 = vpop.permute.xlu0 %3388
        %3390 = vrot.lane.b32.xlu0 %v3380, 7
        %v3391 = vpop.permute.xlu0 %3390
        %3392 = vrot.lane.b32.xlu0 %v3381, 7
        %v3393 = vpop.permute.xlu0 %3392
        %v3394 = vsel %vm3094, %v3387, %v3389
        %v3395 = vsel %vm3094, %v3391, %v3393
        %3398 = vst.msk [vmem:[#allocation5 + $0x40] sm:$0xff] %vm3045, %v3394
        %3399 = vst.msk [vmem:[#allocation5 + $0x50] sm:$0xff] %vm3045, %v3395
        %v3400 = vld [vmem:[#allocation3] sm:$0xff]
        %v3401 = vld [vmem:[#allocation3 + $0x8] sm:$0xff]
        %v3402 = vld [vmem:[#allocation3 + $0x20] sm:$0xff]
        %v3403 = vld [vmem:[#allocation3 + $0x28] sm:$0xff]
        %v3404 = vmul.f32 %v3400, %v3106
        %v3405 = vmul.f32 %v3401, %v3106
        %v3406 = vmul.f32 %v3402, %v3106
        %v3407 = vmul.f32 %v3403, %v3106
        %3412 = vrot.lane.b32.xlu0 %v3404, 1
        %v3413 = vpop.permute.xlu0 %3412
        %3414 = vrot.lane.b32.xlu0 %v3405, 1
        %v3415 = vpop.permute.xlu0 %3414
        %3416 = vrot.lane.b32.xlu0 %v3406, 1
        %v3417 = vpop.permute.xlu0 %3416
        %3418 = vrot.lane.b32.xlu0 %v3407, 1
        %v3419 = vpop.permute.xlu0 %3418
        %v3420 = vsel %vm776, %v3413, %v3415
        %v3421 = vsel %vm776, %v3417, %v3419
        %3424 = vst.msk [vmem:[#allocation5 + $0x60] sm:$0xff] %vm3045, %v3420
        %3425 = vst.msk [vmem:[#allocation5 + $0x70] sm:$0xff] %vm3045, %v3421
        %v3426 = vld [vmem:[#allocation3 + $0x8] sm:$0xff]
        %v3427 = vld [vmem:[#allocation3 + $0x28] sm:$0xff]
        %3428 = vst.msk [vmem:[#allocation5 + $0x80] sm:$0xff] %vm3045, %v3426
        %3429 = vst.msk [vmem:[#allocation5 + $0x90] sm:$0xff] %vm3045, %v3427
        %v3430 = vld [vmem:[#allocation3 + $0x8] sm:$0xff]
        %v3431 = vld [vmem:[#allocation3 + $0x28] sm:$0xff]
        %v3432 = vmul.f32 %v3430, %v3137
        %v3433 = vmul.f32 %v3431, %v3137
        %3436 = vrot.lane.b32.xlu0 %v3432, 127
        %v3437 = vpop.permute.xlu0 %3436
        %3438 = vrot.lane.b32.xlu0 %v3433, 127
        %v3439 = vpop.permute.xlu0 %3438
        %3442 = vst.msk [vmem:[#allocation5 + $0xa0] sm:$0xff] %vm3045, %v3437
        %3443 = vst.msk [vmem:[#allocation5 + $0xb0] sm:$0xff] %vm3045, %v3439
        %v3444 = vld [vmem:[#allocation3 + $0x8] sm:$0xff]
        %v3445 = vld [vmem:[#allocation3 + $0x28] sm:$0xff]
        %v3446 = vmul.f32 %v3444, %v3154
        %v3447 = vmul.f32 %v3445, %v3154
        %3450 = vrot.lane.b32.xlu0 %v3446, 121
        %v3451 = vpop.permute.xlu0 %3450
        %3452 = vrot.lane.b32.xlu0 %v3447, 121
        %v3453 = vpop.permute.xlu0 %3452
        %3456 = vst.msk [vmem:[#allocation5 + $0xc0] sm:$0xff] %vm3045, %v3451
        %3457 = vst.msk [vmem:[#allocation5 + $0xd0] sm:$0xff] %vm3045, %v3453
        %v3458 = vld [vmem:[#allocation3 + $0x8] sm:$0xff]
        %v3459 = vld [vmem:[#allocation3 + $0x28] sm:$0xff]
        %3462 = vrot.lane.b32.xlu0 %v3458, 120
        %v3463 = vpop.permute.xlu0 %3462
        %3464 = vrot.lane.b32.xlu0 %v3459, 120
        %v3465 = vpop.permute.xlu0 %3464
        %3468 = vst.msk [vmem:[#allocation5 + $0xe0] sm:$0xff] %vm3045, %v3463
        %3469 = vst.msk [vmem:[#allocation5 + $0xf0] sm:$0xff] %vm3045, %v3465
        %v3470 = vld [vmem:[#allocation3 + $0x8] sm:$0xff]
        %v3471 = vld [vmem:[#allocation3 + $0x28] sm:$0xff]
        %v3472 = vmul.f32 %v3470, %v3183
        %v3473 = vmul.f32 %v3471, %v3183
        %3476 = vrot.lane.b32.xlu0 %v3472, 119
        %v3477 = vpop.permute.xlu0 %3476
        %3478 = vrot.lane.b32.xlu0 %v3473, 119
        %v3479 = vpop.permute.xlu0 %3478
        %3482 = vst.msk [vmem:[#allocation5 + $0x100] sm:$0xff] %vm3045, %v3477
        %3483 = vst.msk [vmem:[#allocation5 + $0x110] sm:$0xff] %vm3045, %v3479
        %v3484 = vld [vmem:[#allocation5] sm:$0xff]
        %v3485 = vld [vmem:[#allocation5 + $0x10] sm:$0xff]
        %v3486 = vld [vmem:[#allocation5 + $0x20] sm:$0xff]
        %v3487 = vld [vmem:[#allocation5 + $0x30] sm:$0xff]
        %v3488 = vld [vmem:[#allocation5 + $0x40] sm:$0xff]
        %v3489 = vld [vmem:[#allocation5 + $0x50] sm:$0xff]
        %v3490 = vld [vmem:[#allocation5 + $0x60] sm:$0xff]
        %v3491 = vld [vmem:[#allocation5 + $0x70] sm:$0xff]
        %v3492 = vld [vmem:[#allocation5 + $0x80] sm:$0xff]
        %v3493 = vld [vmem:[#allocation5 + $0x90] sm:$0xff]
        %v3494 = vld [vmem:[#allocation5 + $0xa0] sm:$0xff]
        %v3495 = vld [vmem:[#allocation5 + $0xb0] sm:$0xff]
        %v3496 = vld [vmem:[#allocation5 + $0xc0] sm:$0xff]
        %v3497 = vld [vmem:[#allocation5 + $0xd0] sm:$0xff]
        %v3498 = vld [vmem:[#allocation5 + $0xe0] sm:$0xff]
        %v3499 = vld [vmem:[#allocation5 + $0xf0] sm:$0xff]
        %v3500 = vld [vmem:[#allocation5 + $0x100] sm:$0xff]
        %v3501 = vld [vmem:[#allocation5 + $0x110] sm:$0xff]
        %3503 = vset.pattern.permute.xlu0 0
        %3504 = vperm.xlu0 %3503, %v3324
        %v3505 = vpop.permute.xlu0 %3504
        %3508 = vset.pattern.permute.xlu0 0
        %3509 = vperm.xlu0 %3508, %v3325
        %v3510 = vpop.permute.xlu0 %3509
        %v3513 = vsel %vm709, %v3321, 0
        %v3516 = vsel %vm709, %v3323, 0
        %3518 = vmatprep.subr.mxu0 0.0
        %3519 = vmatpush1.msra.mxu0 %v3484
        %3520 = vmatprep.subr.mxu0 0.0
        %3521 = vmatpush1.msra.mxu0 %v3485
        %3522 = vmatprep.subr.mxu0 0.0
        %3523 = vmatpush1.msra.mxu0 %v3486
        %3524 = vmatprep.subr.mxu0 0.0
        %3525 = vmatpush1.msra.mxu0 %v3487
        %3526 = vmatprep.subr.mxu0 0.0
        %3527 = vmatpush1.msra.mxu0 %v3488
        %3528 = vmatprep.subr.mxu0 0.0
        %3529 = vmatpush1.msra.mxu0 %v3489
        %3530 = vmatprep.subr.mxu0 0.0
        %3531 = vmatpush1.msra.mxu0 %v3490
        %3532 = vmatprep.subr.mxu0 0.0
        %3533 = vmatpush1.msra.mxu0 %v3491
        %3534 = vmatprep.subr.mxu0 0.0
        %3535 = vmatpush1.msra.mxu0 %v3492
        %3536 = vmatprep.subr.mxu0 0.0
        %3537 = vmatpush1.msra.mxu0 %v3493
        %3538 = vmatprep.subr.mxu0 0.0
        %3539 = vmatpush1.msra.mxu0 %v3494
        %3540 = vmatprep.subr.mxu0 0.0
        %3541 = vmatpush1.msra.mxu0 %v3495
        %3542 = vmatprep.subr.mxu0 0.0
        %3543 = vmatpush1.msra.mxu0 %v3496
        %3544 = vmatprep.subr.mxu0 0.0
        %3545 = vmatpush1.msra.mxu0 %v3497
        %3546 = vmatprep.subr.mxu0 0.0
        %3547 = vmatpush1.msra.mxu0 %v3498
        %3548 = vmatprep.subr.mxu0 0.0
        %3549 = vmatpush1.msra.mxu0 %v3499
        %3550 = vmatprep.subr.mxu0 0.0
        %3551 = vmatpush1.msra.mxu0 %v3500
        %3552 = vmatprep.subr.mxu0 0.0
        %3553 = vmatpush1.msra.mxu0 %v3501
        %3554 = vmatprep.subr.mxu0 0.0
        %3555 = vmatpush1.msra.mxu0 0.0
        %3556 = vmatprep.subr.mxu0 0.0
        %3557 = vmatpush1.msra.mxu0 0.0
        %3558 = vmatprep.subr.mxu0 0.0
        %3559 = vmatpush1.msra.mxu0 0.0
        %3560 = vmatprep.subr.mxu0 0.0
        %3561 = vmatpush1.msra.mxu0 0.0
        %3562 = vmatprep.subr.mxu0 0.0
        %3563 = vmatpush1.msra.mxu0 0.0
        %3564 = vmatprep.subr.mxu0 0.0
        %3565 = vmatpush1.msra.mxu0 0.0
        %3566 = vmatprep.subr.mxu0 0.0
        %3567 = vmatpush1.msra.mxu0 0.0
        %3568 = vmatprep.subr.mxu0 0.0
        %3569 = vmatpush1.msra.mxu0 0.0
        %3570 = vmatprep.subr.mxu0 0.0
        %3571 = vmatpush1.msra.mxu0 0.0
        %3572 = vmatprep.subr.mxu0 0.0
        %3573 = vmatpush1.msra.mxu0 0.0
        %3574 = vmatprep.subr.mxu0 0.0
        %3575 = vmatpush1.msra.mxu0 0.0
        %3576 = vmatprep.subr.mxu0 0.0
        %3577 = vmatpush1.msra.mxu0 0.0
        %3578 = vmatprep.subr.mxu0 0.0
        %3579 = vmatpush1.msra.mxu0 0.0
        %3580 = vmatprep.subr.mxu0 0.0
        %3581 = vmatpush1.msra.mxu0 0.0
        %3582 = vmatprep.mubr.f32.mxu0 %v3513
        %3583 = vmatmul.mubr.f32.gmra.mrb[0].mxu0 %v3320
        %v3584 = vpop.f32.mrb[0].mxu0
        %v3585 = vadd.f32 %v3505, %v3584
        %v3586 = vpop.f32.mrb[0].mxu0
        %3587 = vmatprep.mubr.f32.mxu0 %v3516
        %3588 = vmatmul.mubr.f32.gmra.mrb[0].mxu0 %v3322
        %v3589 = vpop.f32.mrb[0].mxu0
        %v3590 = vadd.f32 %v3510, %v3589
        %v3591 = vpop.f32.mrb[0].mxu0
        %3592 = vdwg.mxu0
        %vm3593 = vcmp.gt.f32.partialorder %v3585, 0.0
        %vm3594 = vcmp.gt.f32.partialorder %v3590, 0.0
        %v3595 = vmin.f32 %v3585, 0.0
        %v3596 = vmin.f32 %v3590, 0.0
        %v3597 = vmul.f32 %v3595, 1.442695
        %v3598 = vpow.pop %v3597
        %v3599 = vmul.f32 %v3596, 1.442695
        %v3600 = vpow.pop %v3599
        %v3601 = vsub.f32 %v3598, 1.0
        %v3602 = vsub.f32 %v3600, 1.0
        %v3603 = vsel %vm3593, %v3585, %v3601
        %v3604 = vsel %vm3594, %v3590, %v3602
        %3605 = vst.msk [vmem:[#allocation4] sm:$0xff] %vm3045, %v3603
        %3606 = vst.msk [vmem:[#allocation4 + $0x10] sm:$0xff] %vm3045, %v3604
        %v3607 = vld [vmem:[#allocation4] sm:$0xff]
        %v3608 = vld [vmem:[#allocation4 + $0x10] sm:$0xff]
        %3611 = vrot.lane.b32.xlu0 %v3607, 120
        %v3612 = vpop.permute.xlu0 %3611
        %3613 = vrot.lane.b32.xlu0 %v3608, 120
        %v3614 = vpop.permute.xlu0 %3613
        %v3617 = vmax.f32 %v3607, %v3612
        %v3618 = vmax.f32 %v3608, %v3614
        %v3620 = vsel %vm1703, %v3617, 0
        %v3623 = vsel %vm1703, %v3618, 0
        %3625 = vmatprep.subr.mxu0 0.0
        %3626 = vmatpush1.msra.mxu0 %v593
        %3627 = vmatprep.subr.mxu0 0.0
        %3628 = vmatpush1.msra.mxu0 0.0
        %3629 = vmatprep.subr.mxu0 0.0
        %3630 = vmatpush1.msra.mxu0 0.0
        %3631 = vmatprep.subr.mxu0 0.0
        %3632 = vmatpush1.msra.mxu0 0.0
        %3633 = vmatprep.subr.mxu0 0.0
        %3634 = vmatpush1.msra.mxu0 0.0
        %3635 = vmatprep.subr.mxu0 0.0
        %3636 = vmatpush1.msra.mxu0 0.0
        %3637 = vmatprep.subr.mxu0 0.0
        %3638 = vmatpush1.msra.mxu0 0.0
        %3639 = vmatprep.subr.mxu0 0.0
        %3640 = vmatpush1.msra.mxu0 0.0
        %3641 = vmatprep.subr.mxu0 0.0
        %3642 = vmatpush1.msra.mxu0 0.0
        %3643 = vmatprep.subr.mxu0 0.0
        %3644 = vmatpush1.msra.mxu0 0.0
        %3645 = vmatprep.subr.mxu0 0.0
        %3646 = vmatpush1.msra.mxu0 0.0
        %3647 = vmatprep.subr.mxu0 0.0
        %3648 = vmatpush1.msra.mxu0 0.0
        %3649 = vmatprep.subr.mxu0 0.0
        %3650 = vmatpush1.msra.mxu0 0.0
        %3651 = vmatprep.subr.mxu0 0.0
        %3652 = vmatpush1.msra.mxu0 0.0
        %3653 = vmatprep.subr.mxu0 0.0
        %3654 = vmatpush1.msra.mxu0 0.0
        %3655 = vmatprep.subr.mxu0 0.0
        %3656 = vmatpush1.msra.mxu0 0.0
        %3657 = vmatprep.subr.mxu0 0.0
        %3658 = vmatpush1.msra.mxu0 0.0
        %3659 = vmatprep.subr.mxu0 0.0
        %3660 = vmatpush1.msra.mxu0 0.0
        %3661 = vmatprep.subr.mxu0 0.0
        %3662 = vmatpush1.msra.mxu0 0.0
        %3663 = vmatprep.subr.mxu0 0.0
        %3664 = vmatpush1.msra.mxu0 0.0
        %3665 = vmatprep.subr.mxu0 0.0
        %3666 = vmatpush1.msra.mxu0 0.0
        %3667 = vmatprep.subr.mxu0 0.0
        %3668 = vmatpush1.msra.mxu0 0.0
        %3669 = vmatprep.subr.mxu0 0.0
        %3670 = vmatpush1.msra.mxu0 0.0
        %3671 = vmatprep.subr.mxu0 0.0
        %3672 = vmatpush1.msra.mxu0 0.0
        %3673 = vmatprep.subr.mxu0 0.0
        %3674 = vmatpush1.msra.mxu0 0.0
        %3675 = vmatprep.subr.mxu0 0.0
        %3676 = vmatpush1.msra.mxu0 0.0
        %3677 = vmatprep.subr.mxu0 0.0
        %3678 = vmatpush1.msra.mxu0 0.0
        %3679 = vmatprep.subr.mxu0 0.0
        %3680 = vmatpush1.msra.mxu0 0.0
        %3681 = vmatprep.subr.mxu0 0.0
        %3682 = vmatpush1.msra.mxu0 0.0
        %3683 = vmatprep.subr.mxu0 0.0
        %3684 = vmatpush1.msra.mxu0 0.0
        %3685 = vmatprep.subr.mxu0 0.0
        %3686 = vmatpush1.msra.mxu0 0.0
        %3687 = vmatprep.subr.mxu0 0.0
        %3688 = vmatpush1.msra.mxu0 0.0
        %3689 = vmatprep.mubr.f32.mxu0 0.0
        %3690 = vmatmul.mubr.f32.gmra.mrb[0].mxu0 %v3620
        %v3691 = vpop.f32.mrb[0].mxu0
        %v3692 = vadd.f32 0.0, %v3691
        %v3693 = vpop.f32.mrb[0].mxu0
        %3694 = vmatprep.mubr.f32.mxu0 0.0
        %3695 = vmatmul.mubr.f32.gmra.mrb[0].mxu0 %v3623
        %v3696 = vpop.f32.mrb[0].mxu0
        %v3697 = vadd.f32 0.0, %v3696
        %v3698 = vpop.f32.mrb[0].mxu0
        %3699 = vdwg.mxu0
        %3700 = vmatprep.subr.mxu0 0.0
        %3701 = vmatpush1.msra.mxu0 %v600
        %3702 = vmatprep.subr.mxu0 0.0
        %3703 = vmatpush1.msra.mxu0 0.0
        %3704 = vmatprep.subr.mxu0 0.0
        %3705 = vmatpush1.msra.mxu0 0.0
        %3706 = vmatprep.subr.mxu0 0.0
        %3707 = vmatpush1.msra.mxu0 0.0
        %3708 = vmatprep.subr.mxu0 0.0
        %3709 = vmatpush1.msra.mxu0 0.0
        %3710 = vmatprep.subr.mxu0 0.0
        %3711 = vmatpush1.msra.mxu0 0.0
        %3712 = vmatprep.subr.mxu0 0.0
        %3713 = vmatpush1.msra.mxu0 0.0
        %3714 = vmatprep.subr.mxu0 0.0
        %3715 = vmatpush1.msra.mxu0 0.0
        %3716 = vmatprep.subr.mxu0 0.0
        %3717 = vmatpush1.msra.mxu0 0.0
        %3718 = vmatprep.subr.mxu0 0.0
        %3719 = vmatpush1.msra.mxu0 0.0
        %3720 = vmatprep.subr.mxu0 0.0
        %3721 = vmatpush1.msra.mxu0 0.0
        %3722 = vmatprep.subr.mxu0 0.0
        %3723 = vmatpush1.msra.mxu0 0.0
        %3724 = vmatprep.subr.mxu0 0.0
        %3725 = vmatpush1.msra.mxu0 0.0
        %3726 = vmatprep.subr.mxu0 0.0
        %3727 = vmatpush1.msra.mxu0 0.0
        %3728 = vmatprep.subr.mxu0 0.0
        %3729 = vmatpush1.msra.mxu0 0.0
        %3730 = vmatprep.subr.mxu0 0.0
        %3731 = vmatpush1.msra.mxu0 0.0
        %3732 = vmatprep.subr.mxu0 0.0
        %3733 = vmatpush1.msra.mxu0 0.0
        %3734 = vmatprep.subr.mxu0 0.0
        %3735 = vmatpush1.msra.mxu0 0.0
        %3736 = vmatprep.subr.mxu0 0.0
        %3737 = vmatpush1.msra.mxu0 0.0
        %3738 = vmatprep.subr.mxu0 0.0
        %3739 = vmatpush1.msra.mxu0 0.0
        %3740 = vmatprep.subr.mxu0 0.0
        %3741 = vmatpush1.msra.mxu0 0.0
        %3742 = vmatprep.subr.mxu0 0.0
        %3743 = vmatpush1.msra.mxu0 0.0
        %3744 = vmatprep.subr.mxu0 0.0
        %3745 = vmatpush1.msra.mxu0 0.0
        %3746 = vmatprep.subr.mxu0 0.0
        %3747 = vmatpush1.msra.mxu0 0.0
        %3748 = vmatprep.subr.mxu0 0.0
        %3749 = vmatpush1.msra.mxu0 0.0
        %3750 = vmatprep.subr.mxu0 0.0
        %3751 = vmatpush1.msra.mxu0 0.0
        %3752 = vmatprep.subr.mxu0 0.0
        %3753 = vmatpush1.msra.mxu0 0.0
        %3754 = vmatprep.subr.mxu0 0.0
        %3755 = vmatpush1.msra.mxu0 0.0
        %3756 = vmatprep.subr.mxu0 0.0
        %3757 = vmatpush1.msra.mxu0 0.0
        %3758 = vmatprep.subr.mxu0 0.0
        %3759 = vmatpush1.msra.mxu0 0.0
        %3760 = vmatprep.subr.mxu0 0.0
        %3761 = vmatpush1.msra.mxu0 0.0
        %3762 = vmatprep.subr.mxu0 0.0
        %3763 = vmatpush1.msra.mxu0 0.0
        %3764 = vmatprep.mubr.f32.mxu0 0.0
        %3765 = vmatmul.mubr.f32.gmra.mrb[0].mxu0 %v3620
        %v3766 = vpop.f32.mrb[0].mxu0
        %v3767 = vadd.f32 0.0, %v3766
        %v3768 = vpop.f32.mrb[0].mxu0
        %3769 = vmatprep.mubr.f32.mxu0 0.0
        %3770 = vmatmul.mubr.f32.gmra.mrb[0].mxu0 %v3623
        %v3771 = vpop.f32.mrb[0].mxu0
        %v3772 = vadd.f32 0.0, %v3771
        %v3773 = vpop.f32.mrb[0].mxu0
        %3774 = vdwg.mxu0
        %v3775 = vmax.f32 %v3692, %v3767
        %v3776 = vmax.f32 %v3697, %v3772
        %vm3777 = vcmask 31744
        %3778 = vst.msk [vmem:[#allocation2 + $0x8] sm:$0xff] %vm3777, %v3775
        %3779 = vst.msk [vmem:[#allocation2 + $0x28] sm:$0xff] %vm3777, %v3776
        %v3780 = vld [vmem:[#allocation4] sm:$0xff]
        %v3781 = vld [vmem:[#allocation4 + $0x10] sm:$0xff]
        %3784 = vrot.lane.b32.xlu0 %v3780, 120
        %v3785 = vpop.permute.xlu0 %3784
        %3786 = vrot.lane.b32.xlu0 %v3781, 120
        %v3787 = vpop.permute.xlu0 %3786
        %v3790 = vmax.f32 %v3780, %v3785
        %v3791 = vmax.f32 %v3781, %v3787
        %3794 = vrot.lane.b32.xlu0 %v3790, 112
        %v3795 = vpop.permute.xlu0 %3794
        %3796 = vrot.lane.b32.xlu0 %v3791, 112
        %v3797 = vpop.permute.xlu0 %3796
        %v3798 = vsel %vm1703, %v3795, 0
        %v3800 = vsel %vm1703, %v3797, 0
        %3802 = vmatprep.subr.mxu0 0.0
        %3803 = vmatpush1.msra.mxu0 %v593
        %3804 = vmatprep.subr.mxu0 0.0
        %3805 = vmatpush1.msra.mxu0 0.0
        %3806 = vmatprep.subr.mxu0 0.0
        %3807 = vmatpush1.msra.mxu0 0.0
        %3808 = vmatprep.subr.mxu0 0.0
        %3809 = vmatpush1.msra.mxu0 0.0
        %3810 = vmatprep.subr.mxu0 0.0
        %3811 = vmatpush1.msra.mxu0 0.0
        %3812 = vmatprep.subr.mxu0 0.0
        %3813 = vmatpush1.msra.mxu0 0.0
        %3814 = vmatprep.subr.mxu0 0.0
        %3815 = vmatpush1.msra.mxu0 0.0
        %3816 = vmatprep.subr.mxu0 0.0
        %3817 = vmatpush1.msra.mxu0 0.0
        %3818 = vmatprep.subr.mxu0 0.0
        %3819 = vmatpush1.msra.mxu0 0.0
        %3820 = vmatprep.subr.mxu0 0.0
        %3821 = vmatpush1.msra.mxu0 0.0
        %3822 = vmatprep.subr.mxu0 0.0
        %3823 = vmatpush1.msra.mxu0 0.0
        %3824 = vmatprep.subr.mxu0 0.0
        %3825 = vmatpush1.msra.mxu0 0.0
        %3826 = vmatprep.subr.mxu0 0.0
        %3827 = vmatpush1.msra.mxu0 0.0
        %3828 = vmatprep.subr.mxu0 0.0
        %3829 = vmatpush1.msra.mxu0 0.0
        %3830 = vmatprep.subr.mxu0 0.0
        %3831 = vmatpush1.msra.mxu0 0.0
        %3832 = vmatprep.subr.mxu0 0.0
        %3833 = vmatpush1.msra.mxu0 0.0
        %3834 = vmatprep.subr.mxu0 0.0
        %3835 = vmatpush1.msra.mxu0 0.0
        %3836 = vmatprep.subr.mxu0 0.0
        %3837 = vmatpush1.msra.mxu0 0.0
        %3838 = vmatprep.subr.mxu0 0.0
        %3839 = vmatpush1.msra.mxu0 0.0
        %3840 = vmatprep.subr.mxu0 0.0
        %3841 = vmatpush1.msra.mxu0 0.0
        %3842 = vmatprep.subr.mxu0 0.0
        %3843 = vmatpush1.msra.mxu0 0.0
        %3844 = vmatprep.subr.mxu0 0.0
        %3845 = vmatpush1.msra.mxu0 0.0
        %3846 = vmatprep.subr.mxu0 0.0
        %3847 = vmatpush1.msra.mxu0 0.0
        %3848 = vmatprep.subr.mxu0 0.0
        %3849 = vmatpush1.msra.mxu0 0.0
        %3850 = vmatprep.subr.mxu0 0.0
        %3851 = vmatpush1.msra.mxu0 0.0
        %3852 = vmatprep.subr.mxu0 0.0
        %3853 = vmatpush1.msra.mxu0 0.0
        %3854 = vmatprep.subr.mxu0 0.0
        %3855 = vmatpush1.msra.mxu0 0.0
        %3856 = vmatprep.subr.mxu0 0.0
        %3857 = vmatpush1.msra.mxu0 0.0
        %3858 = vmatprep.subr.mxu0 0.0
        %3859 = vmatpush1.msra.mxu0 0.0
        %3860 = vmatprep.subr.mxu0 0.0
        %3861 = vmatpush1.msra.mxu0 0.0
        %3862 = vmatprep.subr.mxu0 0.0
        %3863 = vmatpush1.msra.mxu0 0.0
        %3864 = vmatprep.subr.mxu0 0.0
        %3865 = vmatpush1.msra.mxu0 0.0
        %3866 = vmatprep.mubr.f32.mxu0 0.0
        %3867 = vmatmul.mubr.f32.gmra.mrb[0].mxu0 %v3798
        %v3868 = vpop.f32.mrb[0].mxu0
        %v3869 = vadd.f32 0.0, %v3868
        %v3870 = vpop.f32.mrb[0].mxu0
        %3871 = vmatprep.mubr.f32.mxu0 0.0
        %3872 = vmatmul.mubr.f32.gmra.mrb[0].mxu0 %v3800
        %v3873 = vpop.f32.mrb[0].mxu0
        %v3874 = vadd.f32 0.0, %v3873
        %v3875 = vpop.f32.mrb[0].mxu0
        %3876 = vdwg.mxu0
        %3877 = vmatprep.subr.mxu0 0.0
        %3878 = vmatpush1.msra.mxu0 %v600
        %3879 = vmatprep.subr.mxu0 0.0
        %3880 = vmatpush1.msra.mxu0 0.0
        %3881 = vmatprep.subr.mxu0 0.0
        %3882 = vmatpush1.msra.mxu0 0.0
        %3883 = vmatprep.subr.mxu0 0.0
        %3884 = vmatpush1.msra.mxu0 0.0
        %3885 = vmatprep.subr.mxu0 0.0
        %3886 = vmatpush1.msra.mxu0 0.0
        %3887 = vmatprep.subr.mxu0 0.0
        %3888 = vmatpush1.msra.mxu0 0.0
        %3889 = vmatprep.subr.mxu0 0.0
        %3890 = vmatpush1.msra.mxu0 0.0
        %3891 = vmatprep.subr.mxu0 0.0
        %3892 = vmatpush1.msra.mxu0 0.0
        %3893 = vmatprep.subr.mxu0 0.0
        %3894 = vmatpush1.msra.mxu0 0.0
        %3895 = vmatprep.subr.mxu0 0.0
        %3896 = vmatpush1.msra.mxu0 0.0
        %3897 = vmatprep.subr.mxu0 0.0
        %3898 = vmatpush1.msra.mxu0 0.0
        %3899 = vmatprep.subr.mxu0 0.0
        %3900 = vmatpush1.msra.mxu0 0.0
        %3901 = vmatprep.subr.mxu0 0.0
        %3902 = vmatpush1.msra.mxu0 0.0
        %3903 = vmatprep.subr.mxu0 0.0
        %3904 = vmatpush1.msra.mxu0 0.0
        %3905 = vmatprep.subr.mxu0 0.0
        %3906 = vmatpush1.msra.mxu0 0.0
        %3907 = vmatprep.subr.mxu0 0.0
        %3908 = vmatpush1.msra.mxu0 0.0
        %3909 = vmatprep.subr.mxu0 0.0
        %3910 = vmatpush1.msra.mxu0 0.0
        %3911 = vmatprep.subr.mxu0 0.0
        %3912 = vmatpush1.msra.mxu0 0.0
        %3913 = vmatprep.subr.mxu0 0.0
        %3914 = vmatpush1.msra.mxu0 0.0
        %3915 = vmatprep.subr.mxu0 0.0
        %3916 = vmatpush1.msra.mxu0 0.0
        %3917 = vmatprep.subr.mxu0 0.0
        %3918 = vmatpush1.msra.mxu0 0.0
        %3919 = vmatprep.subr.mxu0 0.0
        %3920 = vmatpush1.msra.mxu0 0.0
        %3921 = vmatprep.subr.mxu0 0.0
        %3922 = vmatpush1.msra.mxu0 0.0
        %3923 = vmatprep.subr.mxu0 0.0
        %3924 = vmatpush1.msra.mxu0 0.0
        %3925 = vmatprep.subr.mxu0 0.0
        %3926 = vmatpush1.msra.mxu0 0.0
        %3927 = vmatprep.subr.mxu0 0.0
        %3928 = vmatpush1.msra.mxu0 0.0
        %3929 = vmatprep.subr.mxu0 0.0
        %3930 = vmatpush1.msra.mxu0 0.0
        %3931 = vmatprep.subr.mxu0 0.0
        %3932 = vmatpush1.msra.mxu0 0.0
        %3933 = vmatprep.subr.mxu0 0.0
        %3934 = vmatpush1.msra.mxu0 0.0
        %3935 = vmatprep.subr.mxu0 0.0
        %3936 = vmatpush1.msra.mxu0 0.0
        %3937 = vmatprep.subr.mxu0 0.0
        %3938 = vmatpush1.msra.mxu0 0.0
        %3939 = vmatprep.subr.mxu0 0.0
        %3940 = vmatpush1.msra.mxu0 0.0
        %3941 = vmatprep.mubr.f32.mxu0 0.0
        %3942 = vmatmul.mubr.f32.gmra.mrb[0].mxu0 %v3798
        %v3943 = vpop.f32.mrb[0].mxu0
        %v3944 = vadd.f32 0.0, %v3943
        %v3945 = vpop.f32.mrb[0].mxu0
        %3946 = vmatprep.mubr.f32.mxu0 0.0
        %3947 = vmatmul.mubr.f32.gmra.mrb[0].mxu0 %v3800
        %v3948 = vpop.f32.mrb[0].mxu0
        %v3949 = vadd.f32 0.0, %v3948
        %v3950 = vpop.f32.mrb[0].mxu0
        %3951 = vdwg.mxu0
        %v3952 = vmax.f32 %v3869, %v3944
        %v3953 = vmax.f32 %v3874, %v3949
        %3956 = vrot.lane.b32.xlu0 %v3952, 4
        %v3957 = vpop.permute.xlu0 %3956
        %3958 = vrot.lane.b32.xlu0 %v3953, 4
        %v3959 = vpop.permute.xlu0 %3958
        %vm3962 = vcmask 64544
        %3963 = vst.msk [vmem:[#allocation2 + $0x8] sm:$0xff] %vm3962, %v3957
        %3964 = vst.msk [vmem:[#allocation2 + $0x28] sm:$0xff] %vm3962, %v3959
        %v3965 = vld [vmem:[#allocation4] sm:$0xff]
        %v3966 = vld [vmem:[#allocation4 + $0x10] sm:$0xff]
        %3969 = vrot.lane.b32.xlu0 %v3965, 120
        %v3970 = vpop.permute.xlu0 %3969
        %3971 = vrot.lane.b32.xlu0 %v3966, 120
        %v3972 = vpop.permute.xlu0 %3971
        %v3975 = vmax.f32 %v3965, %v3970
        %v3976 = vmax.f32 %v3966, %v3972
        %3979 = vrot.lane.b32.xlu0 %v3975, 96
        %v3980 = vpop.permute.xlu0 %3979
        %3981 = vrot.lane.b32.xlu0 %v3976, 96
        %v3982 = vpop.permute.xlu0 %3981
        %v3983 = vsel %vm1703, %v3980, 0
        %v3985 = vsel %vm1703, %v3982, 0
        %3987 = vmatprep.subr.mxu0 0.0
        %3988 = vmatpush1.msra.mxu0 %v593
        %3989 = vmatprep.subr.mxu0 0.0
        %3990 = vmatpush1.msra.mxu0 0.0
        %3991 = vmatprep.subr.mxu0 0.0
        %3992 = vmatpush1.msra.mxu0 0.0
        %3993 = vmatprep.subr.mxu0 0.0
        %3994 = vmatpush1.msra.mxu0 0.0
        %3995 = vmatprep.subr.mxu0 0.0
        %3996 = vmatpush1.msra.mxu0 0.0
        %3997 = vmatprep.subr.mxu0 0.0
        %3998 = vmatpush1.msra.mxu0 0.0
        %3999 = vmatprep.subr.mxu0 0.0
        %4000 = vmatpush1.msra.mxu0 0.0
        %4001 = vmatprep.subr.mxu0 0.0
        %4002 = vmatpush1.msra.mxu0 0.0
        %4003 = vmatprep.subr.mxu0 0.0
        %4004 = vmatpush1.msra.mxu0 0.0
        %4005 = vmatprep.subr.mxu0 0.0
        %4006 = vmatpush1.msra.mxu0 0.0
        %4007 = vmatprep.subr.mxu0 0.0
        %4008 = vmatpush1.msra.mxu0 0.0
        %4009 = vmatprep.subr.mxu0 0.0
        %4010 = vmatpush1.msra.mxu0 0.0
        %4011 = vmatprep.subr.mxu0 0.0
        %4012 = vmatpush1.msra.mxu0 0.0
        %4013 = vmatprep.subr.mxu0 0.0
        %4014 = vmatpush1.msra.mxu0 0.0
        %4015 = vmatprep.subr.mxu0 0.0
        %4016 = vmatpush1.msra.mxu0 0.0
        %4017 = vmatprep.subr.mxu0 0.0
        %4018 = vmatpush1.msra.mxu0 0.0
        %4019 = vmatprep.subr.mxu0 0.0
        %4020 = vmatpush1.msra.mxu0 0.0
        %4021 = vmatprep.subr.mxu0 0.0
        %4022 = vmatpush1.msra.mxu0 0.0
        %4023 = vmatprep.subr.mxu0 0.0
        %4024 = vmatpush1.msra.mxu0 0.0
        %4025 = vmatprep.subr.mxu0 0.0
        %4026 = vmatpush1.msra.mxu0 0.0
        %4027 = vmatprep.subr.mxu0 0.0
        %4028 = vmatpush1.msra.mxu0 0.0
        %4029 = vmatprep.subr.mxu0 0.0
        %4030 = vmatpush1.msra.mxu0 0.0
        %4031 = vmatprep.subr.mxu0 0.0
        %4032 = vmatpush1.msra.mxu0 0.0
        %4033 = vmatprep.subr.mxu0 0.0
        %4034 = vmatpush1.msra.mxu0 0.0
        %4035 = vmatprep.subr.mxu0 0.0
        %4036 = vmatpush1.msra.mxu0 0.0
        %4037 = vmatprep.subr.mxu0 0.0
        %4038 = vmatpush1.msra.mxu0 0.0
        %4039 = vmatprep.subr.mxu0 0.0
        %4040 = vmatpush1.msra.mxu0 0.0
        %4041 = vmatprep.subr.mxu0 0.0
        %4042 = vmatpush1.msra.mxu0 0.0
        %4043 = vmatprep.subr.mxu0 0.0
        %4044 = vmatpush1.msra.mxu0 0.0
        %4045 = vmatprep.subr.mxu0 0.0
        %4046 = vmatpush1.msra.mxu0 0.0
        %4047 = vmatprep.subr.mxu0 0.0
        %4048 = vmatpush1.msra.mxu0 0.0
        %4049 = vmatprep.subr.mxu0 0.0
        %4050 = vmatpush1.msra.mxu0 0.0
        %4051 = vmatprep.mubr.f32.mxu0 0.0
        %4052 = vmatmul.mubr.f32.gmra.mrb[0].mxu0 %v3983
        %v4053 = vpop.f32.mrb[0].mxu0
        %v4054 = vadd.f32 0.0, %v4053
        %v4055 = vpop.f32.mrb[0].mxu0
        %4056 = vmatprep.mubr.f32.mxu0 0.0
        %4057 = vmatmul.mubr.f32.gmra.mrb[0].mxu0 %v3985
        %v4058 = vpop.f32.mrb[0].mxu0
        %v4059 = vadd.f32 0.0, %v4058
        %v4060 = vpop.f32.mrb[0].mxu0
        %4061 = vdwg.mxu0
        %4062 = vmatprep.subr.mxu0 0.0
        %4063 = vmatpush1.msra.mxu0 %v600
        %4064 = vmatprep.subr.mxu0 0.0
        %4065 = vmatpush1.msra.mxu0 0.0
        %4066 = vmatprep.subr.mxu0 0.0
        %4067 = vmatpush1.msra.mxu0 0.0
        %4068 = vmatprep.subr.mxu0 0.0
        %4069 = vmatpush1.msra.mxu0 0.0
        %4070 = vmatprep.subr.mxu0 0.0
        %4071 = vmatpush1.msra.mxu0 0.0
        %4072 = vmatprep.subr.mxu0 0.0
        %4073 = vmatpush1.msra.mxu0 0.0
        %4074 = vmatprep.subr.mxu0 0.0
        %4075 = vmatpush1.msra.mxu0 0.0
        %4076 = vmatprep.subr.mxu0 0.0
        %4077 = vmatpush1.msra.mxu0 0.0
        %4078 = vmatprep.subr.mxu0 0.0
        %4079 = vmatpush1.msra.mxu0 0.0
        %4080 = vmatprep.subr.mxu0 0.0
        %4081 = vmatpush1.msra.mxu0 0.0
        %4082 = vmatprep.subr.mxu0 0.0
        %4083 = vmatpush1.msra.mxu0 0.0
        %4084 = vmatprep.subr.mxu0 0.0
        %4085 = vmatpush1.msra.mxu0 0.0
        %4086 = vmatprep.subr.mxu0 0.0
        %4087 = vmatpush1.msra.mxu0 0.0
        %4088 = vmatprep.subr.mxu0 0.0
        %4089 = vmatpush1.msra.mxu0 0.0
        %4090 = vmatprep.subr.mxu0 0.0
        %4091 = vmatpush1.msra.mxu0 0.0
        %4092 = vmatprep.subr.mxu0 0.0
        %4093 = vmatpush1.msra.mxu0 0.0
        %4094 = vmatprep.subr.mxu0 0.0
        %4095 = vmatpush1.msra.mxu0 0.0
        %4096 = vmatprep.subr.mxu0 0.0
        %4097 = vmatpush1.msra.mxu0 0.0
        %4098 = vmatprep.subr.mxu0 0.0
        %4099 = vmatpush1.msra.mxu0 0.0
        %4100 = vmatprep.subr.mxu0 0.0
        %4101 = vmatpush1.msra.mxu0 0.0
        %4102 = vmatprep.subr.mxu0 0.0
        %4103 = vmatpush1.msra.mxu0 0.0
        %4104 = vmatprep.subr.mxu0 0.0
        %4105 = vmatpush1.msra.mxu0 0.0
        %4106 = vmatprep.subr.mxu0 0.0
        %4107 = vmatpush1.msra.mxu0 0.0
        %4108 = vmatprep.subr.mxu0 0.0
        %4109 = vmatpush1.msra.mxu0 0.0
        %4110 = vmatprep.subr.mxu0 0.0
        %4111 = vmatpush1.msra.mxu0 0.0
        %4112 = vmatprep.subr.mxu0 0.0
        %4113 = vmatpush1.msra.mxu0 0.0
        %4114 = vmatprep.subr.mxu0 0.0
        %4115 = vmatpush1.msra.mxu0 0.0
        %4116 = vmatprep.subr.mxu0 0.0
        %4117 = vmatpush1.msra.mxu0 0.0
        %4118 = vmatprep.subr.mxu0 0.0
        %4119 = vmatpush1.msra.mxu0 0.0
        %4120 = vmatprep.subr.mxu0 0.0
        %4121 = vmatpush1.msra.mxu0 0.0
        %4122 = vmatprep.subr.mxu0 0.0
        %4123 = vmatpush1.msra.mxu0 0.0
        %4124 = vmatprep.subr.mxu0 0.0
        %4125 = vmatpush1.msra.mxu0 0.0
        %4126 = vmatprep.mubr.f32.mxu0 0.0
        %4127 = vmatmul.mubr.f32.gmra.mrb[0].mxu0 %v3983
        %v4128 = vpop.f32.mrb[0].mxu0
        %v4129 = vadd.f32 0.0, %v4128
        %v4130 = vpop.f32.mrb[0].mxu0
        %4131 = vmatprep.mubr.f32.mxu0 0.0
        %4132 = vmatmul.mubr.f32.gmra.mrb[0].mxu0 %v3985
        %v4133 = vpop.f32.mrb[0].mxu0
        %v4134 = vadd.f32 0.0, %v4133
        %v4135 = vpop.f32.mrb[0].mxu0
        %4136 = vdwg.mxu0
        %v4137 = vmax.f32 %v4054, %v4129
        %v4138 = vmax.f32 %v4059, %v4134
        %4141 = vrot.lane.b32.xlu0 %v4137, 8
        %v4142 = vpop.permute.xlu0 %4141
        %4143 = vrot.lane.b32.xlu0 %v4138, 8
        %v4144 = vpop.permute.xlu0 %4143
        %vm4147 = vcmask 97344
        %4148 = vst.msk [vmem:[#allocation2 + $0x8] sm:$0xff] %vm4147, %v4142
        %4149 = vst.msk [vmem:[#allocation2 + $0x28] sm:$0xff] %vm4147, %v4144
        %v4150 = vld [vmem:[#allocation4] sm:$0xff]
        %v4151 = vld [vmem:[#allocation4 + $0x10] sm:$0xff]
        %4154 = vrot.lane.b32.xlu0 %v4150, 120
        %v4155 = vpop.permute.xlu0 %4154
        %4156 = vrot.lane.b32.xlu0 %v4151, 120
        %v4157 = vpop.permute.xlu0 %4156
        %v4160 = vmax.f32 %v4150, %v4155
        %v4161 = vmax.f32 %v4151, %v4157
        %4164 = vrot.lane.b32.xlu0 %v4160, 80
        %v4165 = vpop.permute.xlu0 %4164
        %4166 = vrot.lane.b32.xlu0 %v4161, 80
        %v4167 = vpop.permute.xlu0 %4166
        %v4168 = vsel %vm1703, %v4165, 0
        %v4170 = vsel %vm1703, %v4167, 0
        %4172 = vmatprep.subr.mxu0 0.0
        %4173 = vmatpush1.msra.mxu0 %v593
        %4174 = vmatprep.subr.mxu0 0.0
        %4175 = vmatpush1.msra.mxu0 0.0
        %4176 = vmatprep.subr.mxu0 0.0
        %4177 = vmatpush1.msra.mxu0 0.0
        %4178 = vmatprep.subr.mxu0 0.0
        %4179 = vmatpush1.msra.mxu0 0.0
        %4180 = vmatprep.subr.mxu0 0.0
        %4181 = vmatpush1.msra.mxu0 0.0
        %4182 = vmatprep.subr.mxu0 0.0
        %4183 = vmatpush1.msra.mxu0 0.0
        %4184 = vmatprep.subr.mxu0 0.0
        %4185 = vmatpush1.msra.mxu0 0.0
        %4186 = vmatprep.subr.mxu0 0.0
        %4187 = vmatpush1.msra.mxu0 0.0
        %4188 = vmatprep.subr.mxu0 0.0
        %4189 = vmatpush1.msra.mxu0 0.0
        %4190 = vmatprep.subr.mxu0 0.0
        %4191 = vmatpush1.msra.mxu0 0.0
        %4192 = vmatprep.subr.mxu0 0.0
        %4193 = vmatpush1.msra.mxu0 0.0
        %4194 = vmatprep.subr.mxu0 0.0
        %4195 = vmatpush1.msra.mxu0 0.0
        %4196 = vmatprep.subr.mxu0 0.0
        %4197 = vmatpush1.msra.mxu0 0.0
        %4198 = vmatprep.subr.mxu0 0.0
        %4199 = vmatpush1.msra.mxu0 0.0
        %4200 = vmatprep.subr.mxu0 0.0
        %4201 = vmatpush1.msra.mxu0 0.0
        %4202 = vmatprep.subr.mxu0 0.0
        %4203 = vmatpush1.msra.mxu0 0.0
        %4204 = vmatprep.subr.mxu0 0.0
        %4205 = vmatpush1.msra.mxu0 0.0
        %4206 = vmatprep.subr.mxu0 0.0
        %4207 = vmatpush1.msra.mxu0 0.0
        %4208 = vmatprep.subr.mxu0 0.0
        %4209 = vmatpush1.msra.mxu0 0.0
        %4210 = vmatprep.subr.mxu0 0.0
        %4211 = vmatpush1.msra.mxu0 0.0
        %4212 = vmatprep.subr.mxu0 0.0
        %4213 = vmatpush1.msra.mxu0 0.0
        %4214 = vmatprep.subr.mxu0 0.0
        %4215 = vmatpush1.msra.mxu0 0.0
        %4216 = vmatprep.subr.mxu0 0.0
        %4217 = vmatpush1.msra.mxu0 0.0
        %4218 = vmatprep.subr.mxu0 0.0
        %4219 = vmatpush1.msra.mxu0 0.0
        %4220 = vmatprep.subr.mxu0 0.0
        %4221 = vmatpush1.msra.mxu0 0.0
        %4222 = vmatprep.subr.mxu0 0.0
        %4223 = vmatpush1.msra.mxu0 0.0
        %4224 = vmatprep.subr.mxu0 0.0
        %4225 = vmatpush1.msra.mxu0 0.0
        %4226 = vmatprep.subr.mxu0 0.0
        %4227 = vmatpush1.msra.mxu0 0.0
        %4228 = vmatprep.subr.mxu0 0.0
        %4229 = vmatpush1.msra.mxu0 0.0
        %4230 = vmatprep.subr.mxu0 0.0
        %4231 = vmatpush1.msra.mxu0 0.0
        %4232 = vmatprep.subr.mxu0 0.0
        %4233 = vmatpush1.msra.mxu0 0.0
        %4234 = vmatprep.subr.mxu0 0.0
        %4235 = vmatpush1.msra.mxu0 0.0
        %4236 = vmatprep.mubr.f32.mxu0 0.0
        %4237 = vmatmul.mubr.f32.gmra.mrb[0].mxu0 %v4168
        %v4238 = vpop.f32.mrb[0].mxu0
        %v4239 = vadd.f32 0.0, %v4238
        %v4240 = vpop.f32.mrb[0].mxu0
        %4241 = vmatprep.mubr.f32.mxu0 0.0
        %4242 = vmatmul.mubr.f32.gmra.mrb[0].mxu0 %v4170
        %v4243 = vpop.f32.mrb[0].mxu0
        %v4244 = vadd.f32 0.0, %v4243
        %v4245 = vpop.f32.mrb[0].mxu0
        %4246 = vdwg.mxu0
        %4247 = vmatprep.subr.mxu0 0.0
        %4248 = vmatpush1.msra.mxu0 %v600
        %4249 = vmatprep.subr.mxu0 0.0
        %4250 = vmatpush1.msra.mxu0 0.0
        %4251 = vmatprep.subr.mxu0 0.0
        %4252 = vmatpush1.msra.mxu0 0.0
        %4253 = vmatprep.subr.mxu0 0.0
        %4254 = vmatpush1.msra.mxu0 0.0
        %4255 = vmatprep.subr.mxu0 0.0
        %4256 = vmatpush1.msra.mxu0 0.0
        %4257 = vmatprep.subr.mxu0 0.0
        %4258 = vmatpush1.msra.mxu0 0.0
        %4259 = vmatprep.subr.mxu0 0.0
        %4260 = vmatpush1.msra.mxu0 0.0
        %4261 = vmatprep.subr.mxu0 0.0
        %4262 = vmatpush1.msra.mxu0 0.0
        %4263 = vmatprep.subr.mxu0 0.0
        %4264 = vmatpush1.msra.mxu0 0.0
        %4265 = vmatprep.subr.mxu0 0.0
        %4266 = vmatpush1.msra.mxu0 0.0
        %4267 = vmatprep.subr.mxu0 0.0
        %4268 = vmatpush1.msra.mxu0 0.0
        %4269 = vmatprep.subr.mxu0 0.0
        %4270 = vmatpush1.msra.mxu0 0.0
        %4271 = vmatprep.subr.mxu0 0.0
        %4272 = vmatpush1.msra.mxu0 0.0
        %4273 = vmatprep.subr.mxu0 0.0
        %4274 = vmatpush1.msra.mxu0 0.0
        %4275 = vmatprep.subr.mxu0 0.0
        %4276 = vmatpush1.msra.mxu0 0.0
        %4277 = vmatprep.subr.mxu0 0.0
        %4278 = vmatpush1.msra.mxu0 0.0
        %4279 = vmatprep.subr.mxu0 0.0
        %4280 = vmatpush1.msra.mxu0 0.0
        %4281 = vmatprep.subr.mxu0 0.0
        %4282 = vmatpush1.msra.mxu0 0.0
        %4283 = vmatprep.subr.mxu0 0.0
        %4284 = vmatpush1.msra.mxu0 0.0
        %4285 = vmatprep.subr.mxu0 0.0
        %4286 = vmatpush1.msra.mxu0 0.0
        %4287 = vmatprep.subr.mxu0 0.0
        %4288 = vmatpush1.msra.mxu0 0.0
        %4289 = vmatprep.subr.mxu0 0.0
        %4290 = vmatpush1.msra.mxu0 0.0
        %4291 = vmatprep.subr.mxu0 0.0
        %4292 = vmatpush1.msra.mxu0 0.0
        %4293 = vmatprep.subr.mxu0 0.0
        %4294 = vmatpush1.msra.mxu0 0.0
        %4295 = vmatprep.subr.mxu0 0.0
        %4296 = vmatpush1.msra.mxu0 0.0
        %4297 = vmatprep.subr.mxu0 0.0
        %4298 = vmatpush1.msra.mxu0 0.0
        %4299 = vmatprep.subr.mxu0 0.0
        %4300 = vmatpush1.msra.mxu0 0.0
        %4301 = vmatprep.subr.mxu0 0.0
        %4302 = vmatpush1.msra.mxu0 0.0
        %4303 = vmatprep.subr.mxu0 0.0
        %4304 = vmatpush1.msra.mxu0 0.0
        %4305 = vmatprep.subr.mxu0 0.0
        %4306 = vmatpush1.msra.mxu0 0.0
        %4307 = vmatprep.subr.mxu0 0.0
        %4308 = vmatpush1.msra.mxu0 0.0
        %4309 = vmatprep.subr.mxu0 0.0
        %4310 = vmatpush1.msra.mxu0 0.0
        %4311 = vmatprep.mubr.f32.mxu0 0.0
        %4312 = vmatmul.mubr.f32.gmra.mrb[0].mxu0 %v4168
        %v4313 = vpop.f32.mrb[0].mxu0
        %v4314 = vadd.f32 0.0, %v4313
        %v4315 = vpop.f32.mrb[0].mxu0
        %4316 = vmatprep.mubr.f32.mxu0 0.0
        %4317 = vmatmul.mubr.f32.gmra.mrb[0].mxu0 %v4170
        %v4318 = vpop.f32.mrb[0].mxu0
        %v4319 = vadd.f32 0.0, %v4318
        %v4320 = vpop.f32.mrb[0].mxu0
        %4321 = vdwg.mxu0
        %v4322 = vmax.f32 %v4239, %v4314
        %v4323 = vmax.f32 %v4244, %v4319
        %4326 = vrot.lane.b32.xlu0 %v4322, 12
        %v4327 = vpop.permute.xlu0 %4326
        %4328 = vrot.lane.b32.xlu0 %v4323, 12
        %v4329 = vpop.permute.xlu0 %4328
        %vm4332 = vcmask 130144
        %4333 = vst.msk [vmem:[#allocation2 + $0x8] sm:$0xff] %vm4332, %v4327
        %4334 = vst.msk [vmem:[#allocation2 + $0x28] sm:$0xff] %vm4332, %v4329
        %4335 = vst [vmem:[#allocation2] sm:$0xff] 0.0
        %4336 = vst [vmem:[#allocation2 + $0x20] sm:$0xff] 0.0
        %vm4337 = vcmask 228480
        %4338 = vst.msk [vmem:[#allocation2 + $0x8] sm:$0xff] %vm4337, 0.0
        %4339 = vst.msk [vmem:[#allocation2 + $0x28] sm:$0xff] %vm4337, 0.0
        %4340 = vst [vmem:[#allocation3] sm:$0xff] 0.0
        %4341 = vst [vmem:[#allocation3 + $0x20] sm:$0xff] 0.0
        %4342 = vst [vmem:[#allocation3 + $0x40] sm:$0xff] 0.0
        %4343 = vst [vmem:[#allocation3 + $0x60] sm:$0xff] 0.0
        %4344 = vst.msk [vmem:[#allocation3 + $0x8] sm:$0xff] %vm4337, 0.0
        %4345 = vst.msk [vmem:[#allocation3 + $0x28] sm:$0xff] %vm4337, 0.0
        %4346 = vst.msk [vmem:[#allocation3 + $0x48] sm:$0xff] %vm4337, 0.0
        %4347 = vst.msk [vmem:[#allocation3 + $0x68] sm:$0xff] %vm4337, 0.0
        %v4348 = vld [vmem:[%s9] sm:$0xff]
        %v4349 = vld [vmem:[%s9 + $0x8] sm:$0xff]
        %v4350 = vld [vmem:[%s9 + $0x10] sm:$0xff]
        %v4351 = vld [vmem:[%s9 + $0x18] sm:$0xff]
        %v4352 = vld [vmem:[%s9 + $0x20] sm:$0xff]
        %v4353 = vld [vmem:[%s9 + $0x28] sm:$0xff]
        %v4354 = vld [vmem:[%s9 + $0x30] sm:$0xff]
        %v4355 = vld [vmem:[%s9 + $0x38] sm:$0xff]
        %v4356 = vld [vmem:[%s10] sm:$0xff]
        %v4357 = vld [vmem:[%s10 + $0x8] sm:$0xff]
        %v4358 = vld [vmem:[%s10 + $0x10] sm:$0xff]
        %v4359 = vld [vmem:[%s10 + $0x18] sm:$0xff]
        %v4360 = vld [vmem:[#allocation2] sm:$0xff]
        %v4361 = vld [vmem:[#allocation2 + $0x8] sm:$0xff]
        %v4362 = vld [vmem:[#allocation2 + $0x20] sm:$0xff]
        %v4363 = vld [vmem:[#allocation2 + $0x28] sm:$0xff]
        %4365 = vrot.lane.b32.xlu0 %v634, 123
        %v4366 = vpop.permute.xlu0 %4365
        %v4368 = vmul.f32 %v4360, %v4366
        %v4369 = vmul.f32 %v4361, %v4366
        %v4370 = vmul.f32 %v4362, %v4366
        %v4371 = vmul.f32 %v4363, %v4366
        %4376 = vrot.lane.b32.xlu0 %v4368, 5
        %v4377 = vpop.permute.xlu0 %4376
        %4378 = vrot.lane.b32.xlu0 %v4369, 5
        %v4379 = vpop.permute.xlu0 %4378
        %4380 = vrot.lane.b32.xlu0 %v4370, 5
        %v4381 = vpop.permute.xlu0 %4380
        %4382 = vrot.lane.b32.xlu0 %v4371, 5
        %v4383 = vpop.permute.xlu0 %4382
        %vm4384 = vcmask 39936
        %v4385 = vsel %vm4384, %v4377, %v4379
        %v4386 = vsel %vm4384, %v4381, %v4383
        %4389 = vst.msk [vmem:[#allocation5] sm:$0xff] %vm709, %v4385
        %4390 = vst.msk [vmem:[#allocation5 + $0x10] sm:$0xff] %vm709, %v4386
        %v4391 = vld [vmem:[#allocation2] sm:$0xff]
        %v4392 = vld [vmem:[#allocation2 + $0x8] sm:$0xff]
        %v4393 = vld [vmem:[#allocation2 + $0x20] sm:$0xff]
        %v4394 = vld [vmem:[#allocation2 + $0x28] sm:$0xff]
        %4399 = vrot.lane.b32.xlu0 %v4391, 4
        %v4400 = vpop.permute.xlu0 %4399
        %4401 = vrot.lane.b32.xlu0 %v4392, 4
        %v4402 = vpop.permute.xlu0 %4401
        %4403 = vrot.lane.b32.xlu0 %v4393, 4
        %v4404 = vpop.permute.xlu0 %4403
        %4405 = vrot.lane.b32.xlu0 %v4394, 4
        %v4406 = vpop.permute.xlu0 %4405
        %v4407 = vsel %vm3777, %v4400, %v4402
        %v4408 = vsel %vm3777, %v4404, %v4406
        %4411 = vst.msk [vmem:[#allocation5 + $0x20] sm:$0xff] %vm709, %v4407
        %4412 = vst.msk [vmem:[#allocation5 + $0x30] sm:$0xff] %vm709, %v4408
        %v4413 = vld [vmem:[#allocation2] sm:$0xff]
        %v4414 = vld [vmem:[#allocation2 + $0x8] sm:$0xff]
        %v4415 = vld [vmem:[#allocation2 + $0x20] sm:$0xff]
        %v4416 = vld [vmem:[#allocation2 + $0x28] sm:$0xff]
        %4418 = vrot.lane.b32.xlu0 %v637, 125
        %v4419 = vpop.permute.xlu0 %4418
        %v4421 = vmul.f32 %v4413, %v4419
        %v4422 = vmul.f32 %v4414, %v4419
        %v4423 = vmul.f32 %v4415, %v4419
        %v4424 = vmul.f32 %v4416, %v4419
        %4429 = vrot.lane.b32.xlu0 %v4421, 3
        %v4430 = vpop.permute.xlu0 %4429
        %4431 = vrot.lane.b32.xlu0 %v4422, 3
        %v4432 = vpop.permute.xlu0 %4431
        %4433 = vrot.lane.b32.xlu0 %v4423, 3
        %v4434 = vpop.permute.xlu0 %4433
        %4435 = vrot.lane.b32.xlu0 %v4424, 3
        %v4436 = vpop.permute.xlu0 %4435
        %vm4437 = vcmask 23552
        %v4438 = vsel %vm4437, %v4430, %v4432
        %v4439 = vsel %vm4437, %v4434, %v4436
        %4442 = vst.msk [vmem:[#allocation5 + $0x40] sm:$0xff] %vm709, %v4438
        %4443 = vst.msk [vmem:[#allocation5 + $0x50] sm:$0xff] %vm709, %v4439
        %v4444 = vld [vmem:[#allocation2] sm:$0xff]
        %v4445 = vld [vmem:[#allocation2 + $0x8] sm:$0xff]
        %v4446 = vld [vmem:[#allocation2 + $0x20] sm:$0xff]
        %v4447 = vld [vmem:[#allocation2 + $0x28] sm:$0xff]
        %4448 = vrot.lane.b32.xlu0 %v634, 127
        %v4449 = vpop.permute.xlu0 %4448
        %v4451 = vmul.f32 %v4444, %v4449
        %v4452 = vmul.f32 %v4445, %v4449
        %v4453 = vmul.f32 %v4446, %v4449
        %v4454 = vmul.f32 %v4447, %v4449
        %4459 = vrot.lane.b32.xlu0 %v4451, 1
        %v4460 = vpop.permute.xlu0 %4459
        %4461 = vrot.lane.b32.xlu0 %v4452, 1
        %v4462 = vpop.permute.xlu0 %4461
        %4463 = vrot.lane.b32.xlu0 %v4453, 1
        %v4464 = vpop.permute.xlu0 %4463
        %4465 = vrot.lane.b32.xlu0 %v4454, 1
        %v4466 = vpop.permute.xlu0 %4465
        %v4467 = vsel %vm776, %v4460, %v4462
        %v4468 = vsel %vm776, %v4464, %v4466
        %4471 = vst.msk [vmem:[#allocation5 + $0x60] sm:$0xff] %vm709, %v4467
        %4472 = vst.msk [vmem:[#allocation5 + $0x70] sm:$0xff] %vm709, %v4468
        %v4473 = vld [vmem:[#allocation2 + $0x8] sm:$0xff]
        %v4474 = vld [vmem:[#allocation2 + $0x28] sm:$0xff]
        %4475 = vst.msk [vmem:[#allocation5 + $0x80] sm:$0xff] %vm709, %v4473
        %4476 = vst.msk [vmem:[#allocation5 + $0x90] sm:$0xff] %vm709, %v4474
        %v4477 = vld [vmem:[#allocation2 + $0x8] sm:$0xff]
        %v4478 = vld [vmem:[#allocation2 + $0x28] sm:$0xff]
        %4479 = vrot.lane.b32.xlu0 %v637, 1
        %v4480 = vpop.permute.xlu0 %4479
        %v4482 = vmul.f32 %v4477, %v4480
        %v4483 = vmul.f32 %v4478, %v4480
        %4486 = vrot.lane.b32.xlu0 %v4482, 127
        %v4487 = vpop.permute.xlu0 %4486
        %4488 = vrot.lane.b32.xlu0 %v4483, 127
        %v4489 = vpop.permute.xlu0 %4488
        %4492 = vst.msk [vmem:[#allocation5 + $0xa0] sm:$0xff] %vm709, %v4487
        %4493 = vst.msk [vmem:[#allocation5 + $0xb0] sm:$0xff] %vm709, %v4489
        %v4494 = vld [vmem:[#allocation2 + $0x8] sm:$0xff]
        %v4495 = vld [vmem:[#allocation2 + $0x28] sm:$0xff]
        %4496 = vrot.lane.b32.xlu0 %v634, 3
        %v4497 = vpop.permute.xlu0 %4496
        %v4499 = vmul.f32 %v4494, %v4497
        %v4500 = vmul.f32 %v4495, %v4497
        %4503 = vrot.lane.b32.xlu0 %v4499, 125
        %v4504 = vpop.permute.xlu0 %4503
        %4505 = vrot.lane.b32.xlu0 %v4500, 125
        %v4506 = vpop.permute.xlu0 %4505
        %4509 = vst.msk [vmem:[#allocation5 + $0xc0] sm:$0xff] %vm709, %v4504
        %4510 = vst.msk [vmem:[#allocation5 + $0xd0] sm:$0xff] %vm709, %v4506
        %v4511 = vld [vmem:[#allocation2 + $0x8] sm:$0xff]
        %v4512 = vld [vmem:[#allocation2 + $0x28] sm:$0xff]
        %4515 = vrot.lane.b32.xlu0 %v4511, 124
        %v4516 = vpop.permute.xlu0 %4515
        %4517 = vrot.lane.b32.xlu0 %v4512, 124
        %v4518 = vpop.permute.xlu0 %4517
        %4521 = vst.msk [vmem:[#allocation5 + $0xe0] sm:$0xff] %vm709, %v4516
        %4522 = vst.msk [vmem:[#allocation5 + $0xf0] sm:$0xff] %vm709, %v4518
        %v4523 = vld [vmem:[#allocation2 + $0x8] sm:$0xff]
        %v4524 = vld [vmem:[#allocation2 + $0x28] sm:$0xff]
        %4525 = vrot.lane.b32.xlu0 %v637, 5
        %v4526 = vpop.permute.xlu0 %4525
        %v4528 = vmul.f32 %v4523, %v4526
        %v4529 = vmul.f32 %v4524, %v4526
        %4532 = vrot.lane.b32.xlu0 %v4528, 123
        %v4533 = vpop.permute.xlu0 %4532
        %4534 = vrot.lane.b32.xlu0 %v4529, 123
        %v4535 = vpop.permute.xlu0 %4534
        %4538 = vst.msk [vmem:[#allocation5 + $0x100] sm:$0xff] %vm709, %v4533
        %4539 = vst.msk [vmem:[#allocation5 + $0x110] sm:$0xff] %vm709, %v4535
        %v4540 = vld [vmem:[#allocation5] sm:$0xff]
        %v4541 = vld [vmem:[#allocation5 + $0x10] sm:$0xff]
        %v4542 = vld [vmem:[#allocation5 + $0x20] sm:$0xff]
        %v4543 = vld [vmem:[#allocation5 + $0x30] sm:$0xff]
        %v4544 = vld [vmem:[#allocation5 + $0x40] sm:$0xff]
        %v4545 = vld [vmem:[#allocation5 + $0x50] sm:$0xff]
        %v4546 = vld [vmem:[#allocation5 + $0x60] sm:$0xff]
        %v4547 = vld [vmem:[#allocation5 + $0x70] sm:$0xff]
        %v4548 = vld [vmem:[#allocation5 + $0x80] sm:$0xff]
        %v4549 = vld [vmem:[#allocation5 + $0x90] sm:$0xff]
        %v4550 = vld [vmem:[#allocation5 + $0xa0] sm:$0xff]
        %v4551 = vld [vmem:[#allocation5 + $0xb0] sm:$0xff]
        %v4552 = vld [vmem:[#allocation5 + $0xc0] sm:$0xff]
        %v4553 = vld [vmem:[#allocation5 + $0xd0] sm:$0xff]
        %v4554 = vld [vmem:[#allocation5 + $0xe0] sm:$0xff]
        %v4555 = vld [vmem:[#allocation5 + $0xf0] sm:$0xff]
        %v4556 = vld [vmem:[#allocation5 + $0x100] sm:$0xff]
        %v4557 = vld [vmem:[#allocation5 + $0x110] sm:$0xff]
        %4559 = vset.pattern.permute.xlu0 0
        %4560 = vperm.xlu0 %4559, %v4356
        %v4561 = vpop.permute.xlu0 %4560
        %4564 = vset.pattern.permute.xlu0 0
        %4565 = vperm.xlu0 %4564, %v4357
        %v4566 = vpop.permute.xlu0 %4565
        %4569 = vset.pattern.permute.xlu0 0
        %4570 = vperm.xlu0 %4569, %v4358
        %v4571 = vpop.permute.xlu0 %4570
        %4574 = vset.pattern.permute.xlu0 0
        %4575 = vperm.xlu0 %4574, %v4359
        %v4576 = vpop.permute.xlu0 %4575
        %v4579 = vsel %vm709, %v4349, 0
        %v4582 = vsel %vm709, %v4351, 0
        %v4585 = vsel %vm709, %v4353, 0
        %v4588 = vsel %vm709, %v4355, 0
        %4590 = vmatprep.subr.mxu0 0.0
        %4591 = vmatpush1.msra.mxu0 %v4540
        %4592 = vmatprep.subr.mxu0 0.0
        %4593 = vmatpush1.msra.mxu0 %v4541
        %4594 = vmatprep.subr.mxu0 0.0
        %4595 = vmatpush1.msra.mxu0 %v4542
        %4596 = vmatprep.subr.mxu0 0.0
        %4597 = vmatpush1.msra.mxu0 %v4543
        %4598 = vmatprep.subr.mxu0 0.0
        %4599 = vmatpush1.msra.mxu0 %v4544
        %4600 = vmatprep.subr.mxu0 0.0
        %4601 = vmatpush1.msra.mxu0 %v4545
        %4602 = vmatprep.subr.mxu0 0.0
        %4603 = vmatpush1.msra.mxu0 %v4546
        %4604 = vmatprep.subr.mxu0 0.0
        %4605 = vmatpush1.msra.mxu0 %v4547
        %4606 = vmatprep.subr.mxu0 0.0
        %4607 = vmatpush1.msra.mxu0 %v4548
        %4608 = vmatprep.subr.mxu0 0.0
        %4609 = vmatpush1.msra.mxu0 %v4549
        %4610 = vmatprep.subr.mxu0 0.0
        %4611 = vmatpush1.msra.mxu0 %v4550
        %4612 = vmatprep.subr.mxu0 0.0
        %4613 = vmatpush1.msra.mxu0 %v4551
        %4614 = vmatprep.subr.mxu0 0.0
        %4615 = vmatpush1.msra.mxu0 %v4552
        %4616 = vmatprep.subr.mxu0 0.0
        %4617 = vmatpush1.msra.mxu0 %v4553
        %4618 = vmatprep.subr.mxu0 0.0
        %4619 = vmatpush1.msra.mxu0 %v4554
        %4620 = vmatprep.subr.mxu0 0.0
        %4621 = vmatpush1.msra.mxu0 %v4555
        %4622 = vmatprep.subr.mxu0 0.0
        %4623 = vmatpush1.msra.mxu0 %v4556
        %4624 = vmatprep.subr.mxu0 0.0
        %4625 = vmatpush1.msra.mxu0 %v4557
        %4626 = vmatprep.subr.mxu0 0.0
        %4627 = vmatpush1.msra.mxu0 0.0
        %4628 = vmatprep.subr.mxu0 0.0
        %4629 = vmatpush1.msra.mxu0 0.0
        %4630 = vmatprep.subr.mxu0 0.0
        %4631 = vmatpush1.msra.mxu0 0.0
        %4632 = vmatprep.subr.mxu0 0.0
        %4633 = vmatpush1.msra.mxu0 0.0
        %4634 = vmatprep.subr.mxu0 0.0
        %4635 = vmatpush1.msra.mxu0 0.0
        %4636 = vmatprep.subr.mxu0 0.0
        %4637 = vmatpush1.msra.mxu0 0.0
        %4638 = vmatprep.subr.mxu0 0.0
        %4639 = vmatpush1.msra.mxu0 0.0
        %4640 = vmatprep.subr.mxu0 0.0
        %4641 = vmatpush1.msra.mxu0 0.0
        %4642 = vmatprep.subr.mxu0 0.0
        %4643 = vmatpush1.msra.mxu0 0.0
        %4644 = vmatprep.subr.mxu0 0.0
        %4645 = vmatpush1.msra.mxu0 0.0
        %4646 = vmatprep.subr.mxu0 0.0
        %4647 = vmatpush1.msra.mxu0 0.0
        %4648 = vmatprep.subr.mxu0 0.0
        %4649 = vmatpush1.msra.mxu0 0.0
        %4650 = vmatprep.subr.mxu0 0.0
        %4651 = vmatpush1.msra.mxu0 0.0
        %4652 = vmatprep.subr.mxu0 0.0
        %4653 = vmatpush1.msra.mxu0 0.0
        %4654 = vmatprep.mubr.f32.mxu0 %v4579
        %4655 = vmatmul.mubr.f32.gmra.mrb[0].mxu0 %v4348
        %v4656 = vpop.f32.mrb[0].mxu0
        %v4657 = vadd.f32 %v4561, %v4656
        %v4658 = vpop.f32.mrb[0].mxu0
        %4659 = vmatprep.mubr.f32.mxu0 %v4582
        %4660 = vmatmul.mubr.f32.gmra.mrb[0].mxu0 %v4350
        %v4661 = vpop.f32.mrb[0].mxu0
        %v4662 = vadd.f32 %v4566, %v4661
        %v4663 = vpop.f32.mrb[0].mxu0
        %4664 = vmatprep.mubr.f32.mxu0 %v4585
        %4665 = vmatmul.mubr.f32.gmra.mrb[0].mxu0 %v4352
        %v4666 = vpop.f32.mrb[0].mxu0
        %v4667 = vadd.f32 %v4571, %v4666
        %v4668 = vpop.f32.mrb[0].mxu0
        %4669 = vmatprep.mubr.f32.mxu0 %v4588
        %4670 = vmatmul.mubr.f32.gmra.mrb[0].mxu0 %v4354
        %v4671 = vpop.f32.mrb[0].mxu0
        %v4672 = vadd.f32 %v4576, %v4671
        %v4673 = vpop.f32.mrb[0].mxu0
        %4674 = vdwg.mxu0
        %vm4675 = vcmp.gt.f32.partialorder %v4657, 0.0
        %vm4676 = vcmp.gt.f32.partialorder %v4662, 0.0
        %vm4677 = vcmp.gt.f32.partialorder %v4667, 0.0
        %vm4678 = vcmp.gt.f32.partialorder %v4672, 0.0
        %v4679 = vmin.f32 %v4657, 0.0
        %v4680 = vmin.f32 %v4662, 0.0
        %v4681 = vmin.f32 %v4667, 0.0
        %v4682 = vmin.f32 %v4672, 0.0
        %v4683 = vmul.f32 %v4679, 1.442695
        %v4684 = vpow.pop %v4683
        %v4685 = vmul.f32 %v4680, 1.442695
        %v4686 = vpow.pop %v4685
        %v4687 = vmul.f32 %v4681, 1.442695
        %v4688 = vpow.pop %v4687
        %v4689 = vmul.f32 %v4682, 1.442695
        %v4690 = vpow.pop %v4689
        %v4691 = vsub.f32 %v4684, 1.0
        %v4692 = vsub.f32 %v4686, 1.0
        %v4693 = vsub.f32 %v4688, 1.0
        %v4694 = vsub.f32 %v4690, 1.0
        %v4695 = vsel %vm4675, %v4657, %v4691
        %v4696 = vsel %vm4676, %v4662, %v4692
        %v4697 = vsel %vm4677, %v4667, %v4693
        %v4698 = vsel %vm4678, %v4672, %v4694
        %4699 = vst.msk [vmem:[#allocation3 + $0x8] sm:$0xff] %vm709, %v4695
        %4700 = vst.msk [vmem:[#allocation3 + $0x28] sm:$0xff] %vm709, %v4696
        %4701 = vst.msk [vmem:[#allocation3 + $0x48] sm:$0xff] %vm709, %v4697
        %4702 = vst.msk [vmem:[#allocation3 + $0x68] sm:$0xff] %vm709, %v4698
        %v4703 = vld [vmem:[%s11] sm:$0xff]
        %v4704 = vld [vmem:[%s11 + $0x8] sm:$0xff]
        %v4705 = vld [vmem:[%s11 + $0x10] sm:$0xff]
        %v4706 = vld [vmem:[%s11 + $0x18] sm:$0xff]
        %v4707 = vld [vmem:[%s11 + $0x20] sm:$0xff]
        %v4708 = vld [vmem:[%s11 + $0x28] sm:$0xff]
        %v4709 = vld [vmem:[%s12] sm:$0xff]
        %v4710 = vld [vmem:[%s12 + $0x8] sm:$0xff]
        %v4711 = vld [vmem:[#allocation3] sm:$0xff]
        %v4712 = vld [vmem:[#allocation3 + $0x8] sm:$0xff]
        %v4713 = vld [vmem:[#allocation3 + $0x20] sm:$0xff]
        %v4714 = vld [vmem:[#allocation3 + $0x28] sm:$0xff]
        %v4715 = vld [vmem:[#allocation3 + $0x40] sm:$0xff]
        %v4716 = vld [vmem:[#allocation3 + $0x48] sm:$0xff]
        %v4717 = vld [vmem:[#allocation3 + $0x60] sm:$0xff]
        %v4718 = vld [vmem:[#allocation3 + $0x68] sm:$0xff]
        %v4719 = vmul.f32 %v4711, %v4366
        %v4720 = vmul.f32 %v4712, %v4366
        %v4721 = vmul.f32 %v4713, %v4366
        %v4722 = vmul.f32 %v4714, %v4366
        %v4723 = vmul.f32 %v4715, %v4366
        %v4724 = vmul.f32 %v4716, %v4366
        %v4725 = vmul.f32 %v4717, %v4366
        %v4726 = vmul.f32 %v4718, %v4366
        %4735 = vrot.lane.b32.xlu0 %v4719, 5
        %v4736 = vpop.permute.xlu0 %4735
        %4737 = vrot.lane.b32.xlu0 %v4720, 5
        %v4738 = vpop.permute.xlu0 %4737
        %4739 = vrot.lane.b32.xlu0 %v4721, 5
        %v4740 = vpop.permute.xlu0 %4739
        %4741 = vrot.lane.b32.xlu0 %v4722, 5
        %v4742 = vpop.permute.xlu0 %4741
        %4743 = vrot.lane.b32.xlu0 %v4723, 5
        %v4744 = vpop.permute.xlu0 %4743
        %4745 = vrot.lane.b32.xlu0 %v4724, 5
        %v4746 = vpop.permute.xlu0 %4745
        %4747 = vrot.lane.b32.xlu0 %v4725, 5
        %v4748 = vpop.permute.xlu0 %4747
        %4749 = vrot.lane.b32.xlu0 %v4726, 5
        %v4750 = vpop.permute.xlu0 %4749
        %v4751 = vsel %vm4384, %v4736, %v4738
        %v4752 = vsel %vm4384, %v4740, %v4742
        %v4753 = vsel %vm4384, %v4744, %v4746
        %v4754 = vsel %vm4384, %v4748, %v4750
        %4759 = vst.msk [vmem:[#allocation5] sm:$0xff] %vm709, %v4751
        %4760 = vst.msk [vmem:[#allocation5 + $0x10] sm:$0xff] %vm709, %v4752
        %4761 = vst.msk [vmem:[#allocation5 + $0x20] sm:$0xff] %vm709, %v4753
        %4762 = vst.msk [vmem:[#allocation5 + $0x30] sm:$0xff] %vm709, %v4754
        %v4763 = vld [vmem:[#allocation3] sm:$0xff]
        %v4764 = vld [vmem:[#allocation3 + $0x8] sm:$0xff]
        %v4765 = vld [vmem:[#allocation3 + $0x20] sm:$0xff]
        %v4766 = vld [vmem:[#allocation3 + $0x28] sm:$0xff]
        %v4767 = vld [vmem:[#allocation3 + $0x40] sm:$0xff]
        %v4768 = vld [vmem:[#allocation3 + $0x48] sm:$0xff]
        %v4769 = vld [vmem:[#allocation3 + $0x60] sm:$0xff]
        %v4770 = vld [vmem:[#allocation3 + $0x68] sm:$0xff]
        %4779 = vrot.lane.b32.xlu0 %v4763, 4
        %v4780 = vpop.permute.xlu0 %4779
        %4781 = vrot.lane.b32.xlu0 %v4764, 4
        %v4782 = vpop.permute.xlu0 %4781
        %4783 = vrot.lane.b32.xlu0 %v4765, 4
        %v4784 = vpop.permute.xlu0 %4783
        %4785 = vrot.lane.b32.xlu0 %v4766, 4
        %v4786 = vpop.permute.xlu0 %4785
        %4787 = vrot.lane.b32.xlu0 %v4767, 4
        %v4788 = vpop.permute.xlu0 %4787
        %4789 = vrot.lane.b32.xlu0 %v4768, 4
        %v4790 = vpop.permute.xlu0 %4789
        %4791 = vrot.lane.b32.xlu0 %v4769, 4
        %v4792 = vpop.permute.xlu0 %4791
        %4793 = vrot.lane.b32.xlu0 %v4770, 4
        %v4794 = vpop.permute.xlu0 %4793
        %v4795 = vsel %vm3777, %v4780, %v4782
        %v4796 = vsel %vm3777, %v4784, %v4786
        %v4797 = vsel %vm3777, %v4788, %v4790
        %v4798 = vsel %vm3777, %v4792, %v4794
        %4803 = vst.msk [vmem:[#allocation5 + $0x40] sm:$0xff] %vm709, %v4795
        %4804 = vst.msk [vmem:[#allocation5 + $0x50] sm:$0xff] %vm709, %v4796
        %4805 = vst.msk [vmem:[#allocation5 + $0x60] sm:$0xff] %vm709, %v4797
        %4806 = vst.msk [vmem:[#allocation5 + $0x70] sm:$0xff] %vm709, %v4798
        %v4807 = vld [vmem:[#allocation3] sm:$0xff]
        %v4808 = vld [vmem:[#allocation3 + $0x8] sm:$0xff]
        %v4809 = vld [vmem:[#allocation3 + $0x20] sm:$0xff]
        %v4810 = vld [vmem:[#allocation3 + $0x28] sm:$0xff]
        %v4811 = vld [vmem:[#allocation3 + $0x40] sm:$0xff]
        %v4812 = vld [vmem:[#allocation3 + $0x48] sm:$0xff]
        %v4813 = vld [vmem:[#allocation3 + $0x60] sm:$0xff]
        %v4814 = vld [vmem:[#allocation3 + $0x68] sm:$0xff]
        %v4815 = vmul.f32 %v4807, %v4419
        %v4816 = vmul.f32 %v4808, %v4419
        %v4817 = vmul.f32 %v4809, %v4419
        %v4818 = vmul.f32 %v4810, %v4419
        %v4819 = vmul.f32 %v4811, %v4419
        %v4820 = vmul.f32 %v4812, %v4419
        %v4821 = vmul.f32 %v4813, %v4419
        %v4822 = vmul.f32 %v4814, %v4419
        %4831 = vrot.lane.b32.xlu0 %v4815, 3
        %v4832 = vpop.permute.xlu0 %4831
        %4833 = vrot.lane.b32.xlu0 %v4816, 3
        %v4834 = vpop.permute.xlu0 %4833
        %4835 = vrot.lane.b32.xlu0 %v4817, 3
        %v4836 = vpop.permute.xlu0 %4835
        %4837 = vrot.lane.b32.xlu0 %v4818, 3
        %v4838 = vpop.permute.xlu0 %4837
        %4839 = vrot.lane.b32.xlu0 %v4819, 3
        %v4840 = vpop.permute.xlu0 %4839
        %4841 = vrot.lane.b32.xlu0 %v4820, 3
        %v4842 = vpop.permute.xlu0 %4841
        %4843 = vrot.lane.b32.xlu0 %v4821, 3
        %v4844 = vpop.permute.xlu0 %4843
        %4845 = vrot.lane.b32.xlu0 %v4822, 3
        %v4846 = vpop.permute.xlu0 %4845
        %v4847 = vsel %vm4437, %v4832, %v4834
        %v4848 = vsel %vm4437, %v4836, %v4838
        %v4849 = vsel %vm4437, %v4840, %v4842
        %v4850 = vsel %vm4437, %v4844, %v4846
        %4855 = vst.msk [vmem:[#allocation5 + $0x80] sm:$0xff] %vm709, %v4847
        %4856 = vst.msk [vmem:[#allocation5 + $0x90] sm:$0xff] %vm709, %v4848
        %4857 = vst.msk [vmem:[#allocation5 + $0xa0] sm:$0xff] %vm709, %v4849
        %4858 = vst.msk [vmem:[#allocation5 + $0xb0] sm:$0xff] %vm709, %v4850
        %v4859 = vld [vmem:[#allocation3] sm:$0xff]
        %v4860 = vld [vmem:[#allocation3 + $0x8] sm:$0xff]
        %v4861 = vld [vmem:[#allocation3 + $0x20] sm:$0xff]
        %v4862 = vld [vmem:[#allocation3 + $0x28] sm:$0xff]
        %v4863 = vld [vmem:[#allocation3 + $0x40] sm:$0xff]
        %v4864 = vld [vmem:[#allocation3 + $0x48] sm:$0xff]
        %v4865 = vld [vmem:[#allocation3 + $0x60] sm:$0xff]
        %v4866 = vld [vmem:[#allocation3 + $0x68] sm:$0xff]
        %v4867 = vmul.f32 %v4859, %v4449
        %v4868 = vmul.f32 %v4860, %v4449
        %v4869 = vmul.f32 %v4861, %v4449
        %v4870 = vmul.f32 %v4862, %v4449
        %v4871 = vmul.f32 %v4863, %v4449
        %v4872 = vmul.f32 %v4864, %v4449
        %v4873 = vmul.f32 %v4865, %v4449
        %v4874 = vmul.f32 %v4866, %v4449
        %4883 = vrot.lane.b32.xlu0 %v4867, 1
        %v4884 = vpop.permute.xlu0 %4883
        %4885 = vrot.lane.b32.xlu0 %v4868, 1
        %v4886 = vpop.permute.xlu0 %4885
        %4887 = vrot.lane.b32.xlu0 %v4869, 1
        %v4888 = vpop.permute.xlu0 %4887
        %4889 = vrot.lane.b32.xlu0 %v4870, 1
        %v4890 = vpop.permute.xlu0 %4889
        %4891 = vrot.lane.b32.xlu0 %v4871, 1
        %v4892 = vpop.permute.xlu0 %4891
        %4893 = vrot.lane.b32.xlu0 %v4872, 1
        %v4894 = vpop.permute.xlu0 %4893
        %4895 = vrot.lane.b32.xlu0 %v4873, 1
        %v4896 = vpop.permute.xlu0 %4895
        %4897 = vrot.lane.b32.xlu0 %v4874, 1
        %v4898 = vpop.permute.xlu0 %4897
        %v4899 = vsel %vm776, %v4884, %v4886
        %v4900 = vsel %vm776, %v4888, %v4890
        %v4901 = vsel %vm776, %v4892, %v4894
        %v4902 = vsel %vm776, %v4896, %v4898
        %4907 = vst.msk [vmem:[#allocation5 + $0xc0] sm:$0xff] %vm709, %v4899
        %4908 = vst.msk [vmem:[#allocation5 + $0xd0] sm:$0xff] %vm709, %v4900
        %4909 = vst.msk [vmem:[#allocation5 + $0xe0] sm:$0xff] %vm709, %v4901
        %4910 = vst.msk [vmem:[#allocation5 + $0xf0] sm:$0xff] %vm709, %v4902
        %v4911 = vld [vmem:[#allocation3 + $0x8] sm:$0xff]
        %v4912 = vld [vmem:[#allocation3 + $0x28] sm:$0xff]
        %v4913 = vld [vmem:[#allocation3 + $0x48] sm:$0xff]
        %v4914 = vld [vmem:[#allocation3 + $0x68] sm:$0xff]
        %4915 = vst.msk [vmem:[#allocation5 + $0x100] sm:$0xff] %vm709, %v4911
        %4916 = vst.msk [vmem:[#allocation5 + $0x110] sm:$0xff] %vm709, %v4912
        %4917 = vst.msk [vmem:[#allocation5 + $0x120] sm:$0xff] %vm709, %v4913
        %4918 = vst.msk [vmem:[#allocation5 + $0x130] sm:$0xff] %vm709, %v4914
        %v4919 = vld [vmem:[#allocation3 + $0x8] sm:$0xff]
        %v4920 = vld [vmem:[#allocation3 + $0x28] sm:$0xff]
        %v4921 = vld [vmem:[#allocation3 + $0x48] sm:$0xff]
        %v4922 = vld [vmem:[#allocation3 + $0x68] sm:$0xff]
        %v4923 = vmul.f32 %v4919, %v4480
        %v4924 = vmul.f32 %v4920, %v4480
        %v4925 = vmul.f32 %v4921, %v4480
        %v4926 = vmul.f32 %v4922, %v4480
        %4931 = vrot.lane.b32.xlu0 %v4923, 127
        %v4932 = vpop.permute.xlu0 %4931
        %4933 = vrot.lane.b32.xlu0 %v4924, 127
        %v4934 = vpop.permute.xlu0 %4933
        %4935 = vrot.lane.b32.xlu0 %v4925, 127
        %v4936 = vpop.permute.xlu0 %4935
        %4937 = vrot.lane.b32.xlu0 %v4926, 127
        %v4938 = vpop.permute.xlu0 %4937
        %4943 = vst.msk [vmem:[#allocation5 + $0x140] sm:$0xff] %vm709, %v4932
        %4944 = vst.msk [vmem:[#allocation5 + $0x150] sm:$0xff] %vm709, %v4934
        %4945 = vst.msk [vmem:[#allocation5 + $0x160] sm:$0xff] %vm709, %v4936
        %4946 = vst.msk [vmem:[#allocation5 + $0x170] sm:$0xff] %vm709, %v4938
        %v4947 = vld [vmem:[#allocation3 + $0x8] sm:$0xff]
        %v4948 = vld [vmem:[#allocation3 + $0x28] sm:$0xff]
        %v4949 = vld [vmem:[#allocation3 + $0x48] sm:$0xff]
        %v4950 = vld [vmem:[#allocation3 + $0x68] sm:$0xff]
        %v4951 = vmul.f32 %v4947, %v4497
        %v4952 = vmul.f32 %v4948, %v4497
        %v4953 = vmul.f32 %v4949, %v4497
        %v4954 = vmul.f32 %v4950, %v4497
        %4959 = vrot.lane.b32.xlu0 %v4951, 125
        %v4960 = vpop.permute.xlu0 %4959
        %4961 = vrot.lane.b32.xlu0 %v4952, 125
        %v4962 = vpop.permute.xlu0 %4961
        %4963 = vrot.lane.b32.xlu0 %v4953, 125
        %v4964 = vpop.permute.xlu0 %4963
        %4965 = vrot.lane.b32.xlu0 %v4954, 125
        %v4966 = vpop.permute.xlu0 %4965
        %4971 = vst.msk [vmem:[#allocation5 + $0x180] sm:$0xff] %vm709, %v4960
        %4972 = vst.msk [vmem:[#allocation5 + $0x190] sm:$0xff] %vm709, %v4962
        %4973 = vst.msk [vmem:[#allocation5 + $0x1a0] sm:$0xff] %vm709, %v4964
        %4974 = vst.msk [vmem:[#allocation5 + $0x1b0] sm:$0xff] %vm709, %v4966
        %v4975 = vld [vmem:[#allocation3 + $0x8] sm:$0xff]
        %v4976 = vld [vmem:[#allocation3 + $0x28] sm:$0xff]
        %v4977 = vld [vmem:[#allocation3 + $0x48] sm:$0xff]
        %v4978 = vld [vmem:[#allocation3 + $0x68] sm:$0xff]
        %4983 = vrot.lane.b32.xlu0 %v4975, 124
        %v4984 = vpop.permute.xlu0 %4983
        %4985 = vrot.lane.b32.xlu0 %v4976, 124
        %v4986 = vpop.permute.xlu0 %4985
        %4987 = vrot.lane.b32.xlu0 %v4977, 124
        %v4988 = vpop.permute.xlu0 %4987
        %4989 = vrot.lane.b32.xlu0 %v4978, 124
        %v4990 = vpop.permute.xlu0 %4989
        %4995 = vst.msk [vmem:[#allocation5 + $0x1c0] sm:$0xff] %vm709, %v4984
        %4996 = vst.msk [vmem:[#allocation5 + $0x1d0] sm:$0xff] %vm709, %v4986
        %4997 = vst.msk [vmem:[#allocation5 + $0x1e0] sm:$0xff] %vm709, %v4988
        %4998 = vst.msk [vmem:[#allocation5 + $0x1f0] sm:$0xff] %vm709, %v4990
        %v4999 = vld [vmem:[#allocation3 + $0x8] sm:$0xff]
        %v5000 = vld [vmem:[#allocation3 + $0x28] sm:$0xff]
        %v5001 = vld [vmem:[#allocation3 + $0x48] sm:$0xff]
        %v5002 = vld [vmem:[#allocation3 + $0x68] sm:$0xff]
        %v5003 = vmul.f32 %v4999, %v4526
        %v5004 = vmul.f32 %v5000, %v4526
        %v5005 = vmul.f32 %v5001, %v4526
        %v5006 = vmul.f32 %v5002, %v4526
        %5011 = vrot.lane.b32.xlu0 %v5003, 123
        %v5012 = vpop.permute.xlu0 %5011
        %5013 = vrot.lane.b32.xlu0 %v5004, 123
        %v5014 = vpop.permute.xlu0 %5013
        %5015 = vrot.lane.b32.xlu0 %v5005, 123
        %v5016 = vpop.permute.xlu0 %5015
        %5017 = vrot.lane.b32.xlu0 %v5006, 123
        %v5018 = vpop.permute.xlu0 %5017
        %5023 = vst.msk [vmem:[#allocation5 + $0x200] sm:$0xff] %vm709, %v5012
        %5024 = vst.msk [vmem:[#allocation5 + $0x210] sm:$0xff] %vm709, %v5014
        %5025 = vst.msk [vmem:[#allocation5 + $0x220] sm:$0xff] %vm709, %v5016
        %5026 = vst.msk [vmem:[#allocation5 + $0x230] sm:$0xff] %vm709, %v5018
        %v5027 = vld [vmem:[#allocation5] sm:$0xff]
        %v5028 = vld [vmem:[#allocation5 + $0x10] sm:$0xff]
        %v5029 = vld [vmem:[#allocation5 + $0x20] sm:$0xff]
        %v5030 = vld [vmem:[#allocation5 + $0x30] sm:$0xff]
        %v5031 = vld [vmem:[#allocation5 + $0x40] sm:$0xff]
        %v5032 = vld [vmem:[#allocation5 + $0x50] sm:$0xff]
        %v5033 = vld [vmem:[#allocation5 + $0x60] sm:$0xff]
        %v5034 = vld [vmem:[#allocation5 + $0x70] sm:$0xff]
        %v5035 = vld [vmem:[#allocation5 + $0x80] sm:$0xff]
        %v5036 = vld [vmem:[#allocation5 + $0x90] sm:$0xff]
        %v5037 = vld [vmem:[#allocation5 + $0xa0] sm:$0xff]
        %v5038 = vld [vmem:[#allocation5 + $0xb0] sm:$0xff]
        %v5039 = vld [vmem:[#allocation5 + $0xc0] sm:$0xff]
        %v5040 = vld [vmem:[#allocation5 + $0xd0] sm:$0xff]
        %v5041 = vld [vmem:[#allocation5 + $0xe0] sm:$0xff]
        %v5042 = vld [vmem:[#allocation5 + $0xf0] sm:$0xff]
        %v5043 = vld [vmem:[#allocation5 + $0x100] sm:$0xff]
        %v5044 = vld [vmem:[#allocation5 + $0x110] sm:$0xff]
        %v5045 = vld [vmem:[#allocation5 + $0x120] sm:$0xff]
        %v5046 = vld [vmem:[#allocation5 + $0x130] sm:$0xff]
        %v5047 = vld [vmem:[#allocation5 + $0x140] sm:$0xff]
        %v5048 = vld [vmem:[#allocation5 + $0x150] sm:$0xff]
        %v5049 = vld [vmem:[#allocation5 + $0x160] sm:$0xff]
        %v5050 = vld [vmem:[#allocation5 + $0x170] sm:$0xff]
        %v5051 = vld [vmem:[#allocation5 + $0x180] sm:$0xff]
        %v5052 = vld [vmem:[#allocation5 + $0x190] sm:$0xff]
        %v5053 = vld [vmem:[#allocation5 + $0x1a0] sm:$0xff]
        %v5054 = vld [vmem:[#allocation5 + $0x1b0] sm:$0xff]
        %v5055 = vld [vmem:[#allocation5 + $0x1c0] sm:$0xff]
        %v5056 = vld [vmem:[#allocation5 + $0x1d0] sm:$0xff]
        %v5057 = vld [vmem:[#allocation5 + $0x1e0] sm:$0xff]
        %v5058 = vld [vmem:[#allocation5 + $0x1f0] sm:$0xff]
        %v5059 = vld [vmem:[#allocation5 + $0x200] sm:$0xff]
        %v5060 = vld [vmem:[#allocation5 + $0x210] sm:$0xff]
        %v5061 = vld [vmem:[#allocation5 + $0x220] sm:$0xff]
        %v5062 = vld [vmem:[#allocation5 + $0x230] sm:$0xff]
        %5064 = vset.pattern.permute.xlu0 0
        %5065 = vperm.xlu0 %5064, %v4709
        %v5066 = vpop.permute.xlu0 %5065
        %5069 = vset.pattern.permute.xlu0 0
        %5070 = vperm.xlu0 %5069, %v4710
        %v5071 = vpop.permute.xlu0 %5070
        %vm5073 = vcmask 261120
        %v5075 = vsel %vm5073, %v4705, 0
        %v5078 = vsel %vm5073, %v4708, 0
        %5080 = vmatprep.subr.mxu0 0.0
        %5081 = vmatpush1.msra.mxu0 %v5027
        %5082 = vmatprep.subr.mxu0 0.0
        %5083 = vmatpush1.msra.mxu0 %v5028
        %5084 = vmatprep.subr.mxu0 0.0
        %5085 = vmatpush1.msra.mxu0 %v5029
        %5086 = vmatprep.subr.mxu0 0.0
        %5087 = vmatpush1.msra.mxu0 %v5030
        %5088 = vmatprep.subr.mxu0 0.0
        %5089 = vmatpush1.msra.mxu0 %v5031
        %5090 = vmatprep.subr.mxu0 0.0
        %5091 = vmatpush1.msra.mxu0 %v5032
        %5092 = vmatprep.subr.mxu0 0.0
        %5093 = vmatpush1.msra.mxu0 %v5033
        %5094 = vmatprep.subr.mxu0 0.0
        %5095 = vmatpush1.msra.mxu0 %v5034
        %5096 = vmatprep.subr.mxu0 0.0
        %5097 = vmatpush1.msra.mxu0 %v5035
        %5098 = vmatprep.subr.mxu0 0.0
        %5099 = vmatpush1.msra.mxu0 %v5036
        %5100 = vmatprep.subr.mxu0 0.0
        %5101 = vmatpush1.msra.mxu0 %v5037
        %5102 = vmatprep.subr.mxu0 0.0
        %5103 = vmatpush1.msra.mxu0 %v5038
        %5104 = vmatprep.subr.mxu0 0.0
        %5105 = vmatpush1.msra.mxu0 %v5039
        %5106 = vmatprep.subr.mxu0 0.0
        %5107 = vmatpush1.msra.mxu0 %v5040
        %5108 = vmatprep.subr.mxu0 0.0
        %5109 = vmatpush1.msra.mxu0 %v5041
        %5110 = vmatprep.subr.mxu0 0.0
        %5111 = vmatpush1.msra.mxu0 %v5042
        %5112 = vmatprep.subr.mxu0 0.0
        %5113 = vmatpush1.msra.mxu0 %v5043
        %5114 = vmatprep.subr.mxu0 0.0
        %5115 = vmatpush1.msra.mxu0 %v5044
        %5116 = vmatprep.subr.mxu0 0.0
        %5117 = vmatpush1.msra.mxu0 %v5045
        %5118 = vmatprep.subr.mxu0 0.0
        %5119 = vmatpush1.msra.mxu0 %v5046
        %5120 = vmatprep.subr.mxu0 0.0
        %5121 = vmatpush1.msra.mxu0 %v5047
        %5122 = vmatprep.subr.mxu0 0.0
        %5123 = vmatpush1.msra.mxu0 %v5048
        %5124 = vmatprep.subr.mxu0 0.0
        %5125 = vmatpush1.msra.mxu0 %v5049
        %5126 = vmatprep.subr.mxu0 0.0
        %5127 = vmatpush1.msra.mxu0 %v5050
        %5128 = vmatprep.subr.mxu0 0.0
        %5129 = vmatpush1.msra.mxu0 %v5051
        %5130 = vmatprep.subr.mxu0 0.0
        %5131 = vmatpush1.msra.mxu0 %v5052
        %5132 = vmatprep.subr.mxu0 0.0
        %5133 = vmatpush1.msra.mxu0 %v5053
        %5134 = vmatprep.subr.mxu0 0.0
        %5135 = vmatpush1.msra.mxu0 %v5054
        %5136 = vmatprep.subr.mxu0 0.0
        %5137 = vmatpush1.msra.mxu0 %v5055
        %5138 = vmatprep.subr.mxu0 0.0
        %5139 = vmatpush1.msra.mxu0 %v5056
        %5140 = vmatprep.subr.mxu0 0.0
        %5141 = vmatpush1.msra.mxu0 %v5057
        %5142 = vmatprep.subr.mxu0 0.0
        %5143 = vmatpush1.msra.mxu0 %v5058
        %5144 = vmatprep.mubr.f32.mxu0 %v4704
        %5145 = vmatmul.mubr.f32.gmra.mrb[0].mxu0 %v4703
        %v5146 = vpop.f32.mrb[0].mxu0
        %v5147 = vadd.f32 %v5066, %v5146
        %v5148 = vpop.f32.mrb[0].mxu0
        %5149 = vmatprep.mubr.f32.mxu0 %v4707
        %5150 = vmatmul.mubr.f32.gmra.mrb[0].mxu0 %v4706
        %v5151 = vpop.f32.mrb[0].mxu0
        %v5152 = vadd.f32 %v5071, %v5151
        %v5153 = vpop.f32.mrb[0].mxu0
        %5154 = vdwg.mxu0
        %5155 = vmatprep.subr.mxu0 0.0
        %5156 = vmatpush1.msra.mxu0 %v5059
        %5157 = vmatprep.subr.mxu0 0.0
        %5158 = vmatpush1.msra.mxu0 %v5060
        %5159 = vmatprep.subr.mxu0 0.0
        %5160 = vmatpush1.msra.mxu0 %v5061
        %5161 = vmatprep.subr.mxu0 0.0
        %5162 = vmatpush1.msra.mxu0 %v5062
        %5163 = vmatprep.subr.mxu0 0.0
        %5164 = vmatpush1.msra.mxu0 0.0
        %5165 = vmatprep.subr.mxu0 0.0
        %5166 = vmatpush1.msra.mxu0 0.0
        %5167 = vmatprep.subr.mxu0 0.0
        %5168 = vmatpush1.msra.mxu0 0.0
        %5169 = vmatprep.subr.mxu0 0.0
        %5170 = vmatpush1.msra.mxu0 0.0
        %5171 = vmatprep.subr.mxu0 0.0
        %5172 = vmatpush1.msra.mxu0 0.0
        %5173 = vmatprep.subr.mxu0 0.0
        %5174 = vmatpush1.msra.mxu0 0.0
        %5175 = vmatprep.subr.mxu0 0.0
        %5176 = vmatpush1.msra.mxu0 0.0
        %5177 = vmatprep.subr.mxu0 0.0
        %5178 = vmatpush1.msra.mxu0 0.0
        %5179 = vmatprep.subr.mxu0 0.0
        %5180 = vmatpush1.msra.mxu0 0.0
        %5181 = vmatprep.subr.mxu0 0.0
        %5182 = vmatpush1.msra.mxu0 0.0
        %5183 = vmatprep.subr.mxu0 0.0
        %5184 = vmatpush1.msra.mxu0 0.0
        %5185 = vmatprep.subr.mxu0 0.0
        %5186 = vmatpush1.msra.mxu0 0.0
        %5187 = vmatprep.subr.mxu0 0.0
        %5188 = vmatpush1.msra.mxu0 0.0
        %5189 = vmatprep.subr.mxu0 0.0
        %5190 = vmatpush1.msra.mxu0 0.0
        %5191 = vmatprep.subr.mxu0 0.0
        %5192 = vmatpush1.msra.mxu0 0.0
        %5193 = vmatprep.subr.mxu0 0.0
        %5194 = vmatpush1.msra.mxu0 0.0
        %5195 = vmatprep.subr.mxu0 0.0
        %5196 = vmatpush1.msra.mxu0 0.0
        %5197 = vmatprep.subr.mxu0 0.0
        %5198 = vmatpush1.msra.mxu0 0.0
        %5199 = vmatprep.subr.mxu0 0.0
        %5200 = vmatpush1.msra.mxu0 0.0
        %5201 = vmatprep.subr.mxu0 0.0
        %5202 = vmatpush1.msra.mxu0 0.0
        %5203 = vmatprep.subr.mxu0 0.0
        %5204 = vmatpush1.msra.mxu0 0.0
        %5205 = vmatprep.subr.mxu0 0.0
        %5206 = vmatpush1.msra.mxu0 0.0
        %5207 = vmatprep.subr.mxu0 0.0
        %5208 = vmatpush1.msra.mxu0 0.0
        %5209 = vmatprep.subr.mxu0 0.0
        %5210 = vmatpush1.msra.mxu0 0.0
        %5211 = vmatprep.subr.mxu0 0.0
        %5212 = vmatpush1.msra.mxu0 0.0
        %5213 = vmatprep.subr.mxu0 0.0
        %5214 = vmatpush1.msra.mxu0 0.0
        %5215 = vmatprep.subr.mxu0 0.0
        %5216 = vmatpush1.msra.mxu0 0.0
        %5217 = vmatprep.subr.mxu0 0.0
        %5218 = vmatpush1.msra.mxu0 0.0
        %5219 = vmatprep.mubr.f32.mxu0 0.0
        %5220 = vmatmul.mubr.f32.gmra.mrb[0].mxu0 %v5075
        %v5221 = vpop.f32.mrb[0].mxu0
        %v5222 = vadd.f32 %v5147, %v5221
        %v5223 = vpop.f32.mrb[0].mxu0
        %5224 = vmatprep.mubr.f32.mxu0 0.0
        %5225 = vmatmul.mubr.f32.gmra.mrb[0].mxu0 %v5078
        %v5226 = vpop.f32.mrb[0].mxu0
        %v5227 = vadd.f32 %v5152, %v5226
        %v5228 = vpop.f32.mrb[0].mxu0
        %5229 = vdwg.mxu0
        %vm5230 = vcmp.gt.f32.partialorder %v5222, 0.0
        %vm5231 = vcmp.gt.f32.partialorder %v5227, 0.0
        %v5232 = vmin.f32 %v5222, 0.0
        %v5233 = vmin.f32 %v5227, 0.0
        %v5234 = vmul.f32 %v5232, 1.442695
        %v5235 = vpow.pop %v5234
        %v5236 = vmul.f32 %v5233, 1.442695
        %v5237 = vpow.pop %v5236
        %v5238 = vsub.f32 %v5235, 1.0
        %v5239 = vsub.f32 %v5237, 1.0
        %v5240 = vsel %vm5230, %v5222, %v5238
        %v5241 = vsel %vm5231, %v5227, %v5239
        %5242 = vst.msk [vmem:[#allocation4] sm:$0xff] %vm709, %v5240
        %5243 = vst.msk [vmem:[#allocation4 + $0x10] sm:$0xff] %vm709, %v5241
        %v5244 = vld [vmem:[#allocation4] sm:$0xff]
        %v5245 = vld [vmem:[#allocation4 + $0x10] sm:$0xff]
        %5248 = vrot.lane.b32.xlu0 %v5244, 124
        %v5249 = vpop.permute.xlu0 %5248
        %5250 = vrot.lane.b32.xlu0 %v5245, 124
        %v5251 = vpop.permute.xlu0 %5250
        %v5254 = vmax.f32 %v5244, %v5249
        %v5255 = vmax.f32 %v5245, %v5251
        %v5257 = vsel %vm3777, %v5254, 0
        %v5260 = vsel %vm3777, %v5255, 0
        %v5263 = vsel %vm926, %v593, 0
        %5265 = vmatprep.subr.mxu0 0.0
        %5266 = vmatpush1.msra.mxu0 %v5263
        %5267 = vmatprep.subr.mxu0 0.0
        %5268 = vmatpush1.msra.mxu0 0.0
        %5269 = vmatprep.subr.mxu0 0.0
        %5270 = vmatpush1.msra.mxu0 0.0
        %5271 = vmatprep.subr.mxu0 0.0
        %5272 = vmatpush1.msra.mxu0 0.0
        %5273 = vmatprep.subr.mxu0 0.0
        %5274 = vmatpush1.msra.mxu0 0.0
        %5275 = vmatprep.subr.mxu0 0.0
        %5276 = vmatpush1.msra.mxu0 0.0
        %5277 = vmatprep.subr.mxu0 0.0
        %5278 = vmatpush1.msra.mxu0 0.0
        %5279 = vmatprep.subr.mxu0 0.0
        %5280 = vmatpush1.msra.mxu0 0.0
        %5281 = vmatprep.subr.mxu0 0.0
        %5282 = vmatpush1.msra.mxu0 0.0
        %5283 = vmatprep.subr.mxu0 0.0
        %5284 = vmatpush1.msra.mxu0 0.0
        %5285 = vmatprep.subr.mxu0 0.0
        %5286 = vmatpush1.msra.mxu0 0.0
        %5287 = vmatprep.subr.mxu0 0.0
        %5288 = vmatpush1.msra.mxu0 0.0
        %5289 = vmatprep.subr.mxu0 0.0
        %5290 = vmatpush1.msra.mxu0 0.0
        %5291 = vmatprep.subr.mxu0 0.0
        %5292 = vmatpush1.msra.mxu0 0.0
        %5293 = vmatprep.subr.mxu0 0.0
        %5294 = vmatpush1.msra.mxu0 0.0
        %5295 = vmatprep.subr.mxu0 0.0
        %5296 = vmatpush1.msra.mxu0 0.0
        %5297 = vmatprep.subr.mxu0 0.0
        %5298 = vmatpush1.msra.mxu0 0.0
        %5299 = vmatprep.subr.mxu0 0.0
        %5300 = vmatpush1.msra.mxu0 0.0
        %5301 = vmatprep.subr.mxu0 0.0
        %5302 = vmatpush1.msra.mxu0 0.0
        %5303 = vmatprep.subr.mxu0 0.0
        %5304 = vmatpush1.msra.mxu0 0.0
        %5305 = vmatprep.subr.mxu0 0.0
        %5306 = vmatpush1.msra.mxu0 0.0
        %5307 = vmatprep.subr.mxu0 0.0
        %5308 = vmatpush1.msra.mxu0 0.0
        %5309 = vmatprep.subr.mxu0 0.0
        %5310 = vmatpush1.msra.mxu0 0.0
        %5311 = vmatprep.subr.mxu0 0.0
        %5312 = vmatpush1.msra.mxu0 0.0
        %5313 = vmatprep.subr.mxu0 0.0
        %5314 = vmatpush1.msra.mxu0 0.0
        %5315 = vmatprep.subr.mxu0 0.0
        %5316 = vmatpush1.msra.mxu0 0.0
        %5317 = vmatprep.subr.mxu0 0.0
        %5318 = vmatpush1.msra.mxu0 0.0
        %5319 = vmatprep.subr.mxu0 0.0
        %5320 = vmatpush1.msra.mxu0 0.0
        %5321 = vmatprep.subr.mxu0 0.0
        %5322 = vmatpush1.msra.mxu0 0.0
        %5323 = vmatprep.subr.mxu0 0.0
        %5324 = vmatpush1.msra.mxu0 0.0
        %5325 = vmatprep.subr.mxu0 0.0
        %5326 = vmatpush1.msra.mxu0 0.0
        %5327 = vmatprep.subr.mxu0 0.0
        %5328 = vmatpush1.msra.mxu0 0.0
        %5329 = vmatprep.mubr.f32.mxu0 0.0
        %5330 = vmatmul.mubr.f32.gmra.mrb[0].mxu0 %v5257
        %v5331 = vpop.f32.mrb[0].mxu0
        %v5332 = vadd.f32 0.0, %v5331
        %v5333 = vpop.f32.mrb[0].mxu0
        %5334 = vmatprep.mubr.f32.mxu0 0.0
        %5335 = vmatmul.mubr.f32.gmra.mrb[0].mxu0 %v5260
        %v5336 = vpop.f32.mrb[0].mxu0
        %v5337 = vadd.f32 0.0, %v5336
        %v5338 = vpop.f32.mrb[0].mxu0
        %5339 = vdwg.mxu0
        %v5341 = vsel %vm926, %v600, 0
        %5343 = vmatprep.subr.mxu0 0.0
        %5344 = vmatpush1.msra.mxu0 %v5341
        %5345 = vmatprep.subr.mxu0 0.0
        %5346 = vmatpush1.msra.mxu0 0.0
        %5347 = vmatprep.subr.mxu0 0.0
        %5348 = vmatpush1.msra.mxu0 0.0
        %5349 = vmatprep.subr.mxu0 0.0
        %5350 = vmatpush1.msra.mxu0 0.0
        %5351 = vmatprep.subr.mxu0 0.0
        %5352 = vmatpush1.msra.mxu0 0.0
        %5353 = vmatprep.subr.mxu0 0.0
        %5354 = vmatpush1.msra.mxu0 0.0
        %5355 = vmatprep.subr.mxu0 0.0
        %5356 = vmatpush1.msra.mxu0 0.0
        %5357 = vmatprep.subr.mxu0 0.0
        %5358 = vmatpush1.msra.mxu0 0.0
        %5359 = vmatprep.subr.mxu0 0.0
        %5360 = vmatpush1.msra.mxu0 0.0
        %5361 = vmatprep.subr.mxu0 0.0
        %5362 = vmatpush1.msra.mxu0 0.0
        %5363 = vmatprep.subr.mxu0 0.0
        %5364 = vmatpush1.msra.mxu0 0.0
        %5365 = vmatprep.subr.mxu0 0.0
        %5366 = vmatpush1.msra.mxu0 0.0
        %5367 = vmatprep.subr.mxu0 0.0
        %5368 = vmatpush1.msra.mxu0 0.0
        %5369 = vmatprep.subr.mxu0 0.0
        %5370 = vmatpush1.msra.mxu0 0.0
        %5371 = vmatprep.subr.mxu0 0.0
        %5372 = vmatpush1.msra.mxu0 0.0
        %5373 = vmatprep.subr.mxu0 0.0
        %5374 = vmatpush1.msra.mxu0 0.0
        %5375 = vmatprep.subr.mxu0 0.0
        %5376 = vmatpush1.msra.mxu0 0.0
        %5377 = vmatprep.subr.mxu0 0.0
        %5378 = vmatpush1.msra.mxu0 0.0
        %5379 = vmatprep.subr.mxu0 0.0
        %5380 = vmatpush1.msra.mxu0 0.0
        %5381 = vmatprep.subr.mxu0 0.0
        %5382 = vmatpush1.msra.mxu0 0.0
        %5383 = vmatprep.subr.mxu0 0.0
        %5384 = vmatpush1.msra.mxu0 0.0
        %5385 = vmatprep.subr.mxu0 0.0
        %5386 = vmatpush1.msra.mxu0 0.0
        %5387 = vmatprep.subr.mxu0 0.0
        %5388 = vmatpush1.msra.mxu0 0.0
        %5389 = vmatprep.subr.mxu0 0.0
        %5390 = vmatpush1.msra.mxu0 0.0
        %5391 = vmatprep.subr.mxu0 0.0
        %5392 = vmatpush1.msra.mxu0 0.0
        %5393 = vmatprep.subr.mxu0 0.0
        %5394 = vmatpush1.msra.mxu0 0.0
        %5395 = vmatprep.subr.mxu0 0.0
        %5396 = vmatpush1.msra.mxu0 0.0
        %5397 = vmatprep.subr.mxu0 0.0
        %5398 = vmatpush1.msra.mxu0 0.0
        %5399 = vmatprep.subr.mxu0 0.0
        %5400 = vmatpush1.msra.mxu0 0.0
        %5401 = vmatprep.subr.mxu0 0.0
        %5402 = vmatpush1.msra.mxu0 0.0
        %5403 = vmatprep.subr.mxu0 0.0
        %5404 = vmatpush1.msra.mxu0 0.0
        %5405 = vmatprep.subr.mxu0 0.0
        %5406 = vmatpush1.msra.mxu0 0.0
        %5407 = vmatprep.mubr.f32.mxu0 0.0
        %5408 = vmatmul.mubr.f32.gmra.mrb[0].mxu0 %v5257
        %v5409 = vpop.f32.mrb[0].mxu0
        %v5410 = vadd.f32 0.0, %v5409
        %v5411 = vpop.f32.mrb[0].mxu0
        %5412 = vmatprep.mubr.f32.mxu0 0.0
        %5413 = vmatmul.mubr.f32.gmra.mrb[0].mxu0 %v5260
        %v5414 = vpop.f32.mrb[0].mxu0
        %v5415 = vadd.f32 0.0, %v5414
        %v5416 = vpop.f32.mrb[0].mxu0
        %5417 = vdwg.mxu0
        %v5418 = vmax.f32 %v5332, %v5410
        %v5419 = vmax.f32 %v5337, %v5415
        %vm5420 = vcmask 15360
        %5421 = vst.msk [vmem:[#allocation6] sm:$0xff] %vm5420, %v5418
        %5422 = vst.msk [vmem:[#allocation6 + $0x8] sm:$0xff] %vm5420, %v5419
        %v5423 = vld [vmem:[#allocation4] sm:$0xff]
        %v5424 = vld [vmem:[#allocation4 + $0x10] sm:$0xff]
        %5427 = vrot.lane.b32.xlu0 %v5423, 124
        %v5428 = vpop.permute.xlu0 %5427
        %5429 = vrot.lane.b32.xlu0 %v5424, 124
        %v5430 = vpop.permute.xlu0 %5429
        %v5433 = vmax.f32 %v5423, %v5428
        %v5434 = vmax.f32 %v5424, %v5430
        %5437 = vrot.lane.b32.xlu0 %v5433, 120
        %v5438 = vpop.permute.xlu0 %5437
        %5439 = vrot.lane.b32.xlu0 %v5434, 120
        %v5440 = vpop.permute.xlu0 %5439
        %v5441 = vsel %vm3777, %v5438, 0
        %v5443 = vsel %vm3777, %v5440, 0
        %5445 = vmatprep.subr.mxu0 0.0
        %5446 = vmatpush1.msra.mxu0 %v5263
        %5447 = vmatprep.subr.mxu0 0.0
        %5448 = vmatpush1.msra.mxu0 0.0
        %5449 = vmatprep.subr.mxu0 0.0
        %5450 = vmatpush1.msra.mxu0 0.0
        %5451 = vmatprep.subr.mxu0 0.0
        %5452 = vmatpush1.msra.mxu0 0.0
        %5453 = vmatprep.subr.mxu0 0.0
        %5454 = vmatpush1.msra.mxu0 0.0
        %5455 = vmatprep.subr.mxu0 0.0
        %5456 = vmatpush1.msra.mxu0 0.0
        %5457 = vmatprep.subr.mxu0 0.0
        %5458 = vmatpush1.msra.mxu0 0.0
        %5459 = vmatprep.subr.mxu0 0.0
        %5460 = vmatpush1.msra.mxu0 0.0
        %5461 = vmatprep.subr.mxu0 0.0
        %5462 = vmatpush1.msra.mxu0 0.0
        %5463 = vmatprep.subr.mxu0 0.0
        %5464 = vmatpush1.msra.mxu0 0.0
        %5465 = vmatprep.subr.mxu0 0.0
        %5466 = vmatpush1.msra.mxu0 0.0
        %5467 = vmatprep.subr.mxu0 0.0
        %5468 = vmatpush1.msra.mxu0 0.0
        %5469 = vmatprep.subr.mxu0 0.0
        %5470 = vmatpush1.msra.mxu0 0.0
        %5471 = vmatprep.subr.mxu0 0.0
        %5472 = vmatpush1.msra.mxu0 0.0
        %5473 = vmatprep.subr.mxu0 0.0
        %5474 = vmatpush1.msra.mxu0 0.0
        %5475 = vmatprep.subr.mxu0 0.0
        %5476 = vmatpush1.msra.mxu0 0.0
        %5477 = vmatprep.subr.mxu0 0.0
        %5478 = vmatpush1.msra.mxu0 0.0
        %5479 = vmatprep.subr.mxu0 0.0
        %5480 = vmatpush1.msra.mxu0 0.0
        %5481 = vmatprep.subr.mxu0 0.0
        %5482 = vmatpush1.msra.mxu0 0.0
        %5483 = vmatprep.subr.mxu0 0.0
        %5484 = vmatpush1.msra.mxu0 0.0
        %5485 = vmatprep.subr.mxu0 0.0
        %5486 = vmatpush1.msra.mxu0 0.0
        %5487 = vmatprep.subr.mxu0 0.0
        %5488 = vmatpush1.msra.mxu0 0.0
        %5489 = vmatprep.subr.mxu0 0.0
        %5490 = vmatpush1.msra.mxu0 0.0
        %5491 = vmatprep.subr.mxu0 0.0
        %5492 = vmatpush1.msra.mxu0 0.0
        %5493 = vmatprep.subr.mxu0 0.0
        %5494 = vmatpush1.msra.mxu0 0.0
        %5495 = vmatprep.subr.mxu0 0.0
        %5496 = vmatpush1.msra.mxu0 0.0
        %5497 = vmatprep.subr.mxu0 0.0
        %5498 = vmatpush1.msra.mxu0 0.0
        %5499 = vmatprep.subr.mxu0 0.0
        %5500 = vmatpush1.msra.mxu0 0.0
        %5501 = vmatprep.subr.mxu0 0.0
        %5502 = vmatpush1.msra.mxu0 0.0
        %5503 = vmatprep.subr.mxu0 0.0
        %5504 = vmatpush1.msra.mxu0 0.0
        %5505 = vmatprep.subr.mxu0 0.0
        %5506 = vmatpush1.msra.mxu0 0.0
        %5507 = vmatprep.subr.mxu0 0.0
        %5508 = vmatpush1.msra.mxu0 0.0
        %5509 = vmatprep.mubr.f32.mxu0 0.0
        %5510 = vmatmul.mubr.f32.gmra.mrb[0].mxu0 %v5441
        %v5511 = vpop.f32.mrb[0].mxu0
        %v5512 = vadd.f32 0.0, %v5511
        %v5513 = vpop.f32.mrb[0].mxu0
        %5514 = vmatprep.mubr.f32.mxu0 0.0
        %5515 = vmatmul.mubr.f32.gmra.mrb[0].mxu0 %v5443
        %v5516 = vpop.f32.mrb[0].mxu0
        %v5517 = vadd.f32 0.0, %v5516
        %v5518 = vpop.f32.mrb[0].mxu0
        %5519 = vdwg.mxu0
        %5520 = vmatprep.subr.mxu0 0.0
        %5521 = vmatpush1.msra.mxu0 %v5341
        %5522 = vmatprep.subr.mxu0 0.0
        %5523 = vmatpush1.msra.mxu0 0.0
        %5524 = vmatprep.subr.mxu0 0.0
        %5525 = vmatpush1.msra.mxu0 0.0
        %5526 = vmatprep.subr.mxu0 0.0
        %5527 = vmatpush1.msra.mxu0 0.0
        %5528 = vmatprep.subr.mxu0 0.0
        %5529 = vmatpush1.msra.mxu0 0.0
        %5530 = vmatprep.subr.mxu0 0.0
        %5531 = vmatpush1.msra.mxu0 0.0
        %5532 = vmatprep.subr.mxu0 0.0
        %5533 = vmatpush1.msra.mxu0 0.0
        %5534 = vmatprep.subr.mxu0 0.0
        %5535 = vmatpush1.msra.mxu0 0.0
        %5536 = vmatprep.subr.mxu0 0.0
        %5537 = vmatpush1.msra.mxu0 0.0
        %5538 = vmatprep.subr.mxu0 0.0
        %5539 = vmatpush1.msra.mxu0 0.0
        %5540 = vmatprep.subr.mxu0 0.0
        %5541 = vmatpush1.msra.mxu0 0.0
        %5542 = vmatprep.subr.mxu0 0.0
        %5543 = vmatpush1.msra.mxu0 0.0
        %5544 = vmatprep.subr.mxu0 0.0
        %5545 = vmatpush1.msra.mxu0 0.0
        %5546 = vmatprep.subr.mxu0 0.0
        %5547 = vmatpush1.msra.mxu0 0.0
        %5548 = vmatprep.subr.mxu0 0.0
        %5549 = vmatpush1.msra.mxu0 0.0
        %5550 = vmatprep.subr.mxu0 0.0
        %5551 = vmatpush1.msra.mxu0 0.0
        %5552 = vmatprep.subr.mxu0 0.0
        %5553 = vmatpush1.msra.mxu0 0.0
        %5554 = vmatprep.subr.mxu0 0.0
        %5555 = vmatpush1.msra.mxu0 0.0
        %5556 = vmatprep.subr.mxu0 0.0
        %5557 = vmatpush1.msra.mxu0 0.0
        %5558 = vmatprep.subr.mxu0 0.0
        %5559 = vmatpush1.msra.mxu0 0.0
        %5560 = vmatprep.subr.mxu0 0.0
        %5561 = vmatpush1.msra.mxu0 0.0
        %5562 = vmatprep.subr.mxu0 0.0
        %5563 = vmatpush1.msra.mxu0 0.0
        %5564 = vmatprep.subr.mxu0 0.0
        %5565 = vmatpush1.msra.mxu0 0.0
        %5566 = vmatprep.subr.mxu0 0.0
        %5567 = vmatpush1.msra.mxu0 0.0
        %5568 = vmatprep.subr.mxu0 0.0
        %5569 = vmatpush1.msra.mxu0 0.0
        %5570 = vmatprep.subr.mxu0 0.0
        %5571 = vmatpush1.msra.mxu0 0.0
        %5572 = vmatprep.subr.mxu0 0.0
        %5573 = vmatpush1.msra.mxu0 0.0
        %5574 = vmatprep.subr.mxu0 0.0
        %5575 = vmatpush1.msra.mxu0 0.0
        %5576 = vmatprep.subr.mxu0 0.0
        %5577 = vmatpush1.msra.mxu0 0.0
        %5578 = vmatprep.subr.mxu0 0.0
        %5579 = vmatpush1.msra.mxu0 0.0
        %5580 = vmatprep.subr.mxu0 0.0
        %5581 = vmatpush1.msra.mxu0 0.0
        %5582 = vmatprep.subr.mxu0 0.0
        %5583 = vmatpush1.msra.mxu0 0.0
        %5584 = vmatprep.mubr.f32.mxu0 0.0
        %5585 = vmatmul.mubr.f32.gmra.mrb[0].mxu0 %v5441
        %v5586 = vpop.f32.mrb[0].mxu0
        %v5587 = vadd.f32 0.0, %v5586
        %v5588 = vpop.f32.mrb[0].mxu0
        %5589 = vmatprep.mubr.f32.mxu0 0.0
        %5590 = vmatmul.mubr.f32.gmra.mrb[0].mxu0 %v5443
        %v5591 = vpop.f32.mrb[0].mxu0
        %v5592 = vadd.f32 0.0, %v5591
        %v5593 = vpop.f32.mrb[0].mxu0
        %5594 = vdwg.mxu0
        %v5595 = vmax.f32 %v5512, %v5587
        %v5596 = vmax.f32 %v5517, %v5592
        %5599 = vrot.lane.b32.xlu0 %v5595, 2
        %v5600 = vpop.permute.xlu0 %5599
        %5601 = vrot.lane.b32.xlu0 %v5596, 2
        %v5602 = vpop.permute.xlu0 %5601
        %vm5605 = vcmask 31760
        %5606 = vst.msk [vmem:[#allocation6] sm:$0xff] %vm5605, %v5600
        %5607 = vst.msk [vmem:[#allocation6 + $0x8] sm:$0xff] %vm5605, %v5602
        %v5608 = vld [vmem:[#allocation6] sm:$0x1]
        %v5609 = vld [vmem:[%s13] sm:$0xf]
        %v5610 = vld [vmem:[%s13 + $0x8] sm:$0xf]
        %v5611 = vld [vmem:[#allocation6 + $0x1] sm:$0x1]
        %v5612 = vld [vmem:[%s13] sm:$0xf0]
        %v5613 = vld [vmem:[%s13 + $0x8] sm:$0xf0]
        %v5616 = vrot.slane %v5612, 4
        %v5617 = vrot.slane %v5613, 4
        %v5619 = vsel %vm3777, %v5611, 0
        %v5621 = vsel %vm926, %v5616, 0
        %v5623 = vsel %vm926, %v5617, 0
        %5625 = vmatprep.subr.mxu0 %v5623
        %5626 = vmatpush1.msra.mxu0 %v5621
        %5627 = vmatprep.subr.mxu0 0.0
        %5628 = vmatpush1.msra.mxu0 0.0
        %5629 = vmatprep.subr.mxu0 0.0
        %5630 = vmatpush1.msra.mxu0 0.0
        %5631 = vmatprep.subr.mxu0 0.0
        %5632 = vmatpush1.msra.mxu0 0.0
        %5633 = vmatprep.subr.mxu0 0.0
        %5634 = vmatpush1.msra.mxu0 0.0
        %5635 = vmatprep.subr.mxu0 0.0
        %5636 = vmatpush1.msra.mxu0 0.0
        %5637 = vmatprep.subr.mxu0 0.0
        %5638 = vmatpush1.msra.mxu0 0.0
        %5639 = vmatprep.subr.mxu0 0.0
        %5640 = vmatpush1.msra.mxu0 0.0
        %5641 = vmatprep.subr.mxu0 0.0
        %5642 = vmatpush1.msra.mxu0 0.0
        %5643 = vmatprep.subr.mxu0 0.0
        %5644 = vmatpush1.msra.mxu0 0.0
        %5645 = vmatprep.subr.mxu0 0.0
        %5646 = vmatpush1.msra.mxu0 0.0
        %5647 = vmatprep.subr.mxu0 0.0
        %5648 = vmatpush1.msra.mxu0 0.0
        %5649 = vmatprep.subr.mxu0 0.0
        %5650 = vmatpush1.msra.mxu0 0.0
        %5651 = vmatprep.subr.mxu0 0.0
        %5652 = vmatpush1.msra.mxu0 0.0
        %5653 = vmatprep.subr.mxu0 0.0
        %5654 = vmatpush1.msra.mxu0 0.0
        %5655 = vmatprep.subr.mxu0 0.0
        %5656 = vmatpush1.msra.mxu0 0.0
        %5657 = vmatprep.subr.mxu0 0.0
        %5658 = vmatpush1.msra.mxu0 0.0
        %5659 = vmatprep.subr.mxu0 0.0
        %5660 = vmatpush1.msra.mxu0 0.0
        %5661 = vmatprep.subr.mxu0 0.0
        %5662 = vmatpush1.msra.mxu0 0.0
        %5663 = vmatprep.subr.mxu0 0.0
        %5664 = vmatpush1.msra.mxu0 0.0
        %5665 = vmatprep.subr.mxu0 0.0
        %5666 = vmatpush1.msra.mxu0 0.0
        %5667 = vmatprep.subr.mxu0 0.0
        %5668 = vmatpush1.msra.mxu0 0.0
        %5669 = vmatprep.subr.mxu0 0.0
        %5670 = vmatpush1.msra.mxu0 0.0
        %5671 = vmatprep.subr.mxu0 0.0
        %5672 = vmatpush1.msra.mxu0 0.0
        %5673 = vmatprep.subr.mxu0 0.0
        %5674 = vmatpush1.msra.mxu0 0.0
        %5675 = vmatprep.subr.mxu0 0.0
        %5676 = vmatpush1.msra.mxu0 0.0
        %5677 = vmatprep.subr.mxu0 0.0
        %5678 = vmatpush1.msra.mxu0 0.0
        %5679 = vmatprep.subr.mxu0 0.0
        %5680 = vmatpush1.msra.mxu0 0.0
        %5681 = vmatprep.subr.mxu0 0.0
        %5682 = vmatpush1.msra.mxu0 0.0
        %5683 = vmatprep.subr.mxu0 0.0
        %5684 = vmatpush1.msra.mxu0 0.0
        %5685 = vmatprep.subr.mxu0 0.0
        %5686 = vmatpush1.msra.mxu0 0.0
        %5687 = vmatprep.subr.mxu0 0.0
        %5688 = vmatpush1.msra.mxu0 0.0
        %5689 = vmatprep.mubr.f32.mxu0 0.0
        %5690 = vmatmul.mubr.f32.gmra.mrb[0].mxu0 %v5619
        %v5691 = vpop.f32.mrb[0].mxu0
        %v5692 = vadd.f32 0.0, %v5691
        %v5693 = vpop.f32.mrb[0].mxu0
        %v5694 = vadd.f32 0.0, %v5693
        %5695 = vdwg.mxu0
        %v5697 = vsel %vm3777, %v5608, 0
        %v5700 = vsel %vm926, %v5609, 0
        %v5703 = vsel %vm926, %v5610, 0
        %5705 = vmatprep.subr.mxu0 %v5703
        %5706 = vmatpush1.msra.mxu0 %v5700
        %5707 = vmatprep.subr.mxu0 0.0
        %5708 = vmatpush1.msra.mxu0 0.0
        %5709 = vmatprep.subr.mxu0 0.0
        %5710 = vmatpush1.msra.mxu0 0.0
        %5711 = vmatprep.subr.mxu0 0.0
        %5712 = vmatpush1.msra.mxu0 0.0
        %5713 = vmatprep.subr.mxu0 0.0
        %5714 = vmatpush1.msra.mxu0 0.0
        %5715 = vmatprep.subr.mxu0 0.0
        %5716 = vmatpush1.msra.mxu0 0.0
        %5717 = vmatprep.subr.mxu0 0.0
        %5718 = vmatpush1.msra.mxu0 0.0
        %5719 = vmatprep.subr.mxu0 0.0
        %5720 = vmatpush1.msra.mxu0 0.0
        %5721 = vmatprep.subr.mxu0 0.0
        %5722 = vmatpush1.msra.mxu0 0.0
        %5723 = vmatprep.subr.mxu0 0.0
        %5724 = vmatpush1.msra.mxu0 0.0
        %5725 = vmatprep.subr.mxu0 0.0
        %5726 = vmatpush1.msra.mxu0 0.0
        %5727 = vmatprep.subr.mxu0 0.0
        %5728 = vmatpush1.msra.mxu0 0.0
        %5729 = vmatprep.subr.mxu0 0.0
        %5730 = vmatpush1.msra.mxu0 0.0
        %5731 = vmatprep.subr.mxu0 0.0
        %5732 = vmatpush1.msra.mxu0 0.0
        %5733 = vmatprep.subr.mxu0 0.0
        %5734 = vmatpush1.msra.mxu0 0.0
        %5735 = vmatprep.subr.mxu0 0.0
        %5736 = vmatpush1.msra.mxu0 0.0
        %5737 = vmatprep.subr.mxu0 0.0
        %5738 = vmatpush1.msra.mxu0 0.0
        %5739 = vmatprep.subr.mxu0 0.0
        %5740 = vmatpush1.msra.mxu0 0.0
        %5741 = vmatprep.subr.mxu0 0.0
        %5742 = vmatpush1.msra.mxu0 0.0
        %5743 = vmatprep.subr.mxu0 0.0
        %5744 = vmatpush1.msra.mxu0 0.0
        %5745 = vmatprep.subr.mxu0 0.0
        %5746 = vmatpush1.msra.mxu0 0.0
        %5747 = vmatprep.subr.mxu0 0.0
        %5748 = vmatpush1.msra.mxu0 0.0
        %5749 = vmatprep.subr.mxu0 0.0
        %5750 = vmatpush1.msra.mxu0 0.0
        %5751 = vmatprep.subr.mxu0 0.0
        %5752 = vmatpush1.msra.mxu0 0.0
        %5753 = vmatprep.subr.mxu0 0.0
        %5754 = vmatpush1.msra.mxu0 0.0
        %5755 = vmatprep.subr.mxu0 0.0
        %5756 = vmatpush1.msra.mxu0 0.0
        %5757 = vmatprep.subr.mxu0 0.0
        %5758 = vmatpush1.msra.mxu0 0.0
        %5759 = vmatprep.subr.mxu0 0.0
        %5760 = vmatpush1.msra.mxu0 0.0
        %5761 = vmatprep.subr.mxu0 0.0
        %5762 = vmatpush1.msra.mxu0 0.0
        %5763 = vmatprep.subr.mxu0 0.0
        %5764 = vmatpush1.msra.mxu0 0.0
        %5765 = vmatprep.subr.mxu0 0.0
        %5766 = vmatpush1.msra.mxu0 0.0
        %5767 = vmatprep.subr.mxu0 0.0
        %5768 = vmatpush1.msra.mxu0 0.0
        %5769 = vmatprep.mubr.f32.mxu0 0.0
        %5770 = vmatmul.mubr.f32.gmra.mrb[0].mxu0 %v5697
        %v5771 = vpop.f32.mrb[0].mxu0
        %v5772 = vadd.f32 %v5692, %v5771
        %v5773 = vpop.f32.mrb[0].mxu0
        %v5774 = vadd.f32 %v5694, %v5773
        %5775 = vdwg.mxu0
        %v5776 = vld [vmem:[#allocation6 + $0x2] sm:$0x1]
        %v5777 = vld [vmem:[%s13 + $0x10] sm:$0xf]
        %v5778 = vld [vmem:[%s13 + $0x18] sm:$0xf]
        %v5780 = vsel %vm3777, %v5776, 0
        %v5783 = vsel %vm926, %v5777, 0
        %v5786 = vsel %vm926, %v5778, 0
        %5788 = vmatprep.subr.mxu0 %v5786
        %5789 = vmatpush1.msra.mxu0 %v5783
        %5790 = vmatprep.subr.mxu0 0.0
        %5791 = vmatpush1.msra.mxu0 0.0
        %5792 = vmatprep.subr.mxu0 0.0
        %5793 = vmatpush1.msra.mxu0 0.0
        %5794 = vmatprep.subr.mxu0 0.0
        %5795 = vmatpush1.msra.mxu0 0.0
        %5796 = vmatprep.subr.mxu0 0.0
        %5797 = vmatpush1.msra.mxu0 0.0
        %5798 = vmatprep.subr.mxu0 0.0
        %5799 = vmatpush1.msra.mxu0 0.0
        %5800 = vmatprep.subr.mxu0 0.0
        %5801 = vmatpush1.msra.mxu0 0.0
        %5802 = vmatprep.subr.mxu0 0.0
        %5803 = vmatpush1.msra.mxu0 0.0
        %5804 = vmatprep.subr.mxu0 0.0
        %5805 = vmatpush1.msra.mxu0 0.0
        %5806 = vmatprep.subr.mxu0 0.0
        %5807 = vmatpush1.msra.mxu0 0.0
        %5808 = vmatprep.subr.mxu0 0.0
        %5809 = vmatpush1.msra.mxu0 0.0
        %5810 = vmatprep.subr.mxu0 0.0
        %5811 = vmatpush1.msra.mxu0 0.0
        %5812 = vmatprep.subr.mxu0 0.0
        %5813 = vmatpush1.msra.mxu0 0.0
        %5814 = vmatprep.subr.mxu0 0.0
        %5815 = vmatpush1.msra.mxu0 0.0
        %5816 = vmatprep.subr.mxu0 0.0
        %5817 = vmatpush1.msra.mxu0 0.0
        %5818 = vmatprep.subr.mxu0 0.0
        %5819 = vmatpush1.msra.mxu0 0.0
        %5820 = vmatprep.subr.mxu0 0.0
        %5821 = vmatpush1.msra.mxu0 0.0
        %5822 = vmatprep.subr.mxu0 0.0
        %5823 = vmatpush1.msra.mxu0 0.0
        %5824 = vmatprep.subr.mxu0 0.0
        %5825 = vmatpush1.msra.mxu0 0.0
        %5826 = vmatprep.subr.mxu0 0.0
        %5827 = vmatpush1.msra.mxu0 0.0
        %5828 = vmatprep.subr.mxu0 0.0
        %5829 = vmatpush1.msra.mxu0 0.0
        %5830 = vmatprep.subr.mxu0 0.0
        %5831 = vmatpush1.msra.mxu0 0.0
        %5832 = vmatprep.subr.mxu0 0.0
        %5833 = vmatpush1.msra.mxu0 0.0
        %5834 = vmatprep.subr.mxu0 0.0
        %5835 = vmatpush1.msra.mxu0 0.0
        %5836 = vmatprep.subr.mxu0 0.0
        %5837 = vmatpush1.msra.mxu0 0.0
        %5838 = vmatprep.subr.mxu0 0.0
        %5839 = vmatpush1.msra.mxu0 0.0
        %5840 = vmatprep.subr.mxu0 0.0
        %5841 = vmatpush1.msra.mxu0 0.0
        %5842 = vmatprep.subr.mxu0 0.0
        %5843 = vmatpush1.msra.mxu0 0.0
        %5844 = vmatprep.subr.mxu0 0.0
        %5845 = vmatpush1.msra.mxu0 0.0
        %5846 = vmatprep.subr.mxu0 0.0
        %5847 = vmatpush1.msra.mxu0 0.0
        %5848 = vmatprep.subr.mxu0 0.0
        %5849 = vmatpush1.msra.mxu0 0.0
        %5850 = vmatprep.subr.mxu0 0.0
        %5851 = vmatpush1.msra.mxu0 0.0
        %5852 = vmatprep.mubr.f32.mxu0 0.0
        %5853 = vmatmul.mubr.f32.gmra.mrb[0].mxu0 %v5780
        %v5854 = vpop.f32.mrb[0].mxu0
        %v5855 = vadd.f32 0.0, %v5854
        %v5856 = vpop.f32.mrb[0].mxu0
        %v5857 = vadd.f32 0.0, %v5856
        %5858 = vdwg.mxu0
        %v5859 = vadd.f32 %v5772, %v5855
        %v5860 = vadd.f32 %v5774, %v5857
        %v5861 = vld [vmem:[#allocation6 + $0x3] sm:$0x1]
        %v5862 = vld [vmem:[%s13 + $0x10] sm:$0xf0]
        %v5863 = vld [vmem:[%s13 + $0x18] sm:$0xf0]
        %v5866 = vrot.slane %v5862, 4
        %v5867 = vrot.slane %v5863, 4
        %v5869 = vsel %vm3777, %v5861, 0
        %v5871 = vsel %vm926, %v5866, 0
        %v5873 = vsel %vm926, %v5867, 0
        %5875 = vmatprep.subr.mxu0 %v5873
        %5876 = vmatpush1.msra.mxu0 %v5871
        %5877 = vmatprep.subr.mxu0 0.0
        %5878 = vmatpush1.msra.mxu0 0.0
        %5879 = vmatprep.subr.mxu0 0.0
        %5880 = vmatpush1.msra.mxu0 0.0
        %5881 = vmatprep.subr.mxu0 0.0
        %5882 = vmatpush1.msra.mxu0 0.0
        %5883 = vmatprep.subr.mxu0 0.0
        %5884 = vmatpush1.msra.mxu0 0.0
        %5885 = vmatprep.subr.mxu0 0.0
        %5886 = vmatpush1.msra.mxu0 0.0
        %5887 = vmatprep.subr.mxu0 0.0
        %5888 = vmatpush1.msra.mxu0 0.0
        %5889 = vmatprep.subr.mxu0 0.0
        %5890 = vmatpush1.msra.mxu0 0.0
        %5891 = vmatprep.subr.mxu0 0.0
        %5892 = vmatpush1.msra.mxu0 0.0
        %5893 = vmatprep.subr.mxu0 0.0
        %5894 = vmatpush1.msra.mxu0 0.0
        %5895 = vmatprep.subr.mxu0 0.0
        %5896 = vmatpush1.msra.mxu0 0.0
        %5897 = vmatprep.subr.mxu0 0.0
        %5898 = vmatpush1.msra.mxu0 0.0
        %5899 = vmatprep.subr.mxu0 0.0
        %5900 = vmatpush1.msra.mxu0 0.0
        %5901 = vmatprep.subr.mxu0 0.0
        %5902 = vmatpush1.msra.mxu0 0.0
        %5903 = vmatprep.subr.mxu0 0.0
        %5904 = vmatpush1.msra.mxu0 0.0
        %5905 = vmatprep.subr.mxu0 0.0
        %5906 = vmatpush1.msra.mxu0 0.0
        %5907 = vmatprep.subr.mxu0 0.0
        %5908 = vmatpush1.msra.mxu0 0.0
        %5909 = vmatprep.subr.mxu0 0.0
        %5910 = vmatpush1.msra.mxu0 0.0
        %5911 = vmatprep.subr.mxu0 0.0
        %5912 = vmatpush1.msra.mxu0 0.0
        %5913 = vmatprep.subr.mxu0 0.0
        %5914 = vmatpush1.msra.mxu0 0.0
        %5915 = vmatprep.subr.mxu0 0.0
        %5916 = vmatpush1.msra.mxu0 0.0
        %5917 = vmatprep.subr.mxu0 0.0
        %5918 = vmatpush1.msra.mxu0 0.0
        %5919 = vmatprep.subr.mxu0 0.0
        %5920 = vmatpush1.msra.mxu0 0.0
        %5921 = vmatprep.subr.mxu0 0.0
        %5922 = vmatpush1.msra.mxu0 0.0
        %5923 = vmatprep.subr.mxu0 0.0
        %5924 = vmatpush1.msra.mxu0 0.0
        %5925 = vmatprep.subr.mxu0 0.0
        %5926 = vmatpush1.msra.mxu0 0.0
        %5927 = vmatprep.subr.mxu0 0.0
        %5928 = vmatpush1.msra.mxu0 0.0
        %5929 = vmatprep.subr.mxu0 0.0
        %5930 = vmatpush1.msra.mxu0 0.0
        %5931 = vmatprep.subr.mxu0 0.0
        %5932 = vmatpush1.msra.mxu0 0.0
        %5933 = vmatprep.subr.mxu0 0.0
        %5934 = vmatpush1.msra.mxu0 0.0
        %5935 = vmatprep.subr.mxu0 0.0
        %5936 = vmatpush1.msra.mxu0 0.0
        %5937 = vmatprep.subr.mxu0 0.0
        %5938 = vmatpush1.msra.mxu0 0.0
        %5939 = vmatprep.mubr.f32.mxu0 0.0
        %5940 = vmatmul.mubr.f32.gmra.mrb[0].mxu0 %v5869
        %v5941 = vpop.f32.mrb[0].mxu0
        %v5942 = vadd.f32 0.0, %v5941
        %v5943 = vpop.f32.mrb[0].mxu0
        %v5944 = vadd.f32 0.0, %v5943
        %5945 = vdwg.mxu0
        %v5946 = vadd.f32 %v5859, %v5942
        %v5947 = vadd.f32 %v5860, %v5944
        %v5948 = vld [vmem:[#allocation6 + $0x4] sm:$0x1]
        %v5949 = vld [vmem:[%s13 + $0x20] sm:$0xf]
        %v5950 = vld [vmem:[%s13 + $0x28] sm:$0xf]
        %v5952 = vsel %vm3777, %v5948, 0
        %v5955 = vsel %vm926, %v5949, 0
        %v5958 = vsel %vm926, %v5950, 0
        %5960 = vmatprep.subr.mxu0 %v5958
        %5961 = vmatpush1.msra.mxu0 %v5955
        %5962 = vmatprep.subr.mxu0 0.0
        %5963 = vmatpush1.msra.mxu0 0.0
        %5964 = vmatprep.subr.mxu0 0.0
        %5965 = vmatpush1.msra.mxu0 0.0
        %5966 = vmatprep.subr.mxu0 0.0
        %5967 = vmatpush1.msra.mxu0 0.0
        %5968 = vmatprep.subr.mxu0 0.0
        %5969 = vmatpush1.msra.mxu0 0.0
        %5970 = vmatprep.subr.mxu0 0.0
        %5971 = vmatpush1.msra.mxu0 0.0
        %5972 = vmatprep.subr.mxu0 0.0
        %5973 = vmatpush1.msra.mxu0 0.0
        %5974 = vmatprep.subr.mxu0 0.0
        %5975 = vmatpush1.msra.mxu0 0.0
        %5976 = vmatprep.subr.mxu0 0.0
        %5977 = vmatpush1.msra.mxu0 0.0
        %5978 = vmatprep.subr.mxu0 0.0
        %5979 = vmatpush1.msra.mxu0 0.0
        %5980 = vmatprep.subr.mxu0 0.0
        %5981 = vmatpush1.msra.mxu0 0.0
        %5982 = vmatprep.subr.mxu0 0.0
        %5983 = vmatpush1.msra.mxu0 0.0
        %5984 = vmatprep.subr.mxu0 0.0
        %5985 = vmatpush1.msra.mxu0 0.0
        %5986 = vmatprep.subr.mxu0 0.0
        %5987 = vmatpush1.msra.mxu0 0.0
        %5988 = vmatprep.subr.mxu0 0.0
        %5989 = vmatpush1.msra.mxu0 0.0
        %5990 = vmatprep.subr.mxu0 0.0
        %5991 = vmatpush1.msra.mxu0 0.0
        %5992 = vmatprep.subr.mxu0 0.0
        %5993 = vmatpush1.msra.mxu0 0.0
        %5994 = vmatprep.subr.mxu0 0.0
        %5995 = vmatpush1.msra.mxu0 0.0
        %5996 = vmatprep.subr.mxu0 0.0
        %5997 = vmatpush1.msra.mxu0 0.0
        %5998 = vmatprep.subr.mxu0 0.0
        %5999 = vmatpush1.msra.mxu0 0.0
        %6000 = vmatprep.subr.mxu0 0.0
        %6001 = vmatpush1.msra.mxu0 0.0
        %6002 = vmatprep.subr.mxu0 0.0
        %6003 = vmatpush1.msra.mxu0 0.0
        %6004 = vmatprep.subr.mxu0 0.0
        %6005 = vmatpush1.msra.mxu0 0.0
        %6006 = vmatprep.subr.mxu0 0.0
        %6007 = vmatpush1.msra.mxu0 0.0
        %6008 = vmatprep.subr.mxu0 0.0
        %6009 = vmatpush1.msra.mxu0 0.0
        %6010 = vmatprep.subr.mxu0 0.0
        %6011 = vmatpush1.msra.mxu0 0.0
        %6012 = vmatprep.subr.mxu0 0.0
        %6013 = vmatpush1.msra.mxu0 0.0
        %6014 = vmatprep.subr.mxu0 0.0
        %6015 = vmatpush1.msra.mxu0 0.0
        %6016 = vmatprep.subr.mxu0 0.0
        %6017 = vmatpush1.msra.mxu0 0.0
        %6018 = vmatprep.subr.mxu0 0.0
        %6019 = vmatpush1.msra.mxu0 0.0
        %6020 = vmatprep.subr.mxu0 0.0
        %6021 = vmatpush1.msra.mxu0 0.0
        %6022 = vmatprep.subr.mxu0 0.0
        %6023 = vmatpush1.msra.mxu0 0.0
        %6024 = vmatprep.mubr.f32.mxu0 0.0
        %6025 = vmatmul.mubr.f32.gmra.mrb[0].mxu0 %v5952
        %v6026 = vpop.f32.mrb[0].mxu0
        %v6027 = vadd.f32 0.0, %v6026
        %v6028 = vpop.f32.mrb[0].mxu0
        %v6029 = vadd.f32 0.0, %v6028
        %6030 = vdwg.mxu0
        %v6031 = vadd.f32 %v5946, %v6027
        %v6032 = vadd.f32 %v5947, %v6029
        %v6033 = vld [vmem:[#allocation6 + $0x5] sm:$0x1]
        %v6034 = vld [vmem:[%s13 + $0x20] sm:$0xf0]
        %v6035 = vld [vmem:[%s13 + $0x28] sm:$0xf0]
        %v6038 = vrot.slane %v6034, 4
        %v6039 = vrot.slane %v6035, 4
        %v6041 = vsel %vm3777, %v6033, 0
        %v6043 = vsel %vm926, %v6038, 0
        %v6045 = vsel %vm926, %v6039, 0
        %6047 = vmatprep.subr.mxu0 %v6045
        %6048 = vmatpush1.msra.mxu0 %v6043
        %6049 = vmatprep.subr.mxu0 0.0
        %6050 = vmatpush1.msra.mxu0 0.0
        %6051 = vmatprep.subr.mxu0 0.0
        %6052 = vmatpush1.msra.mxu0 0.0
        %6053 = vmatprep.subr.mxu0 0.0
        %6054 = vmatpush1.msra.mxu0 0.0
        %6055 = vmatprep.subr.mxu0 0.0
        %6056 = vmatpush1.msra.mxu0 0.0
        %6057 = vmatprep.subr.mxu0 0.0
        %6058 = vmatpush1.msra.mxu0 0.0
        %6059 = vmatprep.subr.mxu0 0.0
        %6060 = vmatpush1.msra.mxu0 0.0
        %6061 = vmatprep.subr.mxu0 0.0
        %6062 = vmatpush1.msra.mxu0 0.0
        %6063 = vmatprep.subr.mxu0 0.0
        %6064 = vmatpush1.msra.mxu0 0.0
        %6065 = vmatprep.subr.mxu0 0.0
        %6066 = vmatpush1.msra.mxu0 0.0
        %6067 = vmatprep.subr.mxu0 0.0
        %6068 = vmatpush1.msra.mxu0 0.0
        %6069 = vmatprep.subr.mxu0 0.0
        %6070 = vmatpush1.msra.mxu0 0.0
        %6071 = vmatprep.subr.mxu0 0.0
        %6072 = vmatpush1.msra.mxu0 0.0
        %6073 = vmatprep.subr.mxu0 0.0
        %6074 = vmatpush1.msra.mxu0 0.0
        %6075 = vmatprep.subr.mxu0 0.0
        %6076 = vmatpush1.msra.mxu0 0.0
        %6077 = vmatprep.subr.mxu0 0.0
        %6078 = vmatpush1.msra.mxu0 0.0
        %6079 = vmatprep.subr.mxu0 0.0
        %6080 = vmatpush1.msra.mxu0 0.0
        %6081 = vmatprep.subr.mxu0 0.0
        %6082 = vmatpush1.msra.mxu0 0.0
        %6083 = vmatprep.subr.mxu0 0.0
        %6084 = vmatpush1.msra.mxu0 0.0
        %6085 = vmatprep.subr.mxu0 0.0
        %6086 = vmatpush1.msra.mxu0 0.0
        %6087 = vmatprep.subr.mxu0 0.0
        %6088 = vmatpush1.msra.mxu0 0.0
        %6089 = vmatprep.subr.mxu0 0.0
        %6090 = vmatpush1.msra.mxu0 0.0
        %6091 = vmatprep.subr.mxu0 0.0
        %6092 = vmatpush1.msra.mxu0 0.0
        %6093 = vmatprep.subr.mxu0 0.0
        %6094 = vmatpush1.msra.mxu0 0.0
        %6095 = vmatprep.subr.mxu0 0.0
        %6096 = vmatpush1.msra.mxu0 0.0
        %6097 = vmatprep.subr.mxu0 0.0
        %6098 = vmatpush1.msra.mxu0 0.0
        %6099 = vmatprep.subr.mxu0 0.0
        %6100 = vmatpush1.msra.mxu0 0.0
        %6101 = vmatprep.subr.mxu0 0.0
        %6102 = vmatpush1.msra.mxu0 0.0
        %6103 = vmatprep.subr.mxu0 0.0
        %6104 = vmatpush1.msra.mxu0 0.0
        %6105 = vmatprep.subr.mxu0 0.0
        %6106 = vmatpush1.msra.mxu0 0.0
        %6107 = vmatprep.subr.mxu0 0.0
        %6108 = vmatpush1.msra.mxu0 0.0
        %6109 = vmatprep.subr.mxu0 0.0
        %6110 = vmatpush1.msra.mxu0 0.0
        %6111 = vmatprep.mubr.f32.mxu0 0.0
        %6112 = vmatmul.mubr.f32.gmra.mrb[0].mxu0 %v6041
        %v6113 = vpop.f32.mrb[0].mxu0
        %v6114 = vadd.f32 0.0, %v6113
        %v6115 = vpop.f32.mrb[0].mxu0
        %v6116 = vadd.f32 0.0, %v6115
        %6117 = vdwg.mxu0
        %v6118 = vadd.f32 %v6031, %v6114
        %v6119 = vadd.f32 %v6032, %v6116
        %v6120 = vld [vmem:[#allocation6 + $0x6] sm:$0x1]
        %v6121 = vld [vmem:[%s13 + $0x30] sm:$0xf]
        %v6122 = vld [vmem:[%s13 + $0x38] sm:$0xf]
        %v6124 = vsel %vm3777, %v6120, 0
        %v6127 = vsel %vm926, %v6121, 0
        %v6130 = vsel %vm926, %v6122, 0
        %6132 = vmatprep.subr.mxu0 %v6130
        %6133 = vmatpush1.msra.mxu0 %v6127
        %6134 = vmatprep.subr.mxu0 0.0
        %6135 = vmatpush1.msra.mxu0 0.0
        %6136 = vmatprep.subr.mxu0 0.0
        %6137 = vmatpush1.msra.mxu0 0.0
        %6138 = vmatprep.subr.mxu0 0.0
        %6139 = vmatpush1.msra.mxu0 0.0
        %6140 = vmatprep.subr.mxu0 0.0
        %6141 = vmatpush1.msra.mxu0 0.0
        %6142 = vmatprep.subr.mxu0 0.0
        %6143 = vmatpush1.msra.mxu0 0.0
        %6144 = vmatprep.subr.mxu0 0.0
        %6145 = vmatpush1.msra.mxu0 0.0
        %6146 = vmatprep.subr.mxu0 0.0
        %6147 = vmatpush1.msra.mxu0 0.0
        %6148 = vmatprep.subr.mxu0 0.0
        %6149 = vmatpush1.msra.mxu0 0.0
        %6150 = vmatprep.subr.mxu0 0.0
        %6151 = vmatpush1.msra.mxu0 0.0
        %6152 = vmatprep.subr.mxu0 0.0
        %6153 = vmatpush1.msra.mxu0 0.0
        %6154 = vmatprep.subr.mxu0 0.0
        %6155 = vmatpush1.msra.mxu0 0.0
        %6156 = vmatprep.subr.mxu0 0.0
        %6157 = vmatpush1.msra.mxu0 0.0
        %6158 = vmatprep.subr.mxu0 0.0
        %6159 = vmatpush1.msra.mxu0 0.0
        %6160 = vmatprep.subr.mxu0 0.0
        %6161 = vmatpush1.msra.mxu0 0.0
        %6162 = vmatprep.subr.mxu0 0.0
        %6163 = vmatpush1.msra.mxu0 0.0
        %6164 = vmatprep.subr.mxu0 0.0
        %6165 = vmatpush1.msra.mxu0 0.0
        %6166 = vmatprep.subr.mxu0 0.0
        %6167 = vmatpush1.msra.mxu0 0.0
        %6168 = vmatprep.subr.mxu0 0.0
        %6169 = vmatpush1.msra.mxu0 0.0
        %6170 = vmatprep.subr.mxu0 0.0
        %6171 = vmatpush1.msra.mxu0 0.0
        %6172 = vmatprep.subr.mxu0 0.0
        %6173 = vmatpush1.msra.mxu0 0.0
        %6174 = vmatprep.subr.mxu0 0.0
        %6175 = vmatpush1.msra.mxu0 0.0
        %6176 = vmatprep.subr.mxu0 0.0
        %6177 = vmatpush1.msra.mxu0 0.0
        %6178 = vmatprep.subr.mxu0 0.0
        %6179 = vmatpush1.msra.mxu0 0.0
        %6180 = vmatprep.subr.mxu0 0.0
        %6181 = vmatpush1.msra.mxu0 0.0
        %6182 = vmatprep.subr.mxu0 0.0
        %6183 = vmatpush1.msra.mxu0 0.0
        %6184 = vmatprep.subr.mxu0 0.0
        %6185 = vmatpush1.msra.mxu0 0.0
        %6186 = vmatprep.subr.mxu0 0.0
        %6187 = vmatpush1.msra.mxu0 0.0
        %6188 = vmatprep.subr.mxu0 0.0
        %6189 = vmatpush1.msra.mxu0 0.0
        %6190 = vmatprep.subr.mxu0 0.0
        %6191 = vmatpush1.msra.mxu0 0.0
        %6192 = vmatprep.subr.mxu0 0.0
        %6193 = vmatpush1.msra.mxu0 0.0
        %6194 = vmatprep.subr.mxu0 0.0
        %6195 = vmatpush1.msra.mxu0 0.0
        %6196 = vmatprep.mubr.f32.mxu0 0.0
        %6197 = vmatmul.mubr.f32.gmra.mrb[0].mxu0 %v6124
        %v6198 = vpop.f32.mrb[0].mxu0
        %v6199 = vadd.f32 0.0, %v6198
        %v6200 = vpop.f32.mrb[0].mxu0
        %v6201 = vadd.f32 0.0, %v6200
        %6202 = vdwg.mxu0
        %v6203 = vadd.f32 %v6118, %v6199
        %v6204 = vadd.f32 %v6119, %v6201
        %v6205 = vld [vmem:[#allocation6 + $0x7] sm:$0x1]
        %v6206 = vld [vmem:[%s13 + $0x30] sm:$0xf0]
        %v6207 = vld [vmem:[%s13 + $0x38] sm:$0xf0]
        %v6210 = vrot.slane %v6206, 4
        %v6211 = vrot.slane %v6207, 4
        %v6213 = vsel %vm3777, %v6205, 0
        %v6215 = vsel %vm926, %v6210, 0
        %v6217 = vsel %vm926, %v6211, 0
        %6219 = vmatprep.subr.mxu0 %v6217
        %6220 = vmatpush1.msra.mxu0 %v6215
        %6221 = vmatprep.subr.mxu0 0.0
        %6222 = vmatpush1.msra.mxu0 0.0
        %6223 = vmatprep.subr.mxu0 0.0
        %6224 = vmatpush1.msra.mxu0 0.0
        %6225 = vmatprep.subr.mxu0 0.0
        %6226 = vmatpush1.msra.mxu0 0.0
        %6227 = vmatprep.subr.mxu0 0.0
        %6228 = vmatpush1.msra.mxu0 0.0
        %6229 = vmatprep.subr.mxu0 0.0
        %6230 = vmatpush1.msra.mxu0 0.0
        %6231 = vmatprep.subr.mxu0 0.0
        %6232 = vmatpush1.msra.mxu0 0.0
        %6233 = vmatprep.subr.mxu0 0.0
        %6234 = vmatpush1.msra.mxu0 0.0
        %6235 = vmatprep.subr.mxu0 0.0
        %6236 = vmatpush1.msra.mxu0 0.0
        %6237 = vmatprep.subr.mxu0 0.0
        %6238 = vmatpush1.msra.mxu0 0.0
        %6239 = vmatprep.subr.mxu0 0.0
        %6240 = vmatpush1.msra.mxu0 0.0
        %6241 = vmatprep.subr.mxu0 0.0
        %6242 = vmatpush1.msra.mxu0 0.0
        %6243 = vmatprep.subr.mxu0 0.0
        %6244 = vmatpush1.msra.mxu0 0.0
        %6245 = vmatprep.subr.mxu0 0.0
        %6246 = vmatpush1.msra.mxu0 0.0
        %6247 = vmatprep.subr.mxu0 0.0
        %6248 = vmatpush1.msra.mxu0 0.0
        %6249 = vmatprep.subr.mxu0 0.0
        %6250 = vmatpush1.msra.mxu0 0.0
        %6251 = vmatprep.subr.mxu0 0.0
        %6252 = vmatpush1.msra.mxu0 0.0
        %6253 = vmatprep.subr.mxu0 0.0
        %6254 = vmatpush1.msra.mxu0 0.0
        %6255 = vmatprep.subr.mxu0 0.0
        %6256 = vmatpush1.msra.mxu0 0.0
        %6257 = vmatprep.subr.mxu0 0.0
        %6258 = vmatpush1.msra.mxu0 0.0
        %6259 = vmatprep.subr.mxu0 0.0
        %6260 = vmatpush1.msra.mxu0 0.0
        %6261 = vmatprep.subr.mxu0 0.0
        %6262 = vmatpush1.msra.mxu0 0.0
        %6263 = vmatprep.subr.mxu0 0.0
        %6264 = vmatpush1.msra.mxu0 0.0
        %6265 = vmatprep.subr.mxu0 0.0
        %6266 = vmatpush1.msra.mxu0 0.0
        %6267 = vmatprep.subr.mxu0 0.0
        %6268 = vmatpush1.msra.mxu0 0.0
        %6269 = vmatprep.subr.mxu0 0.0
        %6270 = vmatpush1.msra.mxu0 0.0
        %6271 = vmatprep.subr.mxu0 0.0
        %6272 = vmatpush1.msra.mxu0 0.0
        %6273 = vmatprep.subr.mxu0 0.0
        %6274 = vmatpush1.msra.mxu0 0.0
        %6275 = vmatprep.subr.mxu0 0.0
        %6276 = vmatpush1.msra.mxu0 0.0
        %6277 = vmatprep.subr.mxu0 0.0
        %6278 = vmatpush1.msra.mxu0 0.0
        %6279 = vmatprep.subr.mxu0 0.0
        %6280 = vmatpush1.msra.mxu0 0.0
        %6281 = vmatprep.subr.mxu0 0.0
        %6282 = vmatpush1.msra.mxu0 0.0
        %6283 = vmatprep.mubr.f32.mxu0 0.0
        %6284 = vmatmul.mubr.f32.gmra.mrb[0].mxu0 %v6213
        %v6285 = vpop.f32.mrb[0].mxu0
        %v6286 = vadd.f32 0.0, %v6285
        %v6287 = vpop.f32.mrb[0].mxu0
        %v6288 = vadd.f32 0.0, %v6287
        %6289 = vdwg.mxu0
        %v6290 = vadd.f32 %v6203, %v6286
        %v6291 = vadd.f32 %v6204, %v6288
        %v6292 = vld [vmem:[#allocation6 + $0x8] sm:$0x1]
        %v6293 = vld [vmem:[%s13 + $0x40] sm:$0xf]
        %v6294 = vld [vmem:[%s13 + $0x48] sm:$0xf]
        %v6296 = vsel %vm3777, %v6292, 0
        %v6299 = vsel %vm926, %v6293, 0
        %v6302 = vsel %vm926, %v6294, 0
        %6304 = vmatprep.subr.mxu0 %v6302
        %6305 = vmatpush1.msra.mxu0 %v6299
        %6306 = vmatprep.subr.mxu0 0.0
        %6307 = vmatpush1.msra.mxu0 0.0
        %6308 = vmatprep.subr.mxu0 0.0
        %6309 = vmatpush1.msra.mxu0 0.0
        %6310 = vmatprep.subr.mxu0 0.0
        %6311 = vmatpush1.msra.mxu0 0.0
        %6312 = vmatprep.subr.mxu0 0.0
        %6313 = vmatpush1.msra.mxu0 0.0
        %6314 = vmatprep.subr.mxu0 0.0
        %6315 = vmatpush1.msra.mxu0 0.0
        %6316 = vmatprep.subr.mxu0 0.0
        %6317 = vmatpush1.msra.mxu0 0.0
        %6318 = vmatprep.subr.mxu0 0.0
        %6319 = vmatpush1.msra.mxu0 0.0
        %6320 = vmatprep.subr.mxu0 0.0
        %6321 = vmatpush1.msra.mxu0 0.0
        %6322 = vmatprep.subr.mxu0 0.0
        %6323 = vmatpush1.msra.mxu0 0.0
        %6324 = vmatprep.subr.mxu0 0.0
        %6325 = vmatpush1.msra.mxu0 0.0
        %6326 = vmatprep.subr.mxu0 0.0
        %6327 = vmatpush1.msra.mxu0 0.0
        %6328 = vmatprep.subr.mxu0 0.0
        %6329 = vmatpush1.msra.mxu0 0.0
        %6330 = vmatprep.subr.mxu0 0.0
        %6331 = vmatpush1.msra.mxu0 0.0
        %6332 = vmatprep.subr.mxu0 0.0
        %6333 = vmatpush1.msra.mxu0 0.0
        %6334 = vmatprep.subr.mxu0 0.0
        %6335 = vmatpush1.msra.mxu0 0.0
        %6336 = vmatprep.subr.mxu0 0.0
        %6337 = vmatpush1.msra.mxu0 0.0
        %6338 = vmatprep.subr.mxu0 0.0
        %6339 = vmatpush1.msra.mxu0 0.0
        %6340 = vmatprep.subr.mxu0 0.0
        %6341 = vmatpush1.msra.mxu0 0.0
        %6342 = vmatprep.subr.mxu0 0.0
        %6343 = vmatpush1.msra.mxu0 0.0
        %6344 = vmatprep.subr.mxu0 0.0
        %6345 = vmatpush1.msra.mxu0 0.0
        %6346 = vmatprep.subr.mxu0 0.0
        %6347 = vmatpush1.msra.mxu0 0.0
        %6348 = vmatprep.subr.mxu0 0.0
        %6349 = vmatpush1.msra.mxu0 0.0
        %6350 = vmatprep.subr.mxu0 0.0
        %6351 = vmatpush1.msra.mxu0 0.0
        %6352 = vmatprep.subr.mxu0 0.0
        %6353 = vmatpush1.msra.mxu0 0.0
        %6354 = vmatprep.subr.mxu0 0.0
        %6355 = vmatpush1.msra.mxu0 0.0
        %6356 = vmatprep.subr.mxu0 0.0
        %6357 = vmatpush1.msra.mxu0 0.0
        %6358 = vmatprep.subr.mxu0 0.0
        %6359 = vmatpush1.msra.mxu0 0.0
        %6360 = vmatprep.subr.mxu0 0.0
        %6361 = vmatpush1.msra.mxu0 0.0
        %6362 = vmatprep.subr.mxu0 0.0
        %6363 = vmatpush1.msra.mxu0 0.0
        %6364 = vmatprep.subr.mxu0 0.0
        %6365 = vmatpush1.msra.mxu0 0.0
        %6366 = vmatprep.subr.mxu0 0.0
        %6367 = vmatpush1.msra.mxu0 0.0
        %6368 = vmatprep.mubr.f32.mxu0 0.0
        %6369 = vmatmul.mubr.f32.gmra.mrb[0].mxu0 %v6296
        %v6370 = vpop.f32.mrb[0].mxu0
        %v6371 = vadd.f32 0.0, %v6370
        %v6372 = vpop.f32.mrb[0].mxu0
        %v6373 = vadd.f32 0.0, %v6372
        %6374 = vdwg.mxu0
        %v6375 = vadd.f32 %v6290, %v6371
        %v6376 = vadd.f32 %v6291, %v6373
        %v6377 = vld [vmem:[#allocation6 + $0x9] sm:$0x1]
        %v6378 = vld [vmem:[%s13 + $0x40] sm:$0xf0]
        %v6379 = vld [vmem:[%s13 + $0x48] sm:$0xf0]
        %v6382 = vrot.slane %v6378, 4
        %v6383 = vrot.slane %v6379, 4
        %v6385 = vsel %vm3777, %v6377, 0
        %v6387 = vsel %vm926, %v6382, 0
        %v6389 = vsel %vm926, %v6383, 0
        %6391 = vmatprep.subr.mxu0 %v6389
        %6392 = vmatpush1.msra.mxu0 %v6387
        %6393 = vmatprep.subr.mxu0 0.0
        %6394 = vmatpush1.msra.mxu0 0.0
        %6395 = vmatprep.subr.mxu0 0.0
        %6396 = vmatpush1.msra.mxu0 0.0
        %6397 = vmatprep.subr.mxu0 0.0
        %6398 = vmatpush1.msra.mxu0 0.0
        %6399 = vmatprep.subr.mxu0 0.0
        %6400 = vmatpush1.msra.mxu0 0.0
        %6401 = vmatprep.subr.mxu0 0.0
        %6402 = vmatpush1.msra.mxu0 0.0
        %6403 = vmatprep.subr.mxu0 0.0
        %6404 = vmatpush1.msra.mxu0 0.0
        %6405 = vmatprep.subr.mxu0 0.0
        %6406 = vmatpush1.msra.mxu0 0.0
        %6407 = vmatprep.subr.mxu0 0.0
        %6408 = vmatpush1.msra.mxu0 0.0
        %6409 = vmatprep.subr.mxu0 0.0
        %6410 = vmatpush1.msra.mxu0 0.0
        %6411 = vmatprep.subr.mxu0 0.0
        %6412 = vmatpush1.msra.mxu0 0.0
        %6413 = vmatprep.subr.mxu0 0.0
        %6414 = vmatpush1.msra.mxu0 0.0
        %6415 = vmatprep.subr.mxu0 0.0
        %6416 = vmatpush1.msra.mxu0 0.0
        %6417 = vmatprep.subr.mxu0 0.0
        %6418 = vmatpush1.msra.mxu0 0.0
        %6419 = vmatprep.subr.mxu0 0.0
        %6420 = vmatpush1.msra.mxu0 0.0
        %6421 = vmatprep.subr.mxu0 0.0
        %6422 = vmatpush1.msra.mxu0 0.0
        %6423 = vmatprep.subr.mxu0 0.0
        %6424 = vmatpush1.msra.mxu0 0.0
        %6425 = vmatprep.subr.mxu0 0.0
        %6426 = vmatpush1.msra.mxu0 0.0
        %6427 = vmatprep.subr.mxu0 0.0
        %6428 = vmatpush1.msra.mxu0 0.0
        %6429 = vmatprep.subr.mxu0 0.0
        %6430 = vmatpush1.msra.mxu0 0.0
        %6431 = vmatprep.subr.mxu0 0.0
        %6432 = vmatpush1.msra.mxu0 0.0
        %6433 = vmatprep.subr.mxu0 0.0
        %6434 = vmatpush1.msra.mxu0 0.0
        %6435 = vmatprep.subr.mxu0 0.0
        %6436 = vmatpush1.msra.mxu0 0.0
        %6437 = vmatprep.subr.mxu0 0.0
        %6438 = vmatpush1.msra.mxu0 0.0
        %6439 = vmatprep.subr.mxu0 0.0
        %6440 = vmatpush1.msra.mxu0 0.0
        %6441 = vmatprep.subr.mxu0 0.0
        %6442 = vmatpush1.msra.mxu0 0.0
        %6443 = vmatprep.subr.mxu0 0.0
        %6444 = vmatpush1.msra.mxu0 0.0
        %6445 = vmatprep.subr.mxu0 0.0
        %6446 = vmatpush1.msra.mxu0 0.0
        %6447 = vmatprep.subr.mxu0 0.0
        %6448 = vmatpush1.msra.mxu0 0.0
        %6449 = vmatprep.subr.mxu0 0.0
        %6450 = vmatpush1.msra.mxu0 0.0
        %6451 = vmatprep.subr.mxu0 0.0
        %6452 = vmatpush1.msra.mxu0 0.0
        %6453 = vmatprep.subr.mxu0 0.0
        %6454 = vmatpush1.msra.mxu0 0.0
        %6455 = vmatprep.mubr.f32.mxu0 0.0
        %6456 = vmatmul.mubr.f32.gmra.mrb[0].mxu0 %v6385
        %v6457 = vpop.f32.mrb[0].mxu0
        %v6458 = vadd.f32 0.0, %v6457
        %v6459 = vpop.f32.mrb[0].mxu0
        %v6460 = vadd.f32 0.0, %v6459
        %6461 = vdwg.mxu0
        %v6462 = vadd.f32 %v6375, %v6458
        %v6463 = vadd.f32 %v6376, %v6460
        %v6464 = vld [vmem:[#allocation6 + $0xa] sm:$0x1]
        %v6465 = vld [vmem:[%s13 + $0x50] sm:$0xf]
        %v6466 = vld [vmem:[%s13 + $0x58] sm:$0xf]
        %v6468 = vsel %vm3777, %v6464, 0
        %v6471 = vsel %vm926, %v6465, 0
        %v6474 = vsel %vm926, %v6466, 0
        %6476 = vmatprep.subr.mxu0 %v6474
        %6477 = vmatpush1.msra.mxu0 %v6471
        %6478 = vmatprep.subr.mxu0 0.0
        %6479 = vmatpush1.msra.mxu0 0.0
        %6480 = vmatprep.subr.mxu0 0.0
        %6481 = vmatpush1.msra.mxu0 0.0
        %6482 = vmatprep.subr.mxu0 0.0
        %6483 = vmatpush1.msra.mxu0 0.0
        %6484 = vmatprep.subr.mxu0 0.0
        %6485 = vmatpush1.msra.mxu0 0.0
        %6486 = vmatprep.subr.mxu0 0.0
        %6487 = vmatpush1.msra.mxu0 0.0
        %6488 = vmatprep.subr.mxu0 0.0
        %6489 = vmatpush1.msra.mxu0 0.0
        %6490 = vmatprep.subr.mxu0 0.0
        %6491 = vmatpush1.msra.mxu0 0.0
        %6492 = vmatprep.subr.mxu0 0.0
        %6493 = vmatpush1.msra.mxu0 0.0
        %6494 = vmatprep.subr.mxu0 0.0
        %6495 = vmatpush1.msra.mxu0 0.0
        %6496 = vmatprep.subr.mxu0 0.0
        %6497 = vmatpush1.msra.mxu0 0.0
        %6498 = vmatprep.subr.mxu0 0.0
        %6499 = vmatpush1.msra.mxu0 0.0
        %6500 = vmatprep.subr.mxu0 0.0
        %6501 = vmatpush1.msra.mxu0 0.0
        %6502 = vmatprep.subr.mxu0 0.0
        %6503 = vmatpush1.msra.mxu0 0.0
        %6504 = vmatprep.subr.mxu0 0.0
        %6505 = vmatpush1.msra.mxu0 0.0
        %6506 = vmatprep.subr.mxu0 0.0
        %6507 = vmatpush1.msra.mxu0 0.0
        %6508 = vmatprep.subr.mxu0 0.0
        %6509 = vmatpush1.msra.mxu0 0.0
        %6510 = vmatprep.subr.mxu0 0.0
        %6511 = vmatpush1.msra.mxu0 0.0
        %6512 = vmatprep.subr.mxu0 0.0
        %6513 = vmatpush1.msra.mxu0 0.0
        %6514 = vmatprep.subr.mxu0 0.0
        %6515 = vmatpush1.msra.mxu0 0.0
        %6516 = vmatprep.subr.mxu0 0.0
        %6517 = vmatpush1.msra.mxu0 0.0
        %6518 = vmatprep.subr.mxu0 0.0
        %6519 = vmatpush1.msra.mxu0 0.0
        %6520 = vmatprep.subr.mxu0 0.0
        %6521 = vmatpush1.msra.mxu0 0.0
        %6522 = vmatprep.subr.mxu0 0.0
        %6523 = vmatpush1.msra.mxu0 0.0
        %6524 = vmatprep.subr.mxu0 0.0
        %6525 = vmatpush1.msra.mxu0 0.0
        %6526 = vmatprep.subr.mxu0 0.0
        %6527 = vmatpush1.msra.mxu0 0.0
        %6528 = vmatprep.subr.mxu0 0.0
        %6529 = vmatpush1.msra.mxu0 0.0
        %6530 = vmatprep.subr.mxu0 0.0
        %6531 = vmatpush1.msra.mxu0 0.0
        %6532 = vmatprep.subr.mxu0 0.0
        %6533 = vmatpush1.msra.mxu0 0.0
        %6534 = vmatprep.subr.mxu0 0.0
        %6535 = vmatpush1.msra.mxu0 0.0
        %6536 = vmatprep.subr.mxu0 0.0
        %6537 = vmatpush1.msra.mxu0 0.0
        %6538 = vmatprep.subr.mxu0 0.0
        %6539 = vmatpush1.msra.mxu0 0.0
        %6540 = vmatprep.mubr.f32.mxu0 0.0
        %6541 = vmatmul.mubr.f32.gmra.mrb[0].mxu0 %v6468
        %v6542 = vpop.f32.mrb[0].mxu0
        %v6543 = vadd.f32 0.0, %v6542
        %v6544 = vpop.f32.mrb[0].mxu0
        %v6545 = vadd.f32 0.0, %v6544
        %6546 = vdwg.mxu0
        %v6547 = vadd.f32 %v6462, %v6543
        %v6548 = vadd.f32 %v6463, %v6545
        %v6549 = vld [vmem:[#allocation6 + $0xb] sm:$0x1]
        %v6550 = vld [vmem:[%s13 + $0x50] sm:$0xf0]
        %v6551 = vld [vmem:[%s13 + $0x58] sm:$0xf0]
        %v6554 = vrot.slane %v6550, 4
        %v6555 = vrot.slane %v6551, 4
        %v6557 = vsel %vm3777, %v6549, 0
        %v6559 = vsel %vm926, %v6554, 0
        %v6561 = vsel %vm926, %v6555, 0
        %6563 = vmatprep.subr.mxu0 %v6561
        %6564 = vmatpush1.msra.mxu0 %v6559
        %6565 = vmatprep.subr.mxu0 0.0
        %6566 = vmatpush1.msra.mxu0 0.0
        %6567 = vmatprep.subr.mxu0 0.0
        %6568 = vmatpush1.msra.mxu0 0.0
        %6569 = vmatprep.subr.mxu0 0.0
        %6570 = vmatpush1.msra.mxu0 0.0
        %6571 = vmatprep.subr.mxu0 0.0
        %6572 = vmatpush1.msra.mxu0 0.0
        %6573 = vmatprep.subr.mxu0 0.0
        %6574 = vmatpush1.msra.mxu0 0.0
        %6575 = vmatprep.subr.mxu0 0.0
        %6576 = vmatpush1.msra.mxu0 0.0
        %6577 = vmatprep.subr.mxu0 0.0
        %6578 = vmatpush1.msra.mxu0 0.0
        %6579 = vmatprep.subr.mxu0 0.0
        %6580 = vmatpush1.msra.mxu0 0.0
        %6581 = vmatprep.subr.mxu0 0.0
        %6582 = vmatpush1.msra.mxu0 0.0
        %6583 = vmatprep.subr.mxu0 0.0
        %6584 = vmatpush1.msra.mxu0 0.0
        %6585 = vmatprep.subr.mxu0 0.0
        %6586 = vmatpush1.msra.mxu0 0.0
        %6587 = vmatprep.subr.mxu0 0.0
        %6588 = vmatpush1.msra.mxu0 0.0
        %6589 = vmatprep.subr.mxu0 0.0
        %6590 = vmatpush1.msra.mxu0 0.0
        %6591 = vmatprep.subr.mxu0 0.0
        %6592 = vmatpush1.msra.mxu0 0.0
        %6593 = vmatprep.subr.mxu0 0.0
        %6594 = vmatpush1.msra.mxu0 0.0
        %6595 = vmatprep.subr.mxu0 0.0
        %6596 = vmatpush1.msra.mxu0 0.0
        %6597 = vmatprep.subr.mxu0 0.0
        %6598 = vmatpush1.msra.mxu0 0.0
        %6599 = vmatprep.subr.mxu0 0.0
        %6600 = vmatpush1.msra.mxu0 0.0
        %6601 = vmatprep.subr.mxu0 0.0
        %6602 = vmatpush1.msra.mxu0 0.0
        %6603 = vmatprep.subr.mxu0 0.0
        %6604 = vmatpush1.msra.mxu0 0.0
        %6605 = vmatprep.subr.mxu0 0.0
        %6606 = vmatpush1.msra.mxu0 0.0
        %6607 = vmatprep.subr.mxu0 0.0
        %6608 = vmatpush1.msra.mxu0 0.0
        %6609 = vmatprep.subr.mxu0 0.0
        %6610 = vmatpush1.msra.mxu0 0.0
        %6611 = vmatprep.subr.mxu0 0.0
        %6612 = vmatpush1.msra.mxu0 0.0
        %6613 = vmatprep.subr.mxu0 0.0
        %6614 = vmatpush1.msra.mxu0 0.0
        %6615 = vmatprep.subr.mxu0 0.0
        %6616 = vmatpush1.msra.mxu0 0.0
        %6617 = vmatprep.subr.mxu0 0.0
        %6618 = vmatpush1.msra.mxu0 0.0
        %6619 = vmatprep.subr.mxu0 0.0
        %6620 = vmatpush1.msra.mxu0 0.0
        %6621 = vmatprep.subr.mxu0 0.0
        %6622 = vmatpush1.msra.mxu0 0.0
        %6623 = vmatprep.subr.mxu0 0.0
        %6624 = vmatpush1.msra.mxu0 0.0
        %6625 = vmatprep.subr.mxu0 0.0
        %6626 = vmatpush1.msra.mxu0 0.0
        %6627 = vmatprep.mubr.f32.mxu0 0.0
        %6628 = vmatmul.mubr.f32.gmra.mrb[0].mxu0 %v6557
        %v6629 = vpop.f32.mrb[0].mxu0
        %v6630 = vadd.f32 0.0, %v6629
        %v6631 = vpop.f32.mrb[0].mxu0
        %v6632 = vadd.f32 0.0, %v6631
        %6633 = vdwg.mxu0
        %v6634 = vadd.f32 %v6547, %v6630
        %v6635 = vadd.f32 %v6548, %v6632
        %v6636 = vld [vmem:[#allocation6 + $0xc] sm:$0x1]
        %v6637 = vld [vmem:[%s13 + $0x60] sm:$0xf]
        %v6638 = vld [vmem:[%s13 + $0x68] sm:$0xf]
        %v6640 = vsel %vm3777, %v6636, 0
        %v6643 = vsel %vm926, %v6637, 0
        %v6646 = vsel %vm926, %v6638, 0
        %6648 = vmatprep.subr.mxu0 %v6646
        %6649 = vmatpush1.msra.mxu0 %v6643
        %6650 = vmatprep.subr.mxu0 0.0
        %6651 = vmatpush1.msra.mxu0 0.0
        %6652 = vmatprep.subr.mxu0 0.0
        %6653 = vmatpush1.msra.mxu0 0.0
        %6654 = vmatprep.subr.mxu0 0.0
        %6655 = vmatpush1.msra.mxu0 0.0
        %6656 = vmatprep.subr.mxu0 0.0
        %6657 = vmatpush1.msra.mxu0 0.0
        %6658 = vmatprep.subr.mxu0 0.0
        %6659 = vmatpush1.msra.mxu0 0.0
        %6660 = vmatprep.subr.mxu0 0.0
        %6661 = vmatpush1.msra.mxu0 0.0
        %6662 = vmatprep.subr.mxu0 0.0
        %6663 = vmatpush1.msra.mxu0 0.0
        %6664 = vmatprep.subr.mxu0 0.0
        %6665 = vmatpush1.msra.mxu0 0.0
        %6666 = vmatprep.subr.mxu0 0.0
        %6667 = vmatpush1.msra.mxu0 0.0
        %6668 = vmatprep.subr.mxu0 0.0
        %6669 = vmatpush1.msra.mxu0 0.0
        %6670 = vmatprep.subr.mxu0 0.0
        %6671 = vmatpush1.msra.mxu0 0.0
        %6672 = vmatprep.subr.mxu0 0.0
        %6673 = vmatpush1.msra.mxu0 0.0
        %6674 = vmatprep.subr.mxu0 0.0
        %6675 = vmatpush1.msra.mxu0 0.0
        %6676 = vmatprep.subr.mxu0 0.0
        %6677 = vmatpush1.msra.mxu0 0.0
        %6678 = vmatprep.subr.mxu0 0.0
        %6679 = vmatpush1.msra.mxu0 0.0
        %6680 = vmatprep.subr.mxu0 0.0
        %6681 = vmatpush1.msra.mxu0 0.0
        %6682 = vmatprep.subr.mxu0 0.0
        %6683 = vmatpush1.msra.mxu0 0.0
        %6684 = vmatprep.subr.mxu0 0.0
        %6685 = vmatpush1.msra.mxu0 0.0
        %6686 = vmatprep.subr.mxu0 0.0
        %6687 = vmatpush1.msra.mxu0 0.0
        %6688 = vmatprep.subr.mxu0 0.0
        %6689 = vmatpush1.msra.mxu0 0.0
        %6690 = vmatprep.subr.mxu0 0.0
        %6691 = vmatpush1.msra.mxu0 0.0
        %6692 = vmatprep.subr.mxu0 0.0
        %6693 = vmatpush1.msra.mxu0 0.0
        %6694 = vmatprep.subr.mxu0 0.0
        %6695 = vmatpush1.msra.mxu0 0.0
        %6696 = vmatprep.subr.mxu0 0.0
        %6697 = vmatpush1.msra.mxu0 0.0
        %6698 = vmatprep.subr.mxu0 0.0
        %6699 = vmatpush1.msra.mxu0 0.0
        %6700 = vmatprep.subr.mxu0 0.0
        %6701 = vmatpush1.msra.mxu0 0.0
        %6702 = vmatprep.subr.mxu0 0.0
        %6703 = vmatpush1.msra.mxu0 0.0
        %6704 = vmatprep.subr.mxu0 0.0
        %6705 = vmatpush1.msra.mxu0 0.0
        %6706 = vmatprep.subr.mxu0 0.0
        %6707 = vmatpush1.msra.mxu0 0.0
        %6708 = vmatprep.subr.mxu0 0.0
        %6709 = vmatpush1.msra.mxu0 0.0
        %6710 = vmatprep.subr.mxu0 0.0
        %6711 = vmatpush1.msra.mxu0 0.0
        %6712 = vmatprep.mubr.f32.mxu0 0.0
        %6713 = vmatmul.mubr.f32.gmra.mrb[0].mxu0 %v6640
        %v6714 = vpop.f32.mrb[0].mxu0
        %v6715 = vadd.f32 0.0, %v6714
        %v6716 = vpop.f32.mrb[0].mxu0
        %v6717 = vadd.f32 0.0, %v6716
        %6718 = vdwg.mxu0
        %v6719 = vadd.f32 %v6634, %v6715
        %v6720 = vadd.f32 %v6635, %v6717
        %v6721 = vld [vmem:[#allocation6 + $0xd] sm:$0x1]
        %v6722 = vld [vmem:[%s13 + $0x60] sm:$0xf0]
        %v6723 = vld [vmem:[%s13 + $0x68] sm:$0xf0]
        %v6726 = vrot.slane %v6722, 4
        %v6727 = vrot.slane %v6723, 4
        %v6729 = vsel %vm3777, %v6721, 0
        %v6731 = vsel %vm926, %v6726, 0
        %v6733 = vsel %vm926, %v6727, 0
        %6735 = vmatprep.subr.mxu0 %v6733
        %6736 = vmatpush1.msra.mxu0 %v6731
        %6737 = vmatprep.subr.mxu0 0.0
        %6738 = vmatpush1.msra.mxu0 0.0
        %6739 = vmatprep.subr.mxu0 0.0
        %6740 = vmatpush1.msra.mxu0 0.0
        %6741 = vmatprep.subr.mxu0 0.0
        %6742 = vmatpush1.msra.mxu0 0.0
        %6743 = vmatprep.subr.mxu0 0.0
        %6744 = vmatpush1.msra.mxu0 0.0
        %6745 = vmatprep.subr.mxu0 0.0
        %6746 = vmatpush1.msra.mxu0 0.0
        %6747 = vmatprep.subr.mxu0 0.0
        %6748 = vmatpush1.msra.mxu0 0.0
        %6749 = vmatprep.subr.mxu0 0.0
        %6750 = vmatpush1.msra.mxu0 0.0
        %6751 = vmatprep.subr.mxu0 0.0
        %6752 = vmatpush1.msra.mxu0 0.0
        %6753 = vmatprep.subr.mxu0 0.0
        %6754 = vmatpush1.msra.mxu0 0.0
        %6755 = vmatprep.subr.mxu0 0.0
        %6756 = vmatpush1.msra.mxu0 0.0
        %6757 = vmatprep.subr.mxu0 0.0
        %6758 = vmatpush1.msra.mxu0 0.0
        %6759 = vmatprep.subr.mxu0 0.0
        %6760 = vmatpush1.msra.mxu0 0.0
        %6761 = vmatprep.subr.mxu0 0.0
        %6762 = vmatpush1.msra.mxu0 0.0
        %6763 = vmatprep.subr.mxu0 0.0
        %6764 = vmatpush1.msra.mxu0 0.0
        %6765 = vmatprep.subr.mxu0 0.0
        %6766 = vmatpush1.msra.mxu0 0.0
        %6767 = vmatprep.subr.mxu0 0.0
        %6768 = vmatpush1.msra.mxu0 0.0
        %6769 = vmatprep.subr.mxu0 0.0
        %6770 = vmatpush1.msra.mxu0 0.0
        %6771 = vmatprep.subr.mxu0 0.0
        %6772 = vmatpush1.msra.mxu0 0.0
        %6773 = vmatprep.subr.mxu0 0.0
        %6774 = vmatpush1.msra.mxu0 0.0
        %6775 = vmatprep.subr.mxu0 0.0
        %6776 = vmatpush1.msra.mxu0 0.0
        %6777 = vmatprep.subr.mxu0 0.0
        %6778 = vmatpush1.msra.mxu0 0.0
        %6779 = vmatprep.subr.mxu0 0.0
        %6780 = vmatpush1.msra.mxu0 0.0
        %6781 = vmatprep.subr.mxu0 0.0
        %6782 = vmatpush1.msra.mxu0 0.0
        %6783 = vmatprep.subr.mxu0 0.0
        %6784 = vmatpush1.msra.mxu0 0.0
        %6785 = vmatprep.subr.mxu0 0.0
        %6786 = vmatpush1.msra.mxu0 0.0
        %6787 = vmatprep.subr.mxu0 0.0
        %6788 = vmatpush1.msra.mxu0 0.0
        %6789 = vmatprep.subr.mxu0 0.0
        %6790 = vmatpush1.msra.mxu0 0.0
        %6791 = vmatprep.subr.mxu0 0.0
        %6792 = vmatpush1.msra.mxu0 0.0
        %6793 = vmatprep.subr.mxu0 0.0
        %6794 = vmatpush1.msra.mxu0 0.0
        %6795 = vmatprep.subr.mxu0 0.0
        %6796 = vmatpush1.msra.mxu0 0.0
        %6797 = vmatprep.subr.mxu0 0.0
        %6798 = vmatpush1.msra.mxu0 0.0
        %6799 = vmatprep.mubr.f32.mxu0 0.0
        %6800 = vmatmul.mubr.f32.gmra.mrb[0].mxu0 %v6729
        %v6801 = vpop.f32.mrb[0].mxu0
        %v6802 = vadd.f32 0.0, %v6801
        %v6803 = vpop.f32.mrb[0].mxu0
        %v6804 = vadd.f32 0.0, %v6803
        %6805 = vdwg.mxu0
        %v6806 = vadd.f32 %v6719, %v6802
        %v6807 = vadd.f32 %v6720, %v6804
        %v6808 = vld [vmem:[#allocation6 + $0xe] sm:$0x1]
        %v6809 = vld [vmem:[%s13 + $0x70] sm:$0xf]
        %v6810 = vld [vmem:[%s13 + $0x78] sm:$0xf]
        %v6812 = vsel %vm3777, %v6808, 0
        %v6815 = vsel %vm926, %v6809, 0
        %v6818 = vsel %vm926, %v6810, 0
        %6820 = vmatprep.subr.mxu0 %v6818
        %6821 = vmatpush1.msra.mxu0 %v6815
        %6822 = vmatprep.subr.mxu0 0.0
        %6823 = vmatpush1.msra.mxu0 0.0
        %6824 = vmatprep.subr.mxu0 0.0
        %6825 = vmatpush1.msra.mxu0 0.0
        %6826 = vmatprep.subr.mxu0 0.0
        %6827 = vmatpush1.msra.mxu0 0.0
        %6828 = vmatprep.subr.mxu0 0.0
        %6829 = vmatpush1.msra.mxu0 0.0
        %6830 = vmatprep.subr.mxu0 0.0
        %6831 = vmatpush1.msra.mxu0 0.0
        %6832 = vmatprep.subr.mxu0 0.0
        %6833 = vmatpush1.msra.mxu0 0.0
        %6834 = vmatprep.subr.mxu0 0.0
        %6835 = vmatpush1.msra.mxu0 0.0
        %6836 = vmatprep.subr.mxu0 0.0
        %6837 = vmatpush1.msra.mxu0 0.0
        %6838 = vmatprep.subr.mxu0 0.0
        %6839 = vmatpush1.msra.mxu0 0.0
        %6840 = vmatprep.subr.mxu0 0.0
        %6841 = vmatpush1.msra.mxu0 0.0
        %6842 = vmatprep.subr.mxu0 0.0
        %6843 = vmatpush1.msra.mxu0 0.0
        %6844 = vmatprep.subr.mxu0 0.0
        %6845 = vmatpush1.msra.mxu0 0.0
        %6846 = vmatprep.subr.mxu0 0.0
        %6847 = vmatpush1.msra.mxu0 0.0
        %6848 = vmatprep.subr.mxu0 0.0
        %6849 = vmatpush1.msra.mxu0 0.0
        %6850 = vmatprep.subr.mxu0 0.0
        %6851 = vmatpush1.msra.mxu0 0.0
        %6852 = vmatprep.subr.mxu0 0.0
        %6853 = vmatpush1.msra.mxu0 0.0
        %6854 = vmatprep.subr.mxu0 0.0
        %6855 = vmatpush1.msra.mxu0 0.0
        %6856 = vmatprep.subr.mxu0 0.0
        %6857 = vmatpush1.msra.mxu0 0.0
        %6858 = vmatprep.subr.mxu0 0.0
        %6859 = vmatpush1.msra.mxu0 0.0
        %6860 = vmatprep.subr.mxu0 0.0
        %6861 = vmatpush1.msra.mxu0 0.0
        %6862 = vmatprep.subr.mxu0 0.0
        %6863 = vmatpush1.msra.mxu0 0.0
        %6864 = vmatprep.subr.mxu0 0.0
        %6865 = vmatpush1.msra.mxu0 0.0
        %6866 = vmatprep.subr.mxu0 0.0
        %6867 = vmatpush1.msra.mxu0 0.0
        %6868 = vmatprep.subr.mxu0 0.0
        %6869 = vmatpush1.msra.mxu0 0.0
        %6870 = vmatprep.subr.mxu0 0.0
        %6871 = vmatpush1.msra.mxu0 0.0
        %6872 = vmatprep.subr.mxu0 0.0
        %6873 = vmatpush1.msra.mxu0 0.0
        %6874 = vmatprep.subr.mxu0 0.0
        %6875 = vmatpush1.msra.mxu0 0.0
        %6876 = vmatprep.subr.mxu0 0.0
        %6877 = vmatpush1.msra.mxu0 0.0
        %6878 = vmatprep.subr.mxu0 0.0
        %6879 = vmatpush1.msra.mxu0 0.0
        %6880 = vmatprep.subr.mxu0 0.0
        %6881 = vmatpush1.msra.mxu0 0.0
        %6882 = vmatprep.subr.mxu0 0.0
        %6883 = vmatpush1.msra.mxu0 0.0
        %6884 = vmatprep.mubr.f32.mxu0 0.0
        %6885 = vmatmul.mubr.f32.gmra.mrb[0].mxu0 %v6812
        %v6886 = vpop.f32.mrb[0].mxu0
        %v6887 = vadd.f32 0.0, %v6886
        %v6888 = vpop.f32.mrb[0].mxu0
        %v6889 = vadd.f32 0.0, %v6888
        %6890 = vdwg.mxu0
        %v6891 = vadd.f32 %v6806, %v6887
        %v6892 = vadd.f32 %v6807, %v6889
        %v6893 = vld [vmem:[#allocation6 + $0xf] sm:$0x1]
        %v6894 = vld [vmem:[%s13 + $0x70] sm:$0xf0]
        %v6895 = vld [vmem:[%s13 + $0x78] sm:$0xf0]
        %v6898 = vrot.slane %v6894, 4
        %v6899 = vrot.slane %v6895, 4
        %v6901 = vsel %vm3777, %v6893, 0
        %v6903 = vsel %vm926, %v6898, 0
        %v6905 = vsel %vm926, %v6899, 0
        %6907 = vmatprep.subr.mxu0 %v6905
        %6908 = vmatpush1.msra.mxu0 %v6903
        %6909 = vmatprep.subr.mxu0 0.0
        %6910 = vmatpush1.msra.mxu0 0.0
        %6911 = vmatprep.subr.mxu0 0.0
        %6912 = vmatpush1.msra.mxu0 0.0
        %6913 = vmatprep.subr.mxu0 0.0
        %6914 = vmatpush1.msra.mxu0 0.0
        %6915 = vmatprep.subr.mxu0 0.0
        %6916 = vmatpush1.msra.mxu0 0.0
        %6917 = vmatprep.subr.mxu0 0.0
        %6918 = vmatpush1.msra.mxu0 0.0
        %6919 = vmatprep.subr.mxu0 0.0
        %6920 = vmatpush1.msra.mxu0 0.0
        %6921 = vmatprep.subr.mxu0 0.0
        %6922 = vmatpush1.msra.mxu0 0.0
        %6923 = vmatprep.subr.mxu0 0.0
        %6924 = vmatpush1.msra.mxu0 0.0
        %6925 = vmatprep.subr.mxu0 0.0
        %6926 = vmatpush1.msra.mxu0 0.0
        %6927 = vmatprep.subr.mxu0 0.0
        %6928 = vmatpush1.msra.mxu0 0.0
        %6929 = vmatprep.subr.mxu0 0.0
        %6930 = vmatpush1.msra.mxu0 0.0
        %6931 = vmatprep.subr.mxu0 0.0
        %6932 = vmatpush1.msra.mxu0 0.0
        %6933 = vmatprep.subr.mxu0 0.0
        %6934 = vmatpush1.msra.mxu0 0.0
        %6935 = vmatprep.subr.mxu0 0.0
        %6936 = vmatpush1.msra.mxu0 0.0
        %6937 = vmatprep.subr.mxu0 0.0
        %6938 = vmatpush1.msra.mxu0 0.0
        %6939 = vmatprep.subr.mxu0 0.0
        %6940 = vmatpush1.msra.mxu0 0.0
        %6941 = vmatprep.subr.mxu0 0.0
        %6942 = vmatpush1.msra.mxu0 0.0
        %6943 = vmatprep.subr.mxu0 0.0
        %6944 = vmatpush1.msra.mxu0 0.0
        %6945 = vmatprep.subr.mxu0 0.0
        %6946 = vmatpush1.msra.mxu0 0.0
        %6947 = vmatprep.subr.mxu0 0.0
        %6948 = vmatpush1.msra.mxu0 0.0
        %6949 = vmatprep.subr.mxu0 0.0
        %6950 = vmatpush1.msra.mxu0 0.0
        %6951 = vmatprep.subr.mxu0 0.0
        %6952 = vmatpush1.msra.mxu0 0.0
        %6953 = vmatprep.subr.mxu0 0.0
        %6954 = vmatpush1.msra.mxu0 0.0
        %6955 = vmatprep.subr.mxu0 0.0
        %6956 = vmatpush1.msra.mxu0 0.0
        %6957 = vmatprep.subr.mxu0 0.0
        %6958 = vmatpush1.msra.mxu0 0.0
        %6959 = vmatprep.subr.mxu0 0.0
        %6960 = vmatpush1.msra.mxu0 0.0
        %6961 = vmatprep.subr.mxu0 0.0
        %6962 = vmatpush1.msra.mxu0 0.0
        %6963 = vmatprep.subr.mxu0 0.0
        %6964 = vmatpush1.msra.mxu0 0.0
        %6965 = vmatprep.subr.mxu0 0.0
        %6966 = vmatpush1.msra.mxu0 0.0
        %6967 = vmatprep.subr.mxu0 0.0
        %6968 = vmatpush1.msra.mxu0 0.0
        %6969 = vmatprep.subr.mxu0 0.0
        %6970 = vmatpush1.msra.mxu0 0.0
        %6971 = vmatprep.mubr.f32.mxu0 0.0
        %6972 = vmatmul.mubr.f32.gmra.mrb[0].mxu0 %v6901
        %v6973 = vpop.f32.mrb[0].mxu0
        %v6974 = vadd.f32 0.0, %v6973
        %v6975 = vpop.f32.mrb[0].mxu0
        %v6976 = vadd.f32 0.0, %v6975
        %6977 = vdwg.mxu0
        %v6978 = vadd.f32 %v6891, %v6974
        %v6979 = vadd.f32 %v6892, %v6976
        %v6980 = vld [vmem:[%s14] sm:$0x3]
        %v6982 = vlaneseq
        %v6983 = vshrl.u32 %v6982, 7
        %v6984 = vsub.s32 0, %v6983
        %v6985 = vrot.slane %v6980, %v6984
        %v6986 = vlaneseq
        %v6987 = vshrl.u32 %v6986, 7
        %v6988 = vsub.s32 1, %v6987
        %v6989 = vrot.slane %v6980, %v6988
        %v6992 = vadd.f32 %v6978, %v6985
        %v6993 = vadd.f32 %v6979, %v6989
        %v6994 = vmax.f32 %v6992, 0.0
        %v6995 = vmax.f32 %v6993, 0.0
        %v6996 = vld [vmem:[%s15] sm:$0xff]
        %v6997 = vld [vmem:[%s15 + $0x8] sm:$0xff]
        %v6998 = vld [vmem:[%s15 + $0x10] sm:$0xff]
        %v6999 = vld [vmem:[%s15 + $0x18] sm:$0xff]
        %v7000 = vld [vmem:[%s15 + $0x20] sm:$0xff]
        %v7001 = vld [vmem:[%s15 + $0x28] sm:$0xff]
        %v7002 = vld [vmem:[%s15 + $0x30] sm:$0xff]
        %v7003 = vld [vmem:[%s15 + $0x38] sm:$0xff]
        %v7004 = vld [vmem:[%s15 + $0x40] sm:$0xff]
        %v7005 = vld [vmem:[%s15 + $0x48] sm:$0xff]
        %v7006 = vld [vmem:[%s15 + $0x50] sm:$0xff]
        %v7007 = vld [vmem:[%s15 + $0x58] sm:$0xff]
        %v7008 = vld [vmem:[%s15 + $0x60] sm:$0xff]
        %v7009 = vld [vmem:[%s15 + $0x68] sm:$0xff]
        %v7010 = vld [vmem:[%s15 + $0x70] sm:$0xff]
        %v7011 = vld [vmem:[%s15 + $0x78] sm:$0xff]
        %v7012 = vld [vmem:[%s15 + $0x80] sm:$0xff]
        %v7013 = vld [vmem:[%s15 + $0x88] sm:$0xff]
        %v7014 = vld [vmem:[%s15 + $0x90] sm:$0xff]
        %v7015 = vld [vmem:[%s15 + $0x98] sm:$0xff]
        %v7016 = vld [vmem:[%s15 + $0xa0] sm:$0xff]
        %v7017 = vld [vmem:[%s15 + $0xa8] sm:$0xff]
        %v7018 = vld [vmem:[%s15 + $0xb0] sm:$0xff]
        %v7019 = vld [vmem:[%s15 + $0xb8] sm:$0xff]
        %v7020 = vld [vmem:[%s15 + $0xc0] sm:$0xff]
        %v7021 = vld [vmem:[%s15 + $0xc8] sm:$0xff]
        %v7022 = vld [vmem:[%s15 + $0xd0] sm:$0xff]
        %v7023 = vld [vmem:[%s15 + $0xd8] sm:$0xff]
        %v7024 = vld [vmem:[%s15 + $0xe0] sm:$0xff]
        %v7025 = vld [vmem:[%s15 + $0xe8] sm:$0xff]
        %v7026 = vld [vmem:[%s15 + $0xf0] sm:$0xff]
        %v7027 = vld [vmem:[%s15 + $0xf8] sm:$0xff]
        %v7028 = vld [vmem:[%s16] sm:$0x1]
        %7029 = vmatprep.subr.mxu0 0.0
        %7030 = vmatpush1.msra.mxu0 %v6996
        %7031 = vmatprep.subr.mxu0 0.0
        %7032 = vmatpush1.msra.mxu0 %v6997
        %7033 = vmatprep.subr.mxu0 0.0
        %7034 = vmatpush1.msra.mxu0 %v6998
        %7035 = vmatprep.subr.mxu0 0.0
        %7036 = vmatpush1.msra.mxu0 %v6999
        %7037 = vmatprep.subr.mxu0 0.0
        %7038 = vmatpush1.msra.mxu0 %v7000
        %7039 = vmatprep.subr.mxu0 0.0
        %7040 = vmatpush1.msra.mxu0 %v7001
        %7041 = vmatprep.subr.mxu0 0.0
        %7042 = vmatpush1.msra.mxu0 %v7002
        %7043 = vmatprep.subr.mxu0 0.0
        %7044 = vmatpush1.msra.mxu0 %v7003
        %7045 = vmatprep.subr.mxu0 0.0
        %7046 = vmatpush1.msra.mxu0 %v7004
        %7047 = vmatprep.subr.mxu0 0.0
        %7048 = vmatpush1.msra.mxu0 %v7005
        %7049 = vmatprep.subr.mxu0 0.0
        %7050 = vmatpush1.msra.mxu0 %v7006
        %7051 = vmatprep.subr.mxu0 0.0
        %7052 = vmatpush1.msra.mxu0 %v7007
        %7053 = vmatprep.subr.mxu0 0.0
        %7054 = vmatpush1.msra.mxu0 %v7008
        %7055 = vmatprep.subr.mxu0 0.0
        %7056 = vmatpush1.msra.mxu0 %v7009
        %7057 = vmatprep.subr.mxu0 0.0
        %7058 = vmatpush1.msra.mxu0 %v7010
        %7059 = vmatprep.subr.mxu0 0.0
        %7060 = vmatpush1.msra.mxu0 %v7011
        %7061 = vmatprep.subr.mxu0 0.0
        %7062 = vmatpush1.msra.mxu0 %v7012
        %7063 = vmatprep.subr.mxu0 0.0
        %7064 = vmatpush1.msra.mxu0 %v7013
        %7065 = vmatprep.subr.mxu0 0.0
        %7066 = vmatpush1.msra.mxu0 %v7014
        %7067 = vmatprep.subr.mxu0 0.0
        %7068 = vmatpush1.msra.mxu0 %v7015
        %7069 = vmatprep.subr.mxu0 0.0
        %7070 = vmatpush1.msra.mxu0 %v7016
        %7071 = vmatprep.subr.mxu0 0.0
        %7072 = vmatpush1.msra.mxu0 %v7017
        %7073 = vmatprep.subr.mxu0 0.0
        %7074 = vmatpush1.msra.mxu0 %v7018
        %7075 = vmatprep.subr.mxu0 0.0
        %7076 = vmatpush1.msra.mxu0 %v7019
        %7077 = vmatprep.subr.mxu0 0.0
        %7078 = vmatpush1.msra.mxu0 %v7020
        %7079 = vmatprep.subr.mxu0 0.0
        %7080 = vmatpush1.msra.mxu0 %v7021
        %7081 = vmatprep.subr.mxu0 0.0
        %7082 = vmatpush1.msra.mxu0 %v7022
        %7083 = vmatprep.subr.mxu0 0.0
        %7084 = vmatpush1.msra.mxu0 %v7023
        %7085 = vmatprep.subr.mxu0 0.0
        %7086 = vmatpush1.msra.mxu0 %v7024
        %7087 = vmatprep.subr.mxu0 0.0
        %7088 = vmatpush1.msra.mxu0 %v7025
        %7089 = vmatprep.subr.mxu0 0.0
        %7090 = vmatpush1.msra.mxu0 %v7026
        %7091 = vmatprep.subr.mxu0 0.0
        %7092 = vmatpush1.msra.mxu0 %v7027
        %7093 = vmatprep.mubr.f32.mxu0 %v6995
        %7094 = vmatmul.mubr.f32.gmra.mrb[0].mxu0 %v6994
        %v7095 = vpop.f32.mrb[0].mxu0
        %v7096 = vadd.f32 %v7028, %v7095
        %v7097 = vpop.f32.mrb[0].mxu0
        %7098 = vdwg.mxu0
        %v7099 = vmax.f32 %v7096, 0.0
        %vm7100 = vcmask 32768
        %v7101 = vsel %vm7100, %v7099, -inf
        %7102 = vmax.xlane.f32.xlu0 %v7101
        %v7103 = vpop.xlane.xlu0 %7102
        %v7104 = vsub.f32 %v7099, %v7103
        %v7105 = vmul.f32 %v7104, 1.442695
        %v7106 = vpow.pop %v7105
        %v7107 = vsel %vm7100, %v7106, 0.0
        %7108 = vadd.xlane.f32.xlu0 %v7107
        %v7109 = vpop.xlane.xlu0 %7108
        %v7110 = vrcp.pop %v7109
        %v7111 = vmul.f32 %v7109, %v7110
        %v7112 = vsub.f32 2.0, %v7111
        %v7113 = vmul.f32 %v7110, %v7112
        %v7114 = vmul.f32 %v7106, %v7113
        %7115 = vst.msk [vmem:[%s540] sm:$0x1] %vm7100, %v7114
        %s7116 = sand.u32 %s401, 1
        %s7117 = scalar_lea.sflag [#allocation8], %s7116
        %s7118 = sand.u32 %s401, 1
        %s7119 = scalar_lea.vmem [#allocation7], %s7118
        // Predicated region
        $region89: #{actor_net_forward.1} parent=87 // pred_check
          %p7120 = pneg %p411
        $region90: #{actor_net_forward.1} parent=87 // pred_check_branch
          %7122 = sbr.rel (%p7120) target = $region92
        $region91: #{actor_net_forward.1} parent=87 // pred_region
          %s7124 = ssub.s32 16, 16
          %7125 = vsyncadd %s7117, %s7124
          %s7126 = smul.addr %s31, 16
          %s7127 = scalar_lea.hbm %s17, %s7126
          %s7129 = sshll.u32 %s7119, 4
          %s7130 = int_to_ptr.vmem [resolvable:$true] %s7129
          %7132 = dma.vmem_to_hbm [thread:$0]  %s7130, 16, %s7127, %s7117
        $region92: #{actor_net_forward.1} parent=87 // pred_fallthru
          _
      $region88: #{actor_net_forward.1} parent=5 // pred_fallthru
        _
      %p7133 = scmp.le.s32.totalorder 2, %s26
      // Predicated region
      $region93: #{actor_net_forward.1} parent=5 // pred_check
        %p7134 = pneg %p7133
      $region94: #{actor_net_forward.1} parent=5 // pred_check_branch
        %7136 = sbr.rel (%p7134) target = $region96
      $region95: #{actor_net_forward.1} parent=5 // pred_region
        %s7137 = ssub.s32 %s26, 2
        // Predicated region
        $region97: #{actor_net_forward.1} parent=95 // pred_check
          %p7138 = pneg %p417
        $region98: #{actor_net_forward.1} parent=95 // pred_check_branch
          %7140 = sbr.rel (%p7138) target = $region100
        $region99: #{actor_net_forward.1} parent=95 // pred_region
          %s7141 = sand.u32 %s402, 1
          %s7142 = scalar_lea.sflag [#allocation8], %s7141
          %s7143 = sand.u32 %s402, 1
          %s7144 = scalar_lea.vmem [#allocation7], %s7143
          %7145 = dma.done %s7142, 16
        $region100: #{actor_net_forward.1} parent=95 // pred_fallthru
          _
      $region96: #{actor_net_forward.1} parent=5 // pred_fallthru
        _
    $region6: #{actor_net_forward.1} parent=1 // loop_footer
      %s30 = sadd.s32 1, %s26
    $region7: #{actor_net_forward.1} parent=1 // loop_footer_branch
      %25 = sbr.rel target = $region3
    $region8: #{actor_net_forward.1} parent=1 // loop_exit
      _
    %7146 = vsyncpa [#allocation8], 1
    %s7147 = scalar_lea.sflag [#allocation8], 1
    %7148 = vsyncpa %s7147, 1

</llo_original>
